<compile_context>
chip_gen: v5e
topology: v5e:2x2
jax: 0.10.0
libtpu: 0.0.40
codegen_flags: <defaults>
</compile_context>

<pallas_src>
import functools

import numpy as np
import jax
import jax.numpy as jnp
from jax import lax
from jax.experimental import pallas as pl
from jax.experimental.pallas import tpu as pltpu


_MXU_DTYPE = jnp.bfloat16  # conv matmul input dtype (accumulation stays f32)


# ----------------------------------------------------------------------------
# Fused cnn_layer kernel: 5x conv3x3 (+InstanceNorm+ReLU) + residual, HW on lanes
# ----------------------------------------------------------------------------
def _make_tap_masks(h, w, nb):
    """(9, nb*h*w) f32 validity masks for the 3x3 taps on the flattened row-major image."""
    f = np.arange(h * w)
    i, j = f // w, f % w
    masks = []
    for dh in (-1, 0, 1):
        for dw in (-1, 0, 1):
            valid = (i + dh >= 0) & (i + dh < h) & (j + dw >= 0) & (j + dw < w)
            masks.append(valid)
    m = np.stack(masks, axis=0).astype(np.float32)          # (9, h*w)
    return jnp.asarray(np.tile(m, (1, nb)))                 # (9, nb*h*w)


def _cnn_layer_kernel(x_ref, mask_ref, w0_ref, b0_ref, wk_ref, bk_ref,
                      g_ref, bt_ref, o_ref, *, nb, w_img):
    # x_ref   : (1, 2, L)   L = nb*H*W; row 0 = real planes, row 1 = imag planes
    # mask_ref: (9, L)      f32 {0,1} validity mask per 3x3 tap
    # w0_ref  : (C, 18)     layer-0 weights (Cout, 9*2), bf16
    # wk_ref  : (4, C, 9C)  layers 1..4 (layer-4 has 2 valid output rows, rest zero), bf16
    # b0/bk/g/bt : f32 (C, 1) / (4, C, 1)
    # o_ref   : (1, 2, L)
    L = x_ref.shape[-1]
    hw = L // nb
    inv_hw = 1.0 / hw
    shifts = tuple(dh * w_img + dw for dh in (-1, 0, 1) for dw in (-1, 0, 1))

    def conv(act, w_t, b_t):
        # act: (Cin, L) f32 -> (Cout, L) f32; one full-lane MXU matmul, K = 9*Cin.
        taps = []
        for t, d in enumerate(shifts):
            if d == 0:
                taps.append(act)                             # center tap: always valid
            else:
                shifted = pltpu.roll(act, shift=(-d) % L, axis=1)   # XLU lane rotate
                taps.append(shifted * mask_ref[pl.ds(t, 1), :])     # zero the wrapped lanes
        cols = jnp.concatenate(taps, axis=0)                 # (9*Cin, L)
        y = jnp.dot(w_t, cols.astype(_MXU_DTYPE),
                    preferred_element_type=jnp.float32)
        return y + b_t

    def instnorm_relu(y, g, b):
        # Per-image, per-channel InstanceNorm (two-pass stats, eps=1e-5, biased var) + ReLU.
        segs = []
        for n in range(nb):
            seg = y[:, n * hw:(n + 1) * hw]                  # lane-aligned slice (hw % 128 == 0)
            mean = jnp.sum(seg, axis=1, keepdims=True) * inv_hw
            c = seg - mean
            var = jnp.sum(c * c, axis=1, keepdims=True) * inv_hw
            segs.append(jnp.maximum(c * lax.rsqrt(var + 1e-5) * g + b, 0.0))
        return segs[0] if nb == 1 else jnp.concatenate(segs, axis=1)

    x0 = x_ref[0]                                            # (2, L) f32 residual input
    y = conv(x0, w0_ref[...], b0_ref[...])                   # layer 0: 2 -> C
    y = instnorm_relu(y, g_ref[0], bt_ref[0])
    for l in range(3):                                       # layers 1..3: C -> C
        y = conv(y, wk_ref[l], bk_ref[l])
        y = instnorm_relu(y, g_ref[l + 1], bt_ref[l + 1])
    y = conv(y, wk_ref[3], bk_ref[3])                        # layer 4: C -> 2 (rows 0..1)
    o_ref[0] = y[0:2, :] + x0                                # residual add, lane-dense store


def cnn_layer_apply(kr, ki, p, h, w):
    """Fused 5x(conv3x3[+IN+ReLU]) + residual over N images.  kr/ki: (N, H*W) f32 planes."""
    N, HW = kr.shape
    nb = 2 if N % 2 == 0 else 1          # images per grid step (amortize per-step overhead)
    G = N // nb
    L = nb * HW
    x = jnp.stack([kr.reshape(G, L), ki.reshape(G, L)], axis=1)     # (G, 2, L)
    masks = _make_tap_masks(h, w, nb)                               # (9, L) compile-time const
    kernel = functools.partial(_cnn_layer_kernel, nb=nb, w_img=w)
    const2 = lambda g: (0, 0)
    const3 = lambda g: (0, 0, 0)
    out = pl.pallas_call(
        kernel,
        out_shape=jax.ShapeDtypeStruct((G, 2, L), jnp.float32),
        grid=(G,),
        in_specs=[
            pl.BlockSpec((1, 2, L), lambda g: (g, 0, 0)),
            pl.BlockSpec(masks.shape, const2),       # resident across grid (constant index)
            pl.BlockSpec(p["w0"].shape, const2),
            pl.BlockSpec(p["b0"].shape, const2),
            pl.BlockSpec(p["wk"].shape, const3),
            pl.BlockSpec(p["bk"].shape, const3),
            pl.BlockSpec(p["g"].shape, const3),
            pl.BlockSpec(p["bt"].shape, const3),
        ],
        out_specs=pl.BlockSpec((1, 2, L), lambda g: (g, 0, 0)),
        compiler_params=pltpu.CompilerParams(
            dimension_semantics=("parallel",),
            vmem_limit_bytes=32 * 1024 * 1024),      # safe on v5e/v6e/v7x at this size
    )(x, masks, p["w0"], p["b0"], p["wk"], p["bk"], p["g"], p["bt"])
    return out[:, 0, :].reshape(N, HW), out[:, 1, :].reshape(N, HW)


def init_cnn_params(key, chans=32, in_ch=2):
    """Conv weights packed for the flipped layout: LHS rows = out channel, cols = tap*Cin+cin."""
    dims = [(in_ch, chans), (chans, chans), (chans, chans), (chans, chans), (chans, in_ch)]
    keys = jax.random.split(key, len(dims))
    ws, bs = [], []
    for i, (ci, co) in enumerate(dims):
        std = (2.0 / (9.0 * ci)) ** 0.5
        ws.append(jax.random.normal(keys[i], (3, 3, ci, co), jnp.float32) * std)
        bs.append(jnp.zeros((co,), jnp.float32))
    w0 = ws[0].reshape(9 * in_ch, chans).T.astype(_MXU_DTYPE)               # (C, 18)
    b0 = bs[0].reshape(chans, 1)
    wk = [ws[i].reshape(9 * chans, chans).T for i in (1, 2, 3)]             # (C, 9C)
    w4 = jnp.pad(ws[4].reshape(9 * chans, in_ch).T, ((0, chans - in_ch), (0, 0)))
    wk.append(w4)
    wk = jnp.stack(wk, axis=0).astype(_MXU_DTYPE)                           # (4, C, 9C)
    bk = jnp.stack([bs[1], bs[2], bs[3], jnp.pad(bs[4], (0, chans - in_ch))],
                   axis=0).reshape(4, chans, 1)
    g = jnp.ones((4, chans, 1), jnp.float32)     # InstanceNorm2d(affine=True) init
    bt = jnp.zeros((4, chans, 1), jnp.float32)
    return {"w0": w0, "b0": b0, "wk": wk, "bk": bk, "g": g, "bt": bt}


# ----------------------------------------------------------------------------
# Gridded, lane-dense elementwise kernels on planar (re, im) planes
# ----------------------------------------------------------------------------
def _coil_combine_kernel(ir_ref, ii_ref, sr_ref, si_ref, or_ref, oi_ref):
    a, b = ir_ref[...], ii_ref[...]                       # (1, C, HW)
    c, d = sr_ref[...], si_ref[...]
    or_ref[...] = jnp.sum(a * c + b * d, axis=1, keepdims=True)
    oi_ref[...] = jnp.sum(b * c - a * d, axis=1, keepdims=True)


def coil_combine(ir, ii, sr, si):
    """sum_coil image * conj(sens): (B, C, HW) planes -> (B, 1, HW) planes."""
    B, C, HW = ir.shape
    spec_in = pl.BlockSpec((1, C, HW), lambda b: (b, 0, 0))
    spec_out = pl.BlockSpec((1, 1, HW), lambda b: (b, 0, 0))
    return pl.pallas_call(
        _coil_combine_kernel,
        out_shape=(jax.ShapeDtypeStruct((B, 1, HW), jnp.float32),
                   jax.ShapeDtypeStruct((B, 1, HW), jnp.float32)),
        grid=(B,),
        in_specs=[spec_in] * 4,
        out_specs=(spec_out, spec_out),
        compiler_params=pltpu.CompilerParams(dimension_semantics=("parallel",)),
    )(ir, ii, sr, si)


def _coil_expand_kernel(ir_ref, ii_ref, sr_ref, si_ref, or_ref, oi_ref):
    a, b = ir_ref[...], ii_ref[...]                       # (1, 1, HW)
    c, d = sr_ref[...], si_ref[...]                       # (1, C, HW)
    or_ref[...] = a * c - b * d
    oi_ref[...] = a * d + b * c


def coil_expand(ir, ii, sr, si):
    """image * sens: (B, 1, HW) x (B, C, HW) -> (B, C, HW)."""
    B, C, HW = sr.shape
    spec_img = pl.BlockSpec((1, 1, HW), lambda b: (b, 0, 0))
    spec_coil = pl.BlockSpec((1, C, HW), lambda b: (b, 0, 0))
    return pl.pallas_call(
        _coil_expand_kernel,
        out_shape=(jax.ShapeDtypeStruct((B, C, HW), jnp.float32),
                   jax.ShapeDtypeStruct((B, C, HW), jnp.float32)),
        grid=(B,),
        in_specs=[spec_img, spec_img, spec_coil, spec_coil],
        out_specs=(spec_coil, spec_coil),
        compiler_params=pltpu.CompilerParams(dimension_semantics=("parallel",)),
    )(ir, ii, sr, si)


def _dc_kernel(kr_ref, ki_ref, mr_ref, mi_ref, m_ref, or_ref, oi_ref):
    m = m_ref[...]                                        # (1, 1, HW)
    kr, ki = kr_ref[...], ki_ref[...]                     # (1, C, HW)
    or_ref[...] = kr + m * (mr_ref[...] - kr)             # == (1-m)*k + m*mk
    oi_ref[...] = ki + m * (mi_ref[...] - ki)


def data_consistency(kr, ki, mkr, mki, m):
    """(1 - mask)*kspace + mask*masked_kspace on planar (B, C, HW) planes (in-place on kspace)."""
    B, C, HW = kr.shape
    spec_coil = pl.BlockSpec((1, C, HW), lambda b: (b, 0, 0))
    spec_mask = pl.BlockSpec((1, 1, HW), lambda b: (b, 0, 0))
    return pl.pallas_call(
        _dc_kernel,
        out_shape=(jax.ShapeDtypeStruct((B, C, HW), jnp.float32),
                   jax.ShapeDtypeStruct((B, C, HW), jnp.float32)),
        grid=(B,),
        in_specs=[spec_coil, spec_coil, spec_coil, spec_coil, spec_mask],
        out_specs=(spec_coil, spec_coil),
        input_output_aliases={0: 0, 1: 1},
        compiler_params=pltpu.CompilerParams(dimension_semantics=("parallel",)),
    )(kr, ki, mkr, mki, m)


# ----------------------------------------------------------------------------
# Plain-JAX glue: centered FFTs, crop/pad on planar planes
# ----------------------------------------------------------------------------
def _fft2c_planar(xr, xi, h, w, inverse):
    # TODO(synk): T.fft2 / T.ifft2 have no Pallas equivalent; plain-JAX centered ortho FFT.
    shp = xr.shape
    c = (xr + 1j * xi).reshape(shp[:-1] + (h, w))
    c = jnp.fft.ifftshift(c, axes=(-2, -1))
    c = (jnp.fft.ifftn if inverse else jnp.fft.fftn)(c, axes=(-2, -1), norm="ortho")
    c = jnp.fft.fftshift(c, axes=(-2, -1))
    c = c.reshape(shp)
    return jnp.real(c).astype(jnp.float32), jnp.imag(c).astype(jnp.float32)


def center_crop_planar(xr, xi, h, w, crop):
    ch, cw = crop
    h0, w0 = (h - ch) // 2, (w - cw) // 2

    def cc(x):
        B = x.shape[0]
        return x.reshape(B, 1, h, w)[:, :, h0:h0 + ch, w0:w0 + cw].reshape(B, 1, ch * cw)

    return cc(xr), cc(xi)


def center_pad_planar(xr, xi, crop, h, w):
    ch, cw = crop
    ph, pw = h - ch, w - cw
    ph0, pw0 = ph // 2, pw // 2

    def pp(x):
        B = x.shape[0]
        x = x.reshape(B, 1, ch, cw)
        x = jnp.pad(x, ((0, 0), (0, 0), (ph0, ph - ph0), (pw0, pw - pw0)))
        return x.reshape(B, 1, h * w)

    return pp(xr), pp(xi)


def let_transformer(xr, xi):
    # TODO(synk): LeT_transformer is not defined in the provided source; identity placeholder.
    return xr, xi


def apply_dc(cr, ci, h, w, sr, si, m, mkr, mki, crop):
    pr, pi = center_pad_planar(cr, ci, crop, h, w)
    er, ei = coil_expand(pr, pi, sr, si)                   # Pallas
    kr, ki = _fft2c_planar(er, ei, h, w, inverse=False)
    kr, ki = data_consistency(kr, ki, mkr, mki, m)         # Pallas
    ir, ii = _fft2c_planar(kr, ki, h, w, inverse=True)
    cr2, ci2 = coil_combine(ir, ii, sr, si)                # Pallas
    return center_crop_planar(cr2, ci2, h, w, crop)


# ----------------------------------------------------------------------------
# KIKInet forward
# ----------------------------------------------------------------------------
def kikinet_forward(masked_kspace, mask, sensitivity, params, n_iter=1, crop=(8, 8)):
    """masked_kspace/sensitivity: (B, coil, H, W, 2); mask: (B, 1, H, W, 1)."""
    B, ncoil, h, w, _ = masked_kspace.shape
    HW = h * w
    # One-time conversion to planar re/im lane-dense planes; everything downstream stays planar.
    mkr = masked_kspace[..., 0].reshape(B, ncoil, HW)
    mki = masked_kspace[..., 1].reshape(B, ncoil, HW)
    sr = sensitivity[..., 0].reshape(B, ncoil, HW)
    si = sensitivity[..., 1].reshape(B, ncoil, HW)
    m = mask[:, 0, :, :, 0].reshape(B, 1, HW)
    kr, ki = mkr, mki
    cr = ci = None
    for _ in range(n_iter):
        # MultiCoil k-space CNN: coil folded into batch, one fused Pallas call.
        kr2, ki2 = cnn_layer_apply(kr.reshape(B * ncoil, HW), ki.reshape(B * ncoil, HW),
                                   params["kspace_cnn"], h, w)
        kr, ki = kr2.reshape(B, ncoil, HW), ki2.reshape(B, ncoil, HW)
        ir, ii = _fft2c_planar(kr, ki, h, w, inverse=True)
        cr, ci = coil_combine(ir, ii, sr, si)              # Pallas
        cr, ci = center_crop_planar(cr, ci, h, w, crop)
        cr, ci = let_transformer(cr, ci)                   # attn_model (identity)
        cr, ci = apply_dc(cr, ci, h, w, sr, si, m, mkr, mki, crop)
        cr, ci = let_transformer(cr, ci)                   # attn_model2 (identity)
        cr, ci = apply_dc(cr, ci, h, w, sr, si, m, mkr, mki, crop)
    ch, cw = crop
    return jnp.stack([cr.reshape(B, ch, cw), ci.reshape(B, ch, cw)], axis=-1)


# ----------------------------------------------------------------------------
if __name__ == "__main__":
    B, COIL, H, W = 2, 4, 16, 16
    CROP = 8  # stands in for the reference's 320 crop at small spatial size

    key = jax.random.PRNGKey(0)
    kp, k1, k2, k3 = jax.random.split(key, 4)

    params = {"kspace_cnn": init_cnn_params(kp, chans=32, in_ch=2)}

    masked_kspace = jax.random.normal(k1, (B, COIL, H, W, 2), jnp.float32)
    sensitivity = jax.random.normal(k2, (B, COIL, H, W, 2), jnp.float32) * 0.3
    mask_lines = (jax.random.uniform(k3, (B, 1, 1, W, 1)) > 0.5).astype(jnp.float32)
    mask = jnp.broadcast_to(mask_lines, (B, 1, H, W, 1))

    fwd = jax.jit(functools.partial(kikinet_forward, n_iter=1, crop=(CROP, CROP)))
    out = jax.block_until_ready(fwd(masked_kspace, mask, sensitivity, params))

    assert out.shape == (B, CROP, CROP, 2), out.shape
    assert bool(jnp.all(jnp.isfinite(out)))
    print("KERNEL_OK")
</pallas_src>

<mosaic_0001>
module attributes {stable_mosaic.version = 11 : i64} {
  func.func @_cnn_layer_kernel(%arg0: i32, %arg1: memref<1x2x512xf32, #tpu.memory_space<vmem>>, %arg2: memref<9x512xf32, #tpu.memory_space<vmem>>, %arg3: memref<32x18xbf16, #tpu.memory_space<vmem>>, %arg4: memref<32x1xf32, #tpu.memory_space<vmem>>, %arg5: memref<4x32x288xbf16, #tpu.memory_space<vmem>>, %arg6: memref<4x32x1xf32, #tpu.memory_space<vmem>>, %arg7: memref<4x32x1xf32, #tpu.memory_space<vmem>>, %arg8: memref<4x32x1xf32, #tpu.memory_space<vmem>>, %arg9: memref<1x2x512xf32, #tpu.memory_space<vmem>>) attributes {dimension_semantics = [#tpu.dimension_semantics<parallel>], iteration_bounds = array<i64: 4>, scalar_prefetch = 0 : i64, scratch_operands = 0 : i64, tpu.core_type = #tpu.core_type<tc>, window_params = [{transform_indices = @transform_0, window_bounds = array<i64: 1, 2, 512>}, {pipeline_mode = #tpu.pipeline_mode<synchronous>, transform_indices = @transform_1, window_bounds = array<i64: 9, 512>}, {pipeline_mode = #tpu.pipeline_mode<synchronous>, transform_indices = @transform_2, window_bounds = array<i64: 32, 18>}, {pipeline_mode = #tpu.pipeline_mode<synchronous>, transform_indices = @transform_3, window_bounds = array<i64: 32, 1>}, {pipeline_mode = #tpu.pipeline_mode<synchronous>, transform_indices = @transform_4, window_bounds = array<i64: 4, 32, 288>}, {pipeline_mode = #tpu.pipeline_mode<synchronous>, transform_indices = @transform_5, window_bounds = array<i64: 4, 32, 1>}, {pipeline_mode = #tpu.pipeline_mode<synchronous>, transform_indices = @transform_6, window_bounds = array<i64: 4, 32, 1>}, {pipeline_mode = #tpu.pipeline_mode<synchronous>, transform_indices = @transform_7, window_bounds = array<i64: 4, 32, 1>}, {transform_indices = @transform_8, window_bounds = array<i64: 1, 2, 512>}]} {
    %c0 = arith.constant 0 : index
    %c0_0 = arith.constant 0 : index
    %c0_1 = arith.constant 0 : index
    %0 = vector.load %arg1[%c0, %c0_0, %c0_1] : memref<1x2x512xf32, #tpu.memory_space<vmem>>, vector<1x2x512xf32>
    %1 = vector.shape_cast %0 : vector<1x2x512xf32> to vector<2x512xf32>
    %c0_2 = arith.constant 0 : index
    %c0_3 = arith.constant 0 : index
    %2 = vector.load %arg3[%c0_2, %c0_3] : memref<32x18xbf16, #tpu.memory_space<vmem>>, vector<32x18xbf16>
    %c0_4 = arith.constant 0 : index
    %c0_5 = arith.constant 0 : index
    %3 = vector.load %arg4[%c0_4, %c0_5] : memref<32x1xf32, #tpu.memory_space<vmem>>, vector<32x1xf32>
    %c17_i32 = arith.constant 17 : i32
    %4 = tpu.dynamic_rotate %1 by %c17_i32 dim 1 : vector<2x512xf32>, i32 -> vector<2x512xf32>
    %c0_6 = arith.constant 0 : index
    %c0_7 = arith.constant 0 : index
    %5 = vector.load %arg2[%c0_6, %c0_7] : memref<9x512xf32, #tpu.memory_space<vmem>>, vector<1x512xf32>
    %6 = vector.broadcast %5 : vector<1x512xf32> to vector<2x512xf32>
    %7 = arith.mulf %4, %6 : vector<2x512xf32>
    %c16_i32 = arith.constant 16 : i32
    %8 = tpu.dynamic_rotate %1 by %c16_i32 dim 1 : vector<2x512xf32>, i32 -> vector<2x512xf32>
    %c1 = arith.constant 1 : index
    %c0_8 = arith.constant 0 : index
    %9 = vector.load %arg2[%c1, %c0_8] : memref<9x512xf32, #tpu.memory_space<vmem>>, vector<1x512xf32>
    %10 = vector.broadcast %9 : vector<1x512xf32> to vector<2x512xf32>
    %11 = arith.mulf %8, %10 : vector<2x512xf32>
    %c15_i32 = arith.constant 15 : i32
    %12 = tpu.dynamic_rotate %1 by %c15_i32 dim 1 : vector<2x512xf32>, i32 -> vector<2x512xf32>
    %c2 = arith.constant 2 : index
    %c0_9 = arith.constant 0 : index
    %13 = vector.load %arg2[%c2, %c0_9] : memref<9x512xf32, #tpu.memory_space<vmem>>, vector<1x512xf32>
    %14 = vector.broadcast %13 : vector<1x512xf32> to vector<2x512xf32>
    %15 = arith.mulf %12, %14 : vector<2x512xf32>
    %c1_i32 = arith.constant 1 : i32
    %16 = tpu.dynamic_rotate %1 by %c1_i32 dim 1 : vector<2x512xf32>, i32 -> vector<2x512xf32>
    %c3 = arith.constant 3 : index
    %c0_10 = arith.constant 0 : index
    %17 = vector.load %arg2[%c3, %c0_10] : memref<9x512xf32, #tpu.memory_space<vmem>>, vector<1x512xf32>
    %18 = vector.broadcast %17 : vector<1x512xf32> to vector<2x512xf32>
    %19 = arith.mulf %16, %18 : vector<2x512xf32>
    %c511_i32 = arith.constant 511 : i32
    %20 = tpu.dynamic_rotate %1 by %c511_i32 dim 1 : vector<2x512xf32>, i32 -> vector<2x512xf32>
    %c5 = arith.constant 5 : index
    %c0_11 = arith.constant 0 : index
    %21 = vector.load %arg2[%c5, %c0_11] : memref<9x512xf32, #tpu.memory_space<vmem>>, vector<1x512xf32>
    %22 = vector.broadcast %21 : vector<1x512xf32> to vector<2x512xf32>
    %23 = arith.mulf %20, %22 : vector<2x512xf32>
    %c497_i32 = arith.constant 497 : i32
    %24 = tpu.dynamic_rotate %1 by %c497_i32 dim 1 : vector<2x512xf32>, i32 -> vector<2x512xf32>
    %c6 = arith.constant 6 : index
    %c0_12 = arith.constant 0 : index
    %25 = vector.load %arg2[%c6, %c0_12] : memref<9x512xf32, #tpu.memory_space<vmem>>, vector<1x512xf32>
    %26 = vector.broadcast %25 : vector<1x512xf32> to vector<2x512xf32>
    %27 = arith.mulf %24, %26 : vector<2x512xf32>
    %c496_i32 = arith.constant 496 : i32
    %28 = tpu.dynamic_rotate %1 by %c496_i32 dim 1 : vector<2x512xf32>, i32 -> vector<2x512xf32>
    %c7 = arith.constant 7 : index
    %c0_13 = arith.constant 0 : index
    %29 = vector.load %arg2[%c7, %c0_13] : memref<9x512xf32, #tpu.memory_space<vmem>>, vector<1x512xf32>
    %30 = vector.broadcast %29 : vector<1x512xf32> to vector<2x512xf32>
    %31 = arith.mulf %28, %30 : vector<2x512xf32>
    %c495_i32 = arith.constant 495 : i32
    %32 = tpu.dynamic_rotate %1 by %c495_i32 dim 1 : vector<2x512xf32>, i32 -> vector<2x512xf32>
    %c8 = arith.constant 8 : index
    %c0_14 = arith.constant 0 : index
    %33 = vector.load %arg2[%c8, %c0_14] : memref<9x512xf32, #tpu.memory_space<vmem>>, vector<1x512xf32>
    %34 = vector.broadcast %33 : vector<1x512xf32> to vector<2x512xf32>
    %35 = arith.mulf %32, %34 : vector<2x512xf32>
    %36 = tpu.concatenate %7, %11, %15, %19, %1, %23, %27, %31, %35 in 0 : vector<2x512xf32>, vector<2x512xf32>, vector<2x512xf32>, vector<2x512xf32>, vector<2x512xf32>, vector<2x512xf32>, vector<2x512xf32>, vector<2x512xf32>, vector<2x512xf32> -> vector<18x512xf32>
    %37 = arith.truncf %36 : vector<18x512xf32> to vector<18x512xbf16>
    %cst = arith.constant dense<0.000000e+00> : vector<32x512xf32>
    %38 = tpu.matmul %2, %37, %cst {dimension_numbers = #tpu.dot_dimension_numbers<[1], [0], [0], [1], [0, 0, 1, 1], [], []>} : vector<32x18xbf16>, vector<18x512xbf16>, vector<32x512xf32> -> vector<32x512xf32>
    %39 = vector.broadcast %3 : vector<32x1xf32> to vector<32x512xf32>
    %40 = arith.addf %38, %39 : vector<32x512xf32>
    %c0_15 = arith.constant 0 : index
    %c0_16 = arith.constant 0 : index
    %c0_17 = arith.constant 0 : index
    %41 = vector.load %arg7[%c0_15, %c0_16, %c0_17] : memref<4x32x1xf32, #tpu.memory_space<vmem>>, vector<1x32x1xf32>
    %42 = vector.shape_cast %41 : vector<1x32x1xf32> to vector<32x1xf32>
    %c0_18 = arith.constant 0 : index
    %c0_19 = arith.constant 0 : index
    %c0_20 = arith.constant 0 : index
    %43 = vector.load %arg8[%c0_18, %c0_19, %c0_20] : memref<4x32x1xf32, #tpu.memory_space<vmem>>, vector<1x32x1xf32>
    %44 = vector.shape_cast %43 : vector<1x32x1xf32> to vector<32x1xf32>
    %45 = vector.extract_strided_slice %40 {offsets = [0, 0], sizes = [32, 256], strides = [1, 1]} : vector<32x512xf32> to vector<32x256xf32>
    %cst_21 = arith.constant dense<0.000000e+00> : vector<32xf32>
    %46 = vector.multi_reduction <add>, %45, %cst_21 [1] : vector<32x256xf32> to vector<32xf32>
    %47 = vector.shape_cast %46 : vector<32xf32> to vector<32x1xf32>
    %cst_22 = arith.constant 3.906250e-03 : f32
    %48 = vector.broadcast %cst_22 : f32 to vector<32x1xf32>
    %49 = arith.mulf %47, %48 : vector<32x1xf32>
    %50 = vector.broadcast %49 : vector<32x1xf32> to vector<32x256xf32>
    %51 = arith.subf %45, %50 : vector<32x256xf32>
    %52 = arith.mulf %51, %51 : vector<32x256xf32>
    %cst_23 = arith.constant dense<0.000000e+00> : vector<32xf32>
    %53 = vector.multi_reduction <add>, %52, %cst_23 [1] : vector<32x256xf32> to vector<32xf32>
    %54 = vector.shape_cast %53 : vector<32xf32> to vector<32x1xf32>
    %cst_24 = arith.constant 3.906250e-03 : f32
    %55 = vector.broadcast %cst_24 : f32 to vector<32x1xf32>
    %56 = arith.mulf %54, %55 : vector<32x1xf32>
    %cst_25 = arith.constant 9.99999974E-6 : f32
    %57 = vector.broadcast %cst_25 : f32 to vector<32x1xf32>
    %58 = arith.addf %56, %57 : vector<32x1xf32>
    %59 = math.rsqrt %58 : vector<32x1xf32>
    %60 = vector.broadcast %59 : vector<32x1xf32> to vector<32x256xf32>
    %61 = arith.mulf %51, %60 : vector<32x256xf32>
    %62 = vector.broadcast %42 : vector<32x1xf32> to vector<32x256xf32>
    %63 = arith.mulf %61, %62 : vector<32x256xf32>
    %64 = vector.broadcast %44 : vector<32x1xf32> to vector<32x256xf32>
    %65 = arith.addf %63, %64 : vector<32x256xf32>
    %cst_26 = arith.constant 0.000000e+00 : f32
    %66 = vector.broadcast %cst_26 : f32 to vector<32x256xf32>
    %67 = arith.maximumf %65, %66 : vector<32x256xf32>
    %68 = vector.extract_strided_slice %40 {offsets = [0, 256], sizes = [32, 256], strides = [1, 1]} : vector<32x512xf32> to vector<32x256xf32>
    %cst_27 = arith.constant dense<0.000000e+00> : vector<32xf32>
    %69 = vector.multi_reduction <add>, %68, %cst_27 [1] : vector<32x256xf32> to vector<32xf32>
    %70 = vector.shape_cast %69 : vector<32xf32> to vector<32x1xf32>
    %cst_28 = arith.constant 3.906250e-03 : f32
    %71 = vector.broadcast %cst_28 : f32 to vector<32x1xf32>
    %72 = arith.mulf %70, %71 : vector<32x1xf32>
    %73 = vector.broadcast %72 : vector<32x1xf32> to vector<32x256xf32>
    %74 = arith.subf %68, %73 : vector<32x256xf32>
    %75 = arith.mulf %74, %74 : vector<32x256xf32>
    %cst_29 = arith.constant dense<0.000000e+00> : vector<32xf32>
    %76 = vector.multi_reduction <add>, %75, %cst_29 [1] : vector<32x256xf32> to vector<32xf32>
    %77 = vector.shape_cast %76 : vector<32xf32> to vector<32x1xf32>
    %cst_30 = arith.constant 3.906250e-03 : f32
    %78 = vector.broadcast %cst_30 : f32 to vector<32x1xf32>
    %79 = arith.mulf %77, %78 : vector<32x1xf32>
    %cst_31 = arith.constant 9.99999974E-6 : f32
    %80 = vector.broadcast %cst_31 : f32 to vector<32x1xf32>
    %81 = arith.addf %79, %80 : vector<32x1xf32>
    %82 = math.rsqrt %81 : vector<32x1xf32>
    %83 = vector.broadcast %82 : vector<32x1xf32> to vector<32x256xf32>
    %84 = arith.mulf %74, %83 : vector<32x256xf32>
    %85 = vector.broadcast %42 : vector<32x1xf32> to vector<32x256xf32>
    %86 = arith.mulf %84, %85 : vector<32x256xf32>
    %87 = vector.broadcast %44 : vector<32x1xf32> to vector<32x256xf32>
    %88 = arith.addf %86, %87 : vector<32x256xf32>
    %cst_32 = arith.constant 0.000000e+00 : f32
    %89 = vector.broadcast %cst_32 : f32 to vector<32x256xf32>
    %90 = arith.maximumf %88, %89 : vector<32x256xf32>
    %91 = tpu.concatenate %67, %90 in 1 : vector<32x256xf32>, vector<32x256xf32> -> vector<32x512xf32>
    %c0_33 = arith.constant 0 : index
    %c0_34 = arith.constant 0 : index
    %c0_35 = arith.constant 0 : index
    %92 = vector.load %arg5[%c0_33, %c0_34, %c0_35] : memref<4x32x288xbf16, #tpu.memory_space<vmem>>, vector<1x32x288xbf16>
    %93 = vector.shape_cast %92 : vector<1x32x288xbf16> to vector<32x288xbf16>
    %c0_36 = arith.constant 0 : index
    %c0_37 = arith.constant 0 : index
    %c0_38 = arith.constant 0 : index
    %94 = vector.load %arg6[%c0_36, %c0_37, %c0_38] : memref<4x32x1xf32, #tpu.memory_space<vmem>>, vector<1x32x1xf32>
    %95 = vector.shape_cast %94 : vector<1x32x1xf32> to vector<32x1xf32>
    %c17_i32_39 = arith.constant 17 : i32
    %96 = tpu.dynamic_rotate %91 by %c17_i32_39 dim 1 : vector<32x512xf32>, i32 -> vector<32x512xf32>
    %c0_40 = arith.constant 0 : index
    %c0_41 = arith.constant 0 : index
    %97 = vector.load %arg2[%c0_40, %c0_41] : memref<9x512xf32, #tpu.memory_space<vmem>>, vector<1x512xf32>
    %98 = vector.broadcast %97 : vector<1x512xf32> to vector<32x512xf32>
    %99 = arith.mulf %96, %98 : vector<32x512xf32>
    %c16_i32_42 = arith.constant 16 : i32
    %100 = tpu.dynamic_rotate %91 by %c16_i32_42 dim 1 : vector<32x512xf32>, i32 -> vector<32x512xf32>
    %c1_43 = arith.constant 1 : index
    %c0_44 = arith.constant 0 : index
    %101 = vector.load %arg2[%c1_43, %c0_44] : memref<9x512xf32, #tpu.memory_space<vmem>>, vector<1x512xf32>
    %102 = vector.broadcast %101 : vector<1x512xf32> to vector<32x512xf32>
    %103 = arith.mulf %100, %102 : vector<32x512xf32>
    %c15_i32_45 = arith.constant 15 : i32
    %104 = tpu.dynamic_rotate %91 by %c15_i32_45 dim 1 : vector<32x512xf32>, i32 -> vector<32x512xf32>
    %c2_46 = arith.constant 2 : index
    %c0_47 = arith.constant 0 : index
    %105 = vector.load %arg2[%c2_46, %c0_47] : memref<9x512xf32, #tpu.memory_space<vmem>>, vector<1x512xf32>
    %106 = vector.broadcast %105 : vector<1x512xf32> to vector<32x512xf32>
    %107 = arith.mulf %104, %106 : vector<32x512xf32>
    %c1_i32_48 = arith.constant 1 : i32
    %108 = tpu.dynamic_rotate %91 by %c1_i32_48 dim 1 : vector<32x512xf32>, i32 -> vector<32x512xf32>
    %c3_49 = arith.constant 3 : index
    %c0_50 = arith.constant 0 : index
    %109 = vector.load %arg2[%c3_49, %c0_50] : memref<9x512xf32, #tpu.memory_space<vmem>>, vector<1x512xf32>
    %110 = vector.broadcast %109 : vector<1x512xf32> to vector<32x512xf32>
    %111 = arith.mulf %108, %110 : vector<32x512xf32>
    %c511_i32_51 = arith.constant 511 : i32
    %112 = tpu.dynamic_rotate %91 by %c511_i32_51 dim 1 : vector<32x512xf32>, i32 -> vector<32x512xf32>
    %c5_52 = arith.constant 5 : index
    %c0_53 = arith.constant 0 : index
    %113 = vector.load %arg2[%c5_52, %c0_53] : memref<9x512xf32, #tpu.memory_space<vmem>>, vector<1x512xf32>
    %114 = vector.broadcast %113 : vector<1x512xf32> to vector<32x512xf32>
    %115 = arith.mulf %112, %114 : vector<32x512xf32>
    %c497_i32_54 = arith.constant 497 : i32
    %116 = tpu.dynamic_rotate %91 by %c497_i32_54 dim 1 : vector<32x512xf32>, i32 -> vector<32x512xf32>
    %c6_55 = arith.constant 6 : index
    %c0_56 = arith.constant 0 : index
    %117 = vector.load %arg2[%c6_55, %c0_56] : memref<9x512xf32, #tpu.memory_space<vmem>>, vector<1x512xf32>
    %118 = vector.broadcast %117 : vector<1x512xf32> to vector<32x512xf32>
    %119 = arith.mulf %116, %118 : vector<32x512xf32>
    %c496_i32_57 = arith.constant 496 : i32
    %120 = tpu.dynamic_rotate %91 by %c496_i32_57 dim 1 : vector<32x512xf32>, i32 -> vector<32x512xf32>
    %c7_58 = arith.constant 7 : index
    %c0_59 = arith.constant 0 : index
    %121 = vector.load %arg2[%c7_58, %c0_59] : memref<9x512xf32, #tpu.memory_space<vmem>>, vector<1x512xf32>
    %122 = vector.broadcast %121 : vector<1x512xf32> to vector<32x512xf32>
    %123 = arith.mulf %120, %122 : vector<32x512xf32>
    %c495_i32_60 = arith.constant 495 : i32
    %124 = tpu.dynamic_rotate %91 by %c495_i32_60 dim 1 : vector<32x512xf32>, i32 -> vector<32x512xf32>
    %c8_61 = arith.constant 8 : index
    %c0_62 = arith.constant 0 : index
    %125 = vector.load %arg2[%c8_61, %c0_62] : memref<9x512xf32, #tpu.memory_space<vmem>>, vector<1x512xf32>
    %126 = vector.broadcast %125 : vector<1x512xf32> to vector<32x512xf32>
    %127 = arith.mulf %124, %126 : vector<32x512xf32>
    %128 = tpu.concatenate %99, %103, %107, %111, %91, %115, %119, %123, %127 in 0 : vector<32x512xf32>, vector<32x512xf32>, vector<32x512xf32>, vector<32x512xf32>, vector<32x512xf32>, vector<32x512xf32>, vector<32x512xf32>, vector<32x512xf32>, vector<32x512xf32> -> vector<288x512xf32>
    %129 = arith.truncf %128 : vector<288x512xf32> to vector<288x512xbf16>
    %cst_63 = arith.constant dense<0.000000e+00> : vector<32x512xf32>
    %130 = tpu.matmul %93, %129, %cst_63 {dimension_numbers = #tpu.dot_dimension_numbers<[1], [0], [0], [1], [0, 0, 1, 1], [], []>} : vector<32x288xbf16>, vector<288x512xbf16>, vector<32x512xf32> -> vector<32x512xf32>
    %131 = vector.broadcast %95 : vector<32x1xf32> to vector<32x512xf32>
    %132 = arith.addf %130, %131 : vector<32x512xf32>
    %c1_64 = arith.constant 1 : index
    %c0_65 = arith.constant 0 : index
    %c0_66 = arith.constant 0 : index
    %133 = vector.load %arg7[%c1_64, %c0_65, %c0_66] : memref<4x32x1xf32, #tpu.memory_space<vmem>>, vector<1x32x1xf32>
    %134 = vector.shape_cast %133 : vector<1x32x1xf32> to vector<32x1xf32>
    %c1_67 = arith.constant 1 : index
    %c0_68 = arith.constant 0 : index
    %c0_69 = arith.constant 0 : index
    %135 = vector.load %arg8[%c1_67, %c0_68, %c0_69] : memref<4x32x1xf32, #tpu.memory_space<vmem>>, vector<1x32x1xf32>
    %136 = vector.shape_cast %135 : vector<1x32x1xf32> to vector<32x1xf32>
    %137 = vector.extract_strided_slice %132 {offsets = [0, 0], sizes = [32, 256], strides = [1, 1]} : vector<32x512xf32> to vector<32x256xf32>
    %cst_70 = arith.constant dense<0.000000e+00> : vector<32xf32>
    %138 = vector.multi_reduction <add>, %137, %cst_70 [1] : vector<32x256xf32> to vector<32xf32>
    %139 = vector.shape_cast %138 : vector<32xf32> to vector<32x1xf32>
    %cst_71 = arith.constant 3.906250e-03 : f32
    %140 = vector.broadcast %cst_71 : f32 to vector<32x1xf32>
    %141 = arith.mulf %139, %140 : vector<32x1xf32>
    %142 = vector.broadcast %141 : vector<32x1xf32> to vector<32x256xf32>
    %143 = arith.subf %137, %142 : vector<32x256xf32>
    %144 = arith.mulf %143, %143 : vector<32x256xf32>
    %cst_72 = arith.constant dense<0.000000e+00> : vector<32xf32>
    %145 = vector.multi_reduction <add>, %144, %cst_72 [1] : vector<32x256xf32> to vector<32xf32>
    %146 = vector.shape_cast %145 : vector<32xf32> to vector<32x1xf32>
    %cst_73 = arith.constant 3.906250e-03 : f32
    %147 = vector.broadcast %cst_73 : f32 to vector<32x1xf32>
    %148 = arith.mulf %146, %147 : vector<32x1xf32>
    %cst_74 = arith.constant 9.99999974E-6 : f32
    %149 = vector.broadcast %cst_74 : f32 to vector<32x1xf32>
    %150 = arith.addf %148, %149 : vector<32x1xf32>
    %151 = math.rsqrt %150 : vector<32x1xf32>
    %152 = vector.broadcast %151 : vector<32x1xf32> to vector<32x256xf32>
    %153 = arith.mulf %143, %152 : vector<32x256xf32>
    %154 = vector.broadcast %134 : vector<32x1xf32> to vector<32x256xf32>
    %155 = arith.mulf %153, %154 : vector<32x256xf32>
    %156 = vector.broadcast %136 : vector<32x1xf32> to vector<32x256xf32>
    %157 = arith.addf %155, %156 : vector<32x256xf32>
    %cst_75 = arith.constant 0.000000e+00 : f32
    %158 = vector.broadcast %cst_75 : f32 to vector<32x256xf32>
    %159 = arith.maximumf %157, %158 : vector<32x256xf32>
    %160 = vector.extract_strided_slice %132 {offsets = [0, 256], sizes = [32, 256], strides = [1, 1]} : vector<32x512xf32> to vector<32x256xf32>
    %cst_76 = arith.constant dense<0.000000e+00> : vector<32xf32>
    %161 = vector.multi_reduction <add>, %160, %cst_76 [1] : vector<32x256xf32> to vector<32xf32>
    %162 = vector.shape_cast %161 : vector<32xf32> to vector<32x1xf32>
    %cst_77 = arith.constant 3.906250e-03 : f32
    %163 = vector.broadcast %cst_77 : f32 to vector<32x1xf32>
    %164 = arith.mulf %162, %163 : vector<32x1xf32>
    %165 = vector.broadcast %164 : vector<32x1xf32> to vector<32x256xf32>
    %166 = arith.subf %160, %165 : vector<32x256xf32>
    %167 = arith.mulf %166, %166 : vector<32x256xf32>
    %cst_78 = arith.constant dense<0.000000e+00> : vector<32xf32>
    %168 = vector.multi_reduction <add>, %167, %cst_78 [1] : vector<32x256xf32> to vector<32xf32>
    %169 = vector.shape_cast %168 : vector<32xf32> to vector<32x1xf32>
    %cst_79 = arith.constant 3.906250e-03 : f32
    %170 = vector.broadcast %cst_79 : f32 to vector<32x1xf32>
    %171 = arith.mulf %169, %170 : vector<32x1xf32>
    %cst_80 = arith.constant 9.99999974E-6 : f32
    %172 = vector.broadcast %cst_80 : f32 to vector<32x1xf32>
    %173 = arith.addf %171, %172 : vector<32x1xf32>
    %174 = math.rsqrt %173 : vector<32x1xf32>
    %175 = vector.broadcast %174 : vector<32x1xf32> to vector<32x256xf32>
    %176 = arith.mulf %166, %175 : vector<32x256xf32>
    %177 = vector.broadcast %134 : vector<32x1xf32> to vector<32x256xf32>
    %178 = arith.mulf %176, %177 : vector<32x256xf32>
    %179 = vector.broadcast %136 : vector<32x1xf32> to vector<32x256xf32>
    %180 = arith.addf %178, %179 : vector<32x256xf32>
    %cst_81 = arith.constant 0.000000e+00 : f32
    %181 = vector.broadcast %cst_81 : f32 to vector<32x256xf32>
    %182 = arith.maximumf %180, %181 : vector<32x256xf32>
    %183 = tpu.concatenate %159, %182 in 1 : vector<32x256xf32>, vector<32x256xf32> -> vector<32x512xf32>
    %c1_82 = arith.constant 1 : index
    %c0_83 = arith.constant 0 : index
    %c0_84 = arith.constant 0 : index
    %184 = vector.load %arg5[%c1_82, %c0_83, %c0_84] : memref<4x32x288xbf16, #tpu.memory_space<vmem>>, vector<1x32x288xbf16>
    %185 = vector.shape_cast %184 : vector<1x32x288xbf16> to vector<32x288xbf16>
    %c1_85 = arith.constant 1 : index
    %c0_86 = arith.constant 0 : index
    %c0_87 = arith.constant 0 : index
    %186 = vector.load %arg6[%c1_85, %c0_86, %c0_87] : memref<4x32x1xf32, #tpu.memory_space<vmem>>, vector<1x32x1xf32>
    %187 = vector.shape_cast %186 : vector<1x32x1xf32> to vector<32x1xf32>
    %c17_i32_88 = arith.constant 17 : i32
    %188 = tpu.dynamic_rotate %183 by %c17_i32_88 dim 1 : vector<32x512xf32>, i32 -> vector<32x512xf32>
    %c0_89 = arith.constant 0 : index
    %c0_90 = arith.constant 0 : index
    %189 = vector.load %arg2[%c0_89, %c0_90] : memref<9x512xf32, #tpu.memory_space<vmem>>, vector<1x512xf32>
    %190 = vector.broadcast %189 : vector<1x512xf32> to vector<32x512xf32>
    %191 = arith.mulf %188, %190 : vector<32x512xf32>
    %c16_i32_91 = arith.constant 16 : i32
    %192 = tpu.dynamic_rotate %183 by %c16_i32_91 dim 1 : vector<32x512xf32>, i32 -> vector<32x512xf32>
    %c1_92 = arith.constant 1 : index
    %c0_93 = arith.constant 0 : index
    %193 = vector.load %arg2[%c1_92, %c0_93] : memref<9x512xf32, #tpu.memory_space<vmem>>, vector<1x512xf32>
    %194 = vector.broadcast %193 : vector<1x512xf32> to vector<32x512xf32>
    %195 = arith.mulf %192, %194 : vector<32x512xf32>
    %c15_i32_94 = arith.constant 15 : i32
    %196 = tpu.dynamic_rotate %183 by %c15_i32_94 dim 1 : vector<32x512xf32>, i32 -> vector<32x512xf32>
    %c2_95 = arith.constant 2 : index
    %c0_96 = arith.constant 0 : index
    %197 = vector.load %arg2[%c2_95, %c0_96] : memref<9x512xf32, #tpu.memory_space<vmem>>, vector<1x512xf32>
    %198 = vector.broadcast %197 : vector<1x512xf32> to vector<32x512xf32>
    %199 = arith.mulf %196, %198 : vector<32x512xf32>
    %c1_i32_97 = arith.constant 1 : i32
    %200 = tpu.dynamic_rotate %183 by %c1_i32_97 dim 1 : vector<32x512xf32>, i32 -> vector<32x512xf32>
    %c3_98 = arith.constant 3 : index
    %c0_99 = arith.constant 0 : index
    %201 = vector.load %arg2[%c3_98, %c0_99] : memref<9x512xf32, #tpu.memory_space<vmem>>, vector<1x512xf32>
    %202 = vector.broadcast %201 : vector<1x512xf32> to vector<32x512xf32>
    %203 = arith.mulf %200, %202 : vector<32x512xf32>
    %c511_i32_100 = arith.constant 511 : i32
    %204 = tpu.dynamic_rotate %183 by %c511_i32_100 dim 1 : vector<32x512xf32>, i32 -> vector<32x512xf32>
    %c5_101 = arith.constant 5 : index
    %c0_102 = arith.constant 0 : index
    %205 = vector.load %arg2[%c5_101, %c0_102] : memref<9x512xf32, #tpu.memory_space<vmem>>, vector<1x512xf32>
    %206 = vector.broadcast %205 : vector<1x512xf32> to vector<32x512xf32>
    %207 = arith.mulf %204, %206 : vector<32x512xf32>
    %c497_i32_103 = arith.constant 497 : i32
    %208 = tpu.dynamic_rotate %183 by %c497_i32_103 dim 1 : vector<32x512xf32>, i32 -> vector<32x512xf32>
    %c6_104 = arith.constant 6 : index
    %c0_105 = arith.constant 0 : index
    %209 = vector.load %arg2[%c6_104, %c0_105] : memref<9x512xf32, #tpu.memory_space<vmem>>, vector<1x512xf32>
    %210 = vector.broadcast %209 : vector<1x512xf32> to vector<32x512xf32>
    %211 = arith.mulf %208, %210 : vector<32x512xf32>
    %c496_i32_106 = arith.constant 496 : i32
    %212 = tpu.dynamic_rotate %183 by %c496_i32_106 dim 1 : vector<32x512xf32>, i32 -> vector<32x512xf32>
    %c7_107 = arith.constant 7 : index
    %c0_108 = arith.constant 0 : index
    %213 = vector.load %arg2[%c7_107, %c0_108] : memref<9x512xf32, #tpu.memory_space<vmem>>, vector<1x512xf32>
    %214 = vector.broadcast %213 : vector<1x512xf32> to vector<32x512xf32>
    %215 = arith.mulf %212, %214 : vector<32x512xf32>
    %c495_i32_109 = arith.constant 495 : i32
    %216 = tpu.dynamic_rotate %183 by %c495_i32_109 dim 1 : vector<32x512xf32>, i32 -> vector<32x512xf32>
    %c8_110 = arith.constant 8 : index
    %c0_111 = arith.constant 0 : index
    %217 = vector.load %arg2[%c8_110, %c0_111] : memref<9x512xf32, #tpu.memory_space<vmem>>, vector<1x512xf32>
    %218 = vector.broadcast %217 : vector<1x512xf32> to vector<32x512xf32>
    %219 = arith.mulf %216, %218 : vector<32x512xf32>
    %220 = tpu.concatenate %191, %195, %199, %203, %183, %207, %211, %215, %219 in 0 : vector<32x512xf32>, vector<32x512xf32>, vector<32x512xf32>, vector<32x512xf32>, vector<32x512xf32>, vector<32x512xf32>, vector<32x512xf32>, vector<32x512xf32>, vector<32x512xf32> -> vector<288x512xf32>
    %221 = arith.truncf %220 : vector<288x512xf32> to vector<288x512xbf16>
    %cst_112 = arith.constant dense<0.000000e+00> : vector<32x512xf32>
    %222 = tpu.matmul %185, %221, %cst_112 {dimension_numbers = #tpu.dot_dimension_numbers<[1], [0], [0], [1], [0, 0, 1, 1], [], []>} : vector<32x288xbf16>, vector<288x512xbf16>, vector<32x512xf32> -> vector<32x512xf32>
    %223 = vector.broadcast %187 : vector<32x1xf32> to vector<32x512xf32>
    %224 = arith.addf %222, %223 : vector<32x512xf32>
    %c2_113 = arith.constant 2 : index
    %c0_114 = arith.constant 0 : index
    %c0_115 = arith.constant 0 : index
    %225 = vector.load %arg7[%c2_113, %c0_114, %c0_115] : memref<4x32x1xf32, #tpu.memory_space<vmem>>, vector<1x32x1xf32>
    %226 = vector.shape_cast %225 : vector<1x32x1xf32> to vector<32x1xf32>
    %c2_116 = arith.constant 2 : index
    %c0_117 = arith.constant 0 : index
    %c0_118 = arith.constant 0 : index
    %227 = vector.load %arg8[%c2_116, %c0_117, %c0_118] : memref<4x32x1xf32, #tpu.memory_space<vmem>>, vector<1x32x1xf32>
    %228 = vector.shape_cast %227 : vector<1x32x1xf32> to vector<32x1xf32>
    %229 = vector.extract_strided_slice %224 {offsets = [0, 0], sizes = [32, 256], strides = [1, 1]} : vector<32x512xf32> to vector<32x256xf32>
    %cst_119 = arith.constant dense<0.000000e+00> : vector<32xf32>
    %230 = vector.multi_reduction <add>, %229, %cst_119 [1] : vector<32x256xf32> to vector<32xf32>
    %231 = vector.shape_cast %230 : vector<32xf32> to vector<32x1xf32>
    %cst_120 = arith.constant 3.906250e-03 : f32
    %232 = vector.broadcast %cst_120 : f32 to vector<32x1xf32>
    %233 = arith.mulf %231, %232 : vector<32x1xf32>
    %234 = vector.broadcast %233 : vector<32x1xf32> to vector<32x256xf32>
    %235 = arith.subf %229, %234 : vector<32x256xf32>
    %236 = arith.mulf %235, %235 : vector<32x256xf32>
    %cst_121 = arith.constant dense<0.000000e+00> : vector<32xf32>
    %237 = vector.multi_reduction <add>, %236, %cst_121 [1] : vector<32x256xf32> to vector<32xf32>
    %238 = vector.shape_cast %237 : vector<32xf32> to vector<32x1xf32>
    %cst_122 = arith.constant 3.906250e-03 : f32
    %239 = vector.broadcast %cst_122 : f32 to vector<32x1xf32>
    %240 = arith.mulf %238, %239 : vector<32x1xf32>
    %cst_123 = arith.constant 9.99999974E-6 : f32
    %241 = vector.broadcast %cst_123 : f32 to vector<32x1xf32>
    %242 = arith.addf %240, %241 : vector<32x1xf32>
    %243 = math.rsqrt %242 : vector<32x1xf32>
    %244 = vector.broadcast %243 : vector<32x1xf32> to vector<32x256xf32>
    %245 = arith.mulf %235, %244 : vector<32x256xf32>
    %246 = vector.broadcast %226 : vector<32x1xf32> to vector<32x256xf32>
    %247 = arith.mulf %245, %246 : vector<32x256xf32>
    %248 = vector.broadcast %228 : vector<32x1xf32> to vector<32x256xf32>
    %249 = arith.addf %247, %248 : vector<32x256xf32>
    %cst_124 = arith.constant 0.000000e+00 : f32
    %250 = vector.broadcast %cst_124 : f32 to vector<32x256xf32>
    %251 = arith.maximumf %249, %250 : vector<32x256xf32>
    %252 = vector.extract_strided_slice %224 {offsets = [0, 256], sizes = [32, 256], strides = [1, 1]} : vector<32x512xf32> to vector<32x256xf32>
    %cst_125 = arith.constant dense<0.000000e+00> : vector<32xf32>
    %253 = vector.multi_reduction <add>, %252, %cst_125 [1] : vector<32x256xf32> to vector<32xf32>
    %254 = vector.shape_cast %253 : vector<32xf32> to vector<32x1xf32>
    %cst_126 = arith.constant 3.906250e-03 : f32
    %255 = vector.broadcast %cst_126 : f32 to vector<32x1xf32>
    %256 = arith.mulf %254, %255 : vector<32x1xf32>
    %257 = vector.broadcast %256 : vector<32x1xf32> to vector<32x256xf32>
    %258 = arith.subf %252, %257 : vector<32x256xf32>
    %259 = arith.mulf %258, %258 : vector<32x256xf32>
    %cst_127 = arith.constant dense<0.000000e+00> : vector<32xf32>
    %260 = vector.multi_reduction <add>, %259, %cst_127 [1] : vector<32x256xf32> to vector<32xf32>
    %261 = vector.shape_cast %260 : vector<32xf32> to vector<32x1xf32>
    %cst_128 = arith.constant 3.906250e-03 : f32
    %262 = vector.broadcast %cst_128 : f32 to vector<32x1xf32>
    %263 = arith.mulf %261, %262 : vector<32x1xf32>
    %cst_129 = arith.constant 9.99999974E-6 : f32
    %264 = vector.broadcast %cst_129 : f32 to vector<32x1xf32>
    %265 = arith.addf %263, %264 : vector<32x1xf32>
    %266 = math.rsqrt %265 : vector<32x1xf32>
    %267 = vector.broadcast %266 : vector<32x1xf32> to vector<32x256xf32>
    %268 = arith.mulf %258, %267 : vector<32x256xf32>
    %269 = vector.broadcast %226 : vector<32x1xf32> to vector<32x256xf32>
    %270 = arith.mulf %268, %269 : vector<32x256xf32>
    %271 = vector.broadcast %228 : vector<32x1xf32> to vector<32x256xf32>
    %272 = arith.addf %270, %271 : vector<32x256xf32>
    %cst_130 = arith.constant 0.000000e+00 : f32
    %273 = vector.broadcast %cst_130 : f32 to vector<32x256xf32>
    %274 = arith.maximumf %272, %273 : vector<32x256xf32>
    %275 = tpu.concatenate %251, %274 in 1 : vector<32x256xf32>, vector<32x256xf32> -> vector<32x512xf32>
    %c2_131 = arith.constant 2 : index
    %c0_132 = arith.constant 0 : index
    %c0_133 = arith.constant 0 : index
    %276 = vector.load %arg5[%c2_131, %c0_132, %c0_133] : memref<4x32x288xbf16, #tpu.memory_space<vmem>>, vector<1x32x288xbf16>
    %277 = vector.shape_cast %276 : vector<1x32x288xbf16> to vector<32x288xbf16>
    %c2_134 = arith.constant 2 : index
    %c0_135 = arith.constant 0 : index
    %c0_136 = arith.constant 0 : index
    %278 = vector.load %arg6[%c2_134, %c0_135, %c0_136] : memref<4x32x1xf32, #tpu.memory_space<vmem>>, vector<1x32x1xf32>
    %279 = vector.shape_cast %278 : vector<1x32x1xf32> to vector<32x1xf32>
    %c17_i32_137 = arith.constant 17 : i32
    %280 = tpu.dynamic_rotate %275 by %c17_i32_137 dim 1 : vector<32x512xf32>, i32 -> vector<32x512xf32>
    %c0_138 = arith.constant 0 : index
    %c0_139 = arith.constant 0 : index
    %281 = vector.load %arg2[%c0_138, %c0_139] : memref<9x512xf32, #tpu.memory_space<vmem>>, vector<1x512xf32>
    %282 = vector.broadcast %281 : vector<1x512xf32> to vector<32x512xf32>
    %283 = arith.mulf %280, %282 : vector<32x512xf32>
    %c16_i32_140 = arith.constant 16 : i32
    %284 = tpu.dynamic_rotate %275 by %c16_i32_140 dim 1 : vector<32x512xf32>, i32 -> vector<32x512xf32>
    %c1_141 = arith.constant 1 : index
    %c0_142 = arith.constant 0 : index
    %285 = vector.load %arg2[%c1_141, %c0_142] : memref<9x512xf32, #tpu.memory_space<vmem>>, vector<1x512xf32>
    %286 = vector.broadcast %285 : vector<1x512xf32> to vector<32x512xf32>
    %287 = arith.mulf %284, %286 : vector<32x512xf32>
    %c15_i32_143 = arith.constant 15 : i32
    %288 = tpu.dynamic_rotate %275 by %c15_i32_143 dim 1 : vector<32x512xf32>, i32 -> vector<32x512xf32>
    %c2_144 = arith.constant 2 : index
    %c0_145 = arith.constant 0 : index
    %289 = vector.load %arg2[%c2_144, %c0_145] : memref<9x512xf32, #tpu.memory_space<vmem>>, vector<1x512xf32>
    %290 = vector.broadcast %289 : vector<1x512xf32> to vector<32x512xf32>
    %291 = arith.mulf %288, %290 : vector<32x512xf32>
    %c1_i32_146 = arith.constant 1 : i32
    %292 = tpu.dynamic_rotate %275 by %c1_i32_146 dim 1 : vector<32x512xf32>, i32 -> vector<32x512xf32>
    %c3_147 = arith.constant 3 : index
    %c0_148 = arith.constant 0 : index
    %293 = vector.load %arg2[%c3_147, %c0_148] : memref<9x512xf32, #tpu.memory_space<vmem>>, vector<1x512xf32>
    %294 = vector.broadcast %293 : vector<1x512xf32> to vector<32x512xf32>
    %295 = arith.mulf %292, %294 : vector<32x512xf32>
    %c511_i32_149 = arith.constant 511 : i32
    %296 = tpu.dynamic_rotate %275 by %c511_i32_149 dim 1 : vector<32x512xf32>, i32 -> vector<32x512xf32>
    %c5_150 = arith.constant 5 : index
    %c0_151 = arith.constant 0 : index
    %297 = vector.load %arg2[%c5_150, %c0_151] : memref<9x512xf32, #tpu.memory_space<vmem>>, vector<1x512xf32>
    %298 = vector.broadcast %297 : vector<1x512xf32> to vector<32x512xf32>
    %299 = arith.mulf %296, %298 : vector<32x512xf32>
    %c497_i32_152 = arith.constant 497 : i32
    %300 = tpu.dynamic_rotate %275 by %c497_i32_152 dim 1 : vector<32x512xf32>, i32 -> vector<32x512xf32>
    %c6_153 = arith.constant 6 : index
    %c0_154 = arith.constant 0 : index
    %301 = vector.load %arg2[%c6_153, %c0_154] : memref<9x512xf32, #tpu.memory_space<vmem>>, vector<1x512xf32>
    %302 = vector.broadcast %301 : vector<1x512xf32> to vector<32x512xf32>
    %303 = arith.mulf %300, %302 : vector<32x512xf32>
    %c496_i32_155 = arith.constant 496 : i32
    %304 = tpu.dynamic_rotate %275 by %c496_i32_155 dim 1 : vector<32x512xf32>, i32 -> vector<32x512xf32>
    %c7_156 = arith.constant 7 : index
    %c0_157 = arith.constant 0 : index
    %305 = vector.load %arg2[%c7_156, %c0_157] : memref<9x512xf32, #tpu.memory_space<vmem>>, vector<1x512xf32>
    %306 = vector.broadcast %305 : vector<1x512xf32> to vector<32x512xf32>
    %307 = arith.mulf %304, %306 : vector<32x512xf32>
    %c495_i32_158 = arith.constant 495 : i32
    %308 = tpu.dynamic_rotate %275 by %c495_i32_158 dim 1 : vector<32x512xf32>, i32 -> vector<32x512xf32>
    %c8_159 = arith.constant 8 : index
    %c0_160 = arith.constant 0 : index
    %309 = vector.load %arg2[%c8_159, %c0_160] : memref<9x512xf32, #tpu.memory_space<vmem>>, vector<1x512xf32>
    %310 = vector.broadcast %309 : vector<1x512xf32> to vector<32x512xf32>
    %311 = arith.mulf %308, %310 : vector<32x512xf32>
    %312 = tpu.concatenate %283, %287, %291, %295, %275, %299, %303, %307, %311 in 0 : vector<32x512xf32>, vector<32x512xf32>, vector<32x512xf32>, vector<32x512xf32>, vector<32x512xf32>, vector<32x512xf32>, vector<32x512xf32>, vector<32x512xf32>, vector<32x512xf32> -> vector<288x512xf32>
    %313 = arith.truncf %312 : vector<288x512xf32> to vector<288x512xbf16>
    %cst_161 = arith.constant dense<0.000000e+00> : vector<32x512xf32>
    %314 = tpu.matmul %277, %313, %cst_161 {dimension_numbers = #tpu.dot_dimension_numbers<[1], [0], [0], [1], [0, 0, 1, 1], [], []>} : vector<32x288xbf16>, vector<288x512xbf16>, vector<32x512xf32> -> vector<32x512xf32>
    %315 = vector.broadcast %279 : vector<32x1xf32> to vector<32x512xf32>
    %316 = arith.addf %314, %315 : vector<32x512xf32>
    %c3_162 = arith.constant 3 : index
    %c0_163 = arith.constant 0 : index
    %c0_164 = arith.constant 0 : index
    %317 = vector.load %arg7[%c3_162, %c0_163, %c0_164] : memref<4x32x1xf32, #tpu.memory_space<vmem>>, vector<1x32x1xf32>
    %318 = vector.shape_cast %317 : vector<1x32x1xf32> to vector<32x1xf32>
    %c3_165 = arith.constant 3 : index
    %c0_166 = arith.constant 0 : index
    %c0_167 = arith.constant 0 : index
    %319 = vector.load %arg8[%c3_165, %c0_166, %c0_167] : memref<4x32x1xf32, #tpu.memory_space<vmem>>, vector<1x32x1xf32>
    %320 = vector.shape_cast %319 : vector<1x32x1xf32> to vector<32x1xf32>
    %321 = vector.extract_strided_slice %316 {offsets = [0, 0], sizes = [32, 256], strides = [1, 1]} : vector<32x512xf32> to vector<32x256xf32>
    %cst_168 = arith.constant dense<0.000000e+00> : vector<32xf32>
    %322 = vector.multi_reduction <add>, %321, %cst_168 [1] : vector<32x256xf32> to vector<32xf32>
    %323 = vector.shape_cast %322 : vector<32xf32> to vector<32x1xf32>
    %cst_169 = arith.constant 3.906250e-03 : f32
    %324 = vector.broadcast %cst_169 : f32 to vector<32x1xf32>
    %325 = arith.mulf %323, %324 : vector<32x1xf32>
    %326 = vector.broadcast %325 : vector<32x1xf32> to vector<32x256xf32>
    %327 = arith.subf %321, %326 : vector<32x256xf32>
    %328 = arith.mulf %327, %327 : vector<32x256xf32>
    %cst_170 = arith.constant dense<0.000000e+00> : vector<32xf32>
    %329 = vector.multi_reduction <add>, %328, %cst_170 [1] : vector<32x256xf32> to vector<32xf32>
    %330 = vector.shape_cast %329 : vector<32xf32> to vector<32x1xf32>
    %cst_171 = arith.constant 3.906250e-03 : f32
    %331 = vector.broadcast %cst_171 : f32 to vector<32x1xf32>
    %332 = arith.mulf %330, %331 : vector<32x1xf32>
    %cst_172 = arith.constant 9.99999974E-6 : f32
    %333 = vector.broadcast %cst_172 : f32 to vector<32x1xf32>
    %334 = arith.addf %332, %333 : vector<32x1xf32>
    %335 = math.rsqrt %334 : vector<32x1xf32>
    %336 = vector.broadcast %335 : vector<32x1xf32> to vector<32x256xf32>
    %337 = arith.mulf %327, %336 : vector<32x256xf32>
    %338 = vector.broadcast %318 : vector<32x1xf32> to vector<32x256xf32>
    %339 = arith.mulf %337, %338 : vector<32x256xf32>
    %340 = vector.broadcast %320 : vector<32x1xf32> to vector<32x256xf32>
    %341 = arith.addf %339, %340 : vector<32x256xf32>
    %cst_173 = arith.constant 0.000000e+00 : f32
    %342 = vector.broadcast %cst_173 : f32 to vector<32x256xf32>
    %343 = arith.maximumf %341, %342 : vector<32x256xf32>
    %344 = vector.extract_strided_slice %316 {offsets = [0, 256], sizes = [32, 256], strides = [1, 1]} : vector<32x512xf32> to vector<32x256xf32>
    %cst_174 = arith.constant dense<0.000000e+00> : vector<32xf32>
    %345 = vector.multi_reduction <add>, %344, %cst_174 [1] : vector<32x256xf32> to vector<32xf32>
    %346 = vector.shape_cast %345 : vector<32xf32> to vector<32x1xf32>
    %cst_175 = arith.constant 3.906250e-03 : f32
    %347 = vector.broadcast %cst_175 : f32 to vector<32x1xf32>
    %348 = arith.mulf %346, %347 : vector<32x1xf32>
    %349 = vector.broadcast %348 : vector<32x1xf32> to vector<32x256xf32>
    %350 = arith.subf %344, %349 : vector<32x256xf32>
    %351 = arith.mulf %350, %350 : vector<32x256xf32>
    %cst_176 = arith.constant dense<0.000000e+00> : vector<32xf32>
    %352 = vector.multi_reduction <add>, %351, %cst_176 [1] : vector<32x256xf32> to vector<32xf32>
    %353 = vector.shape_cast %352 : vector<32xf32> to vector<32x1xf32>
    %cst_177 = arith.constant 3.906250e-03 : f32
    %354 = vector.broadcast %cst_177 : f32 to vector<32x1xf32>
    %355 = arith.mulf %353, %354 : vector<32x1xf32>
    %cst_178 = arith.constant 9.99999974E-6 : f32
    %356 = vector.broadcast %cst_178 : f32 to vector<32x1xf32>
    %357 = arith.addf %355, %356 : vector<32x1xf32>
    %358 = math.rsqrt %357 : vector<32x1xf32>
    %359 = vector.broadcast %358 : vector<32x1xf32> to vector<32x256xf32>
    %360 = arith.mulf %350, %359 : vector<32x256xf32>
    %361 = vector.broadcast %318 : vector<32x1xf32> to vector<32x256xf32>
    %362 = arith.mulf %360, %361 : vector<32x256xf32>
    %363 = vector.broadcast %320 : vector<32x1xf32> to vector<32x256xf32>
    %364 = arith.addf %362, %363 : vector<32x256xf32>
    %cst_179 = arith.constant 0.000000e+00 : f32
    %365 = vector.broadcast %cst_179 : f32 to vector<32x256xf32>
    %366 = arith.maximumf %364, %365 : vector<32x256xf32>
    %367 = tpu.concatenate %343, %366 in 1 : vector<32x256xf32>, vector<32x256xf32> -> vector<32x512xf32>
    %c3_180 = arith.constant 3 : index
    %c0_181 = arith.constant 0 : index
    %c0_182 = arith.constant 0 : index
    %368 = vector.load %arg5[%c3_180, %c0_181, %c0_182] : memref<4x32x288xbf16, #tpu.memory_space<vmem>>, vector<1x32x288xbf16>
    %369 = vector.shape_cast %368 : vector<1x32x288xbf16> to vector<32x288xbf16>
    %c3_183 = arith.constant 3 : index
    %c0_184 = arith.constant 0 : index
    %c0_185 = arith.constant 0 : index
    %370 = vector.load %arg6[%c3_183, %c0_184, %c0_185] : memref<4x32x1xf32, #tpu.memory_space<vmem>>, vector<1x32x1xf32>
    %371 = vector.shape_cast %370 : vector<1x32x1xf32> to vector<32x1xf32>
    %c17_i32_186 = arith.constant 17 : i32
    %372 = tpu.dynamic_rotate %367 by %c17_i32_186 dim 1 : vector<32x512xf32>, i32 -> vector<32x512xf32>
    %c0_187 = arith.constant 0 : index
    %c0_188 = arith.constant 0 : index
    %373 = vector.load %arg2[%c0_187, %c0_188] : memref<9x512xf32, #tpu.memory_space<vmem>>, vector<1x512xf32>
    %374 = vector.broadcast %373 : vector<1x512xf32> to vector<32x512xf32>
    %375 = arith.mulf %372, %374 : vector<32x512xf32>
    %c16_i32_189 = arith.constant 16 : i32
    %376 = tpu.dynamic_rotate %367 by %c16_i32_189 dim 1 : vector<32x512xf32>, i32 -> vector<32x512xf32>
    %c1_190 = arith.constant 1 : index
    %c0_191 = arith.constant 0 : index
    %377 = vector.load %arg2[%c1_190, %c0_191] : memref<9x512xf32, #tpu.memory_space<vmem>>, vector<1x512xf32>
    %378 = vector.broadcast %377 : vector<1x512xf32> to vector<32x512xf32>
    %379 = arith.mulf %376, %378 : vector<32x512xf32>
    %c15_i32_192 = arith.constant 15 : i32
    %380 = tpu.dynamic_rotate %367 by %c15_i32_192 dim 1 : vector<32x512xf32>, i32 -> vector<32x512xf32>
    %c2_193 = arith.constant 2 : index
    %c0_194 = arith.constant 0 : index
    %381 = vector.load %arg2[%c2_193, %c0_194] : memref<9x512xf32, #tpu.memory_space<vmem>>, vector<1x512xf32>
    %382 = vector.broadcast %381 : vector<1x512xf32> to vector<32x512xf32>
    %383 = arith.mulf %380, %382 : vector<32x512xf32>
    %c1_i32_195 = arith.constant 1 : i32
    %384 = tpu.dynamic_rotate %367 by %c1_i32_195 dim 1 : vector<32x512xf32>, i32 -> vector<32x512xf32>
    %c3_196 = arith.constant 3 : index
    %c0_197 = arith.constant 0 : index
    %385 = vector.load %arg2[%c3_196, %c0_197] : memref<9x512xf32, #tpu.memory_space<vmem>>, vector<1x512xf32>
    %386 = vector.broadcast %385 : vector<1x512xf32> to vector<32x512xf32>
    %387 = arith.mulf %384, %386 : vector<32x512xf32>
    %c511_i32_198 = arith.constant 511 : i32
    %388 = tpu.dynamic_rotate %367 by %c511_i32_198 dim 1 : vector<32x512xf32>, i32 -> vector<32x512xf32>
    %c5_199 = arith.constant 5 : index
    %c0_200 = arith.constant 0 : index
    %389 = vector.load %arg2[%c5_199, %c0_200] : memref<9x512xf32, #tpu.memory_space<vmem>>, vector<1x512xf32>
    %390 = vector.broadcast %389 : vector<1x512xf32> to vector<32x512xf32>
    %391 = arith.mulf %388, %390 : vector<32x512xf32>
    %c497_i32_201 = arith.constant 497 : i32
    %392 = tpu.dynamic_rotate %367 by %c497_i32_201 dim 1 : vector<32x512xf32>, i32 -> vector<32x512xf32>
    %c6_202 = arith.constant 6 : index
    %c0_203 = arith.constant 0 : index
    %393 = vector.load %arg2[%c6_202, %c0_203] : memref<9x512xf32, #tpu.memory_space<vmem>>, vector<1x512xf32>
    %394 = vector.broadcast %393 : vector<1x512xf32> to vector<32x512xf32>
    %395 = arith.mulf %392, %394 : vector<32x512xf32>
    %c496_i32_204 = arith.constant 496 : i32
    %396 = tpu.dynamic_rotate %367 by %c496_i32_204 dim 1 : vector<32x512xf32>, i32 -> vector<32x512xf32>
    %c7_205 = arith.constant 7 : index
    %c0_206 = arith.constant 0 : index
    %397 = vector.load %arg2[%c7_205, %c0_206] : memref<9x512xf32, #tpu.memory_space<vmem>>, vector<1x512xf32>
    %398 = vector.broadcast %397 : vector<1x512xf32> to vector<32x512xf32>
    %399 = arith.mulf %396, %398 : vector<32x512xf32>
    %c495_i32_207 = arith.constant 495 : i32
    %400 = tpu.dynamic_rotate %367 by %c495_i32_207 dim 1 : vector<32x512xf32>, i32 -> vector<32x512xf32>
    %c8_208 = arith.constant 8 : index
    %c0_209 = arith.constant 0 : index
    %401 = vector.load %arg2[%c8_208, %c0_209] : memref<9x512xf32, #tpu.memory_space<vmem>>, vector<1x512xf32>
    %402 = vector.broadcast %401 : vector<1x512xf32> to vector<32x512xf32>
    %403 = arith.mulf %400, %402 : vector<32x512xf32>
    %404 = tpu.concatenate %375, %379, %383, %387, %367, %391, %395, %399, %403 in 0 : vector<32x512xf32>, vector<32x512xf32>, vector<32x512xf32>, vector<32x512xf32>, vector<32x512xf32>, vector<32x512xf32>, vector<32x512xf32>, vector<32x512xf32>, vector<32x512xf32> -> vector<288x512xf32>
    %405 = arith.truncf %404 : vector<288x512xf32> to vector<288x512xbf16>
    %cst_210 = arith.constant dense<0.000000e+00> : vector<32x512xf32>
    %406 = tpu.matmul %369, %405, %cst_210 {dimension_numbers = #tpu.dot_dimension_numbers<[1], [0], [0], [1], [0, 0, 1, 1], [], []>} : vector<32x288xbf16>, vector<288x512xbf16>, vector<32x512xf32> -> vector<32x512xf32>
    %407 = vector.broadcast %371 : vector<32x1xf32> to vector<32x512xf32>
    %408 = arith.addf %406, %407 : vector<32x512xf32>
    %409 = vector.extract_strided_slice %408 {offsets = [0, 0], sizes = [2, 512], strides = [1, 1]} : vector<32x512xf32> to vector<2x512xf32>
    %410 = arith.addf %409, %1 : vector<2x512xf32>
    %c0_211 = arith.constant 0 : index
    %c0_212 = arith.constant 0 : index
    %c0_213 = arith.constant 0 : index
    %411 = vector.load %arg9[%c0_211, %c0_212, %c0_213] : memref<1x2x512xf32, #tpu.memory_space<vmem>>, vector<1x2x512xf32>
    %412 = vector.shape_cast %411 : vector<1x2x512xf32> to vector<2x512xf32>
    %413 = vector.shape_cast %410 : vector<2x512xf32> to vector<1x2x512xf32>
    tpu.vector_store %arg9[%c0_211, %c0_212, %c0_213], %413 {strides = array<i32>} : memref<1x2x512xf32, #tpu.memory_space<vmem>>, vector<1x2x512xf32>,
    return
  }
  func.func @transform_0(%arg0: i32) -> (i32, i32, i32) {
    %c0_i32 = arith.constant 0 : i32
    %c0_i32_0 = arith.constant 0 : i32
    %c0_i32_1 = arith.constant 0 : i32
    return %arg0, %c0_i32, %c0_i32_0 : i32, i32, i32
  }
  func.func @transform_1(%arg0: i32) -> (i32, i32) {
    %c0_i32 = arith.constant 0 : i32
    %c0_i32_0 = arith.constant 0 : i32
    %c0_i32_1 = arith.constant 0 : i32
    return %c0_i32, %c0_i32_0 : i32, i32
  }
  func.func @transform_2(%arg0: i32) -> (i32, i32) {
    %c0_i32 = arith.constant 0 : i32
    %c0_i32_0 = arith.constant 0 : i32
    %c0_i32_1 = arith.constant 0 : i32
    return %c0_i32, %c0_i32_0 : i32, i32
  }
  func.func @transform_3(%arg0: i32) -> (i32, i32) {
    %c0_i32 = arith.constant 0 : i32
    %c0_i32_0 = arith.constant 0 : i32
    %c0_i32_1 = arith.constant 0 : i32
    return %c0_i32, %c0_i32_0 : i32, i32
  }
  func.func @transform_4(%arg0: i32) -> (i32, i32, i32) {
    %c0_i32 = arith.constant 0 : i32
    %c0_i32_0 = arith.constant 0 : i32
    %c0_i32_1 = arith.constant 0 : i32
    %c0_i32_2 = arith.constant 0 : i32
    return %c0_i32, %c0_i32_0, %c0_i32_1 : i32, i32, i32
  }
  func.func @transform_5(%arg0: i32) -> (i32, i32, i32) {
    %c0_i32 = arith.constant 0 : i32
    %c0_i32_0 = arith.constant 0 : i32
    %c0_i32_1 = arith.constant 0 : i32
    %c0_i32_2 = arith.constant 0 : i32
    return %c0_i32, %c0_i32_0, %c0_i32_1 : i32, i32, i32
  }
  func.func @transform_6(%arg0: i32) -> (i32, i32, i32) {
    %c0_i32 = arith.constant 0 : i32
    %c0_i32_0 = arith.constant 0 : i32
    %c0_i32_1 = arith.constant 0 : i32
    %c0_i32_2 = arith.constant 0 : i32
    return %c0_i32, %c0_i32_0, %c0_i32_1 : i32, i32, i32
  }
  func.func @transform_7(%arg0: i32) -> (i32, i32, i32) {
    %c0_i32 = arith.constant 0 : i32
    %c0_i32_0 = arith.constant 0 : i32
    %c0_i32_1 = arith.constant 0 : i32
    %c0_i32_2 = arith.constant 0 : i32
    return %c0_i32, %c0_i32_0, %c0_i32_1 : i32, i32, i32
  }
  func.func @transform_8(%arg0: i32) -> (i32, i32, i32) {
    %c0_i32 = arith.constant 0 : i32
    %c0_i32_0 = arith.constant 0 : i32
    %c0_i32_1 = arith.constant 0 : i32
    return %arg0, %c0_i32, %c0_i32_0 : i32, i32, i32
  }
}

module attributes {stable_mosaic.version = 11 : i64} {
  func.func @_coil_combine_kernel(%arg0: i32, %arg1: memref<1x4x256xf32, #tpu.memory_space<vmem>>, %arg2: memref<1x4x256xf32, #tpu.memory_space<vmem>>, %arg3: memref<1x4x256xf32, #tpu.memory_space<vmem>>, %arg4: memref<1x4x256xf32, #tpu.memory_space<vmem>>, %arg5: memref<1x1x256xf32, #tpu.memory_space<vmem>>, %arg6: memref<1x1x256xf32, #tpu.memory_space<vmem>>) attributes {dimension_semantics = [#tpu.dimension_semantics<parallel>], iteration_bounds = array<i64: 2>, scalar_prefetch = 0 : i64, scratch_operands = 0 : i64, tpu.core_type = #tpu.core_type<tc>, window_params = [{transform_indices = @transform_0, window_bounds = array<i64: 1, 4, 256>}, {transform_indices = @transform_1, window_bounds = array<i64: 1, 4, 256>}, {transform_indices = @transform_2, window_bounds = array<i64: 1, 4, 256>}, {transform_indices = @transform_3, window_bounds = array<i64: 1, 4, 256>}, {transform_indices = @transform_4, window_bounds = array<i64: 1, 1, 256>}, {transform_indices = @transform_5, window_bounds = array<i64: 1, 1, 256>}]} {
    %c0 = arith.constant 0 : index
    %c0_0 = arith.constant 0 : index
    %c0_1 = arith.constant 0 : index
    %0 = vector.load %arg1[%c0, %c0_0, %c0_1] : memref<1x4x256xf32, #tpu.memory_space<vmem>>, vector<1x4x256xf32>
    %c0_2 = arith.constant 0 : index
    %c0_3 = arith.constant 0 : index
    %c0_4 = arith.constant 0 : index
    %1 = vector.load %arg2[%c0_2, %c0_3, %c0_4] : memref<1x4x256xf32, #tpu.memory_space<vmem>>, vector<1x4x256xf32>
    %c0_5 = arith.constant 0 : index
    %c0_6 = arith.constant 0 : index
    %c0_7 = arith.constant 0 : index
    %2 = vector.load %arg3[%c0_5, %c0_6, %c0_7] : memref<1x4x256xf32, #tpu.memory_space<vmem>>, vector<1x4x256xf32>
    %c0_8 = arith.constant 0 : index
    %c0_9 = arith.constant 0 : index
    %c0_10 = arith.constant 0 : index
    %3 = vector.load %arg4[%c0_8, %c0_9, %c0_10] : memref<1x4x256xf32, #tpu.memory_space<vmem>>, vector<1x4x256xf32>
    %4 = arith.mulf %0, %2 : vector<1x4x256xf32>
    %5 = arith.mulf %1, %3 : vector<1x4x256xf32>
    %6 = arith.addf %4, %5 : vector<1x4x256xf32>
    %cst = arith.constant dense<0.000000e+00> : vector<1x256xf32>
    %7 = vector.multi_reduction <add>, %6, %cst [1] : vector<1x4x256xf32> to vector<1x256xf32>
    %8 = vector.shape_cast %7 : vector<1x256xf32> to vector<1x1x256xf32>
    %c0_11 = arith.constant 0 : index
    %c0_12 = arith.constant 0 : index
    %c0_13 = arith.constant 0 : index
    %9 = vector.load %arg5[%c0_11, %c0_12, %c0_13] : memref<1x1x256xf32, #tpu.memory_space<vmem>>, vector<1x1x256xf32>
    tpu.vector_store %arg5[%c0_11, %c0_12, %c0_13], %8 {strides = array<i32>} : memref<1x1x256xf32, #tpu.memory_space<vmem>>, vector<1x1x256xf32>,
    %10 = arith.mulf %1, %2 : vector<1x4x256xf32>
    %11 = arith.mulf %0, %3 : vector<1x4x256xf32>
    %12 = arith.subf %10, %11 : vector<1x4x256xf32>
    %cst_14 = arith.constant dense<0.000000e+00> : vector<1x256xf32>
    %13 = vector.multi_reduction <add>, %12, %cst_14 [1] : vector<1x4x256xf32> to vector<1x256xf32>
    %14 = vector.shape_cast %13 : vector<1x256xf32> to vector<1x1x256xf32>
    %c0_15 = arith.constant 0 : index
    %c0_16 = arith.constant 0 : index
    %c0_17 = arith.constant 0 : index
    %15 = vector.load %arg6[%c0_15, %c0_16, %c0_17] : memref<1x1x256xf32, #tpu.memory_space<vmem>>, vector<1x1x256xf32>
    tpu.vector_store %arg6[%c0_15, %c0_16, %c0_17], %14 {strides = array<i32>} : memref<1x1x256xf32, #tpu.memory_space<vmem>>, vector<1x1x256xf32>,
    return
  }
  func.func @transform_0(%arg0: i32) -> (i32, i32, i32) {
    %c0_i32 = arith.constant 0 : i32
    %c0_i32_0 = arith.constant 0 : i32
    %c0_i32_1 = arith.constant 0 : i32
    return %arg0, %c0_i32, %c0_i32_0 : i32, i32, i32
  }
  func.func @transform_1(%arg0: i32) -> (i32, i32, i32) {
    %c0_i32 = arith.constant 0 : i32
    %c0_i32_0 = arith.constant 0 : i32
    %c0_i32_1 = arith.constant 0 : i32
    return %arg0, %c0_i32, %c0_i32_0 : i32, i32, i32
  }
  func.func @transform_2(%arg0: i32) -> (i32, i32, i32) {
    %c0_i32 = arith.constant 0 : i32
    %c0_i32_0 = arith.constant 0 : i32
    %c0_i32_1 = arith.constant 0 : i32
    return %arg0, %c0_i32, %c0_i32_0 : i32, i32, i32
  }
  func.func @transform_3(%arg0: i32) -> (i32, i32, i32) {
    %c0_i32 = arith.constant 0 : i32
    %c0_i32_0 = arith.constant 0 : i32
    %c0_i32_1 = arith.constant 0 : i32
    return %arg0, %c0_i32, %c0_i32_0 : i32, i32, i32
  }
  func.func @transform_4(%arg0: i32) -> (i32, i32, i32) {
    %c0_i32 = arith.constant 0 : i32
    %c0_i32_0 = arith.constant 0 : i32
    %c0_i32_1 = arith.constant 0 : i32
    return %arg0, %c0_i32, %c0_i32_0 : i32, i32, i32
  }
  func.func @transform_5(%arg0: i32) -> (i32, i32, i32) {
    %c0_i32 = arith.constant 0 : i32
    %c0_i32_0 = arith.constant 0 : i32
    %c0_i32_1 = arith.constant 0 : i32
    return %arg0, %c0_i32, %c0_i32_0 : i32, i32, i32
  }
}

module attributes {stable_mosaic.version = 11 : i64} {
  func.func @_coil_expand_kernel(%arg0: i32, %arg1: memref<1x1x256xf32, #tpu.memory_space<vmem>>, %arg2: memref<1x1x256xf32, #tpu.memory_space<vmem>>, %arg3: memref<1x4x256xf32, #tpu.memory_space<vmem>>, %arg4: memref<1x4x256xf32, #tpu.memory_space<vmem>>, %arg5: memref<1x4x256xf32, #tpu.memory_space<vmem>>, %arg6: memref<1x4x256xf32, #tpu.memory_space<vmem>>) attributes {dimension_semantics = [#tpu.dimension_semantics<parallel>], iteration_bounds = array<i64: 2>, scalar_prefetch = 0 : i64, scratch_operands = 0 : i64, tpu.core_type = #tpu.core_type<tc>, window_params = [{transform_indices = @transform_0, window_bounds = array<i64: 1, 1, 256>}, {transform_indices = @transform_1, window_bounds = array<i64: 1, 1, 256>}, {transform_indices = @transform_2, window_bounds = array<i64: 1, 4, 256>}, {transform_indices = @transform_3, window_bounds = array<i64: 1, 4, 256>}, {transform_indices = @transform_4, window_bounds = array<i64: 1, 4, 256>}, {transform_indices = @transform_5, window_bounds = array<i64: 1, 4, 256>}]} {
    %c0 = arith.constant 0 : index
    %c0_0 = arith.constant 0 : index
    %c0_1 = arith.constant 0 : index
    %0 = vector.load %arg1[%c0, %c0_0, %c0_1] : memref<1x1x256xf32, #tpu.memory_space<vmem>>, vector<1x1x256xf32>
    %c0_2 = arith.constant 0 : index
    %c0_3 = arith.constant 0 : index
    %c0_4 = arith.constant 0 : index
    %1 = vector.load %arg2[%c0_2, %c0_3, %c0_4] : memref<1x1x256xf32, #tpu.memory_space<vmem>>, vector<1x1x256xf32>
    %c0_5 = arith.constant 0 : index
    %c0_6 = arith.constant 0 : index
    %c0_7 = arith.constant 0 : index
    %2 = vector.load %arg3[%c0_5, %c0_6, %c0_7] : memref<1x4x256xf32, #tpu.memory_space<vmem>>, vector<1x4x256xf32>
    %c0_8 = arith.constant 0 : index
    %c0_9 = arith.constant 0 : index
    %c0_10 = arith.constant 0 : index
    %3 = vector.load %arg4[%c0_8, %c0_9, %c0_10] : memref<1x4x256xf32, #tpu.memory_space<vmem>>, vector<1x4x256xf32>
    %4 = vector.broadcast %0 : vector<1x1x256xf32> to vector<1x4x256xf32>
    %5 = arith.mulf %4, %2 : vector<1x4x256xf32>
    %6 = vector.broadcast %1 : vector<1x1x256xf32> to vector<1x4x256xf32>
    %7 = arith.mulf %6, %3 : vector<1x4x256xf32>
    %8 = arith.subf %5, %7 : vector<1x4x256xf32>
    %c0_11 = arith.constant 0 : index
    %c0_12 = arith.constant 0 : index
    %c0_13 = arith.constant 0 : index
    %9 = vector.load %arg5[%c0_11, %c0_12, %c0_13] : memref<1x4x256xf32, #tpu.memory_space<vmem>>, vector<1x4x256xf32>
    tpu.vector_store %arg5[%c0_11, %c0_12, %c0_13], %8 {strides = array<i32>} : memref<1x4x256xf32, #tpu.memory_space<vmem>>, vector<1x4x256xf32>,
    %10 = vector.broadcast %0 : vector<1x1x256xf32> to vector<1x4x256xf32>
    %11 = arith.mulf %10, %3 : vector<1x4x256xf32>
    %12 = vector.broadcast %1 : vector<1x1x256xf32> to vector<1x4x256xf32>
    %13 = arith.mulf %12, %2 : vector<1x4x256xf32>
    %14 = arith.addf %11, %13 : vector<1x4x256xf32>
    %c0_14 = arith.constant 0 : index
    %c0_15 = arith.constant 0 : index
    %c0_16 = arith.constant 0 : index
    %15 = vector.load %arg6[%c0_14, %c0_15, %c0_16] : memref<1x4x256xf32, #tpu.memory_space<vmem>>, vector<1x4x256xf32>
    tpu.vector_store %arg6[%c0_14, %c0_15, %c0_16], %14 {strides = array<i32>} : memref<1x4x256xf32, #tpu.memory_space<vmem>>, vector<1x4x256xf32>,
    return
  }
  func.func @transform_0(%arg0: i32) -> (i32, i32, i32) {
    %c0_i32 = arith.constant 0 : i32
    %c0_i32_0 = arith.constant 0 : i32
    %c0_i32_1 = arith.constant 0 : i32
    return %arg0, %c0_i32, %c0_i32_0 : i32, i32, i32
  }
  func.func @transform_1(%arg0: i32) -> (i32, i32, i32) {
    %c0_i32 = arith.constant 0 : i32
    %c0_i32_0 = arith.constant 0 : i32
    %c0_i32_1 = arith.constant 0 : i32
    return %arg0, %c0_i32, %c0_i32_0 : i32, i32, i32
  }
  func.func @transform_2(%arg0: i32) -> (i32, i32, i32) {
    %c0_i32 = arith.constant 0 : i32
    %c0_i32_0 = arith.constant 0 : i32
    %c0_i32_1 = arith.constant 0 : i32
    return %arg0, %c0_i32, %c0_i32_0 : i32, i32, i32
  }
  func.func @transform_3(%arg0: i32) -> (i32, i32, i32) {
    %c0_i32 = arith.constant 0 : i32
    %c0_i32_0 = arith.constant 0 : i32
    %c0_i32_1 = arith.constant 0 : i32
    return %arg0, %c0_i32, %c0_i32_0 : i32, i32, i32
  }
  func.func @transform_4(%arg0: i32) -> (i32, i32, i32) {
    %c0_i32 = arith.constant 0 : i32
    %c0_i32_0 = arith.constant 0 : i32
    %c0_i32_1 = arith.constant 0 : i32
    return %arg0, %c0_i32, %c0_i32_0 : i32, i32, i32
  }
  func.func @transform_5(%arg0: i32) -> (i32, i32, i32) {
    %c0_i32 = arith.constant 0 : i32
    %c0_i32_0 = arith.constant 0 : i32
    %c0_i32_1 = arith.constant 0 : i32
    return %arg0, %c0_i32, %c0_i32_0 : i32, i32, i32
  }
}

module attributes {stable_mosaic.version = 11 : i64} {
  func.func @_dc_kernel(%arg0: i32, %arg1: memref<1x4x256xf32, #tpu.memory_space<vmem>>, %arg2: memref<1x4x256xf32, #tpu.memory_space<vmem>>, %arg3: memref<1x4x256xf32, #tpu.memory_space<vmem>>, %arg4: memref<1x4x256xf32, #tpu.memory_space<vmem>>, %arg5: memref<1x1x256xf32, #tpu.memory_space<vmem>>, %arg6: memref<1x4x256xf32, #tpu.memory_space<vmem>>, %arg7: memref<1x4x256xf32, #tpu.memory_space<vmem>>) attributes {dimension_semantics = [#tpu.dimension_semantics<parallel>], iteration_bounds = array<i64: 2>, scalar_prefetch = 0 : i64, scratch_operands = 0 : i64, tpu.core_type = #tpu.core_type<tc>, window_params = [{transform_indices = @transform_0, window_bounds = array<i64: 1, 4, 256>}, {transform_indices = @transform_1, window_bounds = array<i64: 1, 4, 256>}, {transform_indices = @transform_2, window_bounds = array<i64: 1, 4, 256>}, {transform_indices = @transform_3, window_bounds = array<i64: 1, 4, 256>}, {transform_indices = @transform_4, window_bounds = array<i64: 1, 1, 256>}, {transform_indices = @transform_5, window_bounds = array<i64: 1, 4, 256>}, {transform_indices = @transform_6, window_bounds = array<i64: 1, 4, 256>}]} {
    %c0 = arith.constant 0 : index
    %c0_0 = arith.constant 0 : index
    %c0_1 = arith.constant 0 : index
    %0 = vector.load %arg5[%c0, %c0_0, %c0_1] : memref<1x1x256xf32, #tpu.memory_space<vmem>>, vector<1x1x256xf32>
    %c0_2 = arith.constant 0 : index
    %c0_3 = arith.constant 0 : index
    %c0_4 = arith.constant 0 : index
    %1 = vector.load %arg1[%c0_2, %c0_3, %c0_4] : memref<1x4x256xf32, #tpu.memory_space<vmem>>, vector<1x4x256xf32>
    %c0_5 = arith.constant 0 : index
    %c0_6 = arith.constant 0 : index
    %c0_7 = arith.constant 0 : index
    %2 = vector.load %arg2[%c0_5, %c0_6, %c0_7] : memref<1x4x256xf32, #tpu.memory_space<vmem>>, vector<1x4x256xf32>
    %c0_8 = arith.constant 0 : index
    %c0_9 = arith.constant 0 : index
    %c0_10 = arith.constant 0 : index
    %3 = vector.load %arg3[%c0_8, %c0_9, %c0_10] : memref<1x4x256xf32, #tpu.memory_space<vmem>>, vector<1x4x256xf32>
    %4 = arith.subf %3, %1 : vector<1x4x256xf32>
    %5 = vector.broadcast %0 : vector<1x1x256xf32> to vector<1x4x256xf32>
    %6 = arith.mulf %5, %4 : vector<1x4x256xf32>
    %7 = arith.addf %1, %6 : vector<1x4x256xf32>
    %c0_11 = arith.constant 0 : index
    %c0_12 = arith.constant 0 : index
    %c0_13 = arith.constant 0 : index
    %8 = vector.load %arg6[%c0_11, %c0_12, %c0_13] : memref<1x4x256xf32, #tpu.memory_space<vmem>>, vector<1x4x256xf32>
    tpu.vector_store %arg6[%c0_11, %c0_12, %c0_13], %7 {strides = array<i32>} : memref<1x4x256xf32, #tpu.memory_space<vmem>>, vector<1x4x256xf32>,
    %c0_14 = arith.constant 0 : index
    %c0_15 = arith.constant 0 : index
    %c0_16 = arith.constant 0 : index
    %9 = vector.load %arg4[%c0_14, %c0_15, %c0_16] : memref<1x4x256xf32, #tpu.memory_space<vmem>>, vector<1x4x256xf32>
    %10 = arith.subf %9, %2 : vector<1x4x256xf32>
    %11 = vector.broadcast %0 : vector<1x1x256xf32> to vector<1x4x256xf32>
    %12 = arith.mulf %11, %10 : vector<1x4x256xf32>
    %13 = arith.addf %2, %12 : vector<1x4x256xf32>
    %c0_17 = arith.constant 0 : index
    %c0_18 = arith.constant 0 : index
    %c0_19 = arith.constant 0 : index
    %14 = vector.load %arg7[%c0_17, %c0_18, %c0_19] : memref<1x4x256xf32, #tpu.memory_space<vmem>>, vector<1x4x256xf32>
    tpu.vector_store %arg7[%c0_17, %c0_18, %c0_19], %13 {strides = array<i32>} : memref<1x4x256xf32, #tpu.memory_space<vmem>>, vector<1x4x256xf32>,
    return
  }
  func.func @transform_0(%arg0: i32) -> (i32, i32, i32) {
    %c0_i32 = arith.constant 0 : i32
    %c0_i32_0 = arith.constant 0 : i32
    %c0_i32_1 = arith.constant 0 : i32
    return %arg0, %c0_i32, %c0_i32_0 : i32, i32, i32
  }
  func.func @transform_1(%arg0: i32) -> (i32, i32, i32) {
    %c0_i32 = arith.constant 0 : i32
    %c0_i32_0 = arith.constant 0 : i32
    %c0_i32_1 = arith.constant 0 : i32
    return %arg0, %c0_i32, %c0_i32_0 : i32, i32, i32
  }
  func.func @transform_2(%arg0: i32) -> (i32, i32, i32) {
    %c0_i32 = arith.constant 0 : i32
    %c0_i32_0 = arith.constant 0 : i32
    %c0_i32_1 = arith.constant 0 : i32
    return %arg0, %c0_i32, %c0_i32_0 : i32, i32, i32
  }
  func.func @transform_3(%arg0: i32) -> (i32, i32, i32) {
    %c0_i32 = arith.constant 0 : i32
    %c0_i32_0 = arith.constant 0 : i32
    %c0_i32_1 = arith.constant 0 : i32
    return %arg0, %c0_i32, %c0_i32_0 : i32, i32, i32
  }
  func.func @transform_4(%arg0: i32) -> (i32, i32, i32) {
    %c0_i32 = arith.constant 0 : i32
    %c0_i32_0 = arith.constant 0 : i32
    %c0_i32_1 = arith.constant 0 : i32
    return %arg0, %c0_i32, %c0_i32_0 : i32, i32, i32
  }
  func.func @transform_5(%arg0: i32) -> (i32, i32, i32) {
    %c0_i32 = arith.constant 0 : i32
    %c0_i32_0 = arith.constant 0 : i32
    %c0_i32_1 = arith.constant 0 : i32
    return %arg0, %c0_i32, %c0_i32_0 : i32, i32, i32
  }
  func.func @transform_6(%arg0: i32) -> (i32, i32, i32) {
    %c0_i32 = arith.constant 0 : i32
    %c0_i32_0 = arith.constant 0 : i32
    %c0_i32_1 = arith.constant 0 : i32
    return %arg0, %c0_i32, %c0_i32_0 : i32, i32, i32
  }
}

</mosaic_0001>

<llo_original>
// kernel: squeeze.13
$region0: #{squeeze.13}
  %s0 = inlined_call_operand.vmem [shape: f32[2,16,16], index: 0, kind: input, shape index: {}]
  %s1 = inlined_call_operand.vmem [shape: f32[2,1,256], index: 1, kind: output, shape index: {}]
  $region1: #{squeeze.13} parent=0
    #allocation0 [shape = 'u8[16384]{0}', space=vmem, size = 0x4000, scoped, tag = 'scoped mem for output reshape']
    %v2 = vld [vmem:[%s0] ss:$8 sm:$0xf]
    %vm3 = vcmask 130048
    %4 = vst.msk [vmem:[#allocation0] ss:$8 sm:$0xf] %vm3, %v2
    %s5 = scalar_lea.vmem %s0, 7
    %v6 = vld [vmem:[%s5] ss:$8 sm:$0xf]
    %7 = vrot.lane.b32.xlu0 %v6, 112
    %v8 = vpop.permute.xlu0 %7
    %vm9 = vcmask 1048448
    %10 = vst.msk [vmem:[#allocation0] ss:$8 sm:$0xf] %vm9, %v8
    %s11 = scalar_lea.vmem %s0, 6
    %v12 = vld [vmem:[%s11] ss:$8 sm:$0xf]
    %13 = vrot.lane.b32.xlu0 %v12, 96
    %v14 = vpop.permute.xlu0 %13
    %vm15 = vcmask 917248
    %16 = vst.msk [vmem:[#allocation0] ss:$8 sm:$0xf] %vm15, %v14
    %s17 = scalar_lea.vmem %s0, 5
    %v18 = vld [vmem:[%s17] ss:$8 sm:$0xf]
    %19 = vrot.lane.b32.xlu0 %v18, 80
    %v20 = vpop.permute.xlu0 %19
    %vm21 = vcmask 786048
    %22 = vst.msk [vmem:[#allocation0] ss:$8 sm:$0xf] %vm21, %v20
    %s23 = scalar_lea.vmem %s0, 4
    %v24 = vld [vmem:[%s23] ss:$8 sm:$0xf]
    %25 = vrot.lane.b32.xlu0 %v24, 64
    %v26 = vpop.permute.xlu0 %25
    %vm27 = vcmask 654848
    %28 = vst.msk [vmem:[#allocation0] ss:$8 sm:$0xf] %vm27, %v26
    %s29 = scalar_lea.vmem %s0, 3
    %v30 = vld [vmem:[%s29] ss:$8 sm:$0xf]
    %31 = vrot.lane.b32.xlu0 %v30, 48
    %v32 = vpop.permute.xlu0 %31
    %vm33 = vcmask 523648
    %34 = vst.msk [vmem:[#allocation0] ss:$8 sm:$0xf] %vm33, %v32
    %s35 = scalar_lea.vmem %s0, 2
    %v36 = vld [vmem:[%s35] ss:$8 sm:$0xf]
    %37 = vrot.lane.b32.xlu0 %v36, 32
    %v38 = vpop.permute.xlu0 %37
    %vm39 = vcmask 392448
    %40 = vst.msk [vmem:[#allocation0] ss:$8 sm:$0xf] %vm39, %v38
    %s41 = scalar_lea.vmem %s0, 1
    %v42 = vld [vmem:[%s41] ss:$8 sm:$0xf]
    %43 = vrot.lane.b32.xlu0 %v42, 16
    %v44 = vpop.permute.xlu0 %43
    %vm45 = vcmask 261248
    %46 = vst.msk [vmem:[#allocation0] ss:$8 sm:$0xf] %vm45, %v44
    %s48 = ssub.s32 2, 1
    %v49 = vld [vmem:[#allocation0] sm:%s48]
    %s51 = ssub.s32 2, 1
    %52 = vst [vmem:[%s1] sm:%s51] %v49
    %s53 = scalar_lea.vmem [#allocation0], 8
    %v54 = vld [vmem:[%s53] sm:%s48]
    %s56 = ssub.s32 2, 1
    %s57 = scalar_lea.vmem %s1, 1
    %58 = vst [vmem:[%s57] sm:%s56] %v54
    %s59 = scalar_lea.vmem [#allocation0], 16
    %v60 = vld [vmem:[%s59] sm:%s48]
    %s62 = ssub.s32 2, 1
    %s63 = scalar_lea.vmem %s1, 2
    %64 = vst [vmem:[%s63] sm:%s62] %v60
    %s65 = scalar_lea.vmem [#allocation0], 24
    %v66 = vld [vmem:[%s65] sm:%s48]
    %s68 = ssub.s32 2, 1
    %s69 = scalar_lea.vmem %s1, 3
    %70 = vst [vmem:[%s69] sm:%s68] %v66

// kernel: squeeze.12
$region0: #{squeeze.12}
  %s0 = inlined_call_operand.vmem [shape: f32[2,4,16,16], index: 0, kind: input, shape index: {}]
  %s1 = inlined_call_operand.vmem [shape: f32[2,4,256], index: 1, kind: output, shape index: {}]
  $region1: #{squeeze.12} parent=0
    #allocation0 [shape = 'u8[16384]{0}', space=vmem, size = 0x4000, scoped, tag = 'scoped mem for output reshape']
    %v2 = vld [vmem:[%s0] ss:$8 sm:$0xf]
    %v3 = vld [vmem:[%s0] ss:$8 sm:$0xf0]
    %vm4 = vcmask 1047556
    %v5 = vsel %vm4, %v3, %v2
    %vm6 = vcmask 130048
    %7 = vst.msk [vmem:[#allocation0] ss:$8 sm:$0x3] %vm6, %v5
    %s8 = scalar_lea.vmem [#allocation0], 4294967281
    %9 = vst.msk [vmem:[%s8] ss:$8 sm:$0xc] %vm6, %v5
    %s10 = scalar_lea.vmem [#allocation0], 4294967266
    %11 = vst.msk [vmem:[%s10] ss:$8 sm:$0x30] %vm6, %v5
    %s12 = scalar_lea.vmem [#allocation0], 4294967251
    %13 = vst.msk [vmem:[%s12] ss:$8 sm:$0xc0] %vm6, %v5
    %s14 = scalar_lea.vmem %s0, 64
    %v15 = vld [vmem:[%s14] ss:$8 sm:$0xf]
    %s16 = scalar_lea.vmem %s0, 64
    %v17 = vld [vmem:[%s16] ss:$8 sm:$0xf0]
    %vm18 = vcmask 1047556
    %v19 = vsel %vm18, %v17, %v15
    %vm20 = vcmask 130048
    %s21 = scalar_lea.vmem [#allocation0], 16
    %22 = vst.msk [vmem:[%s21] ss:$8 sm:$0x3] %vm20, %v19
    %s23 = scalar_lea.vmem [#allocation0], 1
    %24 = vst.msk [vmem:[%s23] ss:$8 sm:$0xc] %vm20, %v19
    %s25 = scalar_lea.vmem [#allocation0], 4294967282
    %26 = vst.msk [vmem:[%s25] ss:$8 sm:$0x30] %vm20, %v19
    %s27 = scalar_lea.vmem [#allocation0], 4294967267
    %28 = vst.msk [vmem:[%s27] ss:$8 sm:$0xc0] %vm20, %v19
    %s29 = scalar_lea.vmem %s0, 7
    %s30 = smov 3
    %v31 = vld [vmem:[%s29] ss:$16 sm:%s30]
    %s32 = scalar_lea.vmem %s0, 7
    %s33 = smov 12
    %v34 = vld [vmem:[%s32] ss:$16 sm:%s33]
    %vm35 = vcmask 1043458
    %v36 = vsel %vm35, %v34, %v31
    %s37 = scalar_lea.vmem %s0, 4294967247
    %s38 = smov 48
    %v39 = vld [vmem:[%s37] ss:$16 sm:%s38]
    %vm40 = vcmask 1045508
    %v41 = vsel %vm40, %v39, %v36
    %s42 = scalar_lea.vmem %s0, 4294967247
    %s43 = smov 192
    %v44 = vld [vmem:[%s42] ss:$16 sm:%s43]
    %vm45 = vcmask 1047558
    %v46 = vsel %vm45, %v44, %v41
    %47 = vrot.lane.b32.xlu0 %v46, 112
    %v48 = vpop.permute.xlu0 %47
    %vm49 = vcmask 1048448
    %50 = vst.msk [vmem:[#allocation0] sm:$0xf] %vm49, %v48
    %s51 = scalar_lea.vmem [#allocation0], 4
    %52 = vst.msk [vmem:[%s51] sm:$0xf0] %vm49, %v48
    %s53 = scalar_lea.vmem %s0, 71
    %s54 = smov 3
    %v55 = vld [vmem:[%s53] ss:$16 sm:%s54]
    %s56 = scalar_lea.vmem %s0, 71
    %s57 = smov 12
    %v58 = vld [vmem:[%s56] ss:$16 sm:%s57]
    %vm59 = vcmask 1043458
    %v60 = vsel %vm59, %v58, %v55
    %s61 = scalar_lea.vmem %s0, 15
    %s62 = smov 48
    %v63 = vld [vmem:[%s61] ss:$16 sm:%s62]
    %vm64 = vcmask 1045508
    %v65 = vsel %vm64, %v63, %v60
    %s66 = scalar_lea.vmem %s0, 15
    %s67 = smov 192
    %v68 = vld [vmem:[%s66] ss:$16 sm:%s67]
    %vm69 = vcmask 1047558
    %v70 = vsel %vm69, %v68, %v65
    %71 = vrot.lane.b32.xlu0 %v70, 112
    %v72 = vpop.permute.xlu0 %71
    %vm73 = vcmask 1048448
    %s74 = scalar_lea.vmem [#allocation0], 16
    %75 = vst.msk [vmem:[%s74] sm:$0xf] %vm73, %v72
    %s76 = scalar_lea.vmem [#allocation0], 20
    %77 = vst.msk [vmem:[%s76] sm:$0xf0] %vm73, %v72
    %s78 = scalar_lea.vmem %s0, 6
    %s79 = smov 3
    %v80 = vld [vmem:[%s78] ss:$16 sm:%s79]
    %s81 = scalar_lea.vmem %s0, 6
    %s82 = smov 12
    %v83 = vld [vmem:[%s81] ss:$16 sm:%s82]
    %vm84 = vcmask 1043458
    %v85 = vsel %vm84, %v83, %v80
    %s86 = scalar_lea.vmem %s0, 4294967246
    %s87 = smov 48
    %v88 = vld [vmem:[%s86] ss:$16 sm:%s87]
    %vm89 = vcmask 1045508
    %v90 = vsel %vm89, %v88, %v85
    %s91 = scalar_lea.vmem %s0, 4294967246
    %s92 = smov 192
    %v93 = vld [vmem:[%s91] ss:$16 sm:%s92]
    %vm94 = vcmask 1047558
    %v95 = vsel %vm94, %v93, %v90
    %96 = vrot.lane.b32.xlu0 %v95, 96
    %v97 = vpop.permute.xlu0 %96
    %vm98 = vcmask 917248
    %99 = vst.msk [vmem:[#allocation0] sm:$0xf] %vm98, %v97
    %s100 = scalar_lea.vmem [#allocation0], 4
    %101 = vst.msk [vmem:[%s100] sm:$0xf0] %vm98, %v97
    %s102 = scalar_lea.vmem %s0, 70
    %s103 = smov 3
    %v104 = vld [vmem:[%s102] ss:$16 sm:%s103]
    %s105 = scalar_lea.vmem %s0, 70
    %s106 = smov 12
    %v107 = vld [vmem:[%s105] ss:$16 sm:%s106]
    %vm108 = vcmask 1043458
    %v109 = vsel %vm108, %v107, %v104
    %s110 = scalar_lea.vmem %s0, 14
    %s111 = smov 48
    %v112 = vld [vmem:[%s110] ss:$16 sm:%s111]
    %vm113 = vcmask 1045508
    %v114 = vsel %vm113, %v112, %v109
    %s115 = scalar_lea.vmem %s0, 14
    %s116 = smov 192
    %v117 = vld [vmem:[%s115] ss:$16 sm:%s116]
    %vm118 = vcmask 1047558
    %v119 = vsel %vm118, %v117, %v114
    %120 = vrot.lane.b32.xlu0 %v119, 96
    %v121 = vpop.permute.xlu0 %120
    %vm122 = vcmask 917248
    %s123 = scalar_lea.vmem [#allocation0], 16
    %124 = vst.msk [vmem:[%s123] sm:$0xf] %vm122, %v121
    %s125 = scalar_lea.vmem [#allocation0], 20
    %126 = vst.msk [vmem:[%s125] sm:$0xf0] %vm122, %v121
    %s127 = scalar_lea.vmem %s0, 5
    %s128 = smov 3
    %v129 = vld [vmem:[%s127] ss:$16 sm:%s128]
    %s130 = scalar_lea.vmem %s0, 5
    %s131 = smov 12
    %v132 = vld [vmem:[%s130] ss:$16 sm:%s131]
    %vm133 = vcmask 1043458
    %v134 = vsel %vm133, %v132, %v129
    %s135 = scalar_lea.vmem %s0, 4294967245
    %s136 = smov 48
    %v137 = vld [vmem:[%s135] ss:$16 sm:%s136]
    %vm138 = vcmask 1045508
    %v139 = vsel %vm138, %v137, %v134
    %s140 = scalar_lea.vmem %s0, 4294967245
    %s141 = smov 192
    %v142 = vld [vmem:[%s140] ss:$16 sm:%s141]
    %vm143 = vcmask 1047558
    %v144 = vsel %vm143, %v142, %v139
    %145 = vrot.lane.b32.xlu0 %v144, 80
    %v146 = vpop.permute.xlu0 %145
    %vm147 = vcmask 786048
    %148 = vst.msk [vmem:[#allocation0] sm:$0xf] %vm147, %v146
    %s149 = scalar_lea.vmem [#allocation0], 4
    %150 = vst.msk [vmem:[%s149] sm:$0xf0] %vm147, %v146
    %s151 = scalar_lea.vmem %s0, 69
    %s152 = smov 3
    %v153 = vld [vmem:[%s151] ss:$16 sm:%s152]
    %s154 = scalar_lea.vmem %s0, 69
    %s155 = smov 12
    %v156 = vld [vmem:[%s154] ss:$16 sm:%s155]
    %vm157 = vcmask 1043458
    %v158 = vsel %vm157, %v156, %v153
    %s159 = scalar_lea.vmem %s0, 13
    %s160 = smov 48
    %v161 = vld [vmem:[%s159] ss:$16 sm:%s160]
    %vm162 = vcmask 1045508
    %v163 = vsel %vm162, %v161, %v158
    %s164 = scalar_lea.vmem %s0, 13
    %s165 = smov 192
    %v166 = vld [vmem:[%s164] ss:$16 sm:%s165]
    %vm167 = vcmask 1047558
    %v168 = vsel %vm167, %v166, %v163
    %169 = vrot.lane.b32.xlu0 %v168, 80
    %v170 = vpop.permute.xlu0 %169
    %vm171 = vcmask 786048
    %s172 = scalar_lea.vmem [#allocation0], 16
    %173 = vst.msk [vmem:[%s172] sm:$0xf] %vm171, %v170
    %s174 = scalar_lea.vmem [#allocation0], 20
    %175 = vst.msk [vmem:[%s174] sm:$0xf0] %vm171, %v170
    %s176 = scalar_lea.vmem %s0, 4
    %s177 = smov 3
    %v178 = vld [vmem:[%s176] ss:$16 sm:%s177]
    %s179 = scalar_lea.vmem %s0, 4
    %s180 = smov 12
    %v181 = vld [vmem:[%s179] ss:$16 sm:%s180]
    %vm182 = vcmask 1043458
    %v183 = vsel %vm182, %v181, %v178
    %s184 = scalar_lea.vmem %s0, 4294967244
    %s185 = smov 48
    %v186 = vld [vmem:[%s184] ss:$16 sm:%s185]
    %vm187 = vcmask 1045508
    %v188 = vsel %vm187, %v186, %v183
    %s189 = scalar_lea.vmem %s0, 4294967244
    %s190 = smov 192
    %v191 = vld [vmem:[%s189] ss:$16 sm:%s190]
    %vm192 = vcmask 1047558
    %v193 = vsel %vm192, %v191, %v188
    %194 = vrot.lane.b32.xlu0 %v193, 64
    %v195 = vpop.permute.xlu0 %194
    %vm196 = vcmask 654848
    %197 = vst.msk [vmem:[#allocation0] sm:$0xf] %vm196, %v195
    %s198 = scalar_lea.vmem [#allocation0], 4
    %199 = vst.msk [vmem:[%s198] sm:$0xf0] %vm196, %v195
    %s200 = scalar_lea.vmem %s0, 68
    %s201 = smov 3
    %v202 = vld [vmem:[%s200] ss:$16 sm:%s201]
    %s203 = scalar_lea.vmem %s0, 68
    %s204 = smov 12
    %v205 = vld [vmem:[%s203] ss:$16 sm:%s204]
    %vm206 = vcmask 1043458
    %v207 = vsel %vm206, %v205, %v202
    %s208 = scalar_lea.vmem %s0, 12
    %s209 = smov 48
    %v210 = vld [vmem:[%s208] ss:$16 sm:%s209]
    %vm211 = vcmask 1045508
    %v212 = vsel %vm211, %v210, %v207
    %s213 = scalar_lea.vmem %s0, 12
    %s214 = smov 192
    %v215 = vld [vmem:[%s213] ss:$16 sm:%s214]
    %vm216 = vcmask 1047558
    %v217 = vsel %vm216, %v215, %v212
    %218 = vrot.lane.b32.xlu0 %v217, 64
    %v219 = vpop.permute.xlu0 %218
    %vm220 = vcmask 654848
    %s221 = scalar_lea.vmem [#allocation0], 16
    %222 = vst.msk [vmem:[%s221] sm:$0xf] %vm220, %v219
    %s223 = scalar_lea.vmem [#allocation0], 20
    %224 = vst.msk [vmem:[%s223] sm:$0xf0] %vm220, %v219
    %s225 = scalar_lea.vmem %s0, 3
    %s226 = smov 3
    %v227 = vld [vmem:[%s225] ss:$16 sm:%s226]
    %s228 = scalar_lea.vmem %s0, 3
    %s229 = smov 12
    %v230 = vld [vmem:[%s228] ss:$16 sm:%s229]
    %vm231 = vcmask 1043458
    %v232 = vsel %vm231, %v230, %v227
    %s233 = scalar_lea.vmem %s0, 4294967243
    %s234 = smov 48
    %v235 = vld [vmem:[%s233] ss:$16 sm:%s234]
    %vm236 = vcmask 1045508
    %v237 = vsel %vm236, %v235, %v232
    %s238 = scalar_lea.vmem %s0, 4294967243
    %s239 = smov 192
    %v240 = vld [vmem:[%s238] ss:$16 sm:%s239]
    %vm241 = vcmask 1047558
    %v242 = vsel %vm241, %v240, %v237
    %243 = vrot.lane.b32.xlu0 %v242, 48
    %v244 = vpop.permute.xlu0 %243
    %vm245 = vcmask 523648
    %246 = vst.msk [vmem:[#allocation0] sm:$0xf] %vm245, %v244
    %s247 = scalar_lea.vmem [#allocation0], 4
    %248 = vst.msk [vmem:[%s247] sm:$0xf0] %vm245, %v244
    %s249 = scalar_lea.vmem %s0, 67
    %s250 = smov 3
    %v251 = vld [vmem:[%s249] ss:$16 sm:%s250]
    %s252 = scalar_lea.vmem %s0, 67
    %s253 = smov 12
    %v254 = vld [vmem:[%s252] ss:$16 sm:%s253]
    %vm255 = vcmask 1043458
    %v256 = vsel %vm255, %v254, %v251
    %s257 = scalar_lea.vmem %s0, 11
    %s258 = smov 48
    %v259 = vld [vmem:[%s257] ss:$16 sm:%s258]
    %vm260 = vcmask 1045508
    %v261 = vsel %vm260, %v259, %v256
    %s262 = scalar_lea.vmem %s0, 11
    %s263 = smov 192
    %v264 = vld [vmem:[%s262] ss:$16 sm:%s263]
    %vm265 = vcmask 1047558
    %v266 = vsel %vm265, %v264, %v261
    %267 = vrot.lane.b32.xlu0 %v266, 48
    %v268 = vpop.permute.xlu0 %267
    %vm269 = vcmask 523648
    %s270 = scalar_lea.vmem [#allocation0], 16
    %271 = vst.msk [vmem:[%s270] sm:$0xf] %vm269, %v268
    %s272 = scalar_lea.vmem [#allocation0], 20
    %273 = vst.msk [vmem:[%s272] sm:$0xf0] %vm269, %v268
    %s274 = scalar_lea.vmem %s0, 2
    %s275 = smov 3
    %v276 = vld [vmem:[%s274] ss:$16 sm:%s275]
    %s277 = scalar_lea.vmem %s0, 2
    %s278 = smov 12
    %v279 = vld [vmem:[%s277] ss:$16 sm:%s278]
    %vm280 = vcmask 1043458
    %v281 = vsel %vm280, %v279, %v276
    %s282 = scalar_lea.vmem %s0, 4294967242
    %s283 = smov 48
    %v284 = vld [vmem:[%s282] ss:$16 sm:%s283]
    %vm285 = vcmask 1045508
    %v286 = vsel %vm285, %v284, %v281
    %s287 = scalar_lea.vmem %s0, 4294967242
    %s288 = smov 192
    %v289 = vld [vmem:[%s287] ss:$16 sm:%s288]
    %vm290 = vcmask 1047558
    %v291 = vsel %vm290, %v289, %v286
    %292 = vrot.lane.b32.xlu0 %v291, 32
    %v293 = vpop.permute.xlu0 %292
    %vm294 = vcmask 392448
    %295 = vst.msk [vmem:[#allocation0] sm:$0xf] %vm294, %v293
    %s296 = scalar_lea.vmem [#allocation0], 4
    %297 = vst.msk [vmem:[%s296] sm:$0xf0] %vm294, %v293
    %s298 = scalar_lea.vmem %s0, 66
    %s299 = smov 3
    %v300 = vld [vmem:[%s298] ss:$16 sm:%s299]
    %s301 = scalar_lea.vmem %s0, 66
    %s302 = smov 12
    %v303 = vld [vmem:[%s301] ss:$16 sm:%s302]
    %vm304 = vcmask 1043458
    %v305 = vsel %vm304, %v303, %v300
    %s306 = scalar_lea.vmem %s0, 10
    %s307 = smov 48
    %v308 = vld [vmem:[%s306] ss:$16 sm:%s307]
    %vm309 = vcmask 1045508
    %v310 = vsel %vm309, %v308, %v305
    %s311 = scalar_lea.vmem %s0, 10
    %s312 = smov 192
    %v313 = vld [vmem:[%s311] ss:$16 sm:%s312]
    %vm314 = vcmask 1047558
    %v315 = vsel %vm314, %v313, %v310
    %316 = vrot.lane.b32.xlu0 %v315, 32
    %v317 = vpop.permute.xlu0 %316
    %vm318 = vcmask 392448
    %s319 = scalar_lea.vmem [#allocation0], 16
    %320 = vst.msk [vmem:[%s319] sm:$0xf] %vm318, %v317
    %s321 = scalar_lea.vmem [#allocation0], 20
    %322 = vst.msk [vmem:[%s321] sm:$0xf0] %vm318, %v317
    %s323 = scalar_lea.vmem %s0, 1
    %s324 = smov 3
    %v325 = vld [vmem:[%s323] ss:$16 sm:%s324]
    %s326 = scalar_lea.vmem %s0, 1
    %s327 = smov 12
    %v328 = vld [vmem:[%s326] ss:$16 sm:%s327]
    %vm329 = vcmask 1043458
    %v330 = vsel %vm329, %v328, %v325
    %s331 = scalar_lea.vmem %s0, 4294967241
    %s332 = smov 48
    %v333 = vld [vmem:[%s331] ss:$16 sm:%s332]
    %vm334 = vcmask 1045508
    %v335 = vsel %vm334, %v333, %v330
    %s336 = scalar_lea.vmem %s0, 4294967241
    %s337 = smov 192
    %v338 = vld [vmem:[%s336] ss:$16 sm:%s337]
    %vm339 = vcmask 1047558
    %v340 = vsel %vm339, %v338, %v335
    %341 = vrot.lane.b32.xlu0 %v340, 16
    %v342 = vpop.permute.xlu0 %341
    %vm343 = vcmask 261248
    %344 = vst.msk [vmem:[#allocation0] sm:$0xf] %vm343, %v342
    %s345 = scalar_lea.vmem [#allocation0], 4
    %346 = vst.msk [vmem:[%s345] sm:$0xf0] %vm343, %v342
    %s347 = scalar_lea.vmem %s0, 65
    %s348 = smov 3
    %v349 = vld [vmem:[%s347] ss:$16 sm:%s348]
    %s350 = scalar_lea.vmem %s0, 65
    %s351 = smov 12
    %v352 = vld [vmem:[%s350] ss:$16 sm:%s351]
    %vm353 = vcmask 1043458
    %v354 = vsel %vm353, %v352, %v349
    %s355 = scalar_lea.vmem %s0, 9
    %s356 = smov 48
    %v357 = vld [vmem:[%s355] ss:$16 sm:%s356]
    %vm358 = vcmask 1045508
    %v359 = vsel %vm358, %v357, %v354
    %s360 = scalar_lea.vmem %s0, 9
    %s361 = smov 192
    %v362 = vld [vmem:[%s360] ss:$16 sm:%s361]
    %vm363 = vcmask 1047558
    %v364 = vsel %vm363, %v362, %v359
    %365 = vrot.lane.b32.xlu0 %v364, 16
    %v366 = vpop.permute.xlu0 %365
    %vm367 = vcmask 261248
    %s368 = scalar_lea.vmem [#allocation0], 16
    %369 = vst.msk [vmem:[%s368] sm:$0xf] %vm367, %v366
    %s370 = scalar_lea.vmem [#allocation0], 20
    %371 = vst.msk [vmem:[%s370] sm:$0xf0] %vm367, %v366
    %s373 = ssub.s32 16, 1
    %v374 = vld [vmem:[#allocation0] sm:%s373]
    %s376 = ssub.s32 16, 1
    %377 = vst [vmem:[%s1] sm:%s376] %v374
    %s378 = scalar_lea.vmem [#allocation0], 8
    %v379 = vld [vmem:[%s378] sm:%s373]
    %s381 = ssub.s32 16, 1
    %s382 = scalar_lea.vmem %s1, 4
    %383 = vst [vmem:[%s382] sm:%s381] %v379
    %s384 = scalar_lea.vmem [#allocation0], 16
    %v385 = vld [vmem:[%s384] sm:%s373]
    %s387 = ssub.s32 16, 1
    %s388 = scalar_lea.vmem %s1, 8
    %389 = vst [vmem:[%s388] sm:%s387] %v385
    %s390 = scalar_lea.vmem [#allocation0], 24
    %v391 = vld [vmem:[%s390] sm:%s373]
    %s393 = ssub.s32 16, 1
    %s394 = scalar_lea.vmem %s1, 12
    %395 = vst [vmem:[%s394] sm:%s393] %v391

// kernel: squeeze.0
$region0: #{squeeze.0}
  %s0 = inlined_call_operand.vmem [shape: f32[2,4,16,16], index: 0, kind: input, shape index: {}]
  %s1 = inlined_call_operand.vmem [shape: f32[4,1,512], index: 1, kind: output, shape index: {}]
  $region1: #{squeeze.0} parent=0
    #allocation0 [shape = 'u8[65536]{0}', space=vmem, size = 0x10000, scoped, tag = 'scoped mem for output reshape']
    %v2 = vld [vmem:[%s0] ss:$8 sm:$0xf]
    %v3 = vld [vmem:[%s0] ss:$8 sm:$0xf0]
    %vm4 = vcmask 1047556
    %v5 = vsel %vm4, %v3, %v2
    %vm6 = vcmask 130048
    %7 = vst.msk [vmem:[#allocation0] ss:$8 sm:$0xf] %vm6, %v5
    %8 = vst.msk [vmem:[#allocation0] ss:$8 sm:$0xf0] %vm6, %v5
    %s9 = scalar_lea.vmem %s0, 64
    %v10 = vld [vmem:[%s9] ss:$8 sm:$0xf]
    %s11 = scalar_lea.vmem %s0, 64
    %v12 = vld [vmem:[%s11] ss:$8 sm:$0xf0]
    %vm13 = vcmask 1047556
    %v14 = vsel %vm13, %v12, %v10
    %vm15 = vcmask 130048
    %s16 = scalar_lea.vmem [#allocation0], 64
    %17 = vst.msk [vmem:[%s16] ss:$8 sm:$0xf] %vm15, %v14
    %s18 = scalar_lea.vmem [#allocation0], 64
    %19 = vst.msk [vmem:[%s18] ss:$8 sm:$0xf0] %vm15, %v14
    %s20 = scalar_lea.vmem %s0, 7
    %v21 = vld [vmem:[%s20] ss:$8 sm:$0xf]
    %s22 = scalar_lea.vmem %s0, 7
    %v23 = vld [vmem:[%s22] ss:$8 sm:$0xf0]
    %vm24 = vcmask 1047556
    %v25 = vsel %vm24, %v23, %v21
    %26 = vrot.lane.b32.xlu0 %v25, 112
    %v27 = vpop.permute.xlu0 %26
    %vm28 = vcmask 1048448
    %29 = vst.msk [vmem:[#allocation0] ss:$8 sm:$0xf] %vm28, %v27
    %30 = vst.msk [vmem:[#allocation0] ss:$8 sm:$0xf0] %vm28, %v27
    %s31 = scalar_lea.vmem %s0, 71
    %v32 = vld [vmem:[%s31] ss:$8 sm:$0xf]
    %s33 = scalar_lea.vmem %s0, 71
    %v34 = vld [vmem:[%s33] ss:$8 sm:$0xf0]
    %vm35 = vcmask 1047556
    %v36 = vsel %vm35, %v34, %v32
    %37 = vrot.lane.b32.xlu0 %v36, 112
    %v38 = vpop.permute.xlu0 %37
    %vm39 = vcmask 1048448
    %s40 = scalar_lea.vmem [#allocation0], 64
    %41 = vst.msk [vmem:[%s40] ss:$8 sm:$0xf] %vm39, %v38
    %s42 = scalar_lea.vmem [#allocation0], 64
    %43 = vst.msk [vmem:[%s42] ss:$8 sm:$0xf0] %vm39, %v38
    %s44 = scalar_lea.vmem %s0, 6
    %v45 = vld [vmem:[%s44] ss:$8 sm:$0xf]
    %s46 = scalar_lea.vmem %s0, 6
    %v47 = vld [vmem:[%s46] ss:$8 sm:$0xf0]
    %vm48 = vcmask 1047556
    %v49 = vsel %vm48, %v47, %v45
    %50 = vrot.lane.b32.xlu0 %v49, 96
    %v51 = vpop.permute.xlu0 %50
    %vm52 = vcmask 917248
    %53 = vst.msk [vmem:[#allocation0] ss:$8 sm:$0xf] %vm52, %v51
    %54 = vst.msk [vmem:[#allocation0] ss:$8 sm:$0xf0] %vm52, %v51
    %s55 = scalar_lea.vmem %s0, 70
    %v56 = vld [vmem:[%s55] ss:$8 sm:$0xf]
    %s57 = scalar_lea.vmem %s0, 70
    %v58 = vld [vmem:[%s57] ss:$8 sm:$0xf0]
    %vm59 = vcmask 1047556
    %v60 = vsel %vm59, %v58, %v56
    %61 = vrot.lane.b32.xlu0 %v60, 96
    %v62 = vpop.permute.xlu0 %61
    %vm63 = vcmask 917248
    %s64 = scalar_lea.vmem [#allocation0], 64
    %65 = vst.msk [vmem:[%s64] ss:$8 sm:$0xf] %vm63, %v62
    %s66 = scalar_lea.vmem [#allocation0], 64
    %67 = vst.msk [vmem:[%s66] ss:$8 sm:$0xf0] %vm63, %v62
    %s68 = scalar_lea.vmem %s0, 5
    %v69 = vld [vmem:[%s68] ss:$8 sm:$0xf]
    %s70 = scalar_lea.vmem %s0, 5
    %v71 = vld [vmem:[%s70] ss:$8 sm:$0xf0]
    %vm72 = vcmask 1047556
    %v73 = vsel %vm72, %v71, %v69
    %74 = vrot.lane.b32.xlu0 %v73, 80
    %v75 = vpop.permute.xlu0 %74
    %vm76 = vcmask 786048
    %77 = vst.msk [vmem:[#allocation0] ss:$8 sm:$0xf] %vm76, %v75
    %78 = vst.msk [vmem:[#allocation0] ss:$8 sm:$0xf0] %vm76, %v75
    %s79 = scalar_lea.vmem %s0, 69
    %v80 = vld [vmem:[%s79] ss:$8 sm:$0xf]
    %s81 = scalar_lea.vmem %s0, 69
    %v82 = vld [vmem:[%s81] ss:$8 sm:$0xf0]
    %vm83 = vcmask 1047556
    %v84 = vsel %vm83, %v82, %v80
    %85 = vrot.lane.b32.xlu0 %v84, 80
    %v86 = vpop.permute.xlu0 %85
    %vm87 = vcmask 786048
    %s88 = scalar_lea.vmem [#allocation0], 64
    %89 = vst.msk [vmem:[%s88] ss:$8 sm:$0xf] %vm87, %v86
    %s90 = scalar_lea.vmem [#allocation0], 64
    %91 = vst.msk [vmem:[%s90] ss:$8 sm:$0xf0] %vm87, %v86
    %s92 = scalar_lea.vmem %s0, 4
    %v93 = vld [vmem:[%s92] ss:$8 sm:$0xf]
    %s94 = scalar_lea.vmem %s0, 4
    %v95 = vld [vmem:[%s94] ss:$8 sm:$0xf0]
    %vm96 = vcmask 1047556
    %v97 = vsel %vm96, %v95, %v93
    %98 = vrot.lane.b32.xlu0 %v97, 64
    %v99 = vpop.permute.xlu0 %98
    %vm100 = vcmask 654848
    %101 = vst.msk [vmem:[#allocation0] ss:$8 sm:$0xf] %vm100, %v99
    %102 = vst.msk [vmem:[#allocation0] ss:$8 sm:$0xf0] %vm100, %v99
    %s103 = scalar_lea.vmem %s0, 68
    %v104 = vld [vmem:[%s103] ss:$8 sm:$0xf]
    %s105 = scalar_lea.vmem %s0, 68
    %v106 = vld [vmem:[%s105] ss:$8 sm:$0xf0]
    %vm107 = vcmask 1047556
    %v108 = vsel %vm107, %v106, %v104
    %109 = vrot.lane.b32.xlu0 %v108, 64
    %v110 = vpop.permute.xlu0 %109
    %vm111 = vcmask 654848
    %s112 = scalar_lea.vmem [#allocation0], 64
    %113 = vst.msk [vmem:[%s112] ss:$8 sm:$0xf] %vm111, %v110
    %s114 = scalar_lea.vmem [#allocation0], 64
    %115 = vst.msk [vmem:[%s114] ss:$8 sm:$0xf0] %vm111, %v110
    %s116 = scalar_lea.vmem %s0, 3
    %v117 = vld [vmem:[%s116] ss:$8 sm:$0xf]
    %s118 = scalar_lea.vmem %s0, 3
    %v119 = vld [vmem:[%s118] ss:$8 sm:$0xf0]
    %vm120 = vcmask 1047556
    %v121 = vsel %vm120, %v119, %v117
    %122 = vrot.lane.b32.xlu0 %v121, 48
    %v123 = vpop.permute.xlu0 %122
    %vm124 = vcmask 523648
    %125 = vst.msk [vmem:[#allocation0] ss:$8 sm:$0xf] %vm124, %v123
    %126 = vst.msk [vmem:[#allocation0] ss:$8 sm:$0xf0] %vm124, %v123
    %s127 = scalar_lea.vmem %s0, 67
    %v128 = vld [vmem:[%s127] ss:$8 sm:$0xf]
    %s129 = scalar_lea.vmem %s0, 67
    %v130 = vld [vmem:[%s129] ss:$8 sm:$0xf0]
    %vm131 = vcmask 1047556
    %v132 = vsel %vm131, %v130, %v128
    %133 = vrot.lane.b32.xlu0 %v132, 48
    %v134 = vpop.permute.xlu0 %133
    %vm135 = vcmask 523648
    %s136 = scalar_lea.vmem [#allocation0], 64
    %137 = vst.msk [vmem:[%s136] ss:$8 sm:$0xf] %vm135, %v134
    %s138 = scalar_lea.vmem [#allocation0], 64
    %139 = vst.msk [vmem:[%s138] ss:$8 sm:$0xf0] %vm135, %v134
    %s140 = scalar_lea.vmem %s0, 2
    %v141 = vld [vmem:[%s140] ss:$8 sm:$0xf]
    %s142 = scalar_lea.vmem %s0, 2
    %v143 = vld [vmem:[%s142] ss:$8 sm:$0xf0]
    %vm144 = vcmask 1047556
    %v145 = vsel %vm144, %v143, %v141
    %146 = vrot.lane.b32.xlu0 %v145, 32
    %v147 = vpop.permute.xlu0 %146
    %vm148 = vcmask 392448
    %149 = vst.msk [vmem:[#allocation0] ss:$8 sm:$0xf] %vm148, %v147
    %150 = vst.msk [vmem:[#allocation0] ss:$8 sm:$0xf0] %vm148, %v147
    %s151 = scalar_lea.vmem %s0, 66
    %v152 = vld [vmem:[%s151] ss:$8 sm:$0xf]
    %s153 = scalar_lea.vmem %s0, 66
    %v154 = vld [vmem:[%s153] ss:$8 sm:$0xf0]
    %vm155 = vcmask 1047556
    %v156 = vsel %vm155, %v154, %v152
    %157 = vrot.lane.b32.xlu0 %v156, 32
    %v158 = vpop.permute.xlu0 %157
    %vm159 = vcmask 392448
    %s160 = scalar_lea.vmem [#allocation0], 64
    %161 = vst.msk [vmem:[%s160] ss:$8 sm:$0xf] %vm159, %v158
    %s162 = scalar_lea.vmem [#allocation0], 64
    %163 = vst.msk [vmem:[%s162] ss:$8 sm:$0xf0] %vm159, %v158
    %s164 = scalar_lea.vmem %s0, 1
    %v165 = vld [vmem:[%s164] ss:$8 sm:$0xf]
    %s166 = scalar_lea.vmem %s0, 1
    %v167 = vld [vmem:[%s166] ss:$8 sm:$0xf0]
    %vm168 = vcmask 1047556
    %v169 = vsel %vm168, %v167, %v165
    %170 = vrot.lane.b32.xlu0 %v169, 16
    %v171 = vpop.permute.xlu0 %170
    %vm172 = vcmask 261248
    %173 = vst.msk [vmem:[#allocation0] ss:$8 sm:$0xf] %vm172, %v171
    %174 = vst.msk [vmem:[#allocation0] ss:$8 sm:$0xf0] %vm172, %v171
    %s175 = scalar_lea.vmem %s0, 65
    %v176 = vld [vmem:[%s175] ss:$8 sm:$0xf]
    %s177 = scalar_lea.vmem %s0, 65
    %v178 = vld [vmem:[%s177] ss:$8 sm:$0xf0]
    %vm179 = vcmask 1047556
    %v180 = vsel %vm179, %v178, %v176
    %181 = vrot.lane.b32.xlu0 %v180, 16
    %v182 = vpop.permute.xlu0 %181
    %vm183 = vcmask 261248
    %s184 = scalar_lea.vmem [#allocation0], 64
    %185 = vst.msk [vmem:[%s184] ss:$8 sm:$0xf] %vm183, %v182
    %s186 = scalar_lea.vmem [#allocation0], 64
    %187 = vst.msk [vmem:[%s186] ss:$8 sm:$0xf0] %vm183, %v182
    %s189 = ssub.s32 2, 1
    %v190 = vld [vmem:[#allocation0] sm:%s189]
    %s192 = ssub.s32 2, 1
    %193 = vst [vmem:[%s1] sm:%s192] %v190
    %s194 = scalar_lea.vmem [#allocation0], 8
    %v195 = vld [vmem:[%s194] sm:%s189]
    %s197 = ssub.s32 2, 1
    %s198 = scalar_lea.vmem %s1, 1
    %199 = vst [vmem:[%s198] sm:%s197] %v195
    %s200 = scalar_lea.vmem [#allocation0], 16
    %v201 = vld [vmem:[%s200] sm:%s189]
    %s203 = ssub.s32 2, 1
    %s204 = scalar_lea.vmem %s1, 2
    %205 = vst [vmem:[%s204] sm:%s203] %v201
    %s206 = scalar_lea.vmem [#allocation0], 24
    %v207 = vld [vmem:[%s206] sm:%s189]
    %s209 = ssub.s32 2, 1
    %s210 = scalar_lea.vmem %s1, 3
    %211 = vst [vmem:[%s210] sm:%s209] %v207
    %s212 = scalar_lea.vmem [#allocation0], 32
    %v213 = vld [vmem:[%s212] sm:%s189]
    %s215 = ssub.s32 2, 1
    %s216 = scalar_lea.vmem %s1, 4
    %217 = vst [vmem:[%s216] sm:%s215] %v213
    %s218 = scalar_lea.vmem [#allocation0], 40
    %v219 = vld [vmem:[%s218] sm:%s189]
    %s221 = ssub.s32 2, 1
    %s222 = scalar_lea.vmem %s1, 5
    %223 = vst [vmem:[%s222] sm:%s221] %v219
    %s224 = scalar_lea.vmem [#allocation0], 48
    %v225 = vld [vmem:[%s224] sm:%s189]
    %s227 = ssub.s32 2, 1
    %s228 = scalar_lea.vmem %s1, 6
    %229 = vst [vmem:[%s228] sm:%s227] %v225
    %s230 = scalar_lea.vmem [#allocation0], 56
    %v231 = vld [vmem:[%s230] sm:%s189]
    %s233 = ssub.s32 2, 1
    %s234 = scalar_lea.vmem %s1, 7
    %235 = vst [vmem:[%s234] sm:%s233] %v231
    %s236 = scalar_lea.vmem [#allocation0], 64
    %v237 = vld [vmem:[%s236] sm:%s189]
    %s239 = ssub.s32 2, 1
    %s240 = scalar_lea.vmem %s1, 8
    %241 = vst [vmem:[%s240] sm:%s239] %v237
    %s242 = scalar_lea.vmem [#allocation0], 72
    %v243 = vld [vmem:[%s242] sm:%s189]
    %s245 = ssub.s32 2, 1
    %s246 = scalar_lea.vmem %s1, 9
    %247 = vst [vmem:[%s246] sm:%s245] %v243
    %s248 = scalar_lea.vmem [#allocation0], 80
    %v249 = vld [vmem:[%s248] sm:%s189]
    %s251 = ssub.s32 2, 1
    %s252 = scalar_lea.vmem %s1, 10
    %253 = vst [vmem:[%s252] sm:%s251] %v249
    %s254 = scalar_lea.vmem [#allocation0], 88
    %v255 = vld [vmem:[%s254] sm:%s189]
    %s257 = ssub.s32 2, 1
    %s258 = scalar_lea.vmem %s1, 11
    %259 = vst [vmem:[%s258] sm:%s257] %v255
    %s260 = scalar_lea.vmem [#allocation0], 96
    %v261 = vld [vmem:[%s260] sm:%s189]
    %s263 = ssub.s32 2, 1
    %s264 = scalar_lea.vmem %s1, 12
    %265 = vst [vmem:[%s264] sm:%s263] %v261
    %s266 = scalar_lea.vmem [#allocation0], 104
    %v267 = vld [vmem:[%s266] sm:%s189]
    %s269 = ssub.s32 2, 1
    %s270 = scalar_lea.vmem %s1, 13
    %271 = vst [vmem:[%s270] sm:%s269] %v267
    %s272 = scalar_lea.vmem [#allocation0], 112
    %v273 = vld [vmem:[%s272] sm:%s189]
    %s275 = ssub.s32 2, 1
    %s276 = scalar_lea.vmem %s1, 14
    %277 = vst [vmem:[%s276] sm:%s275] %v273
    %s278 = scalar_lea.vmem [#allocation0], 120
    %v279 = vld [vmem:[%s278] sm:%s189]
    %s281 = ssub.s32 2, 1
    %s282 = scalar_lea.vmem %s1, 15
    %283 = vst [vmem:[%s282] sm:%s281] %v279

// kernel: kikinet_forward.8
$region0: #{kikinet_forward.8}
  #allocation0 [shape = 'u32[]', space=smem, size = 0x4, offset = 0x4, fixed_abs, tag = 'smem constant byte address 0x4 - core index']
  #allocation1 [shape = 'u32[72,128]{1,0:T(1,128)}', space=vmem, size = 0x9000, scoped, tag = 'internal scratch']
  %s0 = inlined_call_operand.vmem [shape: f32[4,2,512], index: 0, kind: input, shape index: {}]
  %s1 = inlined_call_operand.vmem [shape: f32[9,512], index: 1, kind: input, shape index: {}]
  %s2 = inlined_call_operand.vmem [shape: bf16[32,18], index: 2, kind: input, shape index: {}]
  %s3 = inlined_call_operand.vmem [shape: f32[32,1], index: 3, kind: input, shape index: {}]
  %s4 = inlined_call_operand.vmem [shape: bf16[4,32,288], index: 4, kind: input, shape index: {}]
  %s5 = inlined_call_operand.vmem [shape: f32[4,32,1], index: 5, kind: input, shape index: {}]
  %s6 = inlined_call_operand.vmem [shape: f32[4,32,1], index: 6, kind: input, shape index: {}]
  %s7 = inlined_call_operand.vmem [shape: f32[4,32,1], index: 7, kind: input, shape index: {}]
  %s8 = inlined_call_operand.vmem [shape: f32[4,2,512], index: 8, kind: output, shape index: {}]
  %s9 = sld [smem:[#allocation0]]
  $region65: #{kikinet_forward.8} parent=0
    _
  %s11 = ssub.s32 1, %s9
  %s12 = scalar_select 0, %s11, %s9
  loop: start=0, step=1, limit=6
  $region2: #{kikinet_forward.8} parent=0 // loop_pre_header
    _
  $region3: #{kikinet_forward.8} parent=0 // loop_header
    %s14 = sphi 0, %s18
    %p15 = scmp.ge.s32.totalorder %s14, 6
    %s24 = sphi 0, %s26
    %s27 = sphi 0, %s24
    %s28 = sphi 0, %s27
    %s44 = sphi 0, %s28
    %s48 = sphi 0, %s48
    %s50 = sphi 0, %s48
    %s51 = sphi 0, %s50
    %s65 = sphi 0, %s51
    %s69 = sphi 0, %s69
    %s71 = sphi 0, %s69
    %s72 = sphi 0, %s71
    %s86 = sphi 0, %s72
    %s90 = sphi 0, %s90
    %s92 = sphi 0, %s90
    %s93 = sphi 0, %s92
    %s107 = sphi 0, %s93
    %s111 = sphi 0, %s111
    %s113 = sphi 0, %s111
    %s114 = sphi 0, %s113
    %s128 = sphi 0, %s114
    %s132 = sphi 0, %s132
    %s134 = sphi 0, %s132
    %s135 = sphi 0, %s134
    %s149 = sphi 0, %s135
    %s153 = sphi 0, %s153
    %s155 = sphi 0, %s153
    %s156 = sphi 0, %s155
    %s170 = sphi 0, %s156
    %s174 = sphi 0, %s174
    %s176 = sphi 0, %s174
    %s177 = sphi 0, %s176
    %s191 = sphi 0, %s177
    %s197 = sphi 0, %s199
    %s200 = sphi 0, %s197
    %s201 = sphi 0, %s200
    %s217 = sphi 0, %s201
  $region4: #{kikinet_forward.8} parent=0 // loop_header_branch
    %17 = sbr.rel (%p15) target = $region8
  $region5: #{kikinet_forward.8} parent=0 // loop_body
    %s19 = ssub.s32 %s14, 1
    %s20 = ssub.s32 %s14, 2
    %s21 = sadd.s32 %s14, 1
    %s22 = ssub.s32 %s14, %s21
    %p23 = scmp.eq.s32.totalorder %s22, 0
    %s25 = sadd.s32 %s24, 1
    %s26 = scalar_select %p23, %s24, %s25
    %p29 = pneg %p23
    %p30 = scmp.eq.s32.totalorder %s14, 3
    %p31 = por %p29, %p30
    %p32 = scmp.ne.s32.totalorder %s24, %s27
    %p33 = scmp.eq.s32.totalorder %s14, 0
    %p34 = por %p32, %p33
    %p35 = scmp.ne.s32.totalorder %s24, %s27
    %p36 = scmp.eq.s32.totalorder %s19, 3
    %p37 = por %p35, %p36
    %p38 = scmp.ne.s32.totalorder %s27, %s28
    %p39 = scmp.eq.s32.totalorder %s19, 0
    %p40 = por %p38, %p39
    %p41 = scmp.ne.s32.totalorder %s27, %s28
    %p42 = scmp.eq.s32.totalorder %s20, 3
    %p43 = por %p41, %p42
    %p45 = scmp.ne.s32.totalorder %s28, %s44
    %p46 = scmp.eq.s32.totalorder %s20, 0
    %p47 = por %p45, %p46
    %s49 = sadd.s32 %s48, 1
    %p52 = scmp.eq.s32.totalorder %s14, 3
    %p53 = scmp.ne.s32.totalorder %s48, %s50
    %p54 = scmp.eq.s32.totalorder %s14, 0
    %p55 = por %p53, %p54
    %p56 = scmp.ne.s32.totalorder %s48, %s50
    %p57 = scmp.eq.s32.totalorder %s19, 3
    %p58 = por %p56, %p57
    %p59 = scmp.ne.s32.totalorder %s50, %s51
    %p60 = scmp.eq.s32.totalorder %s19, 0
    %p61 = por %p59, %p60
    %p62 = scmp.ne.s32.totalorder %s50, %s51
    %p63 = scmp.eq.s32.totalorder %s20, 3
    %p64 = por %p62, %p63
    %p66 = scmp.ne.s32.totalorder %s51, %s65
    %p67 = scmp.eq.s32.totalorder %s20, 0
    %p68 = por %p66, %p67
    %s70 = sadd.s32 %s69, 1
    %p73 = scmp.eq.s32.totalorder %s14, 3
    %p74 = scmp.ne.s32.totalorder %s69, %s71
    %p75 = scmp.eq.s32.totalorder %s14, 0
    %p76 = por %p74, %p75
    %p77 = scmp.ne.s32.totalorder %s69, %s71
    %p78 = scmp.eq.s32.totalorder %s19, 3
    %p79 = por %p77, %p78
    %p80 = scmp.ne.s32.totalorder %s71, %s72
    %p81 = scmp.eq.s32.totalorder %s19, 0
    %p82 = por %p80, %p81
    %p83 = scmp.ne.s32.totalorder %s71, %s72
    %p84 = scmp.eq.s32.totalorder %s20, 3
    %p85 = por %p83, %p84
    %p87 = scmp.ne.s32.totalorder %s72, %s86
    %p88 = scmp.eq.s32.totalorder %s20, 0
    %p89 = por %p87, %p88
    %s91 = sadd.s32 %s90, 1
    %p94 = scmp.eq.s32.totalorder %s14, 3
    %p95 = scmp.ne.s32.totalorder %s90, %s92
    %p96 = scmp.eq.s32.totalorder %s14, 0
    %p97 = por %p95, %p96
    %p98 = scmp.ne.s32.totalorder %s90, %s92
    %p99 = scmp.eq.s32.totalorder %s19, 3
    %p100 = por %p98, %p99
    %p101 = scmp.ne.s32.totalorder %s92, %s93
    %p102 = scmp.eq.s32.totalorder %s19, 0
    %p103 = por %p101, %p102
    %p104 = scmp.ne.s32.totalorder %s92, %s93
    %p105 = scmp.eq.s32.totalorder %s20, 3
    %p106 = por %p104, %p105
    %p108 = scmp.ne.s32.totalorder %s93, %s107
    %p109 = scmp.eq.s32.totalorder %s20, 0
    %p110 = por %p108, %p109
    %s112 = sadd.s32 %s111, 1
    %p115 = scmp.eq.s32.totalorder %s14, 3
    %p116 = scmp.ne.s32.totalorder %s111, %s113
    %p117 = scmp.eq.s32.totalorder %s14, 0
    %p118 = por %p116, %p117
    %p119 = scmp.ne.s32.totalorder %s111, %s113
    %p120 = scmp.eq.s32.totalorder %s19, 3
    %p121 = por %p119, %p120
    %p122 = scmp.ne.s32.totalorder %s113, %s114
    %p123 = scmp.eq.s32.totalorder %s19, 0
    %p124 = por %p122, %p123
    %p125 = scmp.ne.s32.totalorder %s113, %s114
    %p126 = scmp.eq.s32.totalorder %s20, 3
    %p127 = por %p125, %p126
    %p129 = scmp.ne.s32.totalorder %s114, %s128
    %p130 = scmp.eq.s32.totalorder %s20, 0
    %p131 = por %p129, %p130
    %s133 = sadd.s32 %s132, 1
    %p136 = scmp.eq.s32.totalorder %s14, 3
    %p137 = scmp.ne.s32.totalorder %s132, %s134
    %p138 = scmp.eq.s32.totalorder %s14, 0
    %p139 = por %p137, %p138
    %p140 = scmp.ne.s32.totalorder %s132, %s134
    %p141 = scmp.eq.s32.totalorder %s19, 3
    %p142 = por %p140, %p141
    %p143 = scmp.ne.s32.totalorder %s134, %s135
    %p144 = scmp.eq.s32.totalorder %s19, 0
    %p145 = por %p143, %p144
    %p146 = scmp.ne.s32.totalorder %s134, %s135
    %p147 = scmp.eq.s32.totalorder %s20, 3
    %p148 = por %p146, %p147
    %p150 = scmp.ne.s32.totalorder %s135, %s149
    %p151 = scmp.eq.s32.totalorder %s20, 0
    %p152 = por %p150, %p151
    %s154 = sadd.s32 %s153, 1
    %p157 = scmp.eq.s32.totalorder %s14, 3
    %p158 = scmp.ne.s32.totalorder %s153, %s155
    %p159 = scmp.eq.s32.totalorder %s14, 0
    %p160 = por %p158, %p159
    %p161 = scmp.ne.s32.totalorder %s153, %s155
    %p162 = scmp.eq.s32.totalorder %s19, 3
    %p163 = por %p161, %p162
    %p164 = scmp.ne.s32.totalorder %s155, %s156
    %p165 = scmp.eq.s32.totalorder %s19, 0
    %p166 = por %p164, %p165
    %p167 = scmp.ne.s32.totalorder %s155, %s156
    %p168 = scmp.eq.s32.totalorder %s20, 3
    %p169 = por %p167, %p168
    %p171 = scmp.ne.s32.totalorder %s156, %s170
    %p172 = scmp.eq.s32.totalorder %s20, 0
    %p173 = por %p171, %p172
    %s175 = sadd.s32 %s174, 1
    %p178 = scmp.eq.s32.totalorder %s14, 3
    %p179 = scmp.ne.s32.totalorder %s174, %s176
    %p180 = scmp.eq.s32.totalorder %s14, 0
    %p181 = por %p179, %p180
    %p182 = scmp.ne.s32.totalorder %s174, %s176
    %p183 = scmp.eq.s32.totalorder %s19, 3
    %p184 = por %p182, %p183
    %p185 = scmp.ne.s32.totalorder %s176, %s177
    %p186 = scmp.eq.s32.totalorder %s19, 0
    %p187 = por %p185, %p186
    %p188 = scmp.ne.s32.totalorder %s176, %s177
    %p189 = scmp.eq.s32.totalorder %s20, 3
    %p190 = por %p188, %p189
    %p192 = scmp.ne.s32.totalorder %s177, %s191
    %p193 = scmp.eq.s32.totalorder %s20, 0
    %p194 = por %p192, %p193
    %s195 = ssub.s32 %s14, %s21
    %p196 = scmp.eq.s32.totalorder %s195, 0
    %s198 = sadd.s32 %s197, 1
    %s199 = scalar_select %p196, %s197, %s198
    %p202 = pneg %p196
    %p203 = scmp.eq.s32.totalorder %s14, 3
    %p204 = por %p202, %p203
    %p205 = scmp.ne.s32.totalorder %s197, %s200
    %p206 = scmp.eq.s32.totalorder %s14, 0
    %p207 = por %p205, %p206
    %p208 = scmp.ne.s32.totalorder %s197, %s200
    %p209 = scmp.eq.s32.totalorder %s19, 3
    %p210 = por %p208, %p209
    %p211 = scmp.ne.s32.totalorder %s200, %s201
    %p212 = scmp.eq.s32.totalorder %s19, 0
    %p213 = por %p211, %p212
    %p214 = scmp.ne.s32.totalorder %s200, %s201
    %p215 = scmp.eq.s32.totalorder %s20, 3
    %p216 = por %p214, %p215
    %p218 = scmp.ne.s32.totalorder %s201, %s217
    %p219 = scmp.eq.s32.totalorder %s20, 0
    %p220 = por %p218, %p219
    %p221 = scmp.le.s32.totalorder 1, %s14
    %p222 = scmp.lt.s32.totalorder %s14, 5
    %p223 = pnand %p221, %p222
    %p224 = pneg %p223
    // Predicated region
    $region9: #{kikinet_forward.8} parent=5 // pred_check
      _
    $region10: #{kikinet_forward.8} parent=5 // pred_check_branch
      %226 = sbr.rel (%p223) target = $region12
    $region11: #{kikinet_forward.8} parent=5 // pred_region
      %s227 = ssub.s32 %s14, 1
      // Predicated region
      $region13: #{kikinet_forward.8} parent=11 // pred_check
        %p228 = pneg %p61
      $region14: #{kikinet_forward.8} parent=11 // pred_check_branch
        %230 = sbr.rel (%p228) target = $region16
      $region15: #{kikinet_forward.8} parent=11 // pred_region
        _
      $region16: #{kikinet_forward.8} parent=11 // pred_fallthru
        _
      // Predicated region
      $region17: #{kikinet_forward.8} parent=11 // pred_check
        %p231 = pneg %p82
      $region18: #{kikinet_forward.8} parent=11 // pred_check_branch
        %233 = sbr.rel (%p231) target = $region20
      $region19: #{kikinet_forward.8} parent=11 // pred_region
        _
      $region20: #{kikinet_forward.8} parent=11 // pred_fallthru
        _
      // Predicated region
      $region21: #{kikinet_forward.8} parent=11 // pred_check
        %p234 = pneg %p103
      $region22: #{kikinet_forward.8} parent=11 // pred_check_branch
        %236 = sbr.rel (%p234) target = $region24
      $region23: #{kikinet_forward.8} parent=11 // pred_region
        _
      $region24: #{kikinet_forward.8} parent=11 // pred_fallthru
        _
      // Predicated region
      $region25: #{kikinet_forward.8} parent=11 // pred_check
        %p237 = pneg %p124
      $region26: #{kikinet_forward.8} parent=11 // pred_check_branch
        %239 = sbr.rel (%p237) target = $region28
      $region27: #{kikinet_forward.8} parent=11 // pred_region
        _
      $region28: #{kikinet_forward.8} parent=11 // pred_fallthru
        _
      // Predicated region
      $region29: #{kikinet_forward.8} parent=11 // pred_check
        %p240 = pneg %p145
      $region30: #{kikinet_forward.8} parent=11 // pred_check_branch
        %242 = sbr.rel (%p240) target = $region32
      $region31: #{kikinet_forward.8} parent=11 // pred_region
        _
      $region32: #{kikinet_forward.8} parent=11 // pred_fallthru
        _
      // Predicated region
      $region33: #{kikinet_forward.8} parent=11 // pred_check
        %p243 = pneg %p166
      $region34: #{kikinet_forward.8} parent=11 // pred_check_branch
        %245 = sbr.rel (%p243) target = $region36
      $region35: #{kikinet_forward.8} parent=11 // pred_region
        _
      $region36: #{kikinet_forward.8} parent=11 // pred_fallthru
        _
      // Predicated region
      $region37: #{kikinet_forward.8} parent=11 // pred_check
        %p246 = pneg %p187
      $region38: #{kikinet_forward.8} parent=11 // pred_check_branch
        %248 = sbr.rel (%p246) target = $region40
      $region39: #{kikinet_forward.8} parent=11 // pred_region
        _
      $region40: #{kikinet_forward.8} parent=11 // pred_fallthru
        _
    $region12: #{kikinet_forward.8} parent=5 // pred_fallthru
      _
    %p249 = scmp.lt.s32.totalorder %s14, 4
    // Predicated region
    $region41: #{kikinet_forward.8} parent=5 // pred_check
      %p250 = pneg %p249
    $region42: #{kikinet_forward.8} parent=5 // pred_check_branch
      %252 = sbr.rel (%p250) target = $region44
    $region43: #{kikinet_forward.8} parent=5 // pred_region
      // Predicated region
      $region45: #{kikinet_forward.8} parent=43 // pred_check
        %p253 = pneg %p34
      $region46: #{kikinet_forward.8} parent=43 // pred_check_branch
        %255 = sbr.rel (%p253) target = $region48
      $region47: #{kikinet_forward.8} parent=43 // pred_region
        %p256 = scmp.lt.s32.totalorder %s14, 3
        %s257 = scalar_select %p256, %s14, 3
        %s258 = smul.addr %s257, 4
        %s259 = smul.addr %s258, 2
        %s260 = scalar_lea.vmem %s0, %s259
      $region48: #{kikinet_forward.8} parent=43 // pred_fallthru
        _
    $region44: #{kikinet_forward.8} parent=5 // pred_fallthru
      _
    %p261 = scmp.le.s32.totalorder 1, %s14
    %p262 = scmp.lt.s32.totalorder %s14, 5
    %p263 = pnand %p261, %p262
    %p264 = pneg %p263
    // Predicated region
    $region49: #{kikinet_forward.8} parent=5 // pred_check
      _
    $region50: #{kikinet_forward.8} parent=5 // pred_check_branch
      %266 = sbr.rel (%p263) target = $region52
    $region51: #{kikinet_forward.8} parent=5 // pred_region
      %s267 = ssub.s32 %s14, 1
      %p268 = scmp.lt.s32.totalorder %s19, 3
      %s269 = scalar_select %p268, %s19, 3
      %s270 = smul.addr %s269, 4
      %s271 = smul.addr %s270, 2
      %s272 = scalar_lea.vmem %s0, %s271
      %p273 = pneg %p40
      %p274 = pneg %p37
      %p275 = pneg %p61
      %p276 = pneg %p58
      %p277 = pneg %p82
      %p278 = pneg %p79
      %p279 = pneg %p103
      %p280 = pneg %p100
      %p281 = pneg %p124
      %p282 = pneg %p121
      %p283 = pneg %p145
      %p284 = pneg %p142
      %p285 = pneg %p166
      %p286 = pneg %p163
      %p287 = pneg %p187
      %p288 = pneg %p184
      %p289 = pneg %p213
      %p290 = pneg %p210
      %p291 = scmp.lt.s32.totalorder %s19, 3
      %s292 = scalar_select %p291, %s19, 3
      %s293 = smul.addr %s292, 4
      %s294 = smul.addr %s293, 2
      %s295 = scalar_lea.vmem %s8, %s294
      %p296 = scmp.lt.s32.totalorder %s19, 3
      %s297 = scalar_select %p296, %s19, 3
      %s298 = smul.addr %s297, 4
      %s299 = smul.addr %s298, 2
      %s300 = scalar_lea.vmem %s0, %s299
      %p301 = scmp.lt.s32.totalorder %s19, 3
      %s302 = scalar_select %p301, %s19, 3
      %s303 = smul.addr %s302, 4
      %s304 = smul.addr %s303, 2
      %s305 = scalar_lea.vmem %s8, %s304
      %v307 = vld [vmem:[%s300] sm:$0xff]
      %v308 = vld [vmem:[%s2] sm:$0xf]
      %v309 = vld [vmem:[%s2 + $0x4] sm:$0xf]
      %v310 = vld [vmem:[%s2 + $0x8] sm:$0xf]
      %v311 = vld [vmem:[%s2 + $0xc] sm:$0xf]
      %v312 = vld [vmem:[%s3] sm:$0xff]
      %v313 = vld [vmem:[%s3 + $0x8] sm:$0xff]
      %v314 = vld [vmem:[%s3 + $0x10] sm:$0xff]
      %v315 = vld [vmem:[%s3 + $0x18] sm:$0xff]
      %317 = vst [vmem:[#allocation1] ss:$4 sm:$0xff] %v307
      %v318 = vld.sshfl [vmem:[#allocation1] sm:$0xff pattern:$0x73625140]
      %v319 = vld.sshfl [vmem:[#allocation1 + $0x8] sm:$0xff pattern:$0x73625140]
      %v320 = vld.sshfl [vmem:[#allocation1 + $0x10] sm:$0xff pattern:$0x73625140]
      %v321 = vld.sshfl [vmem:[#allocation1 + $0x18] sm:$0xff pattern:$0x73625140]
      %326 = vrot.lane.b32.xlu0 %v318, 17
      %v327 = vpop.permute.xlu0 %326
      %328 = vrot.lane.b32.xlu0 %v319, 17
      %v329 = vpop.permute.xlu0 %328
      %330 = vrot.lane.b32.xlu0 %v320, 17
      %v331 = vpop.permute.xlu0 %330
      %332 = vrot.lane.b32.xlu0 %v321, 17
      %v333 = vpop.permute.xlu0 %332
      %v334 = vlaneseq
      %v335 = vand.u32 %v334, 127
      %vm336 = vcmp.lt.s32.totalorder %v335, 17
      %v337 = vsel %vm336, %v331, %v333
      %v338 = vsel %vm336, %v329, %v331
      %v339 = vsel %vm336, %v327, %v329
      %v340 = vsel %vm336, %v333, %v327
      %v341 = vld [vmem:[%s1] ss:$8 sm:$0xf]
      %v343 = vperm.slane %v341, 0
      %v344 = vperm.slane %v341, 1
      %v345 = vperm.slane %v341, 2
      %v346 = vperm.slane %v341, 3
      %v351 = vmul.f32 %v340, %v343
      %v352 = vmul.f32 %v339, %v344
      %v353 = vmul.f32 %v338, %v345
      %v354 = vmul.f32 %v337, %v346
      %355 = vst [vmem:[#allocation1] ss:$4 sm:$0xff] %v307
      %v356 = vld.sshfl [vmem:[#allocation1] sm:$0xff pattern:$0x73625140]
      %v357 = vld.sshfl [vmem:[#allocation1 + $0x8] sm:$0xff pattern:$0x73625140]
      %v358 = vld.sshfl [vmem:[#allocation1 + $0x10] sm:$0xff pattern:$0x73625140]
      %v359 = vld.sshfl [vmem:[#allocation1 + $0x18] sm:$0xff pattern:$0x73625140]
      %364 = vrot.lane.b32.xlu0 %v356, 16
      %v365 = vpop.permute.xlu0 %364
      %366 = vrot.lane.b32.xlu0 %v357, 16
      %v367 = vpop.permute.xlu0 %366
      %368 = vrot.lane.b32.xlu0 %v358, 16
      %v369 = vpop.permute.xlu0 %368
      %370 = vrot.lane.b32.xlu0 %v359, 16
      %v371 = vpop.permute.xlu0 %370
      %vm372 = vcmp.lt.s32.totalorder %v335, 16
      %v373 = vsel %vm372, %v369, %v371
      %v374 = vsel %vm372, %v367, %v369
      %v375 = vsel %vm372, %v365, %v367
      %v376 = vsel %vm372, %v371, %v365
      %s377 = scalar_lea.vmem %s1, 1
      %v378 = vld [vmem:[%s377] ss:$8 sm:$0xf]
      %v380 = vperm.slane %v378, 0
      %v381 = vperm.slane %v378, 1
      %v382 = vperm.slane %v378, 2
      %v383 = vperm.slane %v378, 3
      %v388 = vmul.f32 %v376, %v380
      %v389 = vmul.f32 %v375, %v381
      %v390 = vmul.f32 %v374, %v382
      %v391 = vmul.f32 %v373, %v383
      %392 = vst [vmem:[#allocation1] ss:$4 sm:$0xff] %v307
      %v393 = vld.sshfl [vmem:[#allocation1] sm:$0xff pattern:$0x73625140]
      %v394 = vld.sshfl [vmem:[#allocation1 + $0x8] sm:$0xff pattern:$0x73625140]
      %v395 = vld.sshfl [vmem:[#allocation1 + $0x10] sm:$0xff pattern:$0x73625140]
      %v396 = vld.sshfl [vmem:[#allocation1 + $0x18] sm:$0xff pattern:$0x73625140]
      %401 = vrot.lane.b32.xlu0 %v393, 15
      %v402 = vpop.permute.xlu0 %401
      %403 = vrot.lane.b32.xlu0 %v394, 15
      %v404 = vpop.permute.xlu0 %403
      %405 = vrot.lane.b32.xlu0 %v395, 15
      %v406 = vpop.permute.xlu0 %405
      %407 = vrot.lane.b32.xlu0 %v396, 15
      %v408 = vpop.permute.xlu0 %407
      %vm409 = vcmp.lt.s32.totalorder %v335, 15
      %v410 = vsel %vm409, %v406, %v408
      %v411 = vsel %vm409, %v404, %v406
      %v412 = vsel %vm409, %v402, %v404
      %v413 = vsel %vm409, %v408, %v402
      %s414 = scalar_lea.vmem %s1, 2
      %v415 = vld [vmem:[%s414] ss:$8 sm:$0xf]
      %v417 = vperm.slane %v415, 0
      %v418 = vperm.slane %v415, 1
      %v419 = vperm.slane %v415, 2
      %v420 = vperm.slane %v415, 3
      %v425 = vmul.f32 %v413, %v417
      %v426 = vmul.f32 %v412, %v418
      %v427 = vmul.f32 %v411, %v419
      %v428 = vmul.f32 %v410, %v420
      %429 = vst [vmem:[#allocation1] ss:$4 sm:$0xff] %v307
      %v430 = vld.sshfl [vmem:[#allocation1] sm:$0xff pattern:$0x73625140]
      %v431 = vld.sshfl [vmem:[#allocation1 + $0x8] sm:$0xff pattern:$0x73625140]
      %v432 = vld.sshfl [vmem:[#allocation1 + $0x10] sm:$0xff pattern:$0x73625140]
      %v433 = vld.sshfl [vmem:[#allocation1 + $0x18] sm:$0xff pattern:$0x73625140]
      %438 = vrot.lane.b32.xlu0 %v430, 1
      %v439 = vpop.permute.xlu0 %438
      %440 = vrot.lane.b32.xlu0 %v431, 1
      %v441 = vpop.permute.xlu0 %440
      %442 = vrot.lane.b32.xlu0 %v432, 1
      %v443 = vpop.permute.xlu0 %442
      %444 = vrot.lane.b32.xlu0 %v433, 1
      %v445 = vpop.permute.xlu0 %444
      %vm446 = vcmp.lt.s32.totalorder %v335, 1
      %v447 = vsel %vm446, %v443, %v445
      %v448 = vsel %vm446, %v441, %v443
      %v449 = vsel %vm446, %v439, %v441
      %v450 = vsel %vm446, %v445, %v439
      %s451 = scalar_lea.vmem %s1, 3
      %v452 = vld [vmem:[%s451] ss:$8 sm:$0xf]
      %v454 = vperm.slane %v452, 0
      %v455 = vperm.slane %v452, 1
      %v456 = vperm.slane %v452, 2
      %v457 = vperm.slane %v452, 3
      %v462 = vmul.f32 %v450, %v454
      %v463 = vmul.f32 %v449, %v455
      %v464 = vmul.f32 %v448, %v456
      %v465 = vmul.f32 %v447, %v457
      %466 = vst [vmem:[#allocation1] ss:$4 sm:$0xff] %v307
      %v467 = vld.sshfl [vmem:[#allocation1] sm:$0xff pattern:$0x73625140]
      %v468 = vld.sshfl [vmem:[#allocation1 + $0x8] sm:$0xff pattern:$0x73625140]
      %v469 = vld.sshfl [vmem:[#allocation1 + $0x10] sm:$0xff pattern:$0x73625140]
      %v470 = vld.sshfl [vmem:[#allocation1 + $0x18] sm:$0xff pattern:$0x73625140]
      %475 = vrot.lane.b32.xlu0 %v467, 127
      %v476 = vpop.permute.xlu0 %475
      %477 = vrot.lane.b32.xlu0 %v468, 127
      %v478 = vpop.permute.xlu0 %477
      %479 = vrot.lane.b32.xlu0 %v469, 127
      %v480 = vpop.permute.xlu0 %479
      %481 = vrot.lane.b32.xlu0 %v470, 127
      %v482 = vpop.permute.xlu0 %481
      %vm483 = vcmp.lt.s32.totalorder %v335, 127
      %v484 = vsel %vm483, %v480, %v482
      %v485 = vsel %vm483, %v478, %v480
      %v486 = vsel %vm483, %v476, %v478
      %v487 = vsel %vm483, %v482, %v476
      %s488 = scalar_lea.vmem %s1, 5
      %v489 = vld [vmem:[%s488] ss:$8 sm:$0xf]
      %v491 = vperm.slane %v489, 0
      %v492 = vperm.slane %v489, 1
      %v493 = vperm.slane %v489, 2
      %v494 = vperm.slane %v489, 3
      %v499 = vmul.f32 %v486, %v491
      %v500 = vmul.f32 %v485, %v492
      %v501 = vmul.f32 %v484, %v493
      %v502 = vmul.f32 %v487, %v494
      %503 = vst [vmem:[#allocation1] ss:$4 sm:$0xff] %v307
      %v504 = vld.sshfl [vmem:[#allocation1] sm:$0xff pattern:$0x73625140]
      %v505 = vld.sshfl [vmem:[#allocation1 + $0x8] sm:$0xff pattern:$0x73625140]
      %v506 = vld.sshfl [vmem:[#allocation1 + $0x10] sm:$0xff pattern:$0x73625140]
      %v507 = vld.sshfl [vmem:[#allocation1 + $0x18] sm:$0xff pattern:$0x73625140]
      %512 = vrot.lane.b32.xlu0 %v504, 113
      %v513 = vpop.permute.xlu0 %512
      %514 = vrot.lane.b32.xlu0 %v505, 113
      %v515 = vpop.permute.xlu0 %514
      %516 = vrot.lane.b32.xlu0 %v506, 113
      %v517 = vpop.permute.xlu0 %516
      %518 = vrot.lane.b32.xlu0 %v507, 113
      %v519 = vpop.permute.xlu0 %518
      %vm520 = vcmp.lt.s32.totalorder %v335, 113
      %v521 = vsel %vm520, %v517, %v519
      %v522 = vsel %vm520, %v515, %v517
      %v523 = vsel %vm520, %v513, %v515
      %v524 = vsel %vm520, %v519, %v513
      %s525 = scalar_lea.vmem %s1, 6
      %v526 = vld [vmem:[%s525] ss:$8 sm:$0xf]
      %v528 = vperm.slane %v526, 0
      %v529 = vperm.slane %v526, 1
      %v530 = vperm.slane %v526, 2
      %v531 = vperm.slane %v526, 3
      %v536 = vmul.f32 %v523, %v528
      %v537 = vmul.f32 %v522, %v529
      %v538 = vmul.f32 %v521, %v530
      %v539 = vmul.f32 %v524, %v531
      %540 = vst [vmem:[#allocation1] ss:$4 sm:$0xff] %v307
      %v541 = vld.sshfl [vmem:[#allocation1] sm:$0xff pattern:$0x73625140]
      %v542 = vld.sshfl [vmem:[#allocation1 + $0x8] sm:$0xff pattern:$0x73625140]
      %v543 = vld.sshfl [vmem:[#allocation1 + $0x10] sm:$0xff pattern:$0x73625140]
      %v544 = vld.sshfl [vmem:[#allocation1 + $0x18] sm:$0xff pattern:$0x73625140]
      %549 = vrot.lane.b32.xlu0 %v541, 112
      %v550 = vpop.permute.xlu0 %549
      %551 = vrot.lane.b32.xlu0 %v542, 112
      %v552 = vpop.permute.xlu0 %551
      %553 = vrot.lane.b32.xlu0 %v543, 112
      %v554 = vpop.permute.xlu0 %553
      %555 = vrot.lane.b32.xlu0 %v544, 112
      %v556 = vpop.permute.xlu0 %555
      %vm557 = vcmp.lt.s32.totalorder %v335, 112
      %v558 = vsel %vm557, %v554, %v556
      %v559 = vsel %vm557, %v552, %v554
      %v560 = vsel %vm557, %v550, %v552
      %v561 = vsel %vm557, %v556, %v550
      %s562 = scalar_lea.vmem %s1, 7
      %v563 = vld [vmem:[%s562] ss:$8 sm:$0xf]
      %v565 = vperm.slane %v563, 0
      %v566 = vperm.slane %v563, 1
      %v567 = vperm.slane %v563, 2
      %v568 = vperm.slane %v563, 3
      %v573 = vmul.f32 %v560, %v565
      %v574 = vmul.f32 %v559, %v566
      %v575 = vmul.f32 %v558, %v567
      %v576 = vmul.f32 %v561, %v568
      %577 = vst [vmem:[#allocation1] ss:$4 sm:$0xff] %v307
      %v578 = vld.sshfl [vmem:[#allocation1] sm:$0xff pattern:$0x73625140]
      %v579 = vld.sshfl [vmem:[#allocation1 + $0x8] sm:$0xff pattern:$0x73625140]
      %v580 = vld.sshfl [vmem:[#allocation1 + $0x10] sm:$0xff pattern:$0x73625140]
      %v581 = vld.sshfl [vmem:[#allocation1 + $0x18] sm:$0xff pattern:$0x73625140]
      %586 = vrot.lane.b32.xlu0 %v578, 111
      %v587 = vpop.permute.xlu0 %586
      %588 = vrot.lane.b32.xlu0 %v579, 111
      %v589 = vpop.permute.xlu0 %588
      %590 = vrot.lane.b32.xlu0 %v580, 111
      %v591 = vpop.permute.xlu0 %590
      %592 = vrot.lane.b32.xlu0 %v581, 111
      %v593 = vpop.permute.xlu0 %592
      %vm594 = vcmp.lt.s32.totalorder %v335, 111
      %v595 = vsel %vm594, %v591, %v593
      %v596 = vsel %vm594, %v589, %v591
      %v597 = vsel %vm594, %v587, %v589
      %v598 = vsel %vm594, %v593, %v587
      %s599 = scalar_lea.vmem %s1, 32
      %v600 = vld [vmem:[%s599] ss:$8 sm:$0xf]
      %v602 = vperm.slane %v600, 0
      %v603 = vperm.slane %v600, 1
      %v604 = vperm.slane %v600, 2
      %v605 = vperm.slane %v600, 3
      %v610 = vmul.f32 %v597, %v602
      %v611 = vmul.f32 %v596, %v603
      %v612 = vmul.f32 %v595, %v604
      %v613 = vmul.f32 %v598, %v605
      %v618 = vrot.slane %v388, 6
      %v619 = vrot.slane %v389, 6
      %v620 = vrot.slane %v390, 6
      %v621 = vrot.slane %v391, 6
      %v630 = vrot.slane %v425, 4
      %v631 = vrot.slane %v426, 4
      %v632 = vrot.slane %v427, 4
      %v633 = vrot.slane %v428, 4
      %v642 = vrot.slane %v462, 2
      %v643 = vrot.slane %v463, 2
      %v644 = vrot.slane %v464, 2
      %v645 = vrot.slane %v465, 2
      %650 = vst [vmem:[#allocation1] ss:$4 sm:$0xff] %v307
      %v651 = vld.sshfl [vmem:[#allocation1] sm:$0xff pattern:$0x73625140]
      %v652 = vld.sshfl [vmem:[#allocation1 + $0x8] sm:$0xff pattern:$0x73625140]
      %v653 = vld.sshfl [vmem:[#allocation1 + $0x10] sm:$0xff pattern:$0x73625140]
      %v654 = vld.sshfl [vmem:[#allocation1 + $0x18] sm:$0xff pattern:$0x73625140]
      %v663 = vrot.slane %v499, 6
      %v664 = vrot.slane %v500, 6
      %v665 = vrot.slane %v501, 6
      %v666 = vrot.slane %v502, 6
      %v675 = vrot.slane %v536, 4
      %v676 = vrot.slane %v537, 4
      %v677 = vrot.slane %v538, 4
      %v678 = vrot.slane %v539, 4
      %v687 = vrot.slane %v573, 2
      %v688 = vrot.slane %v574, 2
      %v689 = vrot.slane %v575, 2
      %v690 = vrot.slane %v576, 2
      %vm695 = vcmask 1041408
      %v696 = vsel %vm695, %v351, %v618
      %v697 = vsel %vm695, %v352, %v619
      %v698 = vsel %vm695, %v353, %v620
      %v699 = vsel %vm695, %v354, %v621
      %vm700 = vcmask 1043456
      %v701 = vsel %vm700, %v696, %v630
      %v702 = vsel %vm700, %v697, %v631
      %v703 = vsel %vm700, %v698, %v632
      %v704 = vsel %vm700, %v699, %v633
      %vm705 = vcmask 1045504
      %v706 = vsel %vm705, %v701, %v642
      %v707 = vsel %vm705, %v702, %v643
      %v708 = vsel %vm705, %v703, %v644
      %v709 = vsel %vm705, %v704, %v645
      %v710 = vsel %vm695, %v651, %v663
      %v711 = vsel %vm695, %v652, %v664
      %v712 = vsel %vm695, %v653, %v665
      %v713 = vsel %vm695, %v654, %v666
      %v714 = vsel %vm700, %v710, %v675
      %v715 = vsel %vm700, %v711, %v676
      %v716 = vsel %vm700, %v712, %v677
      %v717 = vsel %vm700, %v713, %v678
      %v718 = vsel %vm705, %v714, %v687
      %v719 = vsel %vm705, %v715, %v688
      %v720 = vsel %vm705, %v716, %v689
      %v721 = vsel %vm705, %v717, %v690
      %v722 = vpack.c.bf16 %v718, %v706
      %v723 = vpack.c.bf16 %v719, %v707
      %v724 = vpack.c.bf16 %v720, %v708
      %v725 = vpack.c.bf16 %v721, %v709
      %v726 = vpack.c.bf16 %v610, %v610
      %v727 = vpack.c.bf16 %v611, %v611
      %v728 = vpack.c.bf16 %v612, %v612
      %v729 = vpack.c.bf16 %v613, %v613
      %731 = vset.pattern.permute.xlu0 0
      %732 = vperm.xlu0 %731, %v312
      %v733 = vpop.permute.xlu0 %732
      %736 = vset.pattern.permute.xlu0 0
      %737 = vperm.xlu0 %736, %v313
      %v738 = vpop.permute.xlu0 %737
      %741 = vset.pattern.permute.xlu0 0
      %742 = vperm.xlu0 %741, %v314
      %v743 = vpop.permute.xlu0 %742
      %746 = vset.pattern.permute.xlu0 0
      %747 = vperm.xlu0 %746, %v315
      %v748 = vpop.permute.xlu0 %747
      %v754 = vunpack.c.l.b16 %v308
      %v755 = vunpack.c.l.b16 %v309
      %v756 = vunpack.c.l.b16 %v310
      %v757 = vunpack.c.l.b16 %v311
      %v758 = vpack.c.b16 %v755, %v754
      %v759 = vpack.c.b16 %v757, %v756
      %vm760 = vcmask 146432
      %v762 = vsel %vm760, %v758, 0
      %v765 = vsel %vm760, %v759, 0
      %vm767 = vcmask 1040384
      %v769 = vsel %vm767, %v726, 0
      %v772 = vsel %vm767, %v727, 0
      %v775 = vsel %vm767, %v728, 0
      %v778 = vsel %vm767, %v729, 0
      %780 = vmatpush.bf16.msra.mxu0 0
      %781 = vmatpush.bf16.msra.mxu0 0
      %782 = vmatpush.bf16.msra.mxu0 0
      %783 = vmatpush.bf16.msra.mxu0 0
      %784 = vmatpush.bf16.msra.mxu0 0
      %785 = vmatpush.bf16.msra.mxu0 0
      %786 = vmatpush.bf16.msra.mxu0 %v769
      %787 = vmatpush.bf16.msra.mxu0 %v722
      %788 = vmatmul.bf16.gmra.mxu0 %v762
      %v789 = vpop.f32.mrf.mxu0
      %v790 = vadd.f32 %v733, %v789
      %v791 = vpop.f32.mrf.mxu0
      %v792 = vadd.f32 %v738, %v791
      %793 = vmatmul.bf16.gmra.mxu0 %v765
      %v794 = vpop.f32.mrf.mxu0
      %v795 = vadd.f32 %v743, %v794
      %v796 = vpop.f32.mrf.mxu0
      %v797 = vadd.f32 %v748, %v796
      %798 = vdwg.mxu0
      %799 = vmatpush.bf16.msra.mxu0 0
      %800 = vmatpush.bf16.msra.mxu0 0
      %801 = vmatpush.bf16.msra.mxu0 0
      %802 = vmatpush.bf16.msra.mxu0 0
      %803 = vmatpush.bf16.msra.mxu0 0
      %804 = vmatpush.bf16.msra.mxu0 0
      %805 = vmatpush.bf16.msra.mxu0 %v772
      %806 = vmatpush.bf16.msra.mxu0 %v723
      %807 = vmatmul.bf16.gmra.mxu0 %v762
      %v808 = vpop.f32.mrf.mxu0
      %v809 = vadd.f32 %v733, %v808
      %v810 = vpop.f32.mrf.mxu0
      %v811 = vadd.f32 %v738, %v810
      %812 = vmatmul.bf16.gmra.mxu0 %v765
      %v813 = vpop.f32.mrf.mxu0
      %v814 = vadd.f32 %v743, %v813
      %v815 = vpop.f32.mrf.mxu0
      %v816 = vadd.f32 %v748, %v815
      %817 = vdwg.mxu0
      %818 = vmatpush.bf16.msra.mxu0 0
      %819 = vmatpush.bf16.msra.mxu0 0
      %820 = vmatpush.bf16.msra.mxu0 0
      %821 = vmatpush.bf16.msra.mxu0 0
      %822 = vmatpush.bf16.msra.mxu0 0
      %823 = vmatpush.bf16.msra.mxu0 0
      %824 = vmatpush.bf16.msra.mxu0 %v775
      %825 = vmatpush.bf16.msra.mxu0 %v724
      %826 = vmatmul.bf16.gmra.mxu0 %v762
      %v827 = vpop.f32.mrf.mxu0
      %v828 = vadd.f32 %v733, %v827
      %v829 = vpop.f32.mrf.mxu0
      %v830 = vadd.f32 %v738, %v829
      %831 = vmatmul.bf16.gmra.mxu0 %v765
      %v832 = vpop.f32.mrf.mxu0
      %v833 = vadd.f32 %v743, %v832
      %v834 = vpop.f32.mrf.mxu0
      %v835 = vadd.f32 %v748, %v834
      %836 = vdwg.mxu0
      %837 = vmatpush.bf16.msra.mxu0 0
      %838 = vmatpush.bf16.msra.mxu0 0
      %839 = vmatpush.bf16.msra.mxu0 0
      %840 = vmatpush.bf16.msra.mxu0 0
      %841 = vmatpush.bf16.msra.mxu0 0
      %842 = vmatpush.bf16.msra.mxu0 0
      %843 = vmatpush.bf16.msra.mxu0 %v778
      %844 = vmatpush.bf16.msra.mxu0 %v725
      %845 = vmatmul.bf16.gmra.mxu0 %v762
      %v846 = vpop.f32.mrf.mxu0
      %v847 = vadd.f32 %v733, %v846
      %v848 = vpop.f32.mrf.mxu0
      %v849 = vadd.f32 %v738, %v848
      %850 = vmatmul.bf16.gmra.mxu0 %v765
      %v851 = vpop.f32.mrf.mxu0
      %v852 = vadd.f32 %v743, %v851
      %v853 = vpop.f32.mrf.mxu0
      %v854 = vadd.f32 %v748, %v853
      %855 = vdwg.mxu0
      %v856 = vld [vmem:[%s6] sm:$0xff]
      %v857 = vld [vmem:[%s6 + $0x8] sm:$0xff]
      %v858 = vld [vmem:[%s6 + $0x10] sm:$0xff]
      %v859 = vld [vmem:[%s6 + $0x18] sm:$0xff]
      %v860 = vld [vmem:[%s7] sm:$0xff]
      %v861 = vld [vmem:[%s7 + $0x8] sm:$0xff]
      %v862 = vld [vmem:[%s7 + $0x10] sm:$0xff]
      %v863 = vld [vmem:[%s7 + $0x18] sm:$0xff]
      %v864 = vadd.f32 %v790, %v809
      %865 = vadd.xlane.f32.xlu0 %v864
      %v866 = vpop.xlane.xlu0 %865
      %v867 = vadd.f32 %v792, %v811
      %868 = vadd.xlane.f32.xlu0 %v867
      %v869 = vpop.xlane.xlu0 %868
      %v870 = vadd.f32 %v795, %v814
      %871 = vadd.xlane.f32.xlu0 %v870
      %v872 = vpop.xlane.xlu0 %871
      %v873 = vadd.f32 %v797, %v816
      %874 = vadd.xlane.f32.xlu0 %v873
      %v875 = vpop.xlane.xlu0 %874
      %v876 = vmul.f32 %v866, 0.00390625
      %v877 = vmul.f32 %v869, 0.00390625
      %v878 = vmul.f32 %v872, 0.00390625
      %v879 = vmul.f32 %v875, 0.00390625
      %v880 = vsub.f32 %v790, %v876
      %v881 = vsub.f32 %v809, %v876
      %v882 = vsub.f32 %v792, %v877
      %v883 = vsub.f32 %v811, %v877
      %v884 = vsub.f32 %v795, %v878
      %v885 = vsub.f32 %v814, %v878
      %v886 = vsub.f32 %v797, %v879
      %v887 = vsub.f32 %v816, %v879
      %v888 = vmul.f32 %v880, %v880
      %v889 = vmul.f32 %v881, %v881
      %v890 = vmul.f32 %v882, %v882
      %v891 = vmul.f32 %v883, %v883
      %v892 = vmul.f32 %v884, %v884
      %v893 = vmul.f32 %v885, %v885
      %v894 = vmul.f32 %v886, %v886
      %v895 = vmul.f32 %v887, %v887
      %v896 = vadd.f32 %v888, %v889
      %897 = vadd.xlane.f32.xlu0 %v896
      %v898 = vpop.xlane.xlu0 %897
      %v899 = vadd.f32 %v890, %v891
      %900 = vadd.xlane.f32.xlu0 %v899
      %v901 = vpop.xlane.xlu0 %900
      %v902 = vadd.f32 %v892, %v893
      %903 = vadd.xlane.f32.xlu0 %v902
      %v904 = vpop.xlane.xlu0 %903
      %v905 = vadd.f32 %v894, %v895
      %906 = vadd.xlane.f32.xlu0 %v905
      %v907 = vpop.xlane.xlu0 %906
      %v908 = vmul.f32 %v898, 0.00390625
      %v909 = vmul.f32 %v901, 0.00390625
      %v910 = vmul.f32 %v904, 0.00390625
      %v911 = vmul.f32 %v907, 0.00390625
      %v912 = vadd.f32 %v908, 1e-05
      %v913 = vadd.f32 %v909, 1e-05
      %v914 = vadd.f32 %v910, 1e-05
      %v915 = vadd.f32 %v911, 1e-05
      %v916 = vrsqrt.pop %v912
      %v917 = vmul.f32 %v916, %v912
      %v918 = vmul.f32 %v917, %v916
      %v919 = vmul.f32 0.5, %v918
      %v920 = vsub.f32 1.5, %v919
      %v921 = vmul.f32 %v916, %v920
      %vm922 = vweird.f32 %v912
      %vm923 = vweird.f32 %v916
      %vm924 = vmor %vm922, %vm923
      %v925 = vsel %vm924, %v916, %v921
      %v926 = vrsqrt.pop %v913
      %v927 = vmul.f32 %v926, %v913
      %v928 = vmul.f32 %v927, %v926
      %v929 = vmul.f32 0.5, %v928
      %v930 = vsub.f32 1.5, %v929
      %v931 = vmul.f32 %v926, %v930
      %vm932 = vweird.f32 %v913
      %vm933 = vweird.f32 %v926
      %vm934 = vmor %vm932, %vm933
      %v935 = vsel %vm934, %v926, %v931
      %v936 = vrsqrt.pop %v914
      %v937 = vmul.f32 %v936, %v914
      %v938 = vmul.f32 %v937, %v936
      %v939 = vmul.f32 0.5, %v938
      %v940 = vsub.f32 1.5, %v939
      %v941 = vmul.f32 %v936, %v940
      %vm942 = vweird.f32 %v914
      %vm943 = vweird.f32 %v936
      %vm944 = vmor %vm942, %vm943
      %v945 = vsel %vm944, %v936, %v941
      %v946 = vrsqrt.pop %v915
      %v947 = vmul.f32 %v946, %v915
      %v948 = vmul.f32 %v947, %v946
      %v949 = vmul.f32 0.5, %v948
      %v950 = vsub.f32 1.5, %v949
      %v951 = vmul.f32 %v946, %v950
      %vm952 = vweird.f32 %v915
      %vm953 = vweird.f32 %v946
      %vm954 = vmor %vm952, %vm953
      %v955 = vsel %vm954, %v946, %v951
      %v956 = vmul.f32 %v880, %v925
      %v957 = vmul.f32 %v881, %v925
      %v958 = vmul.f32 %v882, %v935
      %v959 = vmul.f32 %v883, %v935
      %v960 = vmul.f32 %v884, %v945
      %v961 = vmul.f32 %v885, %v945
      %v962 = vmul.f32 %v886, %v955
      %v963 = vmul.f32 %v887, %v955
      %965 = vset.pattern.permute.xlu0 0
      %966 = vperm.xlu0 %965, %v856
      %v967 = vpop.permute.xlu0 %966
      %970 = vset.pattern.permute.xlu0 0
      %971 = vperm.xlu0 %970, %v857
      %v972 = vpop.permute.xlu0 %971
      %975 = vset.pattern.permute.xlu0 0
      %976 = vperm.xlu0 %975, %v858
      %v977 = vpop.permute.xlu0 %976
      %980 = vset.pattern.permute.xlu0 0
      %981 = vperm.xlu0 %980, %v859
      %v982 = vpop.permute.xlu0 %981
      %v984 = vmul.f32 %v956, %v967
      %v985 = vmul.f32 %v957, %v967
      %v986 = vmul.f32 %v958, %v972
      %v987 = vmul.f32 %v959, %v972
      %v988 = vmul.f32 %v960, %v977
      %v989 = vmul.f32 %v961, %v977
      %v990 = vmul.f32 %v962, %v982
      %v991 = vmul.f32 %v963, %v982
      %993 = vset.pattern.permute.xlu0 0
      %994 = vperm.xlu0 %993, %v860
      %v995 = vpop.permute.xlu0 %994
      %998 = vset.pattern.permute.xlu0 0
      %999 = vperm.xlu0 %998, %v861
      %v1000 = vpop.permute.xlu0 %999
      %1003 = vset.pattern.permute.xlu0 0
      %1004 = vperm.xlu0 %1003, %v862
      %v1005 = vpop.permute.xlu0 %1004
      %1008 = vset.pattern.permute.xlu0 0
      %1009 = vperm.xlu0 %1008, %v863
      %v1010 = vpop.permute.xlu0 %1009
      %v1012 = vadd.f32 %v984, %v995
      %v1013 = vadd.f32 %v985, %v995
      %v1014 = vadd.f32 %v986, %v1000
      %v1015 = vadd.f32 %v987, %v1000
      %v1016 = vadd.f32 %v988, %v1005
      %v1017 = vadd.f32 %v989, %v1005
      %v1018 = vadd.f32 %v990, %v1010
      %v1019 = vadd.f32 %v991, %v1010
      %v1020 = vmax.f32 %v1012, 0.0
      %v1021 = vmax.f32 %v1013, 0.0
      %v1022 = vmax.f32 %v1014, 0.0
      %v1023 = vmax.f32 %v1015, 0.0
      %v1024 = vmax.f32 %v1016, 0.0
      %v1025 = vmax.f32 %v1017, 0.0
      %v1026 = vmax.f32 %v1018, 0.0
      %v1027 = vmax.f32 %v1019, 0.0
      %v1028 = vadd.f32 %v828, %v847
      %1029 = vadd.xlane.f32.xlu0 %v1028
      %v1030 = vpop.xlane.xlu0 %1029
      %v1031 = vadd.f32 %v830, %v849
      %1032 = vadd.xlane.f32.xlu0 %v1031
      %v1033 = vpop.xlane.xlu0 %1032
      %v1034 = vadd.f32 %v833, %v852
      %1035 = vadd.xlane.f32.xlu0 %v1034
      %v1036 = vpop.xlane.xlu0 %1035
      %v1037 = vadd.f32 %v835, %v854
      %1038 = vadd.xlane.f32.xlu0 %v1037
      %v1039 = vpop.xlane.xlu0 %1038
      %v1040 = vmul.f32 %v1030, 0.00390625
      %v1041 = vmul.f32 %v1033, 0.00390625
      %v1042 = vmul.f32 %v1036, 0.00390625
      %v1043 = vmul.f32 %v1039, 0.00390625
      %v1044 = vsub.f32 %v828, %v1040
      %v1045 = vsub.f32 %v847, %v1040
      %v1046 = vsub.f32 %v830, %v1041
      %v1047 = vsub.f32 %v849, %v1041
      %v1048 = vsub.f32 %v833, %v1042
      %v1049 = vsub.f32 %v852, %v1042
      %v1050 = vsub.f32 %v835, %v1043
      %v1051 = vsub.f32 %v854, %v1043
      %v1052 = vmul.f32 %v1044, %v1044
      %v1053 = vmul.f32 %v1045, %v1045
      %v1054 = vmul.f32 %v1046, %v1046
      %v1055 = vmul.f32 %v1047, %v1047
      %v1056 = vmul.f32 %v1048, %v1048
      %v1057 = vmul.f32 %v1049, %v1049
      %v1058 = vmul.f32 %v1050, %v1050
      %v1059 = vmul.f32 %v1051, %v1051
      %v1060 = vadd.f32 %v1052, %v1053
      %1061 = vadd.xlane.f32.xlu0 %v1060
      %v1062 = vpop.xlane.xlu0 %1061
      %v1063 = vadd.f32 %v1054, %v1055
      %1064 = vadd.xlane.f32.xlu0 %v1063
      %v1065 = vpop.xlane.xlu0 %1064
      %v1066 = vadd.f32 %v1056, %v1057
      %1067 = vadd.xlane.f32.xlu0 %v1066
      %v1068 = vpop.xlane.xlu0 %1067
      %v1069 = vadd.f32 %v1058, %v1059
      %1070 = vadd.xlane.f32.xlu0 %v1069
      %v1071 = vpop.xlane.xlu0 %1070
      %v1072 = vmul.f32 %v1062, 0.00390625
      %v1073 = vmul.f32 %v1065, 0.00390625
      %v1074 = vmul.f32 %v1068, 0.00390625
      %v1075 = vmul.f32 %v1071, 0.00390625
      %v1076 = vadd.f32 %v1072, 1e-05
      %v1077 = vadd.f32 %v1073, 1e-05
      %v1078 = vadd.f32 %v1074, 1e-05
      %v1079 = vadd.f32 %v1075, 1e-05
      %v1080 = vrsqrt.pop %v1076
      %v1081 = vmul.f32 %v1080, %v1076
      %v1082 = vmul.f32 %v1081, %v1080
      %v1083 = vmul.f32 0.5, %v1082
      %v1084 = vsub.f32 1.5, %v1083
      %v1085 = vmul.f32 %v1080, %v1084
      %vm1086 = vweird.f32 %v1076
      %vm1087 = vweird.f32 %v1080
      %vm1088 = vmor %vm1086, %vm1087
      %v1089 = vsel %vm1088, %v1080, %v1085
      %v1090 = vrsqrt.pop %v1077
      %v1091 = vmul.f32 %v1090, %v1077
      %v1092 = vmul.f32 %v1091, %v1090
      %v1093 = vmul.f32 0.5, %v1092
      %v1094 = vsub.f32 1.5, %v1093
      %v1095 = vmul.f32 %v1090, %v1094
      %vm1096 = vweird.f32 %v1077
      %vm1097 = vweird.f32 %v1090
      %vm1098 = vmor %vm1096, %vm1097
      %v1099 = vsel %vm1098, %v1090, %v1095
      %v1100 = vrsqrt.pop %v1078
      %v1101 = vmul.f32 %v1100, %v1078
      %v1102 = vmul.f32 %v1101, %v1100
      %v1103 = vmul.f32 0.5, %v1102
      %v1104 = vsub.f32 1.5, %v1103
      %v1105 = vmul.f32 %v1100, %v1104
      %vm1106 = vweird.f32 %v1078
      %vm1107 = vweird.f32 %v1100
      %vm1108 = vmor %vm1106, %vm1107
      %v1109 = vsel %vm1108, %v1100, %v1105
      %v1110 = vrsqrt.pop %v1079
      %v1111 = vmul.f32 %v1110, %v1079
      %v1112 = vmul.f32 %v1111, %v1110
      %v1113 = vmul.f32 0.5, %v1112
      %v1114 = vsub.f32 1.5, %v1113
      %v1115 = vmul.f32 %v1110, %v1114
      %vm1116 = vweird.f32 %v1079
      %vm1117 = vweird.f32 %v1110
      %vm1118 = vmor %vm1116, %vm1117
      %v1119 = vsel %vm1118, %v1110, %v1115
      %v1120 = vmul.f32 %v1044, %v1089
      %v1121 = vmul.f32 %v1045, %v1089
      %v1122 = vmul.f32 %v1046, %v1099
      %v1123 = vmul.f32 %v1047, %v1099
      %v1124 = vmul.f32 %v1048, %v1109
      %v1125 = vmul.f32 %v1049, %v1109
      %v1126 = vmul.f32 %v1050, %v1119
      %v1127 = vmul.f32 %v1051, %v1119
      %v1128 = vmul.f32 %v1120, %v967
      %v1129 = vmul.f32 %v1121, %v967
      %v1130 = vmul.f32 %v1122, %v972
      %v1131 = vmul.f32 %v1123, %v972
      %v1132 = vmul.f32 %v1124, %v977
      %v1133 = vmul.f32 %v1125, %v977
      %v1134 = vmul.f32 %v1126, %v982
      %v1135 = vmul.f32 %v1127, %v982
      %v1136 = vadd.f32 %v1128, %v995
      %v1137 = vadd.f32 %v1129, %v995
      %v1138 = vadd.f32 %v1130, %v1000
      %v1139 = vadd.f32 %v1131, %v1000
      %v1140 = vadd.f32 %v1132, %v1005
      %v1141 = vadd.f32 %v1133, %v1005
      %v1142 = vadd.f32 %v1134, %v1010
      %v1143 = vadd.f32 %v1135, %v1010
      %v1144 = vmax.f32 %v1136, 0.0
      %v1145 = vmax.f32 %v1137, 0.0
      %v1146 = vmax.f32 %v1138, 0.0
      %v1147 = vmax.f32 %v1139, 0.0
      %v1148 = vmax.f32 %v1140, 0.0
      %v1149 = vmax.f32 %v1141, 0.0
      %v1150 = vmax.f32 %v1142, 0.0
      %v1151 = vmax.f32 %v1143, 0.0
      %v1152 = vld [vmem:[%s4] sm:$0xff]
      %v1153 = vld [vmem:[%s4 + $0x8] sm:$0xf]
      %v1154 = vld [vmem:[%s4 + $0xc] sm:$0xff]
      %v1155 = vld [vmem:[%s4 + $0x14] sm:$0xf]
      %v1156 = vld [vmem:[%s4 + $0x18] sm:$0xff]
      %v1157 = vld [vmem:[%s4 + $0x20] sm:$0xf]
      %v1158 = vld [vmem:[%s4 + $0x24] sm:$0xff]
      %v1159 = vld [vmem:[%s4 + $0x2c] sm:$0xf]
      %v1160 = vld [vmem:[%s5] sm:$0xff]
      %v1161 = vld [vmem:[%s5 + $0x8] sm:$0xff]
      %v1162 = vld [vmem:[%s5 + $0x10] sm:$0xff]
      %v1163 = vld [vmem:[%s5 + $0x18] sm:$0xff]
      %1164 = vrot.lane.b32.xlu0 %v1020, 17
      %v1165 = vpop.permute.xlu0 %1164
      %1166 = vrot.lane.b32.xlu0 %v1022, 17
      %v1167 = vpop.permute.xlu0 %1166
      %1168 = vrot.lane.b32.xlu0 %v1024, 17
      %v1169 = vpop.permute.xlu0 %1168
      %1170 = vrot.lane.b32.xlu0 %v1026, 17
      %v1171 = vpop.permute.xlu0 %1170
      %1172 = vrot.lane.b32.xlu0 %v1021, 17
      %v1173 = vpop.permute.xlu0 %1172
      %1174 = vrot.lane.b32.xlu0 %v1023, 17
      %v1175 = vpop.permute.xlu0 %1174
      %1176 = vrot.lane.b32.xlu0 %v1025, 17
      %v1177 = vpop.permute.xlu0 %1176
      %1178 = vrot.lane.b32.xlu0 %v1027, 17
      %v1179 = vpop.permute.xlu0 %1178
      %1180 = vrot.lane.b32.xlu0 %v1144, 17
      %v1181 = vpop.permute.xlu0 %1180
      %1182 = vrot.lane.b32.xlu0 %v1146, 17
      %v1183 = vpop.permute.xlu0 %1182
      %1184 = vrot.lane.b32.xlu0 %v1148, 17
      %v1185 = vpop.permute.xlu0 %1184
      %1186 = vrot.lane.b32.xlu0 %v1150, 17
      %v1187 = vpop.permute.xlu0 %1186
      %1188 = vrot.lane.b32.xlu0 %v1145, 17
      %v1189 = vpop.permute.xlu0 %1188
      %1190 = vrot.lane.b32.xlu0 %v1147, 17
      %v1191 = vpop.permute.xlu0 %1190
      %1192 = vrot.lane.b32.xlu0 %v1149, 17
      %v1193 = vpop.permute.xlu0 %1192
      %1194 = vrot.lane.b32.xlu0 %v1151, 17
      %v1195 = vpop.permute.xlu0 %1194
      %v1196 = vsel %vm336, %v1181, %v1189
      %v1197 = vsel %vm336, %v1183, %v1191
      %v1198 = vsel %vm336, %v1185, %v1193
      %v1199 = vsel %vm336, %v1187, %v1195
      %v1200 = vsel %vm336, %v1173, %v1181
      %v1201 = vsel %vm336, %v1175, %v1183
      %v1202 = vsel %vm336, %v1177, %v1185
      %v1203 = vsel %vm336, %v1179, %v1187
      %v1204 = vsel %vm336, %v1165, %v1173
      %v1205 = vsel %vm336, %v1167, %v1175
      %v1206 = vsel %vm336, %v1169, %v1177
      %v1207 = vsel %vm336, %v1171, %v1179
      %v1208 = vsel %vm336, %v1189, %v1165
      %v1209 = vsel %vm336, %v1191, %v1167
      %v1210 = vsel %vm336, %v1193, %v1169
      %v1211 = vsel %vm336, %v1195, %v1171
      %v1212 = vmul.f32 %v1208, %v343
      %v1213 = vmul.f32 %v1204, %v344
      %v1214 = vmul.f32 %v1200, %v345
      %v1215 = vmul.f32 %v1196, %v346
      %v1216 = vmul.f32 %v1209, %v343
      %v1217 = vmul.f32 %v1205, %v344
      %v1218 = vmul.f32 %v1201, %v345
      %v1219 = vmul.f32 %v1197, %v346
      %v1220 = vmul.f32 %v1210, %v343
      %v1221 = vmul.f32 %v1206, %v344
      %v1222 = vmul.f32 %v1202, %v345
      %v1223 = vmul.f32 %v1198, %v346
      %v1224 = vmul.f32 %v1211, %v343
      %v1225 = vmul.f32 %v1207, %v344
      %v1226 = vmul.f32 %v1203, %v345
      %v1227 = vmul.f32 %v1199, %v346
      %1228 = vrot.lane.b32.xlu0 %v1020, 16
      %v1229 = vpop.permute.xlu0 %1228
      %1230 = vrot.lane.b32.xlu0 %v1022, 16
      %v1231 = vpop.permute.xlu0 %1230
      %1232 = vrot.lane.b32.xlu0 %v1024, 16
      %v1233 = vpop.permute.xlu0 %1232
      %1234 = vrot.lane.b32.xlu0 %v1026, 16
      %v1235 = vpop.permute.xlu0 %1234
      %1236 = vrot.lane.b32.xlu0 %v1021, 16
      %v1237 = vpop.permute.xlu0 %1236
      %1238 = vrot.lane.b32.xlu0 %v1023, 16
      %v1239 = vpop.permute.xlu0 %1238
      %1240 = vrot.lane.b32.xlu0 %v1025, 16
      %v1241 = vpop.permute.xlu0 %1240
      %1242 = vrot.lane.b32.xlu0 %v1027, 16
      %v1243 = vpop.permute.xlu0 %1242
      %1244 = vrot.lane.b32.xlu0 %v1144, 16
      %v1245 = vpop.permute.xlu0 %1244
      %1246 = vrot.lane.b32.xlu0 %v1146, 16
      %v1247 = vpop.permute.xlu0 %1246
      %1248 = vrot.lane.b32.xlu0 %v1148, 16
      %v1249 = vpop.permute.xlu0 %1248
      %1250 = vrot.lane.b32.xlu0 %v1150, 16
      %v1251 = vpop.permute.xlu0 %1250
      %1252 = vrot.lane.b32.xlu0 %v1145, 16
      %v1253 = vpop.permute.xlu0 %1252
      %1254 = vrot.lane.b32.xlu0 %v1147, 16
      %v1255 = vpop.permute.xlu0 %1254
      %1256 = vrot.lane.b32.xlu0 %v1149, 16
      %v1257 = vpop.permute.xlu0 %1256
      %1258 = vrot.lane.b32.xlu0 %v1151, 16
      %v1259 = vpop.permute.xlu0 %1258
      %v1260 = vsel %vm372, %v1245, %v1253
      %v1261 = vsel %vm372, %v1247, %v1255
      %v1262 = vsel %vm372, %v1249, %v1257
      %v1263 = vsel %vm372, %v1251, %v1259
      %v1264 = vsel %vm372, %v1237, %v1245
      %v1265 = vsel %vm372, %v1239, %v1247
      %v1266 = vsel %vm372, %v1241, %v1249
      %v1267 = vsel %vm372, %v1243, %v1251
      %v1268 = vsel %vm372, %v1229, %v1237
      %v1269 = vsel %vm372, %v1231, %v1239
      %v1270 = vsel %vm372, %v1233, %v1241
      %v1271 = vsel %vm372, %v1235, %v1243
      %v1272 = vsel %vm372, %v1253, %v1229
      %v1273 = vsel %vm372, %v1255, %v1231
      %v1274 = vsel %vm372, %v1257, %v1233
      %v1275 = vsel %vm372, %v1259, %v1235
      %v1276 = vmul.f32 %v1272, %v380
      %v1277 = vmul.f32 %v1268, %v381
      %v1278 = vmul.f32 %v1264, %v382
      %v1279 = vmul.f32 %v1260, %v383
      %v1280 = vmul.f32 %v1273, %v380
      %v1281 = vmul.f32 %v1269, %v381
      %v1282 = vmul.f32 %v1265, %v382
      %v1283 = vmul.f32 %v1261, %v383
      %v1284 = vmul.f32 %v1274, %v380
      %v1285 = vmul.f32 %v1270, %v381
      %v1286 = vmul.f32 %v1266, %v382
      %v1287 = vmul.f32 %v1262, %v383
      %v1288 = vmul.f32 %v1275, %v380
      %v1289 = vmul.f32 %v1271, %v381
      %v1290 = vmul.f32 %v1267, %v382
      %v1291 = vmul.f32 %v1263, %v383
      %1292 = vrot.lane.b32.xlu0 %v1020, 15
      %v1293 = vpop.permute.xlu0 %1292
      %1294 = vrot.lane.b32.xlu0 %v1022, 15
      %v1295 = vpop.permute.xlu0 %1294
      %1296 = vrot.lane.b32.xlu0 %v1024, 15
      %v1297 = vpop.permute.xlu0 %1296
      %1298 = vrot.lane.b32.xlu0 %v1026, 15
      %v1299 = vpop.permute.xlu0 %1298
      %1300 = vrot.lane.b32.xlu0 %v1021, 15
      %v1301 = vpop.permute.xlu0 %1300
      %1302 = vrot.lane.b32.xlu0 %v1023, 15
      %v1303 = vpop.permute.xlu0 %1302
      %1304 = vrot.lane.b32.xlu0 %v1025, 15
      %v1305 = vpop.permute.xlu0 %1304
      %1306 = vrot.lane.b32.xlu0 %v1027, 15
      %v1307 = vpop.permute.xlu0 %1306
      %1308 = vrot.lane.b32.xlu0 %v1144, 15
      %v1309 = vpop.permute.xlu0 %1308
      %1310 = vrot.lane.b32.xlu0 %v1146, 15
      %v1311 = vpop.permute.xlu0 %1310
      %1312 = vrot.lane.b32.xlu0 %v1148, 15
      %v1313 = vpop.permute.xlu0 %1312
      %1314 = vrot.lane.b32.xlu0 %v1150, 15
      %v1315 = vpop.permute.xlu0 %1314
      %1316 = vrot.lane.b32.xlu0 %v1145, 15
      %v1317 = vpop.permute.xlu0 %1316
      %1318 = vrot.lane.b32.xlu0 %v1147, 15
      %v1319 = vpop.permute.xlu0 %1318
      %1320 = vrot.lane.b32.xlu0 %v1149, 15
      %v1321 = vpop.permute.xlu0 %1320
      %1322 = vrot.lane.b32.xlu0 %v1151, 15
      %v1323 = vpop.permute.xlu0 %1322
      %v1324 = vsel %vm409, %v1309, %v1317
      %v1325 = vsel %vm409, %v1311, %v1319
      %v1326 = vsel %vm409, %v1313, %v1321
      %v1327 = vsel %vm409, %v1315, %v1323
      %v1328 = vsel %vm409, %v1301, %v1309
      %v1329 = vsel %vm409, %v1303, %v1311
      %v1330 = vsel %vm409, %v1305, %v1313
      %v1331 = vsel %vm409, %v1307, %v1315
      %v1332 = vsel %vm409, %v1293, %v1301
      %v1333 = vsel %vm409, %v1295, %v1303
      %v1334 = vsel %vm409, %v1297, %v1305
      %v1335 = vsel %vm409, %v1299, %v1307
      %v1336 = vsel %vm409, %v1317, %v1293
      %v1337 = vsel %vm409, %v1319, %v1295
      %v1338 = vsel %vm409, %v1321, %v1297
      %v1339 = vsel %vm409, %v1323, %v1299
      %v1340 = vmul.f32 %v1336, %v417
      %v1341 = vmul.f32 %v1332, %v418
      %v1342 = vmul.f32 %v1328, %v419
      %v1343 = vmul.f32 %v1324, %v420
      %v1344 = vmul.f32 %v1337, %v417
      %v1345 = vmul.f32 %v1333, %v418
      %v1346 = vmul.f32 %v1329, %v419
      %v1347 = vmul.f32 %v1325, %v420
      %v1348 = vmul.f32 %v1338, %v417
      %v1349 = vmul.f32 %v1334, %v418
      %v1350 = vmul.f32 %v1330, %v419
      %v1351 = vmul.f32 %v1326, %v420
      %v1352 = vmul.f32 %v1339, %v417
      %v1353 = vmul.f32 %v1335, %v418
      %v1354 = vmul.f32 %v1331, %v419
      %v1355 = vmul.f32 %v1327, %v420
      %1356 = vrot.lane.b32.xlu0 %v1020, 1
      %v1357 = vpop.permute.xlu0 %1356
      %1358 = vrot.lane.b32.xlu0 %v1022, 1
      %v1359 = vpop.permute.xlu0 %1358
      %1360 = vrot.lane.b32.xlu0 %v1024, 1
      %v1361 = vpop.permute.xlu0 %1360
      %1362 = vrot.lane.b32.xlu0 %v1026, 1
      %v1363 = vpop.permute.xlu0 %1362
      %1364 = vrot.lane.b32.xlu0 %v1021, 1
      %v1365 = vpop.permute.xlu0 %1364
      %1366 = vrot.lane.b32.xlu0 %v1023, 1
      %v1367 = vpop.permute.xlu0 %1366
      %1368 = vrot.lane.b32.xlu0 %v1025, 1
      %v1369 = vpop.permute.xlu0 %1368
      %1370 = vrot.lane.b32.xlu0 %v1027, 1
      %v1371 = vpop.permute.xlu0 %1370
      %1372 = vrot.lane.b32.xlu0 %v1144, 1
      %v1373 = vpop.permute.xlu0 %1372
      %1374 = vrot.lane.b32.xlu0 %v1146, 1
      %v1375 = vpop.permute.xlu0 %1374
      %1376 = vrot.lane.b32.xlu0 %v1148, 1
      %v1377 = vpop.permute.xlu0 %1376
      %1378 = vrot.lane.b32.xlu0 %v1150, 1
      %v1379 = vpop.permute.xlu0 %1378
      %1380 = vrot.lane.b32.xlu0 %v1145, 1
      %v1381 = vpop.permute.xlu0 %1380
      %1382 = vrot.lane.b32.xlu0 %v1147, 1
      %v1383 = vpop.permute.xlu0 %1382
      %1384 = vrot.lane.b32.xlu0 %v1149, 1
      %v1385 = vpop.permute.xlu0 %1384
      %1386 = vrot.lane.b32.xlu0 %v1151, 1
      %v1387 = vpop.permute.xlu0 %1386
      %v1388 = vsel %vm446, %v1373, %v1381
      %v1389 = vsel %vm446, %v1375, %v1383
      %v1390 = vsel %vm446, %v1377, %v1385
      %v1391 = vsel %vm446, %v1379, %v1387
      %v1392 = vsel %vm446, %v1365, %v1373
      %v1393 = vsel %vm446, %v1367, %v1375
      %v1394 = vsel %vm446, %v1369, %v1377
      %v1395 = vsel %vm446, %v1371, %v1379
      %v1396 = vsel %vm446, %v1357, %v1365
      %v1397 = vsel %vm446, %v1359, %v1367
      %v1398 = vsel %vm446, %v1361, %v1369
      %v1399 = vsel %vm446, %v1363, %v1371
      %v1400 = vsel %vm446, %v1381, %v1357
      %v1401 = vsel %vm446, %v1383, %v1359
      %v1402 = vsel %vm446, %v1385, %v1361
      %v1403 = vsel %vm446, %v1387, %v1363
      %v1404 = vmul.f32 %v1400, %v454
      %v1405 = vmul.f32 %v1396, %v455
      %v1406 = vmul.f32 %v1392, %v456
      %v1407 = vmul.f32 %v1388, %v457
      %v1408 = vmul.f32 %v1401, %v454
      %v1409 = vmul.f32 %v1397, %v455
      %v1410 = vmul.f32 %v1393, %v456
      %v1411 = vmul.f32 %v1389, %v457
      %v1412 = vmul.f32 %v1402, %v454
      %v1413 = vmul.f32 %v1398, %v455
      %v1414 = vmul.f32 %v1394, %v456
      %v1415 = vmul.f32 %v1390, %v457
      %v1416 = vmul.f32 %v1403, %v454
      %v1417 = vmul.f32 %v1399, %v455
      %v1418 = vmul.f32 %v1395, %v456
      %v1419 = vmul.f32 %v1391, %v457
      %1420 = vrot.lane.b32.xlu0 %v1020, 127
      %v1421 = vpop.permute.xlu0 %1420
      %1422 = vrot.lane.b32.xlu0 %v1022, 127
      %v1423 = vpop.permute.xlu0 %1422
      %1424 = vrot.lane.b32.xlu0 %v1024, 127
      %v1425 = vpop.permute.xlu0 %1424
      %1426 = vrot.lane.b32.xlu0 %v1026, 127
      %v1427 = vpop.permute.xlu0 %1426
      %1428 = vrot.lane.b32.xlu0 %v1021, 127
      %v1429 = vpop.permute.xlu0 %1428
      %1430 = vrot.lane.b32.xlu0 %v1023, 127
      %v1431 = vpop.permute.xlu0 %1430
      %1432 = vrot.lane.b32.xlu0 %v1025, 127
      %v1433 = vpop.permute.xlu0 %1432
      %1434 = vrot.lane.b32.xlu0 %v1027, 127
      %v1435 = vpop.permute.xlu0 %1434
      %1436 = vrot.lane.b32.xlu0 %v1144, 127
      %v1437 = vpop.permute.xlu0 %1436
      %1438 = vrot.lane.b32.xlu0 %v1146, 127
      %v1439 = vpop.permute.xlu0 %1438
      %1440 = vrot.lane.b32.xlu0 %v1148, 127
      %v1441 = vpop.permute.xlu0 %1440
      %1442 = vrot.lane.b32.xlu0 %v1150, 127
      %v1443 = vpop.permute.xlu0 %1442
      %1444 = vrot.lane.b32.xlu0 %v1145, 127
      %v1445 = vpop.permute.xlu0 %1444
      %1446 = vrot.lane.b32.xlu0 %v1147, 127
      %v1447 = vpop.permute.xlu0 %1446
      %1448 = vrot.lane.b32.xlu0 %v1149, 127
      %v1449 = vpop.permute.xlu0 %1448
      %1450 = vrot.lane.b32.xlu0 %v1151, 127
      %v1451 = vpop.permute.xlu0 %1450
      %v1452 = vsel %vm483, %v1437, %v1445
      %v1453 = vsel %vm483, %v1439, %v1447
      %v1454 = vsel %vm483, %v1441, %v1449
      %v1455 = vsel %vm483, %v1443, %v1451
      %v1456 = vsel %vm483, %v1429, %v1437
      %v1457 = vsel %vm483, %v1431, %v1439
      %v1458 = vsel %vm483, %v1433, %v1441
      %v1459 = vsel %vm483, %v1435, %v1443
      %v1460 = vsel %vm483, %v1421, %v1429
      %v1461 = vsel %vm483, %v1423, %v1431
      %v1462 = vsel %vm483, %v1425, %v1433
      %v1463 = vsel %vm483, %v1427, %v1435
      %v1464 = vsel %vm483, %v1445, %v1421
      %v1465 = vsel %vm483, %v1447, %v1423
      %v1466 = vsel %vm483, %v1449, %v1425
      %v1467 = vsel %vm483, %v1451, %v1427
      %v1468 = vmul.f32 %v1460, %v491
      %v1469 = vmul.f32 %v1456, %v492
      %v1470 = vmul.f32 %v1452, %v493
      %v1471 = vmul.f32 %v1464, %v494
      %v1472 = vmul.f32 %v1461, %v491
      %v1473 = vmul.f32 %v1457, %v492
      %v1474 = vmul.f32 %v1453, %v493
      %v1475 = vmul.f32 %v1465, %v494
      %v1476 = vmul.f32 %v1462, %v491
      %v1477 = vmul.f32 %v1458, %v492
      %v1478 = vmul.f32 %v1454, %v493
      %v1479 = vmul.f32 %v1466, %v494
      %v1480 = vmul.f32 %v1463, %v491
      %v1481 = vmul.f32 %v1459, %v492
      %v1482 = vmul.f32 %v1455, %v493
      %v1483 = vmul.f32 %v1467, %v494
      %1484 = vrot.lane.b32.xlu0 %v1020, 113
      %v1485 = vpop.permute.xlu0 %1484
      %1486 = vrot.lane.b32.xlu0 %v1022, 113
      %v1487 = vpop.permute.xlu0 %1486
      %1488 = vrot.lane.b32.xlu0 %v1024, 113
      %v1489 = vpop.permute.xlu0 %1488
      %1490 = vrot.lane.b32.xlu0 %v1026, 113
      %v1491 = vpop.permute.xlu0 %1490
      %1492 = vrot.lane.b32.xlu0 %v1021, 113
      %v1493 = vpop.permute.xlu0 %1492
      %1494 = vrot.lane.b32.xlu0 %v1023, 113
      %v1495 = vpop.permute.xlu0 %1494
      %1496 = vrot.lane.b32.xlu0 %v1025, 113
      %v1497 = vpop.permute.xlu0 %1496
      %1498 = vrot.lane.b32.xlu0 %v1027, 113
      %v1499 = vpop.permute.xlu0 %1498
      %1500 = vrot.lane.b32.xlu0 %v1144, 113
      %v1501 = vpop.permute.xlu0 %1500
      %1502 = vrot.lane.b32.xlu0 %v1146, 113
      %v1503 = vpop.permute.xlu0 %1502
      %1504 = vrot.lane.b32.xlu0 %v1148, 113
      %v1505 = vpop.permute.xlu0 %1504
      %1506 = vrot.lane.b32.xlu0 %v1150, 113
      %v1507 = vpop.permute.xlu0 %1506
      %1508 = vrot.lane.b32.xlu0 %v1145, 113
      %v1509 = vpop.permute.xlu0 %1508
      %1510 = vrot.lane.b32.xlu0 %v1147, 113
      %v1511 = vpop.permute.xlu0 %1510
      %1512 = vrot.lane.b32.xlu0 %v1149, 113
      %v1513 = vpop.permute.xlu0 %1512
      %1514 = vrot.lane.b32.xlu0 %v1151, 113
      %v1515 = vpop.permute.xlu0 %1514
      %v1516 = vsel %vm520, %v1501, %v1509
      %v1517 = vsel %vm520, %v1503, %v1511
      %v1518 = vsel %vm520, %v1505, %v1513
      %v1519 = vsel %vm520, %v1507, %v1515
      %v1520 = vsel %vm520, %v1493, %v1501
      %v1521 = vsel %vm520, %v1495, %v1503
      %v1522 = vsel %vm520, %v1497, %v1505
      %v1523 = vsel %vm520, %v1499, %v1507
      %v1524 = vsel %vm520, %v1485, %v1493
      %v1525 = vsel %vm520, %v1487, %v1495
      %v1526 = vsel %vm520, %v1489, %v1497
      %v1527 = vsel %vm520, %v1491, %v1499
      %v1528 = vsel %vm520, %v1509, %v1485
      %v1529 = vsel %vm520, %v1511, %v1487
      %v1530 = vsel %vm520, %v1513, %v1489
      %v1531 = vsel %vm520, %v1515, %v1491
      %v1532 = vmul.f32 %v1524, %v528
      %v1533 = vmul.f32 %v1520, %v529
      %v1534 = vmul.f32 %v1516, %v530
      %v1535 = vmul.f32 %v1528, %v531
      %v1536 = vmul.f32 %v1525, %v528
      %v1537 = vmul.f32 %v1521, %v529
      %v1538 = vmul.f32 %v1517, %v530
      %v1539 = vmul.f32 %v1529, %v531
      %v1540 = vmul.f32 %v1526, %v528
      %v1541 = vmul.f32 %v1522, %v529
      %v1542 = vmul.f32 %v1518, %v530
      %v1543 = vmul.f32 %v1530, %v531
      %v1544 = vmul.f32 %v1527, %v528
      %v1545 = vmul.f32 %v1523, %v529
      %v1546 = vmul.f32 %v1519, %v530
      %v1547 = vmul.f32 %v1531, %v531
      %1548 = vrot.lane.b32.xlu0 %v1020, 112
      %v1549 = vpop.permute.xlu0 %1548
      %1550 = vrot.lane.b32.xlu0 %v1022, 112
      %v1551 = vpop.permute.xlu0 %1550
      %1552 = vrot.lane.b32.xlu0 %v1024, 112
      %v1553 = vpop.permute.xlu0 %1552
      %1554 = vrot.lane.b32.xlu0 %v1026, 112
      %v1555 = vpop.permute.xlu0 %1554
      %1556 = vrot.lane.b32.xlu0 %v1021, 112
      %v1557 = vpop.permute.xlu0 %1556
      %1558 = vrot.lane.b32.xlu0 %v1023, 112
      %v1559 = vpop.permute.xlu0 %1558
      %1560 = vrot.lane.b32.xlu0 %v1025, 112
      %v1561 = vpop.permute.xlu0 %1560
      %1562 = vrot.lane.b32.xlu0 %v1027, 112
      %v1563 = vpop.permute.xlu0 %1562
      %1564 = vrot.lane.b32.xlu0 %v1144, 112
      %v1565 = vpop.permute.xlu0 %1564
      %1566 = vrot.lane.b32.xlu0 %v1146, 112
      %v1567 = vpop.permute.xlu0 %1566
      %1568 = vrot.lane.b32.xlu0 %v1148, 112
      %v1569 = vpop.permute.xlu0 %1568
      %1570 = vrot.lane.b32.xlu0 %v1150, 112
      %v1571 = vpop.permute.xlu0 %1570
      %1572 = vrot.lane.b32.xlu0 %v1145, 112
      %v1573 = vpop.permute.xlu0 %1572
      %1574 = vrot.lane.b32.xlu0 %v1147, 112
      %v1575 = vpop.permute.xlu0 %1574
      %1576 = vrot.lane.b32.xlu0 %v1149, 112
      %v1577 = vpop.permute.xlu0 %1576
      %1578 = vrot.lane.b32.xlu0 %v1151, 112
      %v1579 = vpop.permute.xlu0 %1578
      %v1580 = vsel %vm557, %v1565, %v1573
      %v1581 = vsel %vm557, %v1567, %v1575
      %v1582 = vsel %vm557, %v1569, %v1577
      %v1583 = vsel %vm557, %v1571, %v1579
      %v1584 = vsel %vm557, %v1557, %v1565
      %v1585 = vsel %vm557, %v1559, %v1567
      %v1586 = vsel %vm557, %v1561, %v1569
      %v1587 = vsel %vm557, %v1563, %v1571
      %v1588 = vsel %vm557, %v1549, %v1557
      %v1589 = vsel %vm557, %v1551, %v1559
      %v1590 = vsel %vm557, %v1553, %v1561
      %v1591 = vsel %vm557, %v1555, %v1563
      %v1592 = vsel %vm557, %v1573, %v1549
      %v1593 = vsel %vm557, %v1575, %v1551
      %v1594 = vsel %vm557, %v1577, %v1553
      %v1595 = vsel %vm557, %v1579, %v1555
      %v1596 = vmul.f32 %v1588, %v565
      %v1597 = vmul.f32 %v1584, %v566
      %v1598 = vmul.f32 %v1580, %v567
      %v1599 = vmul.f32 %v1592, %v568
      %v1600 = vmul.f32 %v1589, %v565
      %v1601 = vmul.f32 %v1585, %v566
      %v1602 = vmul.f32 %v1581, %v567
      %v1603 = vmul.f32 %v1593, %v568
      %v1604 = vmul.f32 %v1590, %v565
      %v1605 = vmul.f32 %v1586, %v566
      %v1606 = vmul.f32 %v1582, %v567
      %v1607 = vmul.f32 %v1594, %v568
      %v1608 = vmul.f32 %v1591, %v565
      %v1609 = vmul.f32 %v1587, %v566
      %v1610 = vmul.f32 %v1583, %v567
      %v1611 = vmul.f32 %v1595, %v568
      %1612 = vrot.lane.b32.xlu0 %v1020, 111
      %v1613 = vpop.permute.xlu0 %1612
      %1614 = vrot.lane.b32.xlu0 %v1022, 111
      %v1615 = vpop.permute.xlu0 %1614
      %1616 = vrot.lane.b32.xlu0 %v1024, 111
      %v1617 = vpop.permute.xlu0 %1616
      %1618 = vrot.lane.b32.xlu0 %v1026, 111
      %v1619 = vpop.permute.xlu0 %1618
      %1620 = vrot.lane.b32.xlu0 %v1021, 111
      %v1621 = vpop.permute.xlu0 %1620
      %1622 = vrot.lane.b32.xlu0 %v1023, 111
      %v1623 = vpop.permute.xlu0 %1622
      %1624 = vrot.lane.b32.xlu0 %v1025, 111
      %v1625 = vpop.permute.xlu0 %1624
      %1626 = vrot.lane.b32.xlu0 %v1027, 111
      %v1627 = vpop.permute.xlu0 %1626
      %1628 = vrot.lane.b32.xlu0 %v1144, 111
      %v1629 = vpop.permute.xlu0 %1628
      %1630 = vrot.lane.b32.xlu0 %v1146, 111
      %v1631 = vpop.permute.xlu0 %1630
      %1632 = vrot.lane.b32.xlu0 %v1148, 111
      %v1633 = vpop.permute.xlu0 %1632
      %1634 = vrot.lane.b32.xlu0 %v1150, 111
      %v1635 = vpop.permute.xlu0 %1634
      %1636 = vrot.lane.b32.xlu0 %v1145, 111
      %v1637 = vpop.permute.xlu0 %1636
      %1638 = vrot.lane.b32.xlu0 %v1147, 111
      %v1639 = vpop.permute.xlu0 %1638
      %1640 = vrot.lane.b32.xlu0 %v1149, 111
      %v1641 = vpop.permute.xlu0 %1640
      %1642 = vrot.lane.b32.xlu0 %v1151, 111
      %v1643 = vpop.permute.xlu0 %1642
      %v1644 = vsel %vm594, %v1629, %v1637
      %v1645 = vsel %vm594, %v1631, %v1639
      %v1646 = vsel %vm594, %v1633, %v1641
      %v1647 = vsel %vm594, %v1635, %v1643
      %v1648 = vsel %vm594, %v1621, %v1629
      %v1649 = vsel %vm594, %v1623, %v1631
      %v1650 = vsel %vm594, %v1625, %v1633
      %v1651 = vsel %vm594, %v1627, %v1635
      %v1652 = vsel %vm594, %v1613, %v1621
      %v1653 = vsel %vm594, %v1615, %v1623
      %v1654 = vsel %vm594, %v1617, %v1625
      %v1655 = vsel %vm594, %v1619, %v1627
      %v1656 = vsel %vm594, %v1637, %v1613
      %v1657 = vsel %vm594, %v1639, %v1615
      %v1658 = vsel %vm594, %v1641, %v1617
      %v1659 = vsel %vm594, %v1643, %v1619
      %v1660 = vmul.f32 %v1652, %v602
      %v1661 = vmul.f32 %v1648, %v603
      %v1662 = vmul.f32 %v1644, %v604
      %v1663 = vmul.f32 %v1656, %v605
      %v1664 = vmul.f32 %v1653, %v602
      %v1665 = vmul.f32 %v1649, %v603
      %v1666 = vmul.f32 %v1645, %v604
      %v1667 = vmul.f32 %v1657, %v605
      %v1668 = vmul.f32 %v1654, %v602
      %v1669 = vmul.f32 %v1650, %v603
      %v1670 = vmul.f32 %v1646, %v604
      %v1671 = vmul.f32 %v1658, %v605
      %v1672 = vmul.f32 %v1655, %v602
      %v1673 = vmul.f32 %v1651, %v603
      %v1674 = vmul.f32 %v1647, %v604
      %v1675 = vmul.f32 %v1659, %v605
      %v1676 = vpack.c.bf16 %v1216, %v1212
      %v1677 = vpack.c.bf16 %v1217, %v1213
      %v1678 = vpack.c.bf16 %v1218, %v1214
      %v1679 = vpack.c.bf16 %v1219, %v1215
      %v1680 = vpack.c.bf16 %v1224, %v1220
      %v1681 = vpack.c.bf16 %v1225, %v1221
      %v1682 = vpack.c.bf16 %v1226, %v1222
      %v1683 = vpack.c.bf16 %v1227, %v1223
      %v1684 = vpack.c.bf16 %v1280, %v1276
      %v1685 = vpack.c.bf16 %v1281, %v1277
      %v1686 = vpack.c.bf16 %v1282, %v1278
      %v1687 = vpack.c.bf16 %v1283, %v1279
      %v1688 = vpack.c.bf16 %v1288, %v1284
      %v1689 = vpack.c.bf16 %v1289, %v1285
      %v1690 = vpack.c.bf16 %v1290, %v1286
      %v1691 = vpack.c.bf16 %v1291, %v1287
      %v1692 = vpack.c.bf16 %v1344, %v1340
      %v1693 = vpack.c.bf16 %v1345, %v1341
      %v1694 = vpack.c.bf16 %v1346, %v1342
      %v1695 = vpack.c.bf16 %v1347, %v1343
      %v1696 = vpack.c.bf16 %v1352, %v1348
      %v1697 = vpack.c.bf16 %v1353, %v1349
      %v1698 = vpack.c.bf16 %v1354, %v1350
      %v1699 = vpack.c.bf16 %v1355, %v1351
      %v1700 = vpack.c.bf16 %v1408, %v1404
      %v1701 = vpack.c.bf16 %v1409, %v1405
      %v1702 = vpack.c.bf16 %v1410, %v1406
      %v1703 = vpack.c.bf16 %v1411, %v1407
      %v1704 = vpack.c.bf16 %v1416, %v1412
      %v1705 = vpack.c.bf16 %v1417, %v1413
      %v1706 = vpack.c.bf16 %v1418, %v1414
      %v1707 = vpack.c.bf16 %v1419, %v1415
      %v1708 = vpack.c.bf16 %v1022, %v1020
      %v1709 = vpack.c.bf16 %v1023, %v1021
      %v1710 = vpack.c.bf16 %v1146, %v1144
      %v1711 = vpack.c.bf16 %v1147, %v1145
      %v1712 = vpack.c.bf16 %v1026, %v1024
      %v1713 = vpack.c.bf16 %v1027, %v1025
      %v1714 = vpack.c.bf16 %v1150, %v1148
      %v1715 = vpack.c.bf16 %v1151, %v1149
      %v1716 = vpack.c.bf16 %v1472, %v1468
      %v1717 = vpack.c.bf16 %v1473, %v1469
      %v1718 = vpack.c.bf16 %v1474, %v1470
      %v1719 = vpack.c.bf16 %v1475, %v1471
      %v1720 = vpack.c.bf16 %v1480, %v1476
      %v1721 = vpack.c.bf16 %v1481, %v1477
      %v1722 = vpack.c.bf16 %v1482, %v1478
      %v1723 = vpack.c.bf16 %v1483, %v1479
      %v1724 = vpack.c.bf16 %v1536, %v1532
      %v1725 = vpack.c.bf16 %v1537, %v1533
      %v1726 = vpack.c.bf16 %v1538, %v1534
      %v1727 = vpack.c.bf16 %v1539, %v1535
      %v1728 = vpack.c.bf16 %v1544, %v1540
      %v1729 = vpack.c.bf16 %v1545, %v1541
      %v1730 = vpack.c.bf16 %v1546, %v1542
      %v1731 = vpack.c.bf16 %v1547, %v1543
      %v1732 = vpack.c.bf16 %v1600, %v1596
      %v1733 = vpack.c.bf16 %v1601, %v1597
      %v1734 = vpack.c.bf16 %v1602, %v1598
      %v1735 = vpack.c.bf16 %v1603, %v1599
      %v1736 = vpack.c.bf16 %v1608, %v1604
      %v1737 = vpack.c.bf16 %v1609, %v1605
      %v1738 = vpack.c.bf16 %v1610, %v1606
      %v1739 = vpack.c.bf16 %v1611, %v1607
      %v1740 = vpack.c.bf16 %v1664, %v1660
      %v1741 = vpack.c.bf16 %v1665, %v1661
      %v1742 = vpack.c.bf16 %v1666, %v1662
      %v1743 = vpack.c.bf16 %v1667, %v1663
      %v1744 = vpack.c.bf16 %v1672, %v1668
      %v1745 = vpack.c.bf16 %v1673, %v1669
      %v1746 = vpack.c.bf16 %v1674, %v1670
      %v1747 = vpack.c.bf16 %v1675, %v1671
      %1749 = vset.pattern.permute.xlu0 0
      %1750 = vperm.xlu0 %1749, %v1160
      %v1751 = vpop.permute.xlu0 %1750
      %1754 = vset.pattern.permute.xlu0 0
      %1755 = vperm.xlu0 %1754, %v1161
      %v1756 = vpop.permute.xlu0 %1755
      %1759 = vset.pattern.permute.xlu0 0
      %1760 = vperm.xlu0 %1759, %v1162
      %v1761 = vpop.permute.xlu0 %1760
      %1764 = vset.pattern.permute.xlu0 0
      %1765 = vperm.xlu0 %1764, %v1163
      %v1766 = vpop.permute.xlu0 %1765
      %v1776 = vunpack.c.l.b16 %v1152
      %v1777 = vunpack.c.h.b16 %v1152
      %v1778 = vunpack.c.l.b16 %v1153
      %v1779 = vunpack.c.l.b16 %v1154
      %v1780 = vunpack.c.h.b16 %v1154
      %v1781 = vunpack.c.l.b16 %v1155
      %v1782 = vunpack.c.l.b16 %v1156
      %v1783 = vunpack.c.h.b16 %v1156
      %v1784 = vunpack.c.l.b16 %v1157
      %v1785 = vunpack.c.l.b16 %v1158
      %v1786 = vunpack.c.h.b16 %v1158
      %v1787 = vunpack.c.l.b16 %v1159
      %v1788 = vpack.c.b16 %v1779, %v1776
      %v1789 = vpack.c.b16 %v1780, %v1777
      %v1790 = vpack.c.b16 %v1781, %v1778
      %v1791 = vpack.c.b16 %v1785, %v1782
      %v1792 = vpack.c.b16 %v1786, %v1783
      %v1793 = vpack.c.b16 %v1787, %v1784
      %vm1798 = vcmask 261120
      %v1800 = vsel %vm1798, %v1790, 0
      %v1803 = vsel %vm1798, %v1793, 0
      %1805 = vmatpush.bf16.msra.mxu0 %v1704
      %1806 = vmatpush.bf16.msra.mxu0 %v1700
      %1807 = vmatpush.bf16.msra.mxu0 %v1696
      %1808 = vmatpush.bf16.msra.mxu0 %v1692
      %1809 = vmatpush.bf16.msra.mxu0 %v1688
      %1810 = vmatpush.bf16.msra.mxu0 %v1684
      %1811 = vmatpush.bf16.msra.mxu0 %v1680
      %1812 = vmatpush.bf16.msra.mxu0 %v1676
      %1813 = vmatmul.bf16.gmra.mxu0 %v1788
      %v1814 = vpop.f32.mrf.mxu0
      %v1815 = vadd.f32 %v1751, %v1814
      %v1816 = vpop.f32.mrf.mxu0
      %v1817 = vadd.f32 %v1756, %v1816
      %1818 = vmatmul.bf16.gmra.mxu0 %v1791
      %v1819 = vpop.f32.mrf.mxu0
      %v1820 = vadd.f32 %v1761, %v1819
      %v1821 = vpop.f32.mrf.mxu0
      %v1822 = vadd.f32 %v1766, %v1821
      %1823 = vdwg.mxu0
      %1824 = vmatpush.bf16.msra.mxu0 %v1736
      %1825 = vmatpush.bf16.msra.mxu0 %v1732
      %1826 = vmatpush.bf16.msra.mxu0 %v1728
      %1827 = vmatpush.bf16.msra.mxu0 %v1724
      %1828 = vmatpush.bf16.msra.mxu0 %v1720
      %1829 = vmatpush.bf16.msra.mxu0 %v1716
      %1830 = vmatpush.bf16.msra.mxu0 %v1712
      %1831 = vmatpush.bf16.msra.mxu0 %v1708
      %1832 = vmatmul.bf16.gmra.mxu0 %v1789
      %v1833 = vpop.f32.mrf.mxu0
      %v1834 = vadd.f32 %v1815, %v1833
      %v1835 = vpop.f32.mrf.mxu0
      %v1836 = vadd.f32 %v1817, %v1835
      %1837 = vmatmul.bf16.gmra.mxu0 %v1792
      %v1838 = vpop.f32.mrf.mxu0
      %v1839 = vadd.f32 %v1820, %v1838
      %v1840 = vpop.f32.mrf.mxu0
      %v1841 = vadd.f32 %v1822, %v1840
      %1842 = vdwg.mxu0
      %1843 = vmatpush.bf16.msra.mxu0 0
      %1844 = vmatpush.bf16.msra.mxu0 0
      %1845 = vmatpush.bf16.msra.mxu0 0
      %1846 = vmatpush.bf16.msra.mxu0 0
      %1847 = vmatpush.bf16.msra.mxu0 0
      %1848 = vmatpush.bf16.msra.mxu0 0
      %1849 = vmatpush.bf16.msra.mxu0 %v1744
      %1850 = vmatpush.bf16.msra.mxu0 %v1740
      %1851 = vmatmul.bf16.gmra.mxu0 %v1800
      %v1852 = vpop.f32.mrf.mxu0
      %v1853 = vadd.f32 %v1834, %v1852
      %v1854 = vpop.f32.mrf.mxu0
      %v1855 = vadd.f32 %v1836, %v1854
      %1856 = vmatmul.bf16.gmra.mxu0 %v1803
      %v1857 = vpop.f32.mrf.mxu0
      %v1858 = vadd.f32 %v1839, %v1857
      %v1859 = vpop.f32.mrf.mxu0
      %v1860 = vadd.f32 %v1841, %v1859
      %1861 = vdwg.mxu0
      %1862 = vmatpush.bf16.msra.mxu0 %v1705
      %1863 = vmatpush.bf16.msra.mxu0 %v1701
      %1864 = vmatpush.bf16.msra.mxu0 %v1697
      %1865 = vmatpush.bf16.msra.mxu0 %v1693
      %1866 = vmatpush.bf16.msra.mxu0 %v1689
      %1867 = vmatpush.bf16.msra.mxu0 %v1685
      %1868 = vmatpush.bf16.msra.mxu0 %v1681
      %1869 = vmatpush.bf16.msra.mxu0 %v1677
      %1870 = vmatmul.bf16.gmra.mxu0 %v1788
      %v1871 = vpop.f32.mrf.mxu0
      %v1872 = vadd.f32 %v1751, %v1871
      %v1873 = vpop.f32.mrf.mxu0
      %v1874 = vadd.f32 %v1756, %v1873
      %1875 = vmatmul.bf16.gmra.mxu0 %v1791
      %v1876 = vpop.f32.mrf.mxu0
      %v1877 = vadd.f32 %v1761, %v1876
      %v1878 = vpop.f32.mrf.mxu0
      %v1879 = vadd.f32 %v1766, %v1878
      %1880 = vdwg.mxu0
      %1881 = vmatpush.bf16.msra.mxu0 %v1737
      %1882 = vmatpush.bf16.msra.mxu0 %v1733
      %1883 = vmatpush.bf16.msra.mxu0 %v1729
      %1884 = vmatpush.bf16.msra.mxu0 %v1725
      %1885 = vmatpush.bf16.msra.mxu0 %v1721
      %1886 = vmatpush.bf16.msra.mxu0 %v1717
      %1887 = vmatpush.bf16.msra.mxu0 %v1713
      %1888 = vmatpush.bf16.msra.mxu0 %v1709
      %1889 = vmatmul.bf16.gmra.mxu0 %v1789
      %v1890 = vpop.f32.mrf.mxu0
      %v1891 = vadd.f32 %v1872, %v1890
      %v1892 = vpop.f32.mrf.mxu0
      %v1893 = vadd.f32 %v1874, %v1892
      %1894 = vmatmul.bf16.gmra.mxu0 %v1792
      %v1895 = vpop.f32.mrf.mxu0
      %v1896 = vadd.f32 %v1877, %v1895
      %v1897 = vpop.f32.mrf.mxu0
      %v1898 = vadd.f32 %v1879, %v1897
      %1899 = vdwg.mxu0
      %1900 = vmatpush.bf16.msra.mxu0 0
      %1901 = vmatpush.bf16.msra.mxu0 0
      %1902 = vmatpush.bf16.msra.mxu0 0
      %1903 = vmatpush.bf16.msra.mxu0 0
      %1904 = vmatpush.bf16.msra.mxu0 0
      %1905 = vmatpush.bf16.msra.mxu0 0
      %1906 = vmatpush.bf16.msra.mxu0 %v1745
      %1907 = vmatpush.bf16.msra.mxu0 %v1741
      %1908 = vmatmul.bf16.gmra.mxu0 %v1800
      %v1909 = vpop.f32.mrf.mxu0
      %v1910 = vadd.f32 %v1891, %v1909
      %v1911 = vpop.f32.mrf.mxu0
      %v1912 = vadd.f32 %v1893, %v1911
      %1913 = vmatmul.bf16.gmra.mxu0 %v1803
      %v1914 = vpop.f32.mrf.mxu0
      %v1915 = vadd.f32 %v1896, %v1914
      %v1916 = vpop.f32.mrf.mxu0
      %v1917 = vadd.f32 %v1898, %v1916
      %1918 = vdwg.mxu0
      %1919 = vmatpush.bf16.msra.mxu0 %v1706
      %1920 = vmatpush.bf16.msra.mxu0 %v1702
      %1921 = vmatpush.bf16.msra.mxu0 %v1698
      %1922 = vmatpush.bf16.msra.mxu0 %v1694
      %1923 = vmatpush.bf16.msra.mxu0 %v1690
      %1924 = vmatpush.bf16.msra.mxu0 %v1686
      %1925 = vmatpush.bf16.msra.mxu0 %v1682
      %1926 = vmatpush.bf16.msra.mxu0 %v1678
      %1927 = vmatmul.bf16.gmra.mxu0 %v1788
      %v1928 = vpop.f32.mrf.mxu0
      %v1929 = vadd.f32 %v1751, %v1928
      %v1930 = vpop.f32.mrf.mxu0
      %v1931 = vadd.f32 %v1756, %v1930
      %1932 = vmatmul.bf16.gmra.mxu0 %v1791
      %v1933 = vpop.f32.mrf.mxu0
      %v1934 = vadd.f32 %v1761, %v1933
      %v1935 = vpop.f32.mrf.mxu0
      %v1936 = vadd.f32 %v1766, %v1935
      %1937 = vdwg.mxu0
      %1938 = vmatpush.bf16.msra.mxu0 %v1738
      %1939 = vmatpush.bf16.msra.mxu0 %v1734
      %1940 = vmatpush.bf16.msra.mxu0 %v1730
      %1941 = vmatpush.bf16.msra.mxu0 %v1726
      %1942 = vmatpush.bf16.msra.mxu0 %v1722
      %1943 = vmatpush.bf16.msra.mxu0 %v1718
      %1944 = vmatpush.bf16.msra.mxu0 %v1714
      %1945 = vmatpush.bf16.msra.mxu0 %v1710
      %1946 = vmatmul.bf16.gmra.mxu0 %v1789
      %v1947 = vpop.f32.mrf.mxu0
      %v1948 = vadd.f32 %v1929, %v1947
      %v1949 = vpop.f32.mrf.mxu0
      %v1950 = vadd.f32 %v1931, %v1949
      %1951 = vmatmul.bf16.gmra.mxu0 %v1792
      %v1952 = vpop.f32.mrf.mxu0
      %v1953 = vadd.f32 %v1934, %v1952
      %v1954 = vpop.f32.mrf.mxu0
      %v1955 = vadd.f32 %v1936, %v1954
      %1956 = vdwg.mxu0
      %1957 = vmatpush.bf16.msra.mxu0 0
      %1958 = vmatpush.bf16.msra.mxu0 0
      %1959 = vmatpush.bf16.msra.mxu0 0
      %1960 = vmatpush.bf16.msra.mxu0 0
      %1961 = vmatpush.bf16.msra.mxu0 0
      %1962 = vmatpush.bf16.msra.mxu0 0
      %1963 = vmatpush.bf16.msra.mxu0 %v1746
      %1964 = vmatpush.bf16.msra.mxu0 %v1742
      %1965 = vmatmul.bf16.gmra.mxu0 %v1800
      %v1966 = vpop.f32.mrf.mxu0
      %v1967 = vadd.f32 %v1948, %v1966
      %v1968 = vpop.f32.mrf.mxu0
      %v1969 = vadd.f32 %v1950, %v1968
      %1970 = vmatmul.bf16.gmra.mxu0 %v1803
      %v1971 = vpop.f32.mrf.mxu0
      %v1972 = vadd.f32 %v1953, %v1971
      %v1973 = vpop.f32.mrf.mxu0
      %v1974 = vadd.f32 %v1955, %v1973
      %1975 = vdwg.mxu0
      %1976 = vmatpush.bf16.msra.mxu0 %v1707
      %1977 = vmatpush.bf16.msra.mxu0 %v1703
      %1978 = vmatpush.bf16.msra.mxu0 %v1699
      %1979 = vmatpush.bf16.msra.mxu0 %v1695
      %1980 = vmatpush.bf16.msra.mxu0 %v1691
      %1981 = vmatpush.bf16.msra.mxu0 %v1687
      %1982 = vmatpush.bf16.msra.mxu0 %v1683
      %1983 = vmatpush.bf16.msra.mxu0 %v1679
      %1984 = vmatmul.bf16.gmra.mxu0 %v1788
      %v1985 = vpop.f32.mrf.mxu0
      %v1986 = vadd.f32 %v1751, %v1985
      %v1987 = vpop.f32.mrf.mxu0
      %v1988 = vadd.f32 %v1756, %v1987
      %1989 = vmatmul.bf16.gmra.mxu0 %v1791
      %v1990 = vpop.f32.mrf.mxu0
      %v1991 = vadd.f32 %v1761, %v1990
      %v1992 = vpop.f32.mrf.mxu0
      %v1993 = vadd.f32 %v1766, %v1992
      %1994 = vdwg.mxu0
      %1995 = vmatpush.bf16.msra.mxu0 %v1739
      %1996 = vmatpush.bf16.msra.mxu0 %v1735
      %1997 = vmatpush.bf16.msra.mxu0 %v1731
      %1998 = vmatpush.bf16.msra.mxu0 %v1727
      %1999 = vmatpush.bf16.msra.mxu0 %v1723
      %2000 = vmatpush.bf16.msra.mxu0 %v1719
      %2001 = vmatpush.bf16.msra.mxu0 %v1715
      %2002 = vmatpush.bf16.msra.mxu0 %v1711
      %2003 = vmatmul.bf16.gmra.mxu0 %v1789
      %v2004 = vpop.f32.mrf.mxu0
      %v2005 = vadd.f32 %v1986, %v2004
      %v2006 = vpop.f32.mrf.mxu0
      %v2007 = vadd.f32 %v1988, %v2006
      %2008 = vmatmul.bf16.gmra.mxu0 %v1792
      %v2009 = vpop.f32.mrf.mxu0
      %v2010 = vadd.f32 %v1991, %v2009
      %v2011 = vpop.f32.mrf.mxu0
      %v2012 = vadd.f32 %v1993, %v2011
      %2013 = vdwg.mxu0
      %2014 = vmatpush.bf16.msra.mxu0 0
      %2015 = vmatpush.bf16.msra.mxu0 0
      %2016 = vmatpush.bf16.msra.mxu0 0
      %2017 = vmatpush.bf16.msra.mxu0 0
      %2018 = vmatpush.bf16.msra.mxu0 0
      %2019 = vmatpush.bf16.msra.mxu0 0
      %2020 = vmatpush.bf16.msra.mxu0 %v1747
      %2021 = vmatpush.bf16.msra.mxu0 %v1743
      %2022 = vmatmul.bf16.gmra.mxu0 %v1800
      %v2023 = vpop.f32.mrf.mxu0
      %v2024 = vadd.f32 %v2005, %v2023
      %v2025 = vpop.f32.mrf.mxu0
      %v2026 = vadd.f32 %v2007, %v2025
      %2027 = vmatmul.bf16.gmra.mxu0 %v1803
      %v2028 = vpop.f32.mrf.mxu0
      %v2029 = vadd.f32 %v2010, %v2028
      %v2030 = vpop.f32.mrf.mxu0
      %v2031 = vadd.f32 %v2012, %v2030
      %2032 = vdwg.mxu0
      %s2033 = scalar_lea.vmem %s6, 32
      %v2034 = vld [vmem:[%s2033] sm:$0xff]
      %v2035 = vld [vmem:[%s2033 + $0x8] sm:$0xff]
      %v2036 = vld [vmem:[%s2033 + $0x10] sm:$0xff]
      %v2037 = vld [vmem:[%s2033 + $0x18] sm:$0xff]
      %s2038 = scalar_lea.vmem %s7, 32
      %v2039 = vld [vmem:[%s2038] sm:$0xff]
      %v2040 = vld [vmem:[%s2038 + $0x8] sm:$0xff]
      %v2041 = vld [vmem:[%s2038 + $0x10] sm:$0xff]
      %v2042 = vld [vmem:[%s2038 + $0x18] sm:$0xff]
      %v2043 = vadd.f32 %v1853, %v1910
      %2044 = vadd.xlane.f32.xlu0 %v2043
      %v2045 = vpop.xlane.xlu0 %2044
      %v2046 = vadd.f32 %v1855, %v1912
      %2047 = vadd.xlane.f32.xlu0 %v2046
      %v2048 = vpop.xlane.xlu0 %2047
      %v2049 = vadd.f32 %v1858, %v1915
      %2050 = vadd.xlane.f32.xlu0 %v2049
      %v2051 = vpop.xlane.xlu0 %2050
      %v2052 = vadd.f32 %v1860, %v1917
      %2053 = vadd.xlane.f32.xlu0 %v2052
      %v2054 = vpop.xlane.xlu0 %2053
      %v2055 = vmul.f32 %v2045, 0.00390625
      %v2056 = vmul.f32 %v2048, 0.00390625
      %v2057 = vmul.f32 %v2051, 0.00390625
      %v2058 = vmul.f32 %v2054, 0.00390625
      %v2059 = vsub.f32 %v1853, %v2055
      %v2060 = vsub.f32 %v1910, %v2055
      %v2061 = vsub.f32 %v1855, %v2056
      %v2062 = vsub.f32 %v1912, %v2056
      %v2063 = vsub.f32 %v1858, %v2057
      %v2064 = vsub.f32 %v1915, %v2057
      %v2065 = vsub.f32 %v1860, %v2058
      %v2066 = vsub.f32 %v1917, %v2058
      %v2067 = vmul.f32 %v2059, %v2059
      %v2068 = vmul.f32 %v2060, %v2060
      %v2069 = vmul.f32 %v2061, %v2061
      %v2070 = vmul.f32 %v2062, %v2062
      %v2071 = vmul.f32 %v2063, %v2063
      %v2072 = vmul.f32 %v2064, %v2064
      %v2073 = vmul.f32 %v2065, %v2065
      %v2074 = vmul.f32 %v2066, %v2066
      %v2075 = vadd.f32 %v2067, %v2068
      %2076 = vadd.xlane.f32.xlu0 %v2075
      %v2077 = vpop.xlane.xlu0 %2076
      %v2078 = vadd.f32 %v2069, %v2070
      %2079 = vadd.xlane.f32.xlu0 %v2078
      %v2080 = vpop.xlane.xlu0 %2079
      %v2081 = vadd.f32 %v2071, %v2072
      %2082 = vadd.xlane.f32.xlu0 %v2081
      %v2083 = vpop.xlane.xlu0 %2082
      %v2084 = vadd.f32 %v2073, %v2074
      %2085 = vadd.xlane.f32.xlu0 %v2084
      %v2086 = vpop.xlane.xlu0 %2085
      %v2087 = vmul.f32 %v2077, 0.00390625
      %v2088 = vmul.f32 %v2080, 0.00390625
      %v2089 = vmul.f32 %v2083, 0.00390625
      %v2090 = vmul.f32 %v2086, 0.00390625
      %v2091 = vadd.f32 %v2087, 1e-05
      %v2092 = vadd.f32 %v2088, 1e-05
      %v2093 = vadd.f32 %v2089, 1e-05
      %v2094 = vadd.f32 %v2090, 1e-05
      %v2095 = vrsqrt.pop %v2091
      %v2096 = vmul.f32 %v2095, %v2091
      %v2097 = vmul.f32 %v2096, %v2095
      %v2098 = vmul.f32 0.5, %v2097
      %v2099 = vsub.f32 1.5, %v2098
      %v2100 = vmul.f32 %v2095, %v2099
      %vm2101 = vweird.f32 %v2091
      %vm2102 = vweird.f32 %v2095
      %vm2103 = vmor %vm2101, %vm2102
      %v2104 = vsel %vm2103, %v2095, %v2100
      %v2105 = vrsqrt.pop %v2092
      %v2106 = vmul.f32 %v2105, %v2092
      %v2107 = vmul.f32 %v2106, %v2105
      %v2108 = vmul.f32 0.5, %v2107
      %v2109 = vsub.f32 1.5, %v2108
      %v2110 = vmul.f32 %v2105, %v2109
      %vm2111 = vweird.f32 %v2092
      %vm2112 = vweird.f32 %v2105
      %vm2113 = vmor %vm2111, %vm2112
      %v2114 = vsel %vm2113, %v2105, %v2110
      %v2115 = vrsqrt.pop %v2093
      %v2116 = vmul.f32 %v2115, %v2093
      %v2117 = vmul.f32 %v2116, %v2115
      %v2118 = vmul.f32 0.5, %v2117
      %v2119 = vsub.f32 1.5, %v2118
      %v2120 = vmul.f32 %v2115, %v2119
      %vm2121 = vweird.f32 %v2093
      %vm2122 = vweird.f32 %v2115
      %vm2123 = vmor %vm2121, %vm2122
      %v2124 = vsel %vm2123, %v2115, %v2120
      %v2125 = vrsqrt.pop %v2094
      %v2126 = vmul.f32 %v2125, %v2094
      %v2127 = vmul.f32 %v2126, %v2125
      %v2128 = vmul.f32 0.5, %v2127
      %v2129 = vsub.f32 1.5, %v2128
      %v2130 = vmul.f32 %v2125, %v2129
      %vm2131 = vweird.f32 %v2094
      %vm2132 = vweird.f32 %v2125
      %vm2133 = vmor %vm2131, %vm2132
      %v2134 = vsel %vm2133, %v2125, %v2130
      %v2135 = vmul.f32 %v2059, %v2104
      %v2136 = vmul.f32 %v2060, %v2104
      %v2137 = vmul.f32 %v2061, %v2114
      %v2138 = vmul.f32 %v2062, %v2114
      %v2139 = vmul.f32 %v2063, %v2124
      %v2140 = vmul.f32 %v2064, %v2124
      %v2141 = vmul.f32 %v2065, %v2134
      %v2142 = vmul.f32 %v2066, %v2134
      %2144 = vset.pattern.permute.xlu0 0
      %2145 = vperm.xlu0 %2144, %v2034
      %v2146 = vpop.permute.xlu0 %2145
      %2149 = vset.pattern.permute.xlu0 0
      %2150 = vperm.xlu0 %2149, %v2035
      %v2151 = vpop.permute.xlu0 %2150
      %2154 = vset.pattern.permute.xlu0 0
      %2155 = vperm.xlu0 %2154, %v2036
      %v2156 = vpop.permute.xlu0 %2155
      %2159 = vset.pattern.permute.xlu0 0
      %2160 = vperm.xlu0 %2159, %v2037
      %v2161 = vpop.permute.xlu0 %2160
      %v2163 = vmul.f32 %v2135, %v2146
      %v2164 = vmul.f32 %v2136, %v2146
      %v2165 = vmul.f32 %v2137, %v2151
      %v2166 = vmul.f32 %v2138, %v2151
      %v2167 = vmul.f32 %v2139, %v2156
      %v2168 = vmul.f32 %v2140, %v2156
      %v2169 = vmul.f32 %v2141, %v2161
      %v2170 = vmul.f32 %v2142, %v2161
      %2172 = vset.pattern.permute.xlu0 0
      %2173 = vperm.xlu0 %2172, %v2039
      %v2174 = vpop.permute.xlu0 %2173
      %2177 = vset.pattern.permute.xlu0 0
      %2178 = vperm.xlu0 %2177, %v2040
      %v2179 = vpop.permute.xlu0 %2178
      %2182 = vset.pattern.permute.xlu0 0
      %2183 = vperm.xlu0 %2182, %v2041
      %v2184 = vpop.permute.xlu0 %2183
      %2187 = vset.pattern.permute.xlu0 0
      %2188 = vperm.xlu0 %2187, %v2042
      %v2189 = vpop.permute.xlu0 %2188
      %v2191 = vadd.f32 %v2163, %v2174
      %v2192 = vadd.f32 %v2164, %v2174
      %v2193 = vadd.f32 %v2165, %v2179
      %v2194 = vadd.f32 %v2166, %v2179
      %v2195 = vadd.f32 %v2167, %v2184
      %v2196 = vadd.f32 %v2168, %v2184
      %v2197 = vadd.f32 %v2169, %v2189
      %v2198 = vadd.f32 %v2170, %v2189
      %v2199 = vmax.f32 %v2191, 0.0
      %v2200 = vmax.f32 %v2192, 0.0
      %v2201 = vmax.f32 %v2193, 0.0
      %v2202 = vmax.f32 %v2194, 0.0
      %v2203 = vmax.f32 %v2195, 0.0
      %v2204 = vmax.f32 %v2196, 0.0
      %v2205 = vmax.f32 %v2197, 0.0
      %v2206 = vmax.f32 %v2198, 0.0
      %v2207 = vadd.f32 %v1967, %v2024
      %2208 = vadd.xlane.f32.xlu0 %v2207
      %v2209 = vpop.xlane.xlu0 %2208
      %v2210 = vadd.f32 %v1969, %v2026
      %2211 = vadd.xlane.f32.xlu0 %v2210
      %v2212 = vpop.xlane.xlu0 %2211
      %v2213 = vadd.f32 %v1972, %v2029
      %2214 = vadd.xlane.f32.xlu0 %v2213
      %v2215 = vpop.xlane.xlu0 %2214
      %v2216 = vadd.f32 %v1974, %v2031
      %2217 = vadd.xlane.f32.xlu0 %v2216
      %v2218 = vpop.xlane.xlu0 %2217
      %v2219 = vmul.f32 %v2209, 0.00390625
      %v2220 = vmul.f32 %v2212, 0.00390625
      %v2221 = vmul.f32 %v2215, 0.00390625
      %v2222 = vmul.f32 %v2218, 0.00390625
      %v2223 = vsub.f32 %v1967, %v2219
      %v2224 = vsub.f32 %v2024, %v2219
      %v2225 = vsub.f32 %v1969, %v2220
      %v2226 = vsub.f32 %v2026, %v2220
      %v2227 = vsub.f32 %v1972, %v2221
      %v2228 = vsub.f32 %v2029, %v2221
      %v2229 = vsub.f32 %v1974, %v2222
      %v2230 = vsub.f32 %v2031, %v2222
      %v2231 = vmul.f32 %v2223, %v2223
      %v2232 = vmul.f32 %v2224, %v2224
      %v2233 = vmul.f32 %v2225, %v2225
      %v2234 = vmul.f32 %v2226, %v2226
      %v2235 = vmul.f32 %v2227, %v2227
      %v2236 = vmul.f32 %v2228, %v2228
      %v2237 = vmul.f32 %v2229, %v2229
      %v2238 = vmul.f32 %v2230, %v2230
      %v2239 = vadd.f32 %v2231, %v2232
      %2240 = vadd.xlane.f32.xlu0 %v2239
      %v2241 = vpop.xlane.xlu0 %2240
      %v2242 = vadd.f32 %v2233, %v2234
      %2243 = vadd.xlane.f32.xlu0 %v2242
      %v2244 = vpop.xlane.xlu0 %2243
      %v2245 = vadd.f32 %v2235, %v2236
      %2246 = vadd.xlane.f32.xlu0 %v2245
      %v2247 = vpop.xlane.xlu0 %2246
      %v2248 = vadd.f32 %v2237, %v2238
      %2249 = vadd.xlane.f32.xlu0 %v2248
      %v2250 = vpop.xlane.xlu0 %2249
      %v2251 = vmul.f32 %v2241, 0.00390625
      %v2252 = vmul.f32 %v2244, 0.00390625
      %v2253 = vmul.f32 %v2247, 0.00390625
      %v2254 = vmul.f32 %v2250, 0.00390625
      %v2255 = vadd.f32 %v2251, 1e-05
      %v2256 = vadd.f32 %v2252, 1e-05
      %v2257 = vadd.f32 %v2253, 1e-05
      %v2258 = vadd.f32 %v2254, 1e-05
      %v2259 = vrsqrt.pop %v2255
      %v2260 = vmul.f32 %v2259, %v2255
      %v2261 = vmul.f32 %v2260, %v2259
      %v2262 = vmul.f32 0.5, %v2261
      %v2263 = vsub.f32 1.5, %v2262
      %v2264 = vmul.f32 %v2259, %v2263
      %vm2265 = vweird.f32 %v2255
      %vm2266 = vweird.f32 %v2259
      %vm2267 = vmor %vm2265, %vm2266
      %v2268 = vsel %vm2267, %v2259, %v2264
      %v2269 = vrsqrt.pop %v2256
      %v2270 = vmul.f32 %v2269, %v2256
      %v2271 = vmul.f32 %v2270, %v2269
      %v2272 = vmul.f32 0.5, %v2271
      %v2273 = vsub.f32 1.5, %v2272
      %v2274 = vmul.f32 %v2269, %v2273
      %vm2275 = vweird.f32 %v2256
      %vm2276 = vweird.f32 %v2269
      %vm2277 = vmor %vm2275, %vm2276
      %v2278 = vsel %vm2277, %v2269, %v2274
      %v2279 = vrsqrt.pop %v2257
      %v2280 = vmul.f32 %v2279, %v2257
      %v2281 = vmul.f32 %v2280, %v2279
      %v2282 = vmul.f32 0.5, %v2281
      %v2283 = vsub.f32 1.5, %v2282
      %v2284 = vmul.f32 %v2279, %v2283
      %vm2285 = vweird.f32 %v2257
      %vm2286 = vweird.f32 %v2279
      %vm2287 = vmor %vm2285, %vm2286
      %v2288 = vsel %vm2287, %v2279, %v2284
      %v2289 = vrsqrt.pop %v2258
      %v2290 = vmul.f32 %v2289, %v2258
      %v2291 = vmul.f32 %v2290, %v2289
      %v2292 = vmul.f32 0.5, %v2291
      %v2293 = vsub.f32 1.5, %v2292
      %v2294 = vmul.f32 %v2289, %v2293
      %vm2295 = vweird.f32 %v2258
      %vm2296 = vweird.f32 %v2289
      %vm2297 = vmor %vm2295, %vm2296
      %v2298 = vsel %vm2297, %v2289, %v2294
      %v2299 = vmul.f32 %v2223, %v2268
      %v2300 = vmul.f32 %v2224, %v2268
      %v2301 = vmul.f32 %v2225, %v2278
      %v2302 = vmul.f32 %v2226, %v2278
      %v2303 = vmul.f32 %v2227, %v2288
      %v2304 = vmul.f32 %v2228, %v2288
      %v2305 = vmul.f32 %v2229, %v2298
      %v2306 = vmul.f32 %v2230, %v2298
      %v2307 = vmul.f32 %v2299, %v2146
      %v2308 = vmul.f32 %v2300, %v2146
      %v2309 = vmul.f32 %v2301, %v2151
      %v2310 = vmul.f32 %v2302, %v2151
      %v2311 = vmul.f32 %v2303, %v2156
      %v2312 = vmul.f32 %v2304, %v2156
      %v2313 = vmul.f32 %v2305, %v2161
      %v2314 = vmul.f32 %v2306, %v2161
      %v2315 = vadd.f32 %v2307, %v2174
      %v2316 = vadd.f32 %v2308, %v2174
      %v2317 = vadd.f32 %v2309, %v2179
      %v2318 = vadd.f32 %v2310, %v2179
      %v2319 = vadd.f32 %v2311, %v2184
      %v2320 = vadd.f32 %v2312, %v2184
      %v2321 = vadd.f32 %v2313, %v2189
      %v2322 = vadd.f32 %v2314, %v2189
      %v2323 = vmax.f32 %v2315, 0.0
      %v2324 = vmax.f32 %v2316, 0.0
      %v2325 = vmax.f32 %v2317, 0.0
      %v2326 = vmax.f32 %v2318, 0.0
      %v2327 = vmax.f32 %v2319, 0.0
      %v2328 = vmax.f32 %v2320, 0.0
      %v2329 = vmax.f32 %v2321, 0.0
      %v2330 = vmax.f32 %v2322, 0.0
      %s2331 = scalar_lea.vmem %s4, 48
      %v2332 = vld [vmem:[%s2331] sm:$0xff]
      %v2333 = vld [vmem:[%s2331 + $0x8] sm:$0xf]
      %v2334 = vld [vmem:[%s2331 + $0xc] sm:$0xff]
      %v2335 = vld [vmem:[%s2331 + $0x14] sm:$0xf]
      %v2336 = vld [vmem:[%s2331 + $0x18] sm:$0xff]
      %v2337 = vld [vmem:[%s2331 + $0x20] sm:$0xf]
      %v2338 = vld [vmem:[%s2331 + $0x24] sm:$0xff]
      %v2339 = vld [vmem:[%s2331 + $0x2c] sm:$0xf]
      %s2340 = scalar_lea.vmem %s5, 32
      %v2341 = vld [vmem:[%s2340] sm:$0xff]
      %v2342 = vld [vmem:[%s2340 + $0x8] sm:$0xff]
      %v2343 = vld [vmem:[%s2340 + $0x10] sm:$0xff]
      %v2344 = vld [vmem:[%s2340 + $0x18] sm:$0xff]
      %2345 = vrot.lane.b32.xlu0 %v2199, 17
      %v2346 = vpop.permute.xlu0 %2345
      %2347 = vrot.lane.b32.xlu0 %v2201, 17
      %v2348 = vpop.permute.xlu0 %2347
      %2349 = vrot.lane.b32.xlu0 %v2203, 17
      %v2350 = vpop.permute.xlu0 %2349
      %2351 = vrot.lane.b32.xlu0 %v2205, 17
      %v2352 = vpop.permute.xlu0 %2351
      %2353 = vrot.lane.b32.xlu0 %v2200, 17
      %v2354 = vpop.permute.xlu0 %2353
      %2355 = vrot.lane.b32.xlu0 %v2202, 17
      %v2356 = vpop.permute.xlu0 %2355
      %2357 = vrot.lane.b32.xlu0 %v2204, 17
      %v2358 = vpop.permute.xlu0 %2357
      %2359 = vrot.lane.b32.xlu0 %v2206, 17
      %v2360 = vpop.permute.xlu0 %2359
      %2361 = vrot.lane.b32.xlu0 %v2323, 17
      %v2362 = vpop.permute.xlu0 %2361
      %2363 = vrot.lane.b32.xlu0 %v2325, 17
      %v2364 = vpop.permute.xlu0 %2363
      %2365 = vrot.lane.b32.xlu0 %v2327, 17
      %v2366 = vpop.permute.xlu0 %2365
      %2367 = vrot.lane.b32.xlu0 %v2329, 17
      %v2368 = vpop.permute.xlu0 %2367
      %2369 = vrot.lane.b32.xlu0 %v2324, 17
      %v2370 = vpop.permute.xlu0 %2369
      %2371 = vrot.lane.b32.xlu0 %v2326, 17
      %v2372 = vpop.permute.xlu0 %2371
      %2373 = vrot.lane.b32.xlu0 %v2328, 17
      %v2374 = vpop.permute.xlu0 %2373
      %2375 = vrot.lane.b32.xlu0 %v2330, 17
      %v2376 = vpop.permute.xlu0 %2375
      %v2377 = vsel %vm336, %v2362, %v2370
      %v2378 = vsel %vm336, %v2364, %v2372
      %v2379 = vsel %vm336, %v2366, %v2374
      %v2380 = vsel %vm336, %v2368, %v2376
      %v2381 = vsel %vm336, %v2354, %v2362
      %v2382 = vsel %vm336, %v2356, %v2364
      %v2383 = vsel %vm336, %v2358, %v2366
      %v2384 = vsel %vm336, %v2360, %v2368
      %v2385 = vsel %vm336, %v2346, %v2354
      %v2386 = vsel %vm336, %v2348, %v2356
      %v2387 = vsel %vm336, %v2350, %v2358
      %v2388 = vsel %vm336, %v2352, %v2360
      %v2389 = vsel %vm336, %v2370, %v2346
      %v2390 = vsel %vm336, %v2372, %v2348
      %v2391 = vsel %vm336, %v2374, %v2350
      %v2392 = vsel %vm336, %v2376, %v2352
      %v2393 = vmul.f32 %v2389, %v343
      %v2394 = vmul.f32 %v2385, %v344
      %v2395 = vmul.f32 %v2381, %v345
      %v2396 = vmul.f32 %v2377, %v346
      %v2397 = vmul.f32 %v2390, %v343
      %v2398 = vmul.f32 %v2386, %v344
      %v2399 = vmul.f32 %v2382, %v345
      %v2400 = vmul.f32 %v2378, %v346
      %v2401 = vmul.f32 %v2391, %v343
      %v2402 = vmul.f32 %v2387, %v344
      %v2403 = vmul.f32 %v2383, %v345
      %v2404 = vmul.f32 %v2379, %v346
      %v2405 = vmul.f32 %v2392, %v343
      %v2406 = vmul.f32 %v2388, %v344
      %v2407 = vmul.f32 %v2384, %v345
      %v2408 = vmul.f32 %v2380, %v346
      %2409 = vrot.lane.b32.xlu0 %v2199, 16
      %v2410 = vpop.permute.xlu0 %2409
      %2411 = vrot.lane.b32.xlu0 %v2201, 16
      %v2412 = vpop.permute.xlu0 %2411
      %2413 = vrot.lane.b32.xlu0 %v2203, 16
      %v2414 = vpop.permute.xlu0 %2413
      %2415 = vrot.lane.b32.xlu0 %v2205, 16
      %v2416 = vpop.permute.xlu0 %2415
      %2417 = vrot.lane.b32.xlu0 %v2200, 16
      %v2418 = vpop.permute.xlu0 %2417
      %2419 = vrot.lane.b32.xlu0 %v2202, 16
      %v2420 = vpop.permute.xlu0 %2419
      %2421 = vrot.lane.b32.xlu0 %v2204, 16
      %v2422 = vpop.permute.xlu0 %2421
      %2423 = vrot.lane.b32.xlu0 %v2206, 16
      %v2424 = vpop.permute.xlu0 %2423
      %2425 = vrot.lane.b32.xlu0 %v2323, 16
      %v2426 = vpop.permute.xlu0 %2425
      %2427 = vrot.lane.b32.xlu0 %v2325, 16
      %v2428 = vpop.permute.xlu0 %2427
      %2429 = vrot.lane.b32.xlu0 %v2327, 16
      %v2430 = vpop.permute.xlu0 %2429
      %2431 = vrot.lane.b32.xlu0 %v2329, 16
      %v2432 = vpop.permute.xlu0 %2431
      %2433 = vrot.lane.b32.xlu0 %v2324, 16
      %v2434 = vpop.permute.xlu0 %2433
      %2435 = vrot.lane.b32.xlu0 %v2326, 16
      %v2436 = vpop.permute.xlu0 %2435
      %2437 = vrot.lane.b32.xlu0 %v2328, 16
      %v2438 = vpop.permute.xlu0 %2437
      %2439 = vrot.lane.b32.xlu0 %v2330, 16
      %v2440 = vpop.permute.xlu0 %2439
      %v2441 = vsel %vm372, %v2426, %v2434
      %v2442 = vsel %vm372, %v2428, %v2436
      %v2443 = vsel %vm372, %v2430, %v2438
      %v2444 = vsel %vm372, %v2432, %v2440
      %v2445 = vsel %vm372, %v2418, %v2426
      %v2446 = vsel %vm372, %v2420, %v2428
      %v2447 = vsel %vm372, %v2422, %v2430
      %v2448 = vsel %vm372, %v2424, %v2432
      %v2449 = vsel %vm372, %v2410, %v2418
      %v2450 = vsel %vm372, %v2412, %v2420
      %v2451 = vsel %vm372, %v2414, %v2422
      %v2452 = vsel %vm372, %v2416, %v2424
      %v2453 = vsel %vm372, %v2434, %v2410
      %v2454 = vsel %vm372, %v2436, %v2412
      %v2455 = vsel %vm372, %v2438, %v2414
      %v2456 = vsel %vm372, %v2440, %v2416
      %v2457 = vmul.f32 %v2453, %v380
      %v2458 = vmul.f32 %v2449, %v381
      %v2459 = vmul.f32 %v2445, %v382
      %v2460 = vmul.f32 %v2441, %v383
      %v2461 = vmul.f32 %v2454, %v380
      %v2462 = vmul.f32 %v2450, %v381
      %v2463 = vmul.f32 %v2446, %v382
      %v2464 = vmul.f32 %v2442, %v383
      %v2465 = vmul.f32 %v2455, %v380
      %v2466 = vmul.f32 %v2451, %v381
      %v2467 = vmul.f32 %v2447, %v382
      %v2468 = vmul.f32 %v2443, %v383
      %v2469 = vmul.f32 %v2456, %v380
      %v2470 = vmul.f32 %v2452, %v381
      %v2471 = vmul.f32 %v2448, %v382
      %v2472 = vmul.f32 %v2444, %v383
      %2473 = vrot.lane.b32.xlu0 %v2199, 15
      %v2474 = vpop.permute.xlu0 %2473
      %2475 = vrot.lane.b32.xlu0 %v2201, 15
      %v2476 = vpop.permute.xlu0 %2475
      %2477 = vrot.lane.b32.xlu0 %v2203, 15
      %v2478 = vpop.permute.xlu0 %2477
      %2479 = vrot.lane.b32.xlu0 %v2205, 15
      %v2480 = vpop.permute.xlu0 %2479
      %2481 = vrot.lane.b32.xlu0 %v2200, 15
      %v2482 = vpop.permute.xlu0 %2481
      %2483 = vrot.lane.b32.xlu0 %v2202, 15
      %v2484 = vpop.permute.xlu0 %2483
      %2485 = vrot.lane.b32.xlu0 %v2204, 15
      %v2486 = vpop.permute.xlu0 %2485
      %2487 = vrot.lane.b32.xlu0 %v2206, 15
      %v2488 = vpop.permute.xlu0 %2487
      %2489 = vrot.lane.b32.xlu0 %v2323, 15
      %v2490 = vpop.permute.xlu0 %2489
      %2491 = vrot.lane.b32.xlu0 %v2325, 15
      %v2492 = vpop.permute.xlu0 %2491
      %2493 = vrot.lane.b32.xlu0 %v2327, 15
      %v2494 = vpop.permute.xlu0 %2493
      %2495 = vrot.lane.b32.xlu0 %v2329, 15
      %v2496 = vpop.permute.xlu0 %2495
      %2497 = vrot.lane.b32.xlu0 %v2324, 15
      %v2498 = vpop.permute.xlu0 %2497
      %2499 = vrot.lane.b32.xlu0 %v2326, 15
      %v2500 = vpop.permute.xlu0 %2499
      %2501 = vrot.lane.b32.xlu0 %v2328, 15
      %v2502 = vpop.permute.xlu0 %2501
      %2503 = vrot.lane.b32.xlu0 %v2330, 15
      %v2504 = vpop.permute.xlu0 %2503
      %v2505 = vsel %vm409, %v2490, %v2498
      %v2506 = vsel %vm409, %v2492, %v2500
      %v2507 = vsel %vm409, %v2494, %v2502
      %v2508 = vsel %vm409, %v2496, %v2504
      %v2509 = vsel %vm409, %v2482, %v2490
      %v2510 = vsel %vm409, %v2484, %v2492
      %v2511 = vsel %vm409, %v2486, %v2494
      %v2512 = vsel %vm409, %v2488, %v2496
      %v2513 = vsel %vm409, %v2474, %v2482
      %v2514 = vsel %vm409, %v2476, %v2484
      %v2515 = vsel %vm409, %v2478, %v2486
      %v2516 = vsel %vm409, %v2480, %v2488
      %v2517 = vsel %vm409, %v2498, %v2474
      %v2518 = vsel %vm409, %v2500, %v2476
      %v2519 = vsel %vm409, %v2502, %v2478
      %v2520 = vsel %vm409, %v2504, %v2480
      %v2521 = vmul.f32 %v2517, %v417
      %v2522 = vmul.f32 %v2513, %v418
      %v2523 = vmul.f32 %v2509, %v419
      %v2524 = vmul.f32 %v2505, %v420
      %v2525 = vmul.f32 %v2518, %v417
      %v2526 = vmul.f32 %v2514, %v418
      %v2527 = vmul.f32 %v2510, %v419
      %v2528 = vmul.f32 %v2506, %v420
      %v2529 = vmul.f32 %v2519, %v417
      %v2530 = vmul.f32 %v2515, %v418
      %v2531 = vmul.f32 %v2511, %v419
      %v2532 = vmul.f32 %v2507, %v420
      %v2533 = vmul.f32 %v2520, %v417
      %v2534 = vmul.f32 %v2516, %v418
      %v2535 = vmul.f32 %v2512, %v419
      %v2536 = vmul.f32 %v2508, %v420
      %2537 = vrot.lane.b32.xlu0 %v2199, 1
      %v2538 = vpop.permute.xlu0 %2537
      %2539 = vrot.lane.b32.xlu0 %v2201, 1
      %v2540 = vpop.permute.xlu0 %2539
      %2541 = vrot.lane.b32.xlu0 %v2203, 1
      %v2542 = vpop.permute.xlu0 %2541
      %2543 = vrot.lane.b32.xlu0 %v2205, 1
      %v2544 = vpop.permute.xlu0 %2543
      %2545 = vrot.lane.b32.xlu0 %v2200, 1
      %v2546 = vpop.permute.xlu0 %2545
      %2547 = vrot.lane.b32.xlu0 %v2202, 1
      %v2548 = vpop.permute.xlu0 %2547
      %2549 = vrot.lane.b32.xlu0 %v2204, 1
      %v2550 = vpop.permute.xlu0 %2549
      %2551 = vrot.lane.b32.xlu0 %v2206, 1
      %v2552 = vpop.permute.xlu0 %2551
      %2553 = vrot.lane.b32.xlu0 %v2323, 1
      %v2554 = vpop.permute.xlu0 %2553
      %2555 = vrot.lane.b32.xlu0 %v2325, 1
      %v2556 = vpop.permute.xlu0 %2555
      %2557 = vrot.lane.b32.xlu0 %v2327, 1
      %v2558 = vpop.permute.xlu0 %2557
      %2559 = vrot.lane.b32.xlu0 %v2329, 1
      %v2560 = vpop.permute.xlu0 %2559
      %2561 = vrot.lane.b32.xlu0 %v2324, 1
      %v2562 = vpop.permute.xlu0 %2561
      %2563 = vrot.lane.b32.xlu0 %v2326, 1
      %v2564 = vpop.permute.xlu0 %2563
      %2565 = vrot.lane.b32.xlu0 %v2328, 1
      %v2566 = vpop.permute.xlu0 %2565
      %2567 = vrot.lane.b32.xlu0 %v2330, 1
      %v2568 = vpop.permute.xlu0 %2567
      %v2569 = vsel %vm446, %v2554, %v2562
      %v2570 = vsel %vm446, %v2556, %v2564
      %v2571 = vsel %vm446, %v2558, %v2566
      %v2572 = vsel %vm446, %v2560, %v2568
      %v2573 = vsel %vm446, %v2546, %v2554
      %v2574 = vsel %vm446, %v2548, %v2556
      %v2575 = vsel %vm446, %v2550, %v2558
      %v2576 = vsel %vm446, %v2552, %v2560
      %v2577 = vsel %vm446, %v2538, %v2546
      %v2578 = vsel %vm446, %v2540, %v2548
      %v2579 = vsel %vm446, %v2542, %v2550
      %v2580 = vsel %vm446, %v2544, %v2552
      %v2581 = vsel %vm446, %v2562, %v2538
      %v2582 = vsel %vm446, %v2564, %v2540
      %v2583 = vsel %vm446, %v2566, %v2542
      %v2584 = vsel %vm446, %v2568, %v2544
      %v2585 = vmul.f32 %v2581, %v454
      %v2586 = vmul.f32 %v2577, %v455
      %v2587 = vmul.f32 %v2573, %v456
      %v2588 = vmul.f32 %v2569, %v457
      %v2589 = vmul.f32 %v2582, %v454
      %v2590 = vmul.f32 %v2578, %v455
      %v2591 = vmul.f32 %v2574, %v456
      %v2592 = vmul.f32 %v2570, %v457
      %v2593 = vmul.f32 %v2583, %v454
      %v2594 = vmul.f32 %v2579, %v455
      %v2595 = vmul.f32 %v2575, %v456
      %v2596 = vmul.f32 %v2571, %v457
      %v2597 = vmul.f32 %v2584, %v454
      %v2598 = vmul.f32 %v2580, %v455
      %v2599 = vmul.f32 %v2576, %v456
      %v2600 = vmul.f32 %v2572, %v457
      %2601 = vrot.lane.b32.xlu0 %v2199, 127
      %v2602 = vpop.permute.xlu0 %2601
      %2603 = vrot.lane.b32.xlu0 %v2201, 127
      %v2604 = vpop.permute.xlu0 %2603
      %2605 = vrot.lane.b32.xlu0 %v2203, 127
      %v2606 = vpop.permute.xlu0 %2605
      %2607 = vrot.lane.b32.xlu0 %v2205, 127
      %v2608 = vpop.permute.xlu0 %2607
      %2609 = vrot.lane.b32.xlu0 %v2200, 127
      %v2610 = vpop.permute.xlu0 %2609
      %2611 = vrot.lane.b32.xlu0 %v2202, 127
      %v2612 = vpop.permute.xlu0 %2611
      %2613 = vrot.lane.b32.xlu0 %v2204, 127
      %v2614 = vpop.permute.xlu0 %2613
      %2615 = vrot.lane.b32.xlu0 %v2206, 127
      %v2616 = vpop.permute.xlu0 %2615
      %2617 = vrot.lane.b32.xlu0 %v2323, 127
      %v2618 = vpop.permute.xlu0 %2617
      %2619 = vrot.lane.b32.xlu0 %v2325, 127
      %v2620 = vpop.permute.xlu0 %2619
      %2621 = vrot.lane.b32.xlu0 %v2327, 127
      %v2622 = vpop.permute.xlu0 %2621
      %2623 = vrot.lane.b32.xlu0 %v2329, 127
      %v2624 = vpop.permute.xlu0 %2623
      %2625 = vrot.lane.b32.xlu0 %v2324, 127
      %v2626 = vpop.permute.xlu0 %2625
      %2627 = vrot.lane.b32.xlu0 %v2326, 127
      %v2628 = vpop.permute.xlu0 %2627
      %2629 = vrot.lane.b32.xlu0 %v2328, 127
      %v2630 = vpop.permute.xlu0 %2629
      %2631 = vrot.lane.b32.xlu0 %v2330, 127
      %v2632 = vpop.permute.xlu0 %2631
      %v2633 = vsel %vm483, %v2618, %v2626
      %v2634 = vsel %vm483, %v2620, %v2628
      %v2635 = vsel %vm483, %v2622, %v2630
      %v2636 = vsel %vm483, %v2624, %v2632
      %v2637 = vsel %vm483, %v2610, %v2618
      %v2638 = vsel %vm483, %v2612, %v2620
      %v2639 = vsel %vm483, %v2614, %v2622
      %v2640 = vsel %vm483, %v2616, %v2624
      %v2641 = vsel %vm483, %v2602, %v2610
      %v2642 = vsel %vm483, %v2604, %v2612
      %v2643 = vsel %vm483, %v2606, %v2614
      %v2644 = vsel %vm483, %v2608, %v2616
      %v2645 = vsel %vm483, %v2626, %v2602
      %v2646 = vsel %vm483, %v2628, %v2604
      %v2647 = vsel %vm483, %v2630, %v2606
      %v2648 = vsel %vm483, %v2632, %v2608
      %v2649 = vmul.f32 %v2641, %v491
      %v2650 = vmul.f32 %v2637, %v492
      %v2651 = vmul.f32 %v2633, %v493
      %v2652 = vmul.f32 %v2645, %v494
      %v2653 = vmul.f32 %v2642, %v491
      %v2654 = vmul.f32 %v2638, %v492
      %v2655 = vmul.f32 %v2634, %v493
      %v2656 = vmul.f32 %v2646, %v494
      %v2657 = vmul.f32 %v2643, %v491
      %v2658 = vmul.f32 %v2639, %v492
      %v2659 = vmul.f32 %v2635, %v493
      %v2660 = vmul.f32 %v2647, %v494
      %v2661 = vmul.f32 %v2644, %v491
      %v2662 = vmul.f32 %v2640, %v492
      %v2663 = vmul.f32 %v2636, %v493
      %v2664 = vmul.f32 %v2648, %v494
      %2665 = vrot.lane.b32.xlu0 %v2199, 113
      %v2666 = vpop.permute.xlu0 %2665
      %2667 = vrot.lane.b32.xlu0 %v2201, 113
      %v2668 = vpop.permute.xlu0 %2667
      %2669 = vrot.lane.b32.xlu0 %v2203, 113
      %v2670 = vpop.permute.xlu0 %2669
      %2671 = vrot.lane.b32.xlu0 %v2205, 113
      %v2672 = vpop.permute.xlu0 %2671
      %2673 = vrot.lane.b32.xlu0 %v2200, 113
      %v2674 = vpop.permute.xlu0 %2673
      %2675 = vrot.lane.b32.xlu0 %v2202, 113
      %v2676 = vpop.permute.xlu0 %2675
      %2677 = vrot.lane.b32.xlu0 %v2204, 113
      %v2678 = vpop.permute.xlu0 %2677
      %2679 = vrot.lane.b32.xlu0 %v2206, 113
      %v2680 = vpop.permute.xlu0 %2679
      %2681 = vrot.lane.b32.xlu0 %v2323, 113
      %v2682 = vpop.permute.xlu0 %2681
      %2683 = vrot.lane.b32.xlu0 %v2325, 113
      %v2684 = vpop.permute.xlu0 %2683
      %2685 = vrot.lane.b32.xlu0 %v2327, 113
      %v2686 = vpop.permute.xlu0 %2685
      %2687 = vrot.lane.b32.xlu0 %v2329, 113
      %v2688 = vpop.permute.xlu0 %2687
      %2689 = vrot.lane.b32.xlu0 %v2324, 113
      %v2690 = vpop.permute.xlu0 %2689
      %2691 = vrot.lane.b32.xlu0 %v2326, 113
      %v2692 = vpop.permute.xlu0 %2691
      %2693 = vrot.lane.b32.xlu0 %v2328, 113
      %v2694 = vpop.permute.xlu0 %2693
      %2695 = vrot.lane.b32.xlu0 %v2330, 113
      %v2696 = vpop.permute.xlu0 %2695
      %v2697 = vsel %vm520, %v2682, %v2690
      %v2698 = vsel %vm520, %v2684, %v2692
      %v2699 = vsel %vm520, %v2686, %v2694
      %v2700 = vsel %vm520, %v2688, %v2696
      %v2701 = vsel %vm520, %v2674, %v2682
      %v2702 = vsel %vm520, %v2676, %v2684
      %v2703 = vsel %vm520, %v2678, %v2686
      %v2704 = vsel %vm520, %v2680, %v2688
      %v2705 = vsel %vm520, %v2666, %v2674
      %v2706 = vsel %vm520, %v2668, %v2676
      %v2707 = vsel %vm520, %v2670, %v2678
      %v2708 = vsel %vm520, %v2672, %v2680
      %v2709 = vsel %vm520, %v2690, %v2666
      %v2710 = vsel %vm520, %v2692, %v2668
      %v2711 = vsel %vm520, %v2694, %v2670
      %v2712 = vsel %vm520, %v2696, %v2672
      %v2713 = vmul.f32 %v2705, %v528
      %v2714 = vmul.f32 %v2701, %v529
      %v2715 = vmul.f32 %v2697, %v530
      %v2716 = vmul.f32 %v2709, %v531
      %v2717 = vmul.f32 %v2706, %v528
      %v2718 = vmul.f32 %v2702, %v529
      %v2719 = vmul.f32 %v2698, %v530
      %v2720 = vmul.f32 %v2710, %v531
      %v2721 = vmul.f32 %v2707, %v528
      %v2722 = vmul.f32 %v2703, %v529
      %v2723 = vmul.f32 %v2699, %v530
      %v2724 = vmul.f32 %v2711, %v531
      %v2725 = vmul.f32 %v2708, %v528
      %v2726 = vmul.f32 %v2704, %v529
      %v2727 = vmul.f32 %v2700, %v530
      %v2728 = vmul.f32 %v2712, %v531
      %2729 = vrot.lane.b32.xlu0 %v2199, 112
      %v2730 = vpop.permute.xlu0 %2729
      %2731 = vrot.lane.b32.xlu0 %v2201, 112
      %v2732 = vpop.permute.xlu0 %2731
      %2733 = vrot.lane.b32.xlu0 %v2203, 112
      %v2734 = vpop.permute.xlu0 %2733
      %2735 = vrot.lane.b32.xlu0 %v2205, 112
      %v2736 = vpop.permute.xlu0 %2735
      %2737 = vrot.lane.b32.xlu0 %v2200, 112
      %v2738 = vpop.permute.xlu0 %2737
      %2739 = vrot.lane.b32.xlu0 %v2202, 112
      %v2740 = vpop.permute.xlu0 %2739
      %2741 = vrot.lane.b32.xlu0 %v2204, 112
      %v2742 = vpop.permute.xlu0 %2741
      %2743 = vrot.lane.b32.xlu0 %v2206, 112
      %v2744 = vpop.permute.xlu0 %2743
      %2745 = vrot.lane.b32.xlu0 %v2323, 112
      %v2746 = vpop.permute.xlu0 %2745
      %2747 = vrot.lane.b32.xlu0 %v2325, 112
      %v2748 = vpop.permute.xlu0 %2747
      %2749 = vrot.lane.b32.xlu0 %v2327, 112
      %v2750 = vpop.permute.xlu0 %2749
      %2751 = vrot.lane.b32.xlu0 %v2329, 112
      %v2752 = vpop.permute.xlu0 %2751
      %2753 = vrot.lane.b32.xlu0 %v2324, 112
      %v2754 = vpop.permute.xlu0 %2753
      %2755 = vrot.lane.b32.xlu0 %v2326, 112
      %v2756 = vpop.permute.xlu0 %2755
      %2757 = vrot.lane.b32.xlu0 %v2328, 112
      %v2758 = vpop.permute.xlu0 %2757
      %2759 = vrot.lane.b32.xlu0 %v2330, 112
      %v2760 = vpop.permute.xlu0 %2759
      %v2761 = vsel %vm557, %v2746, %v2754
      %v2762 = vsel %vm557, %v2748, %v2756
      %v2763 = vsel %vm557, %v2750, %v2758
      %v2764 = vsel %vm557, %v2752, %v2760
      %v2765 = vsel %vm557, %v2738, %v2746
      %v2766 = vsel %vm557, %v2740, %v2748
      %v2767 = vsel %vm557, %v2742, %v2750
      %v2768 = vsel %vm557, %v2744, %v2752
      %v2769 = vsel %vm557, %v2730, %v2738
      %v2770 = vsel %vm557, %v2732, %v2740
      %v2771 = vsel %vm557, %v2734, %v2742
      %v2772 = vsel %vm557, %v2736, %v2744
      %v2773 = vsel %vm557, %v2754, %v2730
      %v2774 = vsel %vm557, %v2756, %v2732
      %v2775 = vsel %vm557, %v2758, %v2734
      %v2776 = vsel %vm557, %v2760, %v2736
      %v2777 = vmul.f32 %v2769, %v565
      %v2778 = vmul.f32 %v2765, %v566
      %v2779 = vmul.f32 %v2761, %v567
      %v2780 = vmul.f32 %v2773, %v568
      %v2781 = vmul.f32 %v2770, %v565
      %v2782 = vmul.f32 %v2766, %v566
      %v2783 = vmul.f32 %v2762, %v567
      %v2784 = vmul.f32 %v2774, %v568
      %v2785 = vmul.f32 %v2771, %v565
      %v2786 = vmul.f32 %v2767, %v566
      %v2787 = vmul.f32 %v2763, %v567
      %v2788 = vmul.f32 %v2775, %v568
      %v2789 = vmul.f32 %v2772, %v565
      %v2790 = vmul.f32 %v2768, %v566
      %v2791 = vmul.f32 %v2764, %v567
      %v2792 = vmul.f32 %v2776, %v568
      %2793 = vrot.lane.b32.xlu0 %v2199, 111
      %v2794 = vpop.permute.xlu0 %2793
      %2795 = vrot.lane.b32.xlu0 %v2201, 111
      %v2796 = vpop.permute.xlu0 %2795
      %2797 = vrot.lane.b32.xlu0 %v2203, 111
      %v2798 = vpop.permute.xlu0 %2797
      %2799 = vrot.lane.b32.xlu0 %v2205, 111
      %v2800 = vpop.permute.xlu0 %2799
      %2801 = vrot.lane.b32.xlu0 %v2200, 111
      %v2802 = vpop.permute.xlu0 %2801
      %2803 = vrot.lane.b32.xlu0 %v2202, 111
      %v2804 = vpop.permute.xlu0 %2803
      %2805 = vrot.lane.b32.xlu0 %v2204, 111
      %v2806 = vpop.permute.xlu0 %2805
      %2807 = vrot.lane.b32.xlu0 %v2206, 111
      %v2808 = vpop.permute.xlu0 %2807
      %2809 = vrot.lane.b32.xlu0 %v2323, 111
      %v2810 = vpop.permute.xlu0 %2809
      %2811 = vrot.lane.b32.xlu0 %v2325, 111
      %v2812 = vpop.permute.xlu0 %2811
      %2813 = vrot.lane.b32.xlu0 %v2327, 111
      %v2814 = vpop.permute.xlu0 %2813
      %2815 = vrot.lane.b32.xlu0 %v2329, 111
      %v2816 = vpop.permute.xlu0 %2815
      %2817 = vrot.lane.b32.xlu0 %v2324, 111
      %v2818 = vpop.permute.xlu0 %2817
      %2819 = vrot.lane.b32.xlu0 %v2326, 111
      %v2820 = vpop.permute.xlu0 %2819
      %2821 = vrot.lane.b32.xlu0 %v2328, 111
      %v2822 = vpop.permute.xlu0 %2821
      %2823 = vrot.lane.b32.xlu0 %v2330, 111
      %v2824 = vpop.permute.xlu0 %2823
      %v2825 = vsel %vm594, %v2810, %v2818
      %v2826 = vsel %vm594, %v2812, %v2820
      %v2827 = vsel %vm594, %v2814, %v2822
      %v2828 = vsel %vm594, %v2816, %v2824
      %v2829 = vsel %vm594, %v2802, %v2810
      %v2830 = vsel %vm594, %v2804, %v2812
      %v2831 = vsel %vm594, %v2806, %v2814
      %v2832 = vsel %vm594, %v2808, %v2816
      %v2833 = vsel %vm594, %v2794, %v2802
      %v2834 = vsel %vm594, %v2796, %v2804
      %v2835 = vsel %vm594, %v2798, %v2806
      %v2836 = vsel %vm594, %v2800, %v2808
      %v2837 = vsel %vm594, %v2818, %v2794
      %v2838 = vsel %vm594, %v2820, %v2796
      %v2839 = vsel %vm594, %v2822, %v2798
      %v2840 = vsel %vm594, %v2824, %v2800
      %v2841 = vmul.f32 %v2833, %v602
      %v2842 = vmul.f32 %v2829, %v603
      %v2843 = vmul.f32 %v2825, %v604
      %v2844 = vmul.f32 %v2837, %v605
      %v2845 = vmul.f32 %v2834, %v602
      %v2846 = vmul.f32 %v2830, %v603
      %v2847 = vmul.f32 %v2826, %v604
      %v2848 = vmul.f32 %v2838, %v605
      %v2849 = vmul.f32 %v2835, %v602
      %v2850 = vmul.f32 %v2831, %v603
      %v2851 = vmul.f32 %v2827, %v604
      %v2852 = vmul.f32 %v2839, %v605
      %v2853 = vmul.f32 %v2836, %v602
      %v2854 = vmul.f32 %v2832, %v603
      %v2855 = vmul.f32 %v2828, %v604
      %v2856 = vmul.f32 %v2840, %v605
      %v2857 = vpack.c.bf16 %v2397, %v2393
      %v2858 = vpack.c.bf16 %v2398, %v2394
      %v2859 = vpack.c.bf16 %v2399, %v2395
      %v2860 = vpack.c.bf16 %v2400, %v2396
      %v2861 = vpack.c.bf16 %v2405, %v2401
      %v2862 = vpack.c.bf16 %v2406, %v2402
      %v2863 = vpack.c.bf16 %v2407, %v2403
      %v2864 = vpack.c.bf16 %v2408, %v2404
      %v2865 = vpack.c.bf16 %v2461, %v2457
      %v2866 = vpack.c.bf16 %v2462, %v2458
      %v2867 = vpack.c.bf16 %v2463, %v2459
      %v2868 = vpack.c.bf16 %v2464, %v2460
      %v2869 = vpack.c.bf16 %v2469, %v2465
      %v2870 = vpack.c.bf16 %v2470, %v2466
      %v2871 = vpack.c.bf16 %v2471, %v2467
      %v2872 = vpack.c.bf16 %v2472, %v2468
      %v2873 = vpack.c.bf16 %v2525, %v2521
      %v2874 = vpack.c.bf16 %v2526, %v2522
      %v2875 = vpack.c.bf16 %v2527, %v2523
      %v2876 = vpack.c.bf16 %v2528, %v2524
      %v2877 = vpack.c.bf16 %v2533, %v2529
      %v2878 = vpack.c.bf16 %v2534, %v2530
      %v2879 = vpack.c.bf16 %v2535, %v2531
      %v2880 = vpack.c.bf16 %v2536, %v2532
      %v2881 = vpack.c.bf16 %v2589, %v2585
      %v2882 = vpack.c.bf16 %v2590, %v2586
      %v2883 = vpack.c.bf16 %v2591, %v2587
      %v2884 = vpack.c.bf16 %v2592, %v2588
      %v2885 = vpack.c.bf16 %v2597, %v2593
      %v2886 = vpack.c.bf16 %v2598, %v2594
      %v2887 = vpack.c.bf16 %v2599, %v2595
      %v2888 = vpack.c.bf16 %v2600, %v2596
      %v2889 = vpack.c.bf16 %v2201, %v2199
      %v2890 = vpack.c.bf16 %v2202, %v2200
      %v2891 = vpack.c.bf16 %v2325, %v2323
      %v2892 = vpack.c.bf16 %v2326, %v2324
      %v2893 = vpack.c.bf16 %v2205, %v2203
      %v2894 = vpack.c.bf16 %v2206, %v2204
      %v2895 = vpack.c.bf16 %v2329, %v2327
      %v2896 = vpack.c.bf16 %v2330, %v2328
      %v2897 = vpack.c.bf16 %v2653, %v2649
      %v2898 = vpack.c.bf16 %v2654, %v2650
      %v2899 = vpack.c.bf16 %v2655, %v2651
      %v2900 = vpack.c.bf16 %v2656, %v2652
      %v2901 = vpack.c.bf16 %v2661, %v2657
      %v2902 = vpack.c.bf16 %v2662, %v2658
      %v2903 = vpack.c.bf16 %v2663, %v2659
      %v2904 = vpack.c.bf16 %v2664, %v2660
      %v2905 = vpack.c.bf16 %v2717, %v2713
      %v2906 = vpack.c.bf16 %v2718, %v2714
      %v2907 = vpack.c.bf16 %v2719, %v2715
      %v2908 = vpack.c.bf16 %v2720, %v2716
      %v2909 = vpack.c.bf16 %v2725, %v2721
      %v2910 = vpack.c.bf16 %v2726, %v2722
      %v2911 = vpack.c.bf16 %v2727, %v2723
      %v2912 = vpack.c.bf16 %v2728, %v2724
      %v2913 = vpack.c.bf16 %v2781, %v2777
      %v2914 = vpack.c.bf16 %v2782, %v2778
      %v2915 = vpack.c.bf16 %v2783, %v2779
      %v2916 = vpack.c.bf16 %v2784, %v2780
      %v2917 = vpack.c.bf16 %v2789, %v2785
      %v2918 = vpack.c.bf16 %v2790, %v2786
      %v2919 = vpack.c.bf16 %v2791, %v2787
      %v2920 = vpack.c.bf16 %v2792, %v2788
      %v2921 = vpack.c.bf16 %v2845, %v2841
      %v2922 = vpack.c.bf16 %v2846, %v2842
      %v2923 = vpack.c.bf16 %v2847, %v2843
      %v2924 = vpack.c.bf16 %v2848, %v2844
      %v2925 = vpack.c.bf16 %v2853, %v2849
      %v2926 = vpack.c.bf16 %v2854, %v2850
      %v2927 = vpack.c.bf16 %v2855, %v2851
      %v2928 = vpack.c.bf16 %v2856, %v2852
      %2930 = vset.pattern.permute.xlu0 0
      %2931 = vperm.xlu0 %2930, %v2341
      %v2932 = vpop.permute.xlu0 %2931
      %2935 = vset.pattern.permute.xlu0 0
      %2936 = vperm.xlu0 %2935, %v2342
      %v2937 = vpop.permute.xlu0 %2936
      %2940 = vset.pattern.permute.xlu0 0
      %2941 = vperm.xlu0 %2940, %v2343
      %v2942 = vpop.permute.xlu0 %2941
      %2945 = vset.pattern.permute.xlu0 0
      %2946 = vperm.xlu0 %2945, %v2344
      %v2947 = vpop.permute.xlu0 %2946
      %v2957 = vunpack.c.l.b16 %v2332
      %v2958 = vunpack.c.h.b16 %v2332
      %v2959 = vunpack.c.l.b16 %v2333
      %v2960 = vunpack.c.l.b16 %v2334
      %v2961 = vunpack.c.h.b16 %v2334
      %v2962 = vunpack.c.l.b16 %v2335
      %v2963 = vunpack.c.l.b16 %v2336
      %v2964 = vunpack.c.h.b16 %v2336
      %v2965 = vunpack.c.l.b16 %v2337
      %v2966 = vunpack.c.l.b16 %v2338
      %v2967 = vunpack.c.h.b16 %v2338
      %v2968 = vunpack.c.l.b16 %v2339
      %v2969 = vpack.c.b16 %v2960, %v2957
      %v2970 = vpack.c.b16 %v2961, %v2958
      %v2971 = vpack.c.b16 %v2962, %v2959
      %v2972 = vpack.c.b16 %v2966, %v2963
      %v2973 = vpack.c.b16 %v2967, %v2964
      %v2974 = vpack.c.b16 %v2968, %v2965
      %v2980 = vsel %vm1798, %v2971, 0
      %v2983 = vsel %vm1798, %v2974, 0
      %2985 = vmatpush.bf16.msra.mxu0 %v2885
      %2986 = vmatpush.bf16.msra.mxu0 %v2881
      %2987 = vmatpush.bf16.msra.mxu0 %v2877
      %2988 = vmatpush.bf16.msra.mxu0 %v2873
      %2989 = vmatpush.bf16.msra.mxu0 %v2869
      %2990 = vmatpush.bf16.msra.mxu0 %v2865
      %2991 = vmatpush.bf16.msra.mxu0 %v2861
      %2992 = vmatpush.bf16.msra.mxu0 %v2857
      %2993 = vmatmul.bf16.gmra.mxu0 %v2969
      %v2994 = vpop.f32.mrf.mxu0
      %v2995 = vadd.f32 %v2932, %v2994
      %v2996 = vpop.f32.mrf.mxu0
      %v2997 = vadd.f32 %v2937, %v2996
      %2998 = vmatmul.bf16.gmra.mxu0 %v2972
      %v2999 = vpop.f32.mrf.mxu0
      %v3000 = vadd.f32 %v2942, %v2999
      %v3001 = vpop.f32.mrf.mxu0
      %v3002 = vadd.f32 %v2947, %v3001
      %3003 = vdwg.mxu0
      %3004 = vmatpush.bf16.msra.mxu0 %v2917
      %3005 = vmatpush.bf16.msra.mxu0 %v2913
      %3006 = vmatpush.bf16.msra.mxu0 %v2909
      %3007 = vmatpush.bf16.msra.mxu0 %v2905
      %3008 = vmatpush.bf16.msra.mxu0 %v2901
      %3009 = vmatpush.bf16.msra.mxu0 %v2897
      %3010 = vmatpush.bf16.msra.mxu0 %v2893
      %3011 = vmatpush.bf16.msra.mxu0 %v2889
      %3012 = vmatmul.bf16.gmra.mxu0 %v2970
      %v3013 = vpop.f32.mrf.mxu0
      %v3014 = vadd.f32 %v2995, %v3013
      %v3015 = vpop.f32.mrf.mxu0
      %v3016 = vadd.f32 %v2997, %v3015
      %3017 = vmatmul.bf16.gmra.mxu0 %v2973
      %v3018 = vpop.f32.mrf.mxu0
      %v3019 = vadd.f32 %v3000, %v3018
      %v3020 = vpop.f32.mrf.mxu0
      %v3021 = vadd.f32 %v3002, %v3020
      %3022 = vdwg.mxu0
      %3023 = vmatpush.bf16.msra.mxu0 0
      %3024 = vmatpush.bf16.msra.mxu0 0
      %3025 = vmatpush.bf16.msra.mxu0 0
      %3026 = vmatpush.bf16.msra.mxu0 0
      %3027 = vmatpush.bf16.msra.mxu0 0
      %3028 = vmatpush.bf16.msra.mxu0 0
      %3029 = vmatpush.bf16.msra.mxu0 %v2925
      %3030 = vmatpush.bf16.msra.mxu0 %v2921
      %3031 = vmatmul.bf16.gmra.mxu0 %v2980
      %v3032 = vpop.f32.mrf.mxu0
      %v3033 = vadd.f32 %v3014, %v3032
      %v3034 = vpop.f32.mrf.mxu0
      %v3035 = vadd.f32 %v3016, %v3034
      %3036 = vmatmul.bf16.gmra.mxu0 %v2983
      %v3037 = vpop.f32.mrf.mxu0
      %v3038 = vadd.f32 %v3019, %v3037
      %v3039 = vpop.f32.mrf.mxu0
      %v3040 = vadd.f32 %v3021, %v3039
      %3041 = vdwg.mxu0
      %3042 = vmatpush.bf16.msra.mxu0 %v2886
      %3043 = vmatpush.bf16.msra.mxu0 %v2882
      %3044 = vmatpush.bf16.msra.mxu0 %v2878
      %3045 = vmatpush.bf16.msra.mxu0 %v2874
      %3046 = vmatpush.bf16.msra.mxu0 %v2870
      %3047 = vmatpush.bf16.msra.mxu0 %v2866
      %3048 = vmatpush.bf16.msra.mxu0 %v2862
      %3049 = vmatpush.bf16.msra.mxu0 %v2858
      %3050 = vmatmul.bf16.gmra.mxu0 %v2969
      %v3051 = vpop.f32.mrf.mxu0
      %v3052 = vadd.f32 %v2932, %v3051
      %v3053 = vpop.f32.mrf.mxu0
      %v3054 = vadd.f32 %v2937, %v3053
      %3055 = vmatmul.bf16.gmra.mxu0 %v2972
      %v3056 = vpop.f32.mrf.mxu0
      %v3057 = vadd.f32 %v2942, %v3056
      %v3058 = vpop.f32.mrf.mxu0
      %v3059 = vadd.f32 %v2947, %v3058
      %3060 = vdwg.mxu0
      %3061 = vmatpush.bf16.msra.mxu0 %v2918
      %3062 = vmatpush.bf16.msra.mxu0 %v2914
      %3063 = vmatpush.bf16.msra.mxu0 %v2910
      %3064 = vmatpush.bf16.msra.mxu0 %v2906
      %3065 = vmatpush.bf16.msra.mxu0 %v2902
      %3066 = vmatpush.bf16.msra.mxu0 %v2898
      %3067 = vmatpush.bf16.msra.mxu0 %v2894
      %3068 = vmatpush.bf16.msra.mxu0 %v2890
      %3069 = vmatmul.bf16.gmra.mxu0 %v2970
      %v3070 = vpop.f32.mrf.mxu0
      %v3071 = vadd.f32 %v3052, %v3070
      %v3072 = vpop.f32.mrf.mxu0
      %v3073 = vadd.f32 %v3054, %v3072
      %3074 = vmatmul.bf16.gmra.mxu0 %v2973
      %v3075 = vpop.f32.mrf.mxu0
      %v3076 = vadd.f32 %v3057, %v3075
      %v3077 = vpop.f32.mrf.mxu0
      %v3078 = vadd.f32 %v3059, %v3077
      %3079 = vdwg.mxu0
      %3080 = vmatpush.bf16.msra.mxu0 0
      %3081 = vmatpush.bf16.msra.mxu0 0
      %3082 = vmatpush.bf16.msra.mxu0 0
      %3083 = vmatpush.bf16.msra.mxu0 0
      %3084 = vmatpush.bf16.msra.mxu0 0
      %3085 = vmatpush.bf16.msra.mxu0 0
      %3086 = vmatpush.bf16.msra.mxu0 %v2926
      %3087 = vmatpush.bf16.msra.mxu0 %v2922
      %3088 = vmatmul.bf16.gmra.mxu0 %v2980
      %v3089 = vpop.f32.mrf.mxu0
      %v3090 = vadd.f32 %v3071, %v3089
      %v3091 = vpop.f32.mrf.mxu0
      %v3092 = vadd.f32 %v3073, %v3091
      %3093 = vmatmul.bf16.gmra.mxu0 %v2983
      %v3094 = vpop.f32.mrf.mxu0
      %v3095 = vadd.f32 %v3076, %v3094
      %v3096 = vpop.f32.mrf.mxu0
      %v3097 = vadd.f32 %v3078, %v3096
      %3098 = vdwg.mxu0
      %3099 = vmatpush.bf16.msra.mxu0 %v2887
      %3100 = vmatpush.bf16.msra.mxu0 %v2883
      %3101 = vmatpush.bf16.msra.mxu0 %v2879
      %3102 = vmatpush.bf16.msra.mxu0 %v2875
      %3103 = vmatpush.bf16.msra.mxu0 %v2871
      %3104 = vmatpush.bf16.msra.mxu0 %v2867
      %3105 = vmatpush.bf16.msra.mxu0 %v2863
      %3106 = vmatpush.bf16.msra.mxu0 %v2859
      %3107 = vmatmul.bf16.gmra.mxu0 %v2969
      %v3108 = vpop.f32.mrf.mxu0
      %v3109 = vadd.f32 %v2932, %v3108
      %v3110 = vpop.f32.mrf.mxu0
      %v3111 = vadd.f32 %v2937, %v3110
      %3112 = vmatmul.bf16.gmra.mxu0 %v2972
      %v3113 = vpop.f32.mrf.mxu0
      %v3114 = vadd.f32 %v2942, %v3113
      %v3115 = vpop.f32.mrf.mxu0
      %v3116 = vadd.f32 %v2947, %v3115
      %3117 = vdwg.mxu0
      %3118 = vmatpush.bf16.msra.mxu0 %v2919
      %3119 = vmatpush.bf16.msra.mxu0 %v2915
      %3120 = vmatpush.bf16.msra.mxu0 %v2911
      %3121 = vmatpush.bf16.msra.mxu0 %v2907
      %3122 = vmatpush.bf16.msra.mxu0 %v2903
      %3123 = vmatpush.bf16.msra.mxu0 %v2899
      %3124 = vmatpush.bf16.msra.mxu0 %v2895
      %3125 = vmatpush.bf16.msra.mxu0 %v2891
      %3126 = vmatmul.bf16.gmra.mxu0 %v2970
      %v3127 = vpop.f32.mrf.mxu0
      %v3128 = vadd.f32 %v3109, %v3127
      %v3129 = vpop.f32.mrf.mxu0
      %v3130 = vadd.f32 %v3111, %v3129
      %3131 = vmatmul.bf16.gmra.mxu0 %v2973
      %v3132 = vpop.f32.mrf.mxu0
      %v3133 = vadd.f32 %v3114, %v3132
      %v3134 = vpop.f32.mrf.mxu0
      %v3135 = vadd.f32 %v3116, %v3134
      %3136 = vdwg.mxu0
      %3137 = vmatpush.bf16.msra.mxu0 0
      %3138 = vmatpush.bf16.msra.mxu0 0
      %3139 = vmatpush.bf16.msra.mxu0 0
      %3140 = vmatpush.bf16.msra.mxu0 0
      %3141 = vmatpush.bf16.msra.mxu0 0
      %3142 = vmatpush.bf16.msra.mxu0 0
      %3143 = vmatpush.bf16.msra.mxu0 %v2927
      %3144 = vmatpush.bf16.msra.mxu0 %v2923
      %3145 = vmatmul.bf16.gmra.mxu0 %v2980
      %v3146 = vpop.f32.mrf.mxu0
      %v3147 = vadd.f32 %v3128, %v3146
      %v3148 = vpop.f32.mrf.mxu0
      %v3149 = vadd.f32 %v3130, %v3148
      %3150 = vmatmul.bf16.gmra.mxu0 %v2983
      %v3151 = vpop.f32.mrf.mxu0
      %v3152 = vadd.f32 %v3133, %v3151
      %v3153 = vpop.f32.mrf.mxu0
      %v3154 = vadd.f32 %v3135, %v3153
      %3155 = vdwg.mxu0
      %3156 = vmatpush.bf16.msra.mxu0 %v2888
      %3157 = vmatpush.bf16.msra.mxu0 %v2884
      %3158 = vmatpush.bf16.msra.mxu0 %v2880
      %3159 = vmatpush.bf16.msra.mxu0 %v2876
      %3160 = vmatpush.bf16.msra.mxu0 %v2872
      %3161 = vmatpush.bf16.msra.mxu0 %v2868
      %3162 = vmatpush.bf16.msra.mxu0 %v2864
      %3163 = vmatpush.bf16.msra.mxu0 %v2860
      %3164 = vmatmul.bf16.gmra.mxu0 %v2969
      %v3165 = vpop.f32.mrf.mxu0
      %v3166 = vadd.f32 %v2932, %v3165
      %v3167 = vpop.f32.mrf.mxu0
      %v3168 = vadd.f32 %v2937, %v3167
      %3169 = vmatmul.bf16.gmra.mxu0 %v2972
      %v3170 = vpop.f32.mrf.mxu0
      %v3171 = vadd.f32 %v2942, %v3170
      %v3172 = vpop.f32.mrf.mxu0
      %v3173 = vadd.f32 %v2947, %v3172
      %3174 = vdwg.mxu0
      %3175 = vmatpush.bf16.msra.mxu0 %v2920
      %3176 = vmatpush.bf16.msra.mxu0 %v2916
      %3177 = vmatpush.bf16.msra.mxu0 %v2912
      %3178 = vmatpush.bf16.msra.mxu0 %v2908
      %3179 = vmatpush.bf16.msra.mxu0 %v2904
      %3180 = vmatpush.bf16.msra.mxu0 %v2900
      %3181 = vmatpush.bf16.msra.mxu0 %v2896
      %3182 = vmatpush.bf16.msra.mxu0 %v2892
      %3183 = vmatmul.bf16.gmra.mxu0 %v2970
      %v3184 = vpop.f32.mrf.mxu0
      %v3185 = vadd.f32 %v3166, %v3184
      %v3186 = vpop.f32.mrf.mxu0
      %v3187 = vadd.f32 %v3168, %v3186
      %3188 = vmatmul.bf16.gmra.mxu0 %v2973
      %v3189 = vpop.f32.mrf.mxu0
      %v3190 = vadd.f32 %v3171, %v3189
      %v3191 = vpop.f32.mrf.mxu0
      %v3192 = vadd.f32 %v3173, %v3191
      %3193 = vdwg.mxu0
      %3194 = vmatpush.bf16.msra.mxu0 0
      %3195 = vmatpush.bf16.msra.mxu0 0
      %3196 = vmatpush.bf16.msra.mxu0 0
      %3197 = vmatpush.bf16.msra.mxu0 0
      %3198 = vmatpush.bf16.msra.mxu0 0
      %3199 = vmatpush.bf16.msra.mxu0 0
      %3200 = vmatpush.bf16.msra.mxu0 %v2928
      %3201 = vmatpush.bf16.msra.mxu0 %v2924
      %3202 = vmatmul.bf16.gmra.mxu0 %v2980
      %v3203 = vpop.f32.mrf.mxu0
      %v3204 = vadd.f32 %v3185, %v3203
      %v3205 = vpop.f32.mrf.mxu0
      %v3206 = vadd.f32 %v3187, %v3205
      %3207 = vmatmul.bf16.gmra.mxu0 %v2983
      %v3208 = vpop.f32.mrf.mxu0
      %v3209 = vadd.f32 %v3190, %v3208
      %v3210 = vpop.f32.mrf.mxu0
      %v3211 = vadd.f32 %v3192, %v3210
      %3212 = vdwg.mxu0
      %s3213 = scalar_lea.vmem %s6, 64
      %v3214 = vld [vmem:[%s3213] sm:$0xff]
      %v3215 = vld [vmem:[%s3213 + $0x8] sm:$0xff]
      %v3216 = vld [vmem:[%s3213 + $0x10] sm:$0xff]
      %v3217 = vld [vmem:[%s3213 + $0x18] sm:$0xff]
      %s3218 = scalar_lea.vmem %s7, 64
      %v3219 = vld [vmem:[%s3218] sm:$0xff]
      %v3220 = vld [vmem:[%s3218 + $0x8] sm:$0xff]
      %v3221 = vld [vmem:[%s3218 + $0x10] sm:$0xff]
      %v3222 = vld [vmem:[%s3218 + $0x18] sm:$0xff]
      %v3223 = vadd.f32 %v3033, %v3090
      %3224 = vadd.xlane.f32.xlu0 %v3223
      %v3225 = vpop.xlane.xlu0 %3224
      %v3226 = vadd.f32 %v3035, %v3092
      %3227 = vadd.xlane.f32.xlu0 %v3226
      %v3228 = vpop.xlane.xlu0 %3227
      %v3229 = vadd.f32 %v3038, %v3095
      %3230 = vadd.xlane.f32.xlu0 %v3229
      %v3231 = vpop.xlane.xlu0 %3230
      %v3232 = vadd.f32 %v3040, %v3097
      %3233 = vadd.xlane.f32.xlu0 %v3232
      %v3234 = vpop.xlane.xlu0 %3233
      %v3235 = vmul.f32 %v3225, 0.00390625
      %v3236 = vmul.f32 %v3228, 0.00390625
      %v3237 = vmul.f32 %v3231, 0.00390625
      %v3238 = vmul.f32 %v3234, 0.00390625
      %v3239 = vsub.f32 %v3033, %v3235
      %v3240 = vsub.f32 %v3090, %v3235
      %v3241 = vsub.f32 %v3035, %v3236
      %v3242 = vsub.f32 %v3092, %v3236
      %v3243 = vsub.f32 %v3038, %v3237
      %v3244 = vsub.f32 %v3095, %v3237
      %v3245 = vsub.f32 %v3040, %v3238
      %v3246 = vsub.f32 %v3097, %v3238
      %v3247 = vmul.f32 %v3239, %v3239
      %v3248 = vmul.f32 %v3240, %v3240
      %v3249 = vmul.f32 %v3241, %v3241
      %v3250 = vmul.f32 %v3242, %v3242
      %v3251 = vmul.f32 %v3243, %v3243
      %v3252 = vmul.f32 %v3244, %v3244
      %v3253 = vmul.f32 %v3245, %v3245
      %v3254 = vmul.f32 %v3246, %v3246
      %v3255 = vadd.f32 %v3247, %v3248
      %3256 = vadd.xlane.f32.xlu0 %v3255
      %v3257 = vpop.xlane.xlu0 %3256
      %v3258 = vadd.f32 %v3249, %v3250
      %3259 = vadd.xlane.f32.xlu0 %v3258
      %v3260 = vpop.xlane.xlu0 %3259
      %v3261 = vadd.f32 %v3251, %v3252
      %3262 = vadd.xlane.f32.xlu0 %v3261
      %v3263 = vpop.xlane.xlu0 %3262
      %v3264 = vadd.f32 %v3253, %v3254
      %3265 = vadd.xlane.f32.xlu0 %v3264
      %v3266 = vpop.xlane.xlu0 %3265
      %v3267 = vmul.f32 %v3257, 0.00390625
      %v3268 = vmul.f32 %v3260, 0.00390625
      %v3269 = vmul.f32 %v3263, 0.00390625
      %v3270 = vmul.f32 %v3266, 0.00390625
      %v3271 = vadd.f32 %v3267, 1e-05
      %v3272 = vadd.f32 %v3268, 1e-05
      %v3273 = vadd.f32 %v3269, 1e-05
      %v3274 = vadd.f32 %v3270, 1e-05
      %v3275 = vrsqrt.pop %v3271
      %v3276 = vmul.f32 %v3275, %v3271
      %v3277 = vmul.f32 %v3276, %v3275
      %v3278 = vmul.f32 0.5, %v3277
      %v3279 = vsub.f32 1.5, %v3278
      %v3280 = vmul.f32 %v3275, %v3279
      %vm3281 = vweird.f32 %v3271
      %vm3282 = vweird.f32 %v3275
      %vm3283 = vmor %vm3281, %vm3282
      %v3284 = vsel %vm3283, %v3275, %v3280
      %v3285 = vrsqrt.pop %v3272
      %v3286 = vmul.f32 %v3285, %v3272
      %v3287 = vmul.f32 %v3286, %v3285
      %v3288 = vmul.f32 0.5, %v3287
      %v3289 = vsub.f32 1.5, %v3288
      %v3290 = vmul.f32 %v3285, %v3289
      %vm3291 = vweird.f32 %v3272
      %vm3292 = vweird.f32 %v3285
      %vm3293 = vmor %vm3291, %vm3292
      %v3294 = vsel %vm3293, %v3285, %v3290
      %v3295 = vrsqrt.pop %v3273
      %v3296 = vmul.f32 %v3295, %v3273
      %v3297 = vmul.f32 %v3296, %v3295
      %v3298 = vmul.f32 0.5, %v3297
      %v3299 = vsub.f32 1.5, %v3298
      %v3300 = vmul.f32 %v3295, %v3299
      %vm3301 = vweird.f32 %v3273
      %vm3302 = vweird.f32 %v3295
      %vm3303 = vmor %vm3301, %vm3302
      %v3304 = vsel %vm3303, %v3295, %v3300
      %v3305 = vrsqrt.pop %v3274
      %v3306 = vmul.f32 %v3305, %v3274
      %v3307 = vmul.f32 %v3306, %v3305
      %v3308 = vmul.f32 0.5, %v3307
      %v3309 = vsub.f32 1.5, %v3308
      %v3310 = vmul.f32 %v3305, %v3309
      %vm3311 = vweird.f32 %v3274
      %vm3312 = vweird.f32 %v3305
      %vm3313 = vmor %vm3311, %vm3312
      %v3314 = vsel %vm3313, %v3305, %v3310
      %v3315 = vmul.f32 %v3239, %v3284
      %v3316 = vmul.f32 %v3240, %v3284
      %v3317 = vmul.f32 %v3241, %v3294
      %v3318 = vmul.f32 %v3242, %v3294
      %v3319 = vmul.f32 %v3243, %v3304
      %v3320 = vmul.f32 %v3244, %v3304
      %v3321 = vmul.f32 %v3245, %v3314
      %v3322 = vmul.f32 %v3246, %v3314
      %3324 = vset.pattern.permute.xlu0 0
      %3325 = vperm.xlu0 %3324, %v3214
      %v3326 = vpop.permute.xlu0 %3325
      %3329 = vset.pattern.permute.xlu0 0
      %3330 = vperm.xlu0 %3329, %v3215
      %v3331 = vpop.permute.xlu0 %3330
      %3334 = vset.pattern.permute.xlu0 0
      %3335 = vperm.xlu0 %3334, %v3216
      %v3336 = vpop.permute.xlu0 %3335
      %3339 = vset.pattern.permute.xlu0 0
      %3340 = vperm.xlu0 %3339, %v3217
      %v3341 = vpop.permute.xlu0 %3340
      %v3343 = vmul.f32 %v3315, %v3326
      %v3344 = vmul.f32 %v3316, %v3326
      %v3345 = vmul.f32 %v3317, %v3331
      %v3346 = vmul.f32 %v3318, %v3331
      %v3347 = vmul.f32 %v3319, %v3336
      %v3348 = vmul.f32 %v3320, %v3336
      %v3349 = vmul.f32 %v3321, %v3341
      %v3350 = vmul.f32 %v3322, %v3341
      %3352 = vset.pattern.permute.xlu0 0
      %3353 = vperm.xlu0 %3352, %v3219
      %v3354 = vpop.permute.xlu0 %3353
      %3357 = vset.pattern.permute.xlu0 0
      %3358 = vperm.xlu0 %3357, %v3220
      %v3359 = vpop.permute.xlu0 %3358
      %3362 = vset.pattern.permute.xlu0 0
      %3363 = vperm.xlu0 %3362, %v3221
      %v3364 = vpop.permute.xlu0 %3363
      %3367 = vset.pattern.permute.xlu0 0
      %3368 = vperm.xlu0 %3367, %v3222
      %v3369 = vpop.permute.xlu0 %3368
      %v3371 = vadd.f32 %v3343, %v3354
      %v3372 = vadd.f32 %v3344, %v3354
      %v3373 = vadd.f32 %v3345, %v3359
      %v3374 = vadd.f32 %v3346, %v3359
      %v3375 = vadd.f32 %v3347, %v3364
      %v3376 = vadd.f32 %v3348, %v3364
      %v3377 = vadd.f32 %v3349, %v3369
      %v3378 = vadd.f32 %v3350, %v3369
      %v3379 = vmax.f32 %v3371, 0.0
      %v3380 = vmax.f32 %v3372, 0.0
      %v3381 = vmax.f32 %v3373, 0.0
      %v3382 = vmax.f32 %v3374, 0.0
      %v3383 = vmax.f32 %v3375, 0.0
      %v3384 = vmax.f32 %v3376, 0.0
      %v3385 = vmax.f32 %v3377, 0.0
      %v3386 = vmax.f32 %v3378, 0.0
      %v3387 = vadd.f32 %v3147, %v3204
      %3388 = vadd.xlane.f32.xlu0 %v3387
      %v3389 = vpop.xlane.xlu0 %3388
      %v3390 = vadd.f32 %v3149, %v3206
      %3391 = vadd.xlane.f32.xlu0 %v3390
      %v3392 = vpop.xlane.xlu0 %3391
      %v3393 = vadd.f32 %v3152, %v3209
      %3394 = vadd.xlane.f32.xlu0 %v3393
      %v3395 = vpop.xlane.xlu0 %3394
      %v3396 = vadd.f32 %v3154, %v3211
      %3397 = vadd.xlane.f32.xlu0 %v3396
      %v3398 = vpop.xlane.xlu0 %3397
      %v3399 = vmul.f32 %v3389, 0.00390625
      %v3400 = vmul.f32 %v3392, 0.00390625
      %v3401 = vmul.f32 %v3395, 0.00390625
      %v3402 = vmul.f32 %v3398, 0.00390625
      %v3403 = vsub.f32 %v3147, %v3399
      %v3404 = vsub.f32 %v3204, %v3399
      %v3405 = vsub.f32 %v3149, %v3400
      %v3406 = vsub.f32 %v3206, %v3400
      %v3407 = vsub.f32 %v3152, %v3401
      %v3408 = vsub.f32 %v3209, %v3401
      %v3409 = vsub.f32 %v3154, %v3402
      %v3410 = vsub.f32 %v3211, %v3402
      %v3411 = vmul.f32 %v3403, %v3403
      %v3412 = vmul.f32 %v3404, %v3404
      %v3413 = vmul.f32 %v3405, %v3405
      %v3414 = vmul.f32 %v3406, %v3406
      %v3415 = vmul.f32 %v3407, %v3407
      %v3416 = vmul.f32 %v3408, %v3408
      %v3417 = vmul.f32 %v3409, %v3409
      %v3418 = vmul.f32 %v3410, %v3410
      %v3419 = vadd.f32 %v3411, %v3412
      %3420 = vadd.xlane.f32.xlu0 %v3419
      %v3421 = vpop.xlane.xlu0 %3420
      %v3422 = vadd.f32 %v3413, %v3414
      %3423 = vadd.xlane.f32.xlu0 %v3422
      %v3424 = vpop.xlane.xlu0 %3423
      %v3425 = vadd.f32 %v3415, %v3416
      %3426 = vadd.xlane.f32.xlu0 %v3425
      %v3427 = vpop.xlane.xlu0 %3426
      %v3428 = vadd.f32 %v3417, %v3418
      %3429 = vadd.xlane.f32.xlu0 %v3428
      %v3430 = vpop.xlane.xlu0 %3429
      %v3431 = vmul.f32 %v3421, 0.00390625
      %v3432 = vmul.f32 %v3424, 0.00390625
      %v3433 = vmul.f32 %v3427, 0.00390625
      %v3434 = vmul.f32 %v3430, 0.00390625
      %v3435 = vadd.f32 %v3431, 1e-05
      %v3436 = vadd.f32 %v3432, 1e-05
      %v3437 = vadd.f32 %v3433, 1e-05
      %v3438 = vadd.f32 %v3434, 1e-05
      %v3439 = vrsqrt.pop %v3435
      %v3440 = vmul.f32 %v3439, %v3435
      %v3441 = vmul.f32 %v3440, %v3439
      %v3442 = vmul.f32 0.5, %v3441
      %v3443 = vsub.f32 1.5, %v3442
      %v3444 = vmul.f32 %v3439, %v3443
      %vm3445 = vweird.f32 %v3435
      %vm3446 = vweird.f32 %v3439
      %vm3447 = vmor %vm3445, %vm3446
      %v3448 = vsel %vm3447, %v3439, %v3444
      %v3449 = vrsqrt.pop %v3436
      %v3450 = vmul.f32 %v3449, %v3436
      %v3451 = vmul.f32 %v3450, %v3449
      %v3452 = vmul.f32 0.5, %v3451
      %v3453 = vsub.f32 1.5, %v3452
      %v3454 = vmul.f32 %v3449, %v3453
      %vm3455 = vweird.f32 %v3436
      %vm3456 = vweird.f32 %v3449
      %vm3457 = vmor %vm3455, %vm3456
      %v3458 = vsel %vm3457, %v3449, %v3454
      %v3459 = vrsqrt.pop %v3437
      %v3460 = vmul.f32 %v3459, %v3437
      %v3461 = vmul.f32 %v3460, %v3459
      %v3462 = vmul.f32 0.5, %v3461
      %v3463 = vsub.f32 1.5, %v3462
      %v3464 = vmul.f32 %v3459, %v3463
      %vm3465 = vweird.f32 %v3437
      %vm3466 = vweird.f32 %v3459
      %vm3467 = vmor %vm3465, %vm3466
      %v3468 = vsel %vm3467, %v3459, %v3464
      %v3469 = vrsqrt.pop %v3438
      %v3470 = vmul.f32 %v3469, %v3438
      %v3471 = vmul.f32 %v3470, %v3469
      %v3472 = vmul.f32 0.5, %v3471
      %v3473 = vsub.f32 1.5, %v3472
      %v3474 = vmul.f32 %v3469, %v3473
      %vm3475 = vweird.f32 %v3438
      %vm3476 = vweird.f32 %v3469
      %vm3477 = vmor %vm3475, %vm3476
      %v3478 = vsel %vm3477, %v3469, %v3474
      %v3479 = vmul.f32 %v3403, %v3448
      %v3480 = vmul.f32 %v3404, %v3448
      %v3481 = vmul.f32 %v3405, %v3458
      %v3482 = vmul.f32 %v3406, %v3458
      %v3483 = vmul.f32 %v3407, %v3468
      %v3484 = vmul.f32 %v3408, %v3468
      %v3485 = vmul.f32 %v3409, %v3478
      %v3486 = vmul.f32 %v3410, %v3478
      %v3487 = vmul.f32 %v3479, %v3326
      %v3488 = vmul.f32 %v3480, %v3326
      %v3489 = vmul.f32 %v3481, %v3331
      %v3490 = vmul.f32 %v3482, %v3331
      %v3491 = vmul.f32 %v3483, %v3336
      %v3492 = vmul.f32 %v3484, %v3336
      %v3493 = vmul.f32 %v3485, %v3341
      %v3494 = vmul.f32 %v3486, %v3341
      %v3495 = vadd.f32 %v3487, %v3354
      %v3496 = vadd.f32 %v3488, %v3354
      %v3497 = vadd.f32 %v3489, %v3359
      %v3498 = vadd.f32 %v3490, %v3359
      %v3499 = vadd.f32 %v3491, %v3364
      %v3500 = vadd.f32 %v3492, %v3364
      %v3501 = vadd.f32 %v3493, %v3369
      %v3502 = vadd.f32 %v3494, %v3369
      %v3503 = vmax.f32 %v3495, 0.0
      %v3504 = vmax.f32 %v3496, 0.0
      %v3505 = vmax.f32 %v3497, 0.0
      %v3506 = vmax.f32 %v3498, 0.0
      %v3507 = vmax.f32 %v3499, 0.0
      %v3508 = vmax.f32 %v3500, 0.0
      %v3509 = vmax.f32 %v3501, 0.0
      %v3510 = vmax.f32 %v3502, 0.0
      %s3511 = scalar_lea.vmem %s4, 96
      %v3512 = vld [vmem:[%s3511] sm:$0xff]
      %v3513 = vld [vmem:[%s3511 + $0x8] sm:$0xf]
      %v3514 = vld [vmem:[%s3511 + $0xc] sm:$0xff]
      %v3515 = vld [vmem:[%s3511 + $0x14] sm:$0xf]
      %v3516 = vld [vmem:[%s3511 + $0x18] sm:$0xff]
      %v3517 = vld [vmem:[%s3511 + $0x20] sm:$0xf]
      %v3518 = vld [vmem:[%s3511 + $0x24] sm:$0xff]
      %v3519 = vld [vmem:[%s3511 + $0x2c] sm:$0xf]
      %s3520 = scalar_lea.vmem %s5, 64
      %v3521 = vld [vmem:[%s3520] sm:$0xff]
      %v3522 = vld [vmem:[%s3520 + $0x8] sm:$0xff]
      %v3523 = vld [vmem:[%s3520 + $0x10] sm:$0xff]
      %v3524 = vld [vmem:[%s3520 + $0x18] sm:$0xff]
      %3525 = vrot.lane.b32.xlu0 %v3379, 17
      %v3526 = vpop.permute.xlu0 %3525
      %3527 = vrot.lane.b32.xlu0 %v3381, 17
      %v3528 = vpop.permute.xlu0 %3527
      %3529 = vrot.lane.b32.xlu0 %v3383, 17
      %v3530 = vpop.permute.xlu0 %3529
      %3531 = vrot.lane.b32.xlu0 %v3385, 17
      %v3532 = vpop.permute.xlu0 %3531
      %3533 = vrot.lane.b32.xlu0 %v3380, 17
      %v3534 = vpop.permute.xlu0 %3533
      %3535 = vrot.lane.b32.xlu0 %v3382, 17
      %v3536 = vpop.permute.xlu0 %3535
      %3537 = vrot.lane.b32.xlu0 %v3384, 17
      %v3538 = vpop.permute.xlu0 %3537
      %3539 = vrot.lane.b32.xlu0 %v3386, 17
      %v3540 = vpop.permute.xlu0 %3539
      %3541 = vrot.lane.b32.xlu0 %v3503, 17
      %v3542 = vpop.permute.xlu0 %3541
      %3543 = vrot.lane.b32.xlu0 %v3505, 17
      %v3544 = vpop.permute.xlu0 %3543
      %3545 = vrot.lane.b32.xlu0 %v3507, 17
      %v3546 = vpop.permute.xlu0 %3545
      %3547 = vrot.lane.b32.xlu0 %v3509, 17
      %v3548 = vpop.permute.xlu0 %3547
      %3549 = vrot.lane.b32.xlu0 %v3504, 17
      %v3550 = vpop.permute.xlu0 %3549
      %3551 = vrot.lane.b32.xlu0 %v3506, 17
      %v3552 = vpop.permute.xlu0 %3551
      %3553 = vrot.lane.b32.xlu0 %v3508, 17
      %v3554 = vpop.permute.xlu0 %3553
      %3555 = vrot.lane.b32.xlu0 %v3510, 17
      %v3556 = vpop.permute.xlu0 %3555
      %v3557 = vsel %vm336, %v3542, %v3550
      %v3558 = vsel %vm336, %v3544, %v3552
      %v3559 = vsel %vm336, %v3546, %v3554
      %v3560 = vsel %vm336, %v3548, %v3556
      %v3561 = vsel %vm336, %v3534, %v3542
      %v3562 = vsel %vm336, %v3536, %v3544
      %v3563 = vsel %vm336, %v3538, %v3546
      %v3564 = vsel %vm336, %v3540, %v3548
      %v3565 = vsel %vm336, %v3526, %v3534
      %v3566 = vsel %vm336, %v3528, %v3536
      %v3567 = vsel %vm336, %v3530, %v3538
      %v3568 = vsel %vm336, %v3532, %v3540
      %v3569 = vsel %vm336, %v3550, %v3526
      %v3570 = vsel %vm336, %v3552, %v3528
      %v3571 = vsel %vm336, %v3554, %v3530
      %v3572 = vsel %vm336, %v3556, %v3532
      %v3573 = vmul.f32 %v3569, %v343
      %v3574 = vmul.f32 %v3565, %v344
      %v3575 = vmul.f32 %v3561, %v345
      %v3576 = vmul.f32 %v3557, %v346
      %v3577 = vmul.f32 %v3570, %v343
      %v3578 = vmul.f32 %v3566, %v344
      %v3579 = vmul.f32 %v3562, %v345
      %v3580 = vmul.f32 %v3558, %v346
      %v3581 = vmul.f32 %v3571, %v343
      %v3582 = vmul.f32 %v3567, %v344
      %v3583 = vmul.f32 %v3563, %v345
      %v3584 = vmul.f32 %v3559, %v346
      %v3585 = vmul.f32 %v3572, %v343
      %v3586 = vmul.f32 %v3568, %v344
      %v3587 = vmul.f32 %v3564, %v345
      %v3588 = vmul.f32 %v3560, %v346
      %3589 = vrot.lane.b32.xlu0 %v3379, 16
      %v3590 = vpop.permute.xlu0 %3589
      %3591 = vrot.lane.b32.xlu0 %v3381, 16
      %v3592 = vpop.permute.xlu0 %3591
      %3593 = vrot.lane.b32.xlu0 %v3383, 16
      %v3594 = vpop.permute.xlu0 %3593
      %3595 = vrot.lane.b32.xlu0 %v3385, 16
      %v3596 = vpop.permute.xlu0 %3595
      %3597 = vrot.lane.b32.xlu0 %v3380, 16
      %v3598 = vpop.permute.xlu0 %3597
      %3599 = vrot.lane.b32.xlu0 %v3382, 16
      %v3600 = vpop.permute.xlu0 %3599
      %3601 = vrot.lane.b32.xlu0 %v3384, 16
      %v3602 = vpop.permute.xlu0 %3601
      %3603 = vrot.lane.b32.xlu0 %v3386, 16
      %v3604 = vpop.permute.xlu0 %3603
      %3605 = vrot.lane.b32.xlu0 %v3503, 16
      %v3606 = vpop.permute.xlu0 %3605
      %3607 = vrot.lane.b32.xlu0 %v3505, 16
      %v3608 = vpop.permute.xlu0 %3607
      %3609 = vrot.lane.b32.xlu0 %v3507, 16
      %v3610 = vpop.permute.xlu0 %3609
      %3611 = vrot.lane.b32.xlu0 %v3509, 16
      %v3612 = vpop.permute.xlu0 %3611
      %3613 = vrot.lane.b32.xlu0 %v3504, 16
      %v3614 = vpop.permute.xlu0 %3613
      %3615 = vrot.lane.b32.xlu0 %v3506, 16
      %v3616 = vpop.permute.xlu0 %3615
      %3617 = vrot.lane.b32.xlu0 %v3508, 16
      %v3618 = vpop.permute.xlu0 %3617
      %3619 = vrot.lane.b32.xlu0 %v3510, 16
      %v3620 = vpop.permute.xlu0 %3619
      %v3621 = vsel %vm372, %v3606, %v3614
      %v3622 = vsel %vm372, %v3608, %v3616
      %v3623 = vsel %vm372, %v3610, %v3618
      %v3624 = vsel %vm372, %v3612, %v3620
      %v3625 = vsel %vm372, %v3598, %v3606
      %v3626 = vsel %vm372, %v3600, %v3608
      %v3627 = vsel %vm372, %v3602, %v3610
      %v3628 = vsel %vm372, %v3604, %v3612
      %v3629 = vsel %vm372, %v3590, %v3598
      %v3630 = vsel %vm372, %v3592, %v3600
      %v3631 = vsel %vm372, %v3594, %v3602
      %v3632 = vsel %vm372, %v3596, %v3604
      %v3633 = vsel %vm372, %v3614, %v3590
      %v3634 = vsel %vm372, %v3616, %v3592
      %v3635 = vsel %vm372, %v3618, %v3594
      %v3636 = vsel %vm372, %v3620, %v3596
      %v3637 = vmul.f32 %v3633, %v380
      %v3638 = vmul.f32 %v3629, %v381
      %v3639 = vmul.f32 %v3625, %v382
      %v3640 = vmul.f32 %v3621, %v383
      %v3641 = vmul.f32 %v3634, %v380
      %v3642 = vmul.f32 %v3630, %v381
      %v3643 = vmul.f32 %v3626, %v382
      %v3644 = vmul.f32 %v3622, %v383
      %v3645 = vmul.f32 %v3635, %v380
      %v3646 = vmul.f32 %v3631, %v381
      %v3647 = vmul.f32 %v3627, %v382
      %v3648 = vmul.f32 %v3623, %v383
      %v3649 = vmul.f32 %v3636, %v380
      %v3650 = vmul.f32 %v3632, %v381
      %v3651 = vmul.f32 %v3628, %v382
      %v3652 = vmul.f32 %v3624, %v383
      %3653 = vrot.lane.b32.xlu0 %v3379, 15
      %v3654 = vpop.permute.xlu0 %3653
      %3655 = vrot.lane.b32.xlu0 %v3381, 15
      %v3656 = vpop.permute.xlu0 %3655
      %3657 = vrot.lane.b32.xlu0 %v3383, 15
      %v3658 = vpop.permute.xlu0 %3657
      %3659 = vrot.lane.b32.xlu0 %v3385, 15
      %v3660 = vpop.permute.xlu0 %3659
      %3661 = vrot.lane.b32.xlu0 %v3380, 15
      %v3662 = vpop.permute.xlu0 %3661
      %3663 = vrot.lane.b32.xlu0 %v3382, 15
      %v3664 = vpop.permute.xlu0 %3663
      %3665 = vrot.lane.b32.xlu0 %v3384, 15
      %v3666 = vpop.permute.xlu0 %3665
      %3667 = vrot.lane.b32.xlu0 %v3386, 15
      %v3668 = vpop.permute.xlu0 %3667
      %3669 = vrot.lane.b32.xlu0 %v3503, 15
      %v3670 = vpop.permute.xlu0 %3669
      %3671 = vrot.lane.b32.xlu0 %v3505, 15
      %v3672 = vpop.permute.xlu0 %3671
      %3673 = vrot.lane.b32.xlu0 %v3507, 15
      %v3674 = vpop.permute.xlu0 %3673
      %3675 = vrot.lane.b32.xlu0 %v3509, 15
      %v3676 = vpop.permute.xlu0 %3675
      %3677 = vrot.lane.b32.xlu0 %v3504, 15
      %v3678 = vpop.permute.xlu0 %3677
      %3679 = vrot.lane.b32.xlu0 %v3506, 15
      %v3680 = vpop.permute.xlu0 %3679
      %3681 = vrot.lane.b32.xlu0 %v3508, 15
      %v3682 = vpop.permute.xlu0 %3681
      %3683 = vrot.lane.b32.xlu0 %v3510, 15
      %v3684 = vpop.permute.xlu0 %3683
      %v3685 = vsel %vm409, %v3670, %v3678
      %v3686 = vsel %vm409, %v3672, %v3680
      %v3687 = vsel %vm409, %v3674, %v3682
      %v3688 = vsel %vm409, %v3676, %v3684
      %v3689 = vsel %vm409, %v3662, %v3670
      %v3690 = vsel %vm409, %v3664, %v3672
      %v3691 = vsel %vm409, %v3666, %v3674
      %v3692 = vsel %vm409, %v3668, %v3676
      %v3693 = vsel %vm409, %v3654, %v3662
      %v3694 = vsel %vm409, %v3656, %v3664
      %v3695 = vsel %vm409, %v3658, %v3666
      %v3696 = vsel %vm409, %v3660, %v3668
      %v3697 = vsel %vm409, %v3678, %v3654
      %v3698 = vsel %vm409, %v3680, %v3656
      %v3699 = vsel %vm409, %v3682, %v3658
      %v3700 = vsel %vm409, %v3684, %v3660
      %v3701 = vmul.f32 %v3697, %v417
      %v3702 = vmul.f32 %v3693, %v418
      %v3703 = vmul.f32 %v3689, %v419
      %v3704 = vmul.f32 %v3685, %v420
      %v3705 = vmul.f32 %v3698, %v417
      %v3706 = vmul.f32 %v3694, %v418
      %v3707 = vmul.f32 %v3690, %v419
      %v3708 = vmul.f32 %v3686, %v420
      %v3709 = vmul.f32 %v3699, %v417
      %v3710 = vmul.f32 %v3695, %v418
      %v3711 = vmul.f32 %v3691, %v419
      %v3712 = vmul.f32 %v3687, %v420
      %v3713 = vmul.f32 %v3700, %v417
      %v3714 = vmul.f32 %v3696, %v418
      %v3715 = vmul.f32 %v3692, %v419
      %v3716 = vmul.f32 %v3688, %v420
      %3717 = vrot.lane.b32.xlu0 %v3379, 1
      %v3718 = vpop.permute.xlu0 %3717
      %3719 = vrot.lane.b32.xlu0 %v3381, 1
      %v3720 = vpop.permute.xlu0 %3719
      %3721 = vrot.lane.b32.xlu0 %v3383, 1
      %v3722 = vpop.permute.xlu0 %3721
      %3723 = vrot.lane.b32.xlu0 %v3385, 1
      %v3724 = vpop.permute.xlu0 %3723
      %3725 = vrot.lane.b32.xlu0 %v3380, 1
      %v3726 = vpop.permute.xlu0 %3725
      %3727 = vrot.lane.b32.xlu0 %v3382, 1
      %v3728 = vpop.permute.xlu0 %3727
      %3729 = vrot.lane.b32.xlu0 %v3384, 1
      %v3730 = vpop.permute.xlu0 %3729
      %3731 = vrot.lane.b32.xlu0 %v3386, 1
      %v3732 = vpop.permute.xlu0 %3731
      %3733 = vrot.lane.b32.xlu0 %v3503, 1
      %v3734 = vpop.permute.xlu0 %3733
      %3735 = vrot.lane.b32.xlu0 %v3505, 1
      %v3736 = vpop.permute.xlu0 %3735
      %3737 = vrot.lane.b32.xlu0 %v3507, 1
      %v3738 = vpop.permute.xlu0 %3737
      %3739 = vrot.lane.b32.xlu0 %v3509, 1
      %v3740 = vpop.permute.xlu0 %3739
      %3741 = vrot.lane.b32.xlu0 %v3504, 1
      %v3742 = vpop.permute.xlu0 %3741
      %3743 = vrot.lane.b32.xlu0 %v3506, 1
      %v3744 = vpop.permute.xlu0 %3743
      %3745 = vrot.lane.b32.xlu0 %v3508, 1
      %v3746 = vpop.permute.xlu0 %3745
      %3747 = vrot.lane.b32.xlu0 %v3510, 1
      %v3748 = vpop.permute.xlu0 %3747
      %v3749 = vsel %vm446, %v3734, %v3742
      %v3750 = vsel %vm446, %v3736, %v3744
      %v3751 = vsel %vm446, %v3738, %v3746
      %v3752 = vsel %vm446, %v3740, %v3748
      %v3753 = vsel %vm446, %v3726, %v3734
      %v3754 = vsel %vm446, %v3728, %v3736
      %v3755 = vsel %vm446, %v3730, %v3738
      %v3756 = vsel %vm446, %v3732, %v3740
      %v3757 = vsel %vm446, %v3718, %v3726
      %v3758 = vsel %vm446, %v3720, %v3728
      %v3759 = vsel %vm446, %v3722, %v3730
      %v3760 = vsel %vm446, %v3724, %v3732
      %v3761 = vsel %vm446, %v3742, %v3718
      %v3762 = vsel %vm446, %v3744, %v3720
      %v3763 = vsel %vm446, %v3746, %v3722
      %v3764 = vsel %vm446, %v3748, %v3724
      %v3765 = vmul.f32 %v3761, %v454
      %v3766 = vmul.f32 %v3757, %v455
      %v3767 = vmul.f32 %v3753, %v456
      %v3768 = vmul.f32 %v3749, %v457
      %v3769 = vmul.f32 %v3762, %v454
      %v3770 = vmul.f32 %v3758, %v455
      %v3771 = vmul.f32 %v3754, %v456
      %v3772 = vmul.f32 %v3750, %v457
      %v3773 = vmul.f32 %v3763, %v454
      %v3774 = vmul.f32 %v3759, %v455
      %v3775 = vmul.f32 %v3755, %v456
      %v3776 = vmul.f32 %v3751, %v457
      %v3777 = vmul.f32 %v3764, %v454
      %v3778 = vmul.f32 %v3760, %v455
      %v3779 = vmul.f32 %v3756, %v456
      %v3780 = vmul.f32 %v3752, %v457
      %3781 = vrot.lane.b32.xlu0 %v3379, 127
      %v3782 = vpop.permute.xlu0 %3781
      %3783 = vrot.lane.b32.xlu0 %v3381, 127
      %v3784 = vpop.permute.xlu0 %3783
      %3785 = vrot.lane.b32.xlu0 %v3383, 127
      %v3786 = vpop.permute.xlu0 %3785
      %3787 = vrot.lane.b32.xlu0 %v3385, 127
      %v3788 = vpop.permute.xlu0 %3787
      %3789 = vrot.lane.b32.xlu0 %v3380, 127
      %v3790 = vpop.permute.xlu0 %3789
      %3791 = vrot.lane.b32.xlu0 %v3382, 127
      %v3792 = vpop.permute.xlu0 %3791
      %3793 = vrot.lane.b32.xlu0 %v3384, 127
      %v3794 = vpop.permute.xlu0 %3793
      %3795 = vrot.lane.b32.xlu0 %v3386, 127
      %v3796 = vpop.permute.xlu0 %3795
      %3797 = vrot.lane.b32.xlu0 %v3503, 127
      %v3798 = vpop.permute.xlu0 %3797
      %3799 = vrot.lane.b32.xlu0 %v3505, 127
      %v3800 = vpop.permute.xlu0 %3799
      %3801 = vrot.lane.b32.xlu0 %v3507, 127
      %v3802 = vpop.permute.xlu0 %3801
      %3803 = vrot.lane.b32.xlu0 %v3509, 127
      %v3804 = vpop.permute.xlu0 %3803
      %3805 = vrot.lane.b32.xlu0 %v3504, 127
      %v3806 = vpop.permute.xlu0 %3805
      %3807 = vrot.lane.b32.xlu0 %v3506, 127
      %v3808 = vpop.permute.xlu0 %3807
      %3809 = vrot.lane.b32.xlu0 %v3508, 127
      %v3810 = vpop.permute.xlu0 %3809
      %3811 = vrot.lane.b32.xlu0 %v3510, 127
      %v3812 = vpop.permute.xlu0 %3811
      %v3813 = vsel %vm483, %v3798, %v3806
      %v3814 = vsel %vm483, %v3800, %v3808
      %v3815 = vsel %vm483, %v3802, %v3810
      %v3816 = vsel %vm483, %v3804, %v3812
      %v3817 = vsel %vm483, %v3790, %v3798
      %v3818 = vsel %vm483, %v3792, %v3800
      %v3819 = vsel %vm483, %v3794, %v3802
      %v3820 = vsel %vm483, %v3796, %v3804
      %v3821 = vsel %vm483, %v3782, %v3790
      %v3822 = vsel %vm483, %v3784, %v3792
      %v3823 = vsel %vm483, %v3786, %v3794
      %v3824 = vsel %vm483, %v3788, %v3796
      %v3825 = vsel %vm483, %v3806, %v3782
      %v3826 = vsel %vm483, %v3808, %v3784
      %v3827 = vsel %vm483, %v3810, %v3786
      %v3828 = vsel %vm483, %v3812, %v3788
      %v3829 = vmul.f32 %v3821, %v491
      %v3830 = vmul.f32 %v3817, %v492
      %v3831 = vmul.f32 %v3813, %v493
      %v3832 = vmul.f32 %v3825, %v494
      %v3833 = vmul.f32 %v3822, %v491
      %v3834 = vmul.f32 %v3818, %v492
      %v3835 = vmul.f32 %v3814, %v493
      %v3836 = vmul.f32 %v3826, %v494
      %v3837 = vmul.f32 %v3823, %v491
      %v3838 = vmul.f32 %v3819, %v492
      %v3839 = vmul.f32 %v3815, %v493
      %v3840 = vmul.f32 %v3827, %v494
      %v3841 = vmul.f32 %v3824, %v491
      %v3842 = vmul.f32 %v3820, %v492
      %v3843 = vmul.f32 %v3816, %v493
      %v3844 = vmul.f32 %v3828, %v494
      %3845 = vrot.lane.b32.xlu0 %v3379, 113
      %v3846 = vpop.permute.xlu0 %3845
      %3847 = vrot.lane.b32.xlu0 %v3381, 113
      %v3848 = vpop.permute.xlu0 %3847
      %3849 = vrot.lane.b32.xlu0 %v3383, 113
      %v3850 = vpop.permute.xlu0 %3849
      %3851 = vrot.lane.b32.xlu0 %v3385, 113
      %v3852 = vpop.permute.xlu0 %3851
      %3853 = vrot.lane.b32.xlu0 %v3380, 113
      %v3854 = vpop.permute.xlu0 %3853
      %3855 = vrot.lane.b32.xlu0 %v3382, 113
      %v3856 = vpop.permute.xlu0 %3855
      %3857 = vrot.lane.b32.xlu0 %v3384, 113
      %v3858 = vpop.permute.xlu0 %3857
      %3859 = vrot.lane.b32.xlu0 %v3386, 113
      %v3860 = vpop.permute.xlu0 %3859
      %3861 = vrot.lane.b32.xlu0 %v3503, 113
      %v3862 = vpop.permute.xlu0 %3861
      %3863 = vrot.lane.b32.xlu0 %v3505, 113
      %v3864 = vpop.permute.xlu0 %3863
      %3865 = vrot.lane.b32.xlu0 %v3507, 113
      %v3866 = vpop.permute.xlu0 %3865
      %3867 = vrot.lane.b32.xlu0 %v3509, 113
      %v3868 = vpop.permute.xlu0 %3867
      %3869 = vrot.lane.b32.xlu0 %v3504, 113
      %v3870 = vpop.permute.xlu0 %3869
      %3871 = vrot.lane.b32.xlu0 %v3506, 113
      %v3872 = vpop.permute.xlu0 %3871
      %3873 = vrot.lane.b32.xlu0 %v3508, 113
      %v3874 = vpop.permute.xlu0 %3873
      %3875 = vrot.lane.b32.xlu0 %v3510, 113
      %v3876 = vpop.permute.xlu0 %3875
      %v3877 = vsel %vm520, %v3862, %v3870
      %v3878 = vsel %vm520, %v3864, %v3872
      %v3879 = vsel %vm520, %v3866, %v3874
      %v3880 = vsel %vm520, %v3868, %v3876
      %v3881 = vsel %vm520, %v3854, %v3862
      %v3882 = vsel %vm520, %v3856, %v3864
      %v3883 = vsel %vm520, %v3858, %v3866
      %v3884 = vsel %vm520, %v3860, %v3868
      %v3885 = vsel %vm520, %v3846, %v3854
      %v3886 = vsel %vm520, %v3848, %v3856
      %v3887 = vsel %vm520, %v3850, %v3858
      %v3888 = vsel %vm520, %v3852, %v3860
      %v3889 = vsel %vm520, %v3870, %v3846
      %v3890 = vsel %vm520, %v3872, %v3848
      %v3891 = vsel %vm520, %v3874, %v3850
      %v3892 = vsel %vm520, %v3876, %v3852
      %v3893 = vmul.f32 %v3885, %v528
      %v3894 = vmul.f32 %v3881, %v529
      %v3895 = vmul.f32 %v3877, %v530
      %v3896 = vmul.f32 %v3889, %v531
      %v3897 = vmul.f32 %v3886, %v528
      %v3898 = vmul.f32 %v3882, %v529
      %v3899 = vmul.f32 %v3878, %v530
      %v3900 = vmul.f32 %v3890, %v531
      %v3901 = vmul.f32 %v3887, %v528
      %v3902 = vmul.f32 %v3883, %v529
      %v3903 = vmul.f32 %v3879, %v530
      %v3904 = vmul.f32 %v3891, %v531
      %v3905 = vmul.f32 %v3888, %v528
      %v3906 = vmul.f32 %v3884, %v529
      %v3907 = vmul.f32 %v3880, %v530
      %v3908 = vmul.f32 %v3892, %v531
      %3909 = vrot.lane.b32.xlu0 %v3379, 112
      %v3910 = vpop.permute.xlu0 %3909
      %3911 = vrot.lane.b32.xlu0 %v3381, 112
      %v3912 = vpop.permute.xlu0 %3911
      %3913 = vrot.lane.b32.xlu0 %v3383, 112
      %v3914 = vpop.permute.xlu0 %3913
      %3915 = vrot.lane.b32.xlu0 %v3385, 112
      %v3916 = vpop.permute.xlu0 %3915
      %3917 = vrot.lane.b32.xlu0 %v3380, 112
      %v3918 = vpop.permute.xlu0 %3917
      %3919 = vrot.lane.b32.xlu0 %v3382, 112
      %v3920 = vpop.permute.xlu0 %3919
      %3921 = vrot.lane.b32.xlu0 %v3384, 112
      %v3922 = vpop.permute.xlu0 %3921
      %3923 = vrot.lane.b32.xlu0 %v3386, 112
      %v3924 = vpop.permute.xlu0 %3923
      %3925 = vrot.lane.b32.xlu0 %v3503, 112
      %v3926 = vpop.permute.xlu0 %3925
      %3927 = vrot.lane.b32.xlu0 %v3505, 112
      %v3928 = vpop.permute.xlu0 %3927
      %3929 = vrot.lane.b32.xlu0 %v3507, 112
      %v3930 = vpop.permute.xlu0 %3929
      %3931 = vrot.lane.b32.xlu0 %v3509, 112
      %v3932 = vpop.permute.xlu0 %3931
      %3933 = vrot.lane.b32.xlu0 %v3504, 112
      %v3934 = vpop.permute.xlu0 %3933
      %3935 = vrot.lane.b32.xlu0 %v3506, 112
      %v3936 = vpop.permute.xlu0 %3935
      %3937 = vrot.lane.b32.xlu0 %v3508, 112
      %v3938 = vpop.permute.xlu0 %3937
      %3939 = vrot.lane.b32.xlu0 %v3510, 112
      %v3940 = vpop.permute.xlu0 %3939
      %v3941 = vsel %vm557, %v3926, %v3934
      %v3942 = vsel %vm557, %v3928, %v3936
      %v3943 = vsel %vm557, %v3930, %v3938
      %v3944 = vsel %vm557, %v3932, %v3940
      %v3945 = vsel %vm557, %v3918, %v3926
      %v3946 = vsel %vm557, %v3920, %v3928
      %v3947 = vsel %vm557, %v3922, %v3930
      %v3948 = vsel %vm557, %v3924, %v3932
      %v3949 = vsel %vm557, %v3910, %v3918
      %v3950 = vsel %vm557, %v3912, %v3920
      %v3951 = vsel %vm557, %v3914, %v3922
      %v3952 = vsel %vm557, %v3916, %v3924
      %v3953 = vsel %vm557, %v3934, %v3910
      %v3954 = vsel %vm557, %v3936, %v3912
      %v3955 = vsel %vm557, %v3938, %v3914
      %v3956 = vsel %vm557, %v3940, %v3916
      %v3957 = vmul.f32 %v3949, %v565
      %v3958 = vmul.f32 %v3945, %v566
      %v3959 = vmul.f32 %v3941, %v567
      %v3960 = vmul.f32 %v3953, %v568
      %v3961 = vmul.f32 %v3950, %v565
      %v3962 = vmul.f32 %v3946, %v566
      %v3963 = vmul.f32 %v3942, %v567
      %v3964 = vmul.f32 %v3954, %v568
      %v3965 = vmul.f32 %v3951, %v565
      %v3966 = vmul.f32 %v3947, %v566
      %v3967 = vmul.f32 %v3943, %v567
      %v3968 = vmul.f32 %v3955, %v568
      %v3969 = vmul.f32 %v3952, %v565
      %v3970 = vmul.f32 %v3948, %v566
      %v3971 = vmul.f32 %v3944, %v567
      %v3972 = vmul.f32 %v3956, %v568
      %3973 = vrot.lane.b32.xlu0 %v3379, 111
      %v3974 = vpop.permute.xlu0 %3973
      %3975 = vrot.lane.b32.xlu0 %v3381, 111
      %v3976 = vpop.permute.xlu0 %3975
      %3977 = vrot.lane.b32.xlu0 %v3383, 111
      %v3978 = vpop.permute.xlu0 %3977
      %3979 = vrot.lane.b32.xlu0 %v3385, 111
      %v3980 = vpop.permute.xlu0 %3979
      %3981 = vrot.lane.b32.xlu0 %v3380, 111
      %v3982 = vpop.permute.xlu0 %3981
      %3983 = vrot.lane.b32.xlu0 %v3382, 111
      %v3984 = vpop.permute.xlu0 %3983
      %3985 = vrot.lane.b32.xlu0 %v3384, 111
      %v3986 = vpop.permute.xlu0 %3985
      %3987 = vrot.lane.b32.xlu0 %v3386, 111
      %v3988 = vpop.permute.xlu0 %3987
      %3989 = vrot.lane.b32.xlu0 %v3503, 111
      %v3990 = vpop.permute.xlu0 %3989
      %3991 = vrot.lane.b32.xlu0 %v3505, 111
      %v3992 = vpop.permute.xlu0 %3991
      %3993 = vrot.lane.b32.xlu0 %v3507, 111
      %v3994 = vpop.permute.xlu0 %3993
      %3995 = vrot.lane.b32.xlu0 %v3509, 111
      %v3996 = vpop.permute.xlu0 %3995
      %3997 = vrot.lane.b32.xlu0 %v3504, 111
      %v3998 = vpop.permute.xlu0 %3997
      %3999 = vrot.lane.b32.xlu0 %v3506, 111
      %v4000 = vpop.permute.xlu0 %3999
      %4001 = vrot.lane.b32.xlu0 %v3508, 111
      %v4002 = vpop.permute.xlu0 %4001
      %4003 = vrot.lane.b32.xlu0 %v3510, 111
      %v4004 = vpop.permute.xlu0 %4003
      %v4005 = vsel %vm594, %v3990, %v3998
      %v4006 = vsel %vm594, %v3992, %v4000
      %v4007 = vsel %vm594, %v3994, %v4002
      %v4008 = vsel %vm594, %v3996, %v4004
      %v4009 = vsel %vm594, %v3982, %v3990
      %v4010 = vsel %vm594, %v3984, %v3992
      %v4011 = vsel %vm594, %v3986, %v3994
      %v4012 = vsel %vm594, %v3988, %v3996
      %v4013 = vsel %vm594, %v3974, %v3982
      %v4014 = vsel %vm594, %v3976, %v3984
      %v4015 = vsel %vm594, %v3978, %v3986
      %v4016 = vsel %vm594, %v3980, %v3988
      %v4017 = vsel %vm594, %v3998, %v3974
      %v4018 = vsel %vm594, %v4000, %v3976
      %v4019 = vsel %vm594, %v4002, %v3978
      %v4020 = vsel %vm594, %v4004, %v3980
      %v4021 = vmul.f32 %v4013, %v602
      %v4022 = vmul.f32 %v4009, %v603
      %v4023 = vmul.f32 %v4005, %v604
      %v4024 = vmul.f32 %v4017, %v605
      %v4025 = vmul.f32 %v4014, %v602
      %v4026 = vmul.f32 %v4010, %v603
      %v4027 = vmul.f32 %v4006, %v604
      %v4028 = vmul.f32 %v4018, %v605
      %v4029 = vmul.f32 %v4015, %v602
      %v4030 = vmul.f32 %v4011, %v603
      %v4031 = vmul.f32 %v4007, %v604
      %v4032 = vmul.f32 %v4019, %v605
      %v4033 = vmul.f32 %v4016, %v602
      %v4034 = vmul.f32 %v4012, %v603
      %v4035 = vmul.f32 %v4008, %v604
      %v4036 = vmul.f32 %v4020, %v605
      %v4037 = vpack.c.bf16 %v3577, %v3573
      %v4038 = vpack.c.bf16 %v3578, %v3574
      %v4039 = vpack.c.bf16 %v3579, %v3575
      %v4040 = vpack.c.bf16 %v3580, %v3576
      %v4041 = vpack.c.bf16 %v3585, %v3581
      %v4042 = vpack.c.bf16 %v3586, %v3582
      %v4043 = vpack.c.bf16 %v3587, %v3583
      %v4044 = vpack.c.bf16 %v3588, %v3584
      %v4045 = vpack.c.bf16 %v3641, %v3637
      %v4046 = vpack.c.bf16 %v3642, %v3638
      %v4047 = vpack.c.bf16 %v3643, %v3639
      %v4048 = vpack.c.bf16 %v3644, %v3640
      %v4049 = vpack.c.bf16 %v3649, %v3645
      %v4050 = vpack.c.bf16 %v3650, %v3646
      %v4051 = vpack.c.bf16 %v3651, %v3647
      %v4052 = vpack.c.bf16 %v3652, %v3648
      %v4053 = vpack.c.bf16 %v3705, %v3701
      %v4054 = vpack.c.bf16 %v3706, %v3702
      %v4055 = vpack.c.bf16 %v3707, %v3703
      %v4056 = vpack.c.bf16 %v3708, %v3704
      %v4057 = vpack.c.bf16 %v3713, %v3709
      %v4058 = vpack.c.bf16 %v3714, %v3710
      %v4059 = vpack.c.bf16 %v3715, %v3711
      %v4060 = vpack.c.bf16 %v3716, %v3712
      %v4061 = vpack.c.bf16 %v3769, %v3765
      %v4062 = vpack.c.bf16 %v3770, %v3766
      %v4063 = vpack.c.bf16 %v3771, %v3767
      %v4064 = vpack.c.bf16 %v3772, %v3768
      %v4065 = vpack.c.bf16 %v3777, %v3773
      %v4066 = vpack.c.bf16 %v3778, %v3774
      %v4067 = vpack.c.bf16 %v3779, %v3775
      %v4068 = vpack.c.bf16 %v3780, %v3776
      %v4069 = vpack.c.bf16 %v3381, %v3379
      %v4070 = vpack.c.bf16 %v3382, %v3380
      %v4071 = vpack.c.bf16 %v3505, %v3503
      %v4072 = vpack.c.bf16 %v3506, %v3504
      %v4073 = vpack.c.bf16 %v3385, %v3383
      %v4074 = vpack.c.bf16 %v3386, %v3384
      %v4075 = vpack.c.bf16 %v3509, %v3507
      %v4076 = vpack.c.bf16 %v3510, %v3508
      %v4077 = vpack.c.bf16 %v3833, %v3829
      %v4078 = vpack.c.bf16 %v3834, %v3830
      %v4079 = vpack.c.bf16 %v3835, %v3831
      %v4080 = vpack.c.bf16 %v3836, %v3832
      %v4081 = vpack.c.bf16 %v3841, %v3837
      %v4082 = vpack.c.bf16 %v3842, %v3838
      %v4083 = vpack.c.bf16 %v3843, %v3839
      %v4084 = vpack.c.bf16 %v3844, %v3840
      %v4085 = vpack.c.bf16 %v3897, %v3893
      %v4086 = vpack.c.bf16 %v3898, %v3894
      %v4087 = vpack.c.bf16 %v3899, %v3895
      %v4088 = vpack.c.bf16 %v3900, %v3896
      %v4089 = vpack.c.bf16 %v3905, %v3901
      %v4090 = vpack.c.bf16 %v3906, %v3902
      %v4091 = vpack.c.bf16 %v3907, %v3903
      %v4092 = vpack.c.bf16 %v3908, %v3904
      %v4093 = vpack.c.bf16 %v3961, %v3957
      %v4094 = vpack.c.bf16 %v3962, %v3958
      %v4095 = vpack.c.bf16 %v3963, %v3959
      %v4096 = vpack.c.bf16 %v3964, %v3960
      %v4097 = vpack.c.bf16 %v3969, %v3965
      %v4098 = vpack.c.bf16 %v3970, %v3966
      %v4099 = vpack.c.bf16 %v3971, %v3967
      %v4100 = vpack.c.bf16 %v3972, %v3968
      %v4101 = vpack.c.bf16 %v4025, %v4021
      %v4102 = vpack.c.bf16 %v4026, %v4022
      %v4103 = vpack.c.bf16 %v4027, %v4023
      %v4104 = vpack.c.bf16 %v4028, %v4024
      %v4105 = vpack.c.bf16 %v4033, %v4029
      %v4106 = vpack.c.bf16 %v4034, %v4030
      %v4107 = vpack.c.bf16 %v4035, %v4031
      %v4108 = vpack.c.bf16 %v4036, %v4032
      %4110 = vset.pattern.permute.xlu0 0
      %4111 = vperm.xlu0 %4110, %v3521
      %v4112 = vpop.permute.xlu0 %4111
      %4115 = vset.pattern.permute.xlu0 0
      %4116 = vperm.xlu0 %4115, %v3522
      %v4117 = vpop.permute.xlu0 %4116
      %4120 = vset.pattern.permute.xlu0 0
      %4121 = vperm.xlu0 %4120, %v3523
      %v4122 = vpop.permute.xlu0 %4121
      %4125 = vset.pattern.permute.xlu0 0
      %4126 = vperm.xlu0 %4125, %v3524
      %v4127 = vpop.permute.xlu0 %4126
      %v4137 = vunpack.c.l.b16 %v3512
      %v4138 = vunpack.c.h.b16 %v3512
      %v4139 = vunpack.c.l.b16 %v3513
      %v4140 = vunpack.c.l.b16 %v3514
      %v4141 = vunpack.c.h.b16 %v3514
      %v4142 = vunpack.c.l.b16 %v3515
      %v4143 = vunpack.c.l.b16 %v3516
      %v4144 = vunpack.c.h.b16 %v3516
      %v4145 = vunpack.c.l.b16 %v3517
      %v4146 = vunpack.c.l.b16 %v3518
      %v4147 = vunpack.c.h.b16 %v3518
      %v4148 = vunpack.c.l.b16 %v3519
      %v4149 = vpack.c.b16 %v4140, %v4137
      %v4150 = vpack.c.b16 %v4141, %v4138
      %v4151 = vpack.c.b16 %v4142, %v4139
      %v4152 = vpack.c.b16 %v4146, %v4143
      %v4153 = vpack.c.b16 %v4147, %v4144
      %v4154 = vpack.c.b16 %v4148, %v4145
      %v4160 = vsel %vm1798, %v4151, 0
      %v4163 = vsel %vm1798, %v4154, 0
      %4165 = vmatpush.bf16.msra.mxu0 %v4065
      %4166 = vmatpush.bf16.msra.mxu0 %v4061
      %4167 = vmatpush.bf16.msra.mxu0 %v4057
      %4168 = vmatpush.bf16.msra.mxu0 %v4053
      %4169 = vmatpush.bf16.msra.mxu0 %v4049
      %4170 = vmatpush.bf16.msra.mxu0 %v4045
      %4171 = vmatpush.bf16.msra.mxu0 %v4041
      %4172 = vmatpush.bf16.msra.mxu0 %v4037
      %4173 = vmatmul.bf16.gmra.mxu0 %v4149
      %v4174 = vpop.f32.mrf.mxu0
      %v4175 = vadd.f32 %v4112, %v4174
      %v4176 = vpop.f32.mrf.mxu0
      %v4177 = vadd.f32 %v4117, %v4176
      %4178 = vmatmul.bf16.gmra.mxu0 %v4152
      %v4179 = vpop.f32.mrf.mxu0
      %v4180 = vadd.f32 %v4122, %v4179
      %v4181 = vpop.f32.mrf.mxu0
      %v4182 = vadd.f32 %v4127, %v4181
      %4183 = vdwg.mxu0
      %4184 = vmatpush.bf16.msra.mxu0 %v4097
      %4185 = vmatpush.bf16.msra.mxu0 %v4093
      %4186 = vmatpush.bf16.msra.mxu0 %v4089
      %4187 = vmatpush.bf16.msra.mxu0 %v4085
      %4188 = vmatpush.bf16.msra.mxu0 %v4081
      %4189 = vmatpush.bf16.msra.mxu0 %v4077
      %4190 = vmatpush.bf16.msra.mxu0 %v4073
      %4191 = vmatpush.bf16.msra.mxu0 %v4069
      %4192 = vmatmul.bf16.gmra.mxu0 %v4150
      %v4193 = vpop.f32.mrf.mxu0
      %v4194 = vadd.f32 %v4175, %v4193
      %v4195 = vpop.f32.mrf.mxu0
      %v4196 = vadd.f32 %v4177, %v4195
      %4197 = vmatmul.bf16.gmra.mxu0 %v4153
      %v4198 = vpop.f32.mrf.mxu0
      %v4199 = vadd.f32 %v4180, %v4198
      %v4200 = vpop.f32.mrf.mxu0
      %v4201 = vadd.f32 %v4182, %v4200
      %4202 = vdwg.mxu0
      %4203 = vmatpush.bf16.msra.mxu0 0
      %4204 = vmatpush.bf16.msra.mxu0 0
      %4205 = vmatpush.bf16.msra.mxu0 0
      %4206 = vmatpush.bf16.msra.mxu0 0
      %4207 = vmatpush.bf16.msra.mxu0 0
      %4208 = vmatpush.bf16.msra.mxu0 0
      %4209 = vmatpush.bf16.msra.mxu0 %v4105
      %4210 = vmatpush.bf16.msra.mxu0 %v4101
      %4211 = vmatmul.bf16.gmra.mxu0 %v4160
      %v4212 = vpop.f32.mrf.mxu0
      %v4213 = vadd.f32 %v4194, %v4212
      %v4214 = vpop.f32.mrf.mxu0
      %v4215 = vadd.f32 %v4196, %v4214
      %4216 = vmatmul.bf16.gmra.mxu0 %v4163
      %v4217 = vpop.f32.mrf.mxu0
      %v4218 = vadd.f32 %v4199, %v4217
      %v4219 = vpop.f32.mrf.mxu0
      %v4220 = vadd.f32 %v4201, %v4219
      %4221 = vdwg.mxu0
      %4222 = vmatpush.bf16.msra.mxu0 %v4066
      %4223 = vmatpush.bf16.msra.mxu0 %v4062
      %4224 = vmatpush.bf16.msra.mxu0 %v4058
      %4225 = vmatpush.bf16.msra.mxu0 %v4054
      %4226 = vmatpush.bf16.msra.mxu0 %v4050
      %4227 = vmatpush.bf16.msra.mxu0 %v4046
      %4228 = vmatpush.bf16.msra.mxu0 %v4042
      %4229 = vmatpush.bf16.msra.mxu0 %v4038
      %4230 = vmatmul.bf16.gmra.mxu0 %v4149
      %v4231 = vpop.f32.mrf.mxu0
      %v4232 = vadd.f32 %v4112, %v4231
      %v4233 = vpop.f32.mrf.mxu0
      %v4234 = vadd.f32 %v4117, %v4233
      %4235 = vmatmul.bf16.gmra.mxu0 %v4152
      %v4236 = vpop.f32.mrf.mxu0
      %v4237 = vadd.f32 %v4122, %v4236
      %v4238 = vpop.f32.mrf.mxu0
      %v4239 = vadd.f32 %v4127, %v4238
      %4240 = vdwg.mxu0
      %4241 = vmatpush.bf16.msra.mxu0 %v4098
      %4242 = vmatpush.bf16.msra.mxu0 %v4094
      %4243 = vmatpush.bf16.msra.mxu0 %v4090
      %4244 = vmatpush.bf16.msra.mxu0 %v4086
      %4245 = vmatpush.bf16.msra.mxu0 %v4082
      %4246 = vmatpush.bf16.msra.mxu0 %v4078
      %4247 = vmatpush.bf16.msra.mxu0 %v4074
      %4248 = vmatpush.bf16.msra.mxu0 %v4070
      %4249 = vmatmul.bf16.gmra.mxu0 %v4150
      %v4250 = vpop.f32.mrf.mxu0
      %v4251 = vadd.f32 %v4232, %v4250
      %v4252 = vpop.f32.mrf.mxu0
      %v4253 = vadd.f32 %v4234, %v4252
      %4254 = vmatmul.bf16.gmra.mxu0 %v4153
      %v4255 = vpop.f32.mrf.mxu0
      %v4256 = vadd.f32 %v4237, %v4255
      %v4257 = vpop.f32.mrf.mxu0
      %v4258 = vadd.f32 %v4239, %v4257
      %4259 = vdwg.mxu0
      %4260 = vmatpush.bf16.msra.mxu0 0
      %4261 = vmatpush.bf16.msra.mxu0 0
      %4262 = vmatpush.bf16.msra.mxu0 0
      %4263 = vmatpush.bf16.msra.mxu0 0
      %4264 = vmatpush.bf16.msra.mxu0 0
      %4265 = vmatpush.bf16.msra.mxu0 0
      %4266 = vmatpush.bf16.msra.mxu0 %v4106
      %4267 = vmatpush.bf16.msra.mxu0 %v4102
      %4268 = vmatmul.bf16.gmra.mxu0 %v4160
      %v4269 = vpop.f32.mrf.mxu0
      %v4270 = vadd.f32 %v4251, %v4269
      %v4271 = vpop.f32.mrf.mxu0
      %v4272 = vadd.f32 %v4253, %v4271
      %4273 = vmatmul.bf16.gmra.mxu0 %v4163
      %v4274 = vpop.f32.mrf.mxu0
      %v4275 = vadd.f32 %v4256, %v4274
      %v4276 = vpop.f32.mrf.mxu0
      %v4277 = vadd.f32 %v4258, %v4276
      %4278 = vdwg.mxu0
      %4279 = vmatpush.bf16.msra.mxu0 %v4067
      %4280 = vmatpush.bf16.msra.mxu0 %v4063
      %4281 = vmatpush.bf16.msra.mxu0 %v4059
      %4282 = vmatpush.bf16.msra.mxu0 %v4055
      %4283 = vmatpush.bf16.msra.mxu0 %v4051
      %4284 = vmatpush.bf16.msra.mxu0 %v4047
      %4285 = vmatpush.bf16.msra.mxu0 %v4043
      %4286 = vmatpush.bf16.msra.mxu0 %v4039
      %4287 = vmatmul.bf16.gmra.mxu0 %v4149
      %v4288 = vpop.f32.mrf.mxu0
      %v4289 = vadd.f32 %v4112, %v4288
      %v4290 = vpop.f32.mrf.mxu0
      %v4291 = vadd.f32 %v4117, %v4290
      %4292 = vmatmul.bf16.gmra.mxu0 %v4152
      %v4293 = vpop.f32.mrf.mxu0
      %v4294 = vadd.f32 %v4122, %v4293
      %v4295 = vpop.f32.mrf.mxu0
      %v4296 = vadd.f32 %v4127, %v4295
      %4297 = vdwg.mxu0
      %4298 = vmatpush.bf16.msra.mxu0 %v4099
      %4299 = vmatpush.bf16.msra.mxu0 %v4095
      %4300 = vmatpush.bf16.msra.mxu0 %v4091
      %4301 = vmatpush.bf16.msra.mxu0 %v4087
      %4302 = vmatpush.bf16.msra.mxu0 %v4083
      %4303 = vmatpush.bf16.msra.mxu0 %v4079
      %4304 = vmatpush.bf16.msra.mxu0 %v4075
      %4305 = vmatpush.bf16.msra.mxu0 %v4071
      %4306 = vmatmul.bf16.gmra.mxu0 %v4150
      %v4307 = vpop.f32.mrf.mxu0
      %v4308 = vadd.f32 %v4289, %v4307
      %v4309 = vpop.f32.mrf.mxu0
      %v4310 = vadd.f32 %v4291, %v4309
      %4311 = vmatmul.bf16.gmra.mxu0 %v4153
      %v4312 = vpop.f32.mrf.mxu0
      %v4313 = vadd.f32 %v4294, %v4312
      %v4314 = vpop.f32.mrf.mxu0
      %v4315 = vadd.f32 %v4296, %v4314
      %4316 = vdwg.mxu0
      %4317 = vmatpush.bf16.msra.mxu0 0
      %4318 = vmatpush.bf16.msra.mxu0 0
      %4319 = vmatpush.bf16.msra.mxu0 0
      %4320 = vmatpush.bf16.msra.mxu0 0
      %4321 = vmatpush.bf16.msra.mxu0 0
      %4322 = vmatpush.bf16.msra.mxu0 0
      %4323 = vmatpush.bf16.msra.mxu0 %v4107
      %4324 = vmatpush.bf16.msra.mxu0 %v4103
      %4325 = vmatmul.bf16.gmra.mxu0 %v4160
      %v4326 = vpop.f32.mrf.mxu0
      %v4327 = vadd.f32 %v4308, %v4326
      %v4328 = vpop.f32.mrf.mxu0
      %v4329 = vadd.f32 %v4310, %v4328
      %4330 = vmatmul.bf16.gmra.mxu0 %v4163
      %v4331 = vpop.f32.mrf.mxu0
      %v4332 = vadd.f32 %v4313, %v4331
      %v4333 = vpop.f32.mrf.mxu0
      %v4334 = vadd.f32 %v4315, %v4333
      %4335 = vdwg.mxu0
      %4336 = vmatpush.bf16.msra.mxu0 %v4068
      %4337 = vmatpush.bf16.msra.mxu0 %v4064
      %4338 = vmatpush.bf16.msra.mxu0 %v4060
      %4339 = vmatpush.bf16.msra.mxu0 %v4056
      %4340 = vmatpush.bf16.msra.mxu0 %v4052
      %4341 = vmatpush.bf16.msra.mxu0 %v4048
      %4342 = vmatpush.bf16.msra.mxu0 %v4044
      %4343 = vmatpush.bf16.msra.mxu0 %v4040
      %4344 = vmatmul.bf16.gmra.mxu0 %v4149
      %v4345 = vpop.f32.mrf.mxu0
      %v4346 = vadd.f32 %v4112, %v4345
      %v4347 = vpop.f32.mrf.mxu0
      %v4348 = vadd.f32 %v4117, %v4347
      %4349 = vmatmul.bf16.gmra.mxu0 %v4152
      %v4350 = vpop.f32.mrf.mxu0
      %v4351 = vadd.f32 %v4122, %v4350
      %v4352 = vpop.f32.mrf.mxu0
      %v4353 = vadd.f32 %v4127, %v4352
      %4354 = vdwg.mxu0
      %4355 = vmatpush.bf16.msra.mxu0 %v4100
      %4356 = vmatpush.bf16.msra.mxu0 %v4096
      %4357 = vmatpush.bf16.msra.mxu0 %v4092
      %4358 = vmatpush.bf16.msra.mxu0 %v4088
      %4359 = vmatpush.bf16.msra.mxu0 %v4084
      %4360 = vmatpush.bf16.msra.mxu0 %v4080
      %4361 = vmatpush.bf16.msra.mxu0 %v4076
      %4362 = vmatpush.bf16.msra.mxu0 %v4072
      %4363 = vmatmul.bf16.gmra.mxu0 %v4150
      %v4364 = vpop.f32.mrf.mxu0
      %v4365 = vadd.f32 %v4346, %v4364
      %v4366 = vpop.f32.mrf.mxu0
      %v4367 = vadd.f32 %v4348, %v4366
      %4368 = vmatmul.bf16.gmra.mxu0 %v4153
      %v4369 = vpop.f32.mrf.mxu0
      %v4370 = vadd.f32 %v4351, %v4369
      %v4371 = vpop.f32.mrf.mxu0
      %v4372 = vadd.f32 %v4353, %v4371
      %4373 = vdwg.mxu0
      %4374 = vmatpush.bf16.msra.mxu0 0
      %4375 = vmatpush.bf16.msra.mxu0 0
      %4376 = vmatpush.bf16.msra.mxu0 0
      %4377 = vmatpush.bf16.msra.mxu0 0
      %4378 = vmatpush.bf16.msra.mxu0 0
      %4379 = vmatpush.bf16.msra.mxu0 0
      %4380 = vmatpush.bf16.msra.mxu0 %v4108
      %4381 = vmatpush.bf16.msra.mxu0 %v4104
      %4382 = vmatmul.bf16.gmra.mxu0 %v4160
      %v4383 = vpop.f32.mrf.mxu0
      %v4384 = vadd.f32 %v4365, %v4383
      %v4385 = vpop.f32.mrf.mxu0
      %v4386 = vadd.f32 %v4367, %v4385
      %4387 = vmatmul.bf16.gmra.mxu0 %v4163
      %v4388 = vpop.f32.mrf.mxu0
      %v4389 = vadd.f32 %v4370, %v4388
      %v4390 = vpop.f32.mrf.mxu0
      %v4391 = vadd.f32 %v4372, %v4390
      %4392 = vdwg.mxu0
      %s4393 = scalar_lea.vmem %s6, 96
      %v4394 = vld [vmem:[%s4393] sm:$0xff]
      %v4395 = vld [vmem:[%s4393 + $0x8] sm:$0xff]
      %v4396 = vld [vmem:[%s4393 + $0x10] sm:$0xff]
      %v4397 = vld [vmem:[%s4393 + $0x18] sm:$0xff]
      %s4398 = scalar_lea.vmem %s7, 96
      %v4399 = vld [vmem:[%s4398] sm:$0xff]
      %v4400 = vld [vmem:[%s4398 + $0x8] sm:$0xff]
      %v4401 = vld [vmem:[%s4398 + $0x10] sm:$0xff]
      %v4402 = vld [vmem:[%s4398 + $0x18] sm:$0xff]
      %v4403 = vadd.f32 %v4213, %v4270
      %4404 = vadd.xlane.f32.xlu0 %v4403
      %v4405 = vpop.xlane.xlu0 %4404
      %v4406 = vadd.f32 %v4215, %v4272
      %4407 = vadd.xlane.f32.xlu0 %v4406
      %v4408 = vpop.xlane.xlu0 %4407
      %v4409 = vadd.f32 %v4218, %v4275
      %4410 = vadd.xlane.f32.xlu0 %v4409
      %v4411 = vpop.xlane.xlu0 %4410
      %v4412 = vadd.f32 %v4220, %v4277
      %4413 = vadd.xlane.f32.xlu0 %v4412
      %v4414 = vpop.xlane.xlu0 %4413
      %v4415 = vmul.f32 %v4405, 0.00390625
      %v4416 = vmul.f32 %v4408, 0.00390625
      %v4417 = vmul.f32 %v4411, 0.00390625
      %v4418 = vmul.f32 %v4414, 0.00390625
      %v4419 = vsub.f32 %v4213, %v4415
      %v4420 = vsub.f32 %v4270, %v4415
      %v4421 = vsub.f32 %v4215, %v4416
      %v4422 = vsub.f32 %v4272, %v4416
      %v4423 = vsub.f32 %v4218, %v4417
      %v4424 = vsub.f32 %v4275, %v4417
      %v4425 = vsub.f32 %v4220, %v4418
      %v4426 = vsub.f32 %v4277, %v4418
      %v4427 = vmul.f32 %v4419, %v4419
      %v4428 = vmul.f32 %v4420, %v4420
      %v4429 = vmul.f32 %v4421, %v4421
      %v4430 = vmul.f32 %v4422, %v4422
      %v4431 = vmul.f32 %v4423, %v4423
      %v4432 = vmul.f32 %v4424, %v4424
      %v4433 = vmul.f32 %v4425, %v4425
      %v4434 = vmul.f32 %v4426, %v4426
      %v4435 = vadd.f32 %v4427, %v4428
      %4436 = vadd.xlane.f32.xlu0 %v4435
      %v4437 = vpop.xlane.xlu0 %4436
      %v4438 = vadd.f32 %v4429, %v4430
      %4439 = vadd.xlane.f32.xlu0 %v4438
      %v4440 = vpop.xlane.xlu0 %4439
      %v4441 = vadd.f32 %v4431, %v4432
      %4442 = vadd.xlane.f32.xlu0 %v4441
      %v4443 = vpop.xlane.xlu0 %4442
      %v4444 = vadd.f32 %v4433, %v4434
      %4445 = vadd.xlane.f32.xlu0 %v4444
      %v4446 = vpop.xlane.xlu0 %4445
      %v4447 = vmul.f32 %v4437, 0.00390625
      %v4448 = vmul.f32 %v4440, 0.00390625
      %v4449 = vmul.f32 %v4443, 0.00390625
      %v4450 = vmul.f32 %v4446, 0.00390625
      %v4451 = vadd.f32 %v4447, 1e-05
      %v4452 = vadd.f32 %v4448, 1e-05
      %v4453 = vadd.f32 %v4449, 1e-05
      %v4454 = vadd.f32 %v4450, 1e-05
      %v4455 = vrsqrt.pop %v4451
      %v4456 = vmul.f32 %v4455, %v4451
      %v4457 = vmul.f32 %v4456, %v4455
      %v4458 = vmul.f32 0.5, %v4457
      %v4459 = vsub.f32 1.5, %v4458
      %v4460 = vmul.f32 %v4455, %v4459
      %vm4461 = vweird.f32 %v4451
      %vm4462 = vweird.f32 %v4455
      %vm4463 = vmor %vm4461, %vm4462
      %v4464 = vsel %vm4463, %v4455, %v4460
      %v4465 = vrsqrt.pop %v4452
      %v4466 = vmul.f32 %v4465, %v4452
      %v4467 = vmul.f32 %v4466, %v4465
      %v4468 = vmul.f32 0.5, %v4467
      %v4469 = vsub.f32 1.5, %v4468
      %v4470 = vmul.f32 %v4465, %v4469
      %vm4471 = vweird.f32 %v4452
      %vm4472 = vweird.f32 %v4465
      %vm4473 = vmor %vm4471, %vm4472
      %v4474 = vsel %vm4473, %v4465, %v4470
      %v4475 = vrsqrt.pop %v4453
      %v4476 = vmul.f32 %v4475, %v4453
      %v4477 = vmul.f32 %v4476, %v4475
      %v4478 = vmul.f32 0.5, %v4477
      %v4479 = vsub.f32 1.5, %v4478
      %v4480 = vmul.f32 %v4475, %v4479
      %vm4481 = vweird.f32 %v4453
      %vm4482 = vweird.f32 %v4475
      %vm4483 = vmor %vm4481, %vm4482
      %v4484 = vsel %vm4483, %v4475, %v4480
      %v4485 = vrsqrt.pop %v4454
      %v4486 = vmul.f32 %v4485, %v4454
      %v4487 = vmul.f32 %v4486, %v4485
      %v4488 = vmul.f32 0.5, %v4487
      %v4489 = vsub.f32 1.5, %v4488
      %v4490 = vmul.f32 %v4485, %v4489
      %vm4491 = vweird.f32 %v4454
      %vm4492 = vweird.f32 %v4485
      %vm4493 = vmor %vm4491, %vm4492
      %v4494 = vsel %vm4493, %v4485, %v4490
      %v4495 = vmul.f32 %v4419, %v4464
      %v4496 = vmul.f32 %v4420, %v4464
      %v4497 = vmul.f32 %v4421, %v4474
      %v4498 = vmul.f32 %v4422, %v4474
      %v4499 = vmul.f32 %v4423, %v4484
      %v4500 = vmul.f32 %v4424, %v4484
      %v4501 = vmul.f32 %v4425, %v4494
      %v4502 = vmul.f32 %v4426, %v4494
      %4504 = vset.pattern.permute.xlu0 0
      %4505 = vperm.xlu0 %4504, %v4394
      %v4506 = vpop.permute.xlu0 %4505
      %4509 = vset.pattern.permute.xlu0 0
      %4510 = vperm.xlu0 %4509, %v4395
      %v4511 = vpop.permute.xlu0 %4510
      %4514 = vset.pattern.permute.xlu0 0
      %4515 = vperm.xlu0 %4514, %v4396
      %v4516 = vpop.permute.xlu0 %4515
      %4519 = vset.pattern.permute.xlu0 0
      %4520 = vperm.xlu0 %4519, %v4397
      %v4521 = vpop.permute.xlu0 %4520
      %v4523 = vmul.f32 %v4495, %v4506
      %v4524 = vmul.f32 %v4496, %v4506
      %v4525 = vmul.f32 %v4497, %v4511
      %v4526 = vmul.f32 %v4498, %v4511
      %v4527 = vmul.f32 %v4499, %v4516
      %v4528 = vmul.f32 %v4500, %v4516
      %v4529 = vmul.f32 %v4501, %v4521
      %v4530 = vmul.f32 %v4502, %v4521
      %4532 = vset.pattern.permute.xlu0 0
      %4533 = vperm.xlu0 %4532, %v4399
      %v4534 = vpop.permute.xlu0 %4533
      %4537 = vset.pattern.permute.xlu0 0
      %4538 = vperm.xlu0 %4537, %v4400
      %v4539 = vpop.permute.xlu0 %4538
      %4542 = vset.pattern.permute.xlu0 0
      %4543 = vperm.xlu0 %4542, %v4401
      %v4544 = vpop.permute.xlu0 %4543
      %4547 = vset.pattern.permute.xlu0 0
      %4548 = vperm.xlu0 %4547, %v4402
      %v4549 = vpop.permute.xlu0 %4548
      %v4551 = vadd.f32 %v4523, %v4534
      %v4552 = vadd.f32 %v4524, %v4534
      %v4553 = vadd.f32 %v4525, %v4539
      %v4554 = vadd.f32 %v4526, %v4539
      %v4555 = vadd.f32 %v4527, %v4544
      %v4556 = vadd.f32 %v4528, %v4544
      %v4557 = vadd.f32 %v4529, %v4549
      %v4558 = vadd.f32 %v4530, %v4549
      %v4559 = vmax.f32 %v4551, 0.0
      %v4560 = vmax.f32 %v4552, 0.0
      %v4561 = vmax.f32 %v4553, 0.0
      %v4562 = vmax.f32 %v4554, 0.0
      %v4563 = vmax.f32 %v4555, 0.0
      %v4564 = vmax.f32 %v4556, 0.0
      %v4565 = vmax.f32 %v4557, 0.0
      %v4566 = vmax.f32 %v4558, 0.0
      %v4567 = vadd.f32 %v4327, %v4384
      %4568 = vadd.xlane.f32.xlu0 %v4567
      %v4569 = vpop.xlane.xlu0 %4568
      %v4570 = vadd.f32 %v4329, %v4386
      %4571 = vadd.xlane.f32.xlu0 %v4570
      %v4572 = vpop.xlane.xlu0 %4571
      %v4573 = vadd.f32 %v4332, %v4389
      %4574 = vadd.xlane.f32.xlu0 %v4573
      %v4575 = vpop.xlane.xlu0 %4574
      %v4576 = vadd.f32 %v4334, %v4391
      %4577 = vadd.xlane.f32.xlu0 %v4576
      %v4578 = vpop.xlane.xlu0 %4577
      %v4579 = vmul.f32 %v4569, 0.00390625
      %v4580 = vmul.f32 %v4572, 0.00390625
      %v4581 = vmul.f32 %v4575, 0.00390625
      %v4582 = vmul.f32 %v4578, 0.00390625
      %v4583 = vsub.f32 %v4327, %v4579
      %v4584 = vsub.f32 %v4384, %v4579
      %v4585 = vsub.f32 %v4329, %v4580
      %v4586 = vsub.f32 %v4386, %v4580
      %v4587 = vsub.f32 %v4332, %v4581
      %v4588 = vsub.f32 %v4389, %v4581
      %v4589 = vsub.f32 %v4334, %v4582
      %v4590 = vsub.f32 %v4391, %v4582
      %v4591 = vmul.f32 %v4583, %v4583
      %v4592 = vmul.f32 %v4584, %v4584
      %v4593 = vmul.f32 %v4585, %v4585
      %v4594 = vmul.f32 %v4586, %v4586
      %v4595 = vmul.f32 %v4587, %v4587
      %v4596 = vmul.f32 %v4588, %v4588
      %v4597 = vmul.f32 %v4589, %v4589
      %v4598 = vmul.f32 %v4590, %v4590
      %v4599 = vadd.f32 %v4591, %v4592
      %4600 = vadd.xlane.f32.xlu0 %v4599
      %v4601 = vpop.xlane.xlu0 %4600
      %v4602 = vadd.f32 %v4593, %v4594
      %4603 = vadd.xlane.f32.xlu0 %v4602
      %v4604 = vpop.xlane.xlu0 %4603
      %v4605 = vadd.f32 %v4595, %v4596
      %4606 = vadd.xlane.f32.xlu0 %v4605
      %v4607 = vpop.xlane.xlu0 %4606
      %v4608 = vadd.f32 %v4597, %v4598
      %4609 = vadd.xlane.f32.xlu0 %v4608
      %v4610 = vpop.xlane.xlu0 %4609
      %v4611 = vmul.f32 %v4601, 0.00390625
      %v4612 = vmul.f32 %v4604, 0.00390625
      %v4613 = vmul.f32 %v4607, 0.00390625
      %v4614 = vmul.f32 %v4610, 0.00390625
      %v4615 = vadd.f32 %v4611, 1e-05
      %v4616 = vadd.f32 %v4612, 1e-05
      %v4617 = vadd.f32 %v4613, 1e-05
      %v4618 = vadd.f32 %v4614, 1e-05
      %v4619 = vrsqrt.pop %v4615
      %v4620 = vmul.f32 %v4619, %v4615
      %v4621 = vmul.f32 %v4620, %v4619
      %v4622 = vmul.f32 0.5, %v4621
      %v4623 = vsub.f32 1.5, %v4622
      %v4624 = vmul.f32 %v4619, %v4623
      %vm4625 = vweird.f32 %v4615
      %vm4626 = vweird.f32 %v4619
      %vm4627 = vmor %vm4625, %vm4626
      %v4628 = vsel %vm4627, %v4619, %v4624
      %v4629 = vrsqrt.pop %v4616
      %v4630 = vmul.f32 %v4629, %v4616
      %v4631 = vmul.f32 %v4630, %v4629
      %v4632 = vmul.f32 0.5, %v4631
      %v4633 = vsub.f32 1.5, %v4632
      %v4634 = vmul.f32 %v4629, %v4633
      %vm4635 = vweird.f32 %v4616
      %vm4636 = vweird.f32 %v4629
      %vm4637 = vmor %vm4635, %vm4636
      %v4638 = vsel %vm4637, %v4629, %v4634
      %v4639 = vrsqrt.pop %v4617
      %v4640 = vmul.f32 %v4639, %v4617
      %v4641 = vmul.f32 %v4640, %v4639
      %v4642 = vmul.f32 0.5, %v4641
      %v4643 = vsub.f32 1.5, %v4642
      %v4644 = vmul.f32 %v4639, %v4643
      %vm4645 = vweird.f32 %v4617
      %vm4646 = vweird.f32 %v4639
      %vm4647 = vmor %vm4645, %vm4646
      %v4648 = vsel %vm4647, %v4639, %v4644
      %v4649 = vrsqrt.pop %v4618
      %v4650 = vmul.f32 %v4649, %v4618
      %v4651 = vmul.f32 %v4650, %v4649
      %v4652 = vmul.f32 0.5, %v4651
      %v4653 = vsub.f32 1.5, %v4652
      %v4654 = vmul.f32 %v4649, %v4653
      %vm4655 = vweird.f32 %v4618
      %vm4656 = vweird.f32 %v4649
      %vm4657 = vmor %vm4655, %vm4656
      %v4658 = vsel %vm4657, %v4649, %v4654
      %v4659 = vmul.f32 %v4583, %v4628
      %v4660 = vmul.f32 %v4584, %v4628
      %v4661 = vmul.f32 %v4585, %v4638
      %v4662 = vmul.f32 %v4586, %v4638
      %v4663 = vmul.f32 %v4587, %v4648
      %v4664 = vmul.f32 %v4588, %v4648
      %v4665 = vmul.f32 %v4589, %v4658
      %v4666 = vmul.f32 %v4590, %v4658
      %v4667 = vmul.f32 %v4659, %v4506
      %v4668 = vmul.f32 %v4660, %v4506
      %v4669 = vmul.f32 %v4661, %v4511
      %v4670 = vmul.f32 %v4662, %v4511
      %v4671 = vmul.f32 %v4663, %v4516
      %v4672 = vmul.f32 %v4664, %v4516
      %v4673 = vmul.f32 %v4665, %v4521
      %v4674 = vmul.f32 %v4666, %v4521
      %v4675 = vadd.f32 %v4667, %v4534
      %v4676 = vadd.f32 %v4668, %v4534
      %v4677 = vadd.f32 %v4669, %v4539
      %v4678 = vadd.f32 %v4670, %v4539
      %v4679 = vadd.f32 %v4671, %v4544
      %v4680 = vadd.f32 %v4672, %v4544
      %v4681 = vadd.f32 %v4673, %v4549
      %v4682 = vadd.f32 %v4674, %v4549
      %v4683 = vmax.f32 %v4675, 0.0
      %v4684 = vmax.f32 %v4676, 0.0
      %v4685 = vmax.f32 %v4677, 0.0
      %v4686 = vmax.f32 %v4678, 0.0
      %v4687 = vmax.f32 %v4679, 0.0
      %v4688 = vmax.f32 %v4680, 0.0
      %v4689 = vmax.f32 %v4681, 0.0
      %v4690 = vmax.f32 %v4682, 0.0
      %s4691 = scalar_lea.vmem %s4, 144
      %v4692 = vld [vmem:[%s4691] sm:$0xff]
      %v4693 = vld [vmem:[%s4691 + $0x8] sm:$0xf]
      %v4694 = vld [vmem:[%s4691 + $0xc] sm:$0xff]
      %v4695 = vld [vmem:[%s4691 + $0x14] sm:$0xf]
      %v4696 = vld [vmem:[%s4691 + $0x18] sm:$0xff]
      %v4697 = vld [vmem:[%s4691 + $0x20] sm:$0xf]
      %v4698 = vld [vmem:[%s4691 + $0x24] sm:$0xff]
      %v4699 = vld [vmem:[%s4691 + $0x2c] sm:$0xf]
      %s4700 = scalar_lea.vmem %s5, 96
      %v4701 = vld [vmem:[%s4700] sm:$0xff]
      %v4702 = vld [vmem:[%s4700 + $0x8] sm:$0xff]
      %v4703 = vld [vmem:[%s4700 + $0x10] sm:$0xff]
      %v4704 = vld [vmem:[%s4700 + $0x18] sm:$0xff]
      %4705 = vrot.lane.b32.xlu0 %v4559, 17
      %v4706 = vpop.permute.xlu0 %4705
      %4707 = vrot.lane.b32.xlu0 %v4561, 17
      %v4708 = vpop.permute.xlu0 %4707
      %4709 = vrot.lane.b32.xlu0 %v4563, 17
      %v4710 = vpop.permute.xlu0 %4709
      %4711 = vrot.lane.b32.xlu0 %v4565, 17
      %v4712 = vpop.permute.xlu0 %4711
      %4713 = vrot.lane.b32.xlu0 %v4560, 17
      %v4714 = vpop.permute.xlu0 %4713
      %4715 = vrot.lane.b32.xlu0 %v4562, 17
      %v4716 = vpop.permute.xlu0 %4715
      %4717 = vrot.lane.b32.xlu0 %v4564, 17
      %v4718 = vpop.permute.xlu0 %4717
      %4719 = vrot.lane.b32.xlu0 %v4566, 17
      %v4720 = vpop.permute.xlu0 %4719
      %4721 = vrot.lane.b32.xlu0 %v4683, 17
      %v4722 = vpop.permute.xlu0 %4721
      %4723 = vrot.lane.b32.xlu0 %v4685, 17
      %v4724 = vpop.permute.xlu0 %4723
      %4725 = vrot.lane.b32.xlu0 %v4687, 17
      %v4726 = vpop.permute.xlu0 %4725
      %4727 = vrot.lane.b32.xlu0 %v4689, 17
      %v4728 = vpop.permute.xlu0 %4727
      %4729 = vrot.lane.b32.xlu0 %v4684, 17
      %v4730 = vpop.permute.xlu0 %4729
      %4731 = vrot.lane.b32.xlu0 %v4686, 17
      %v4732 = vpop.permute.xlu0 %4731
      %4733 = vrot.lane.b32.xlu0 %v4688, 17
      %v4734 = vpop.permute.xlu0 %4733
      %4735 = vrot.lane.b32.xlu0 %v4690, 17
      %v4736 = vpop.permute.xlu0 %4735
      %v4737 = vsel %vm336, %v4722, %v4730
      %v4738 = vsel %vm336, %v4724, %v4732
      %v4739 = vsel %vm336, %v4726, %v4734
      %v4740 = vsel %vm336, %v4728, %v4736
      %v4741 = vsel %vm336, %v4714, %v4722
      %v4742 = vsel %vm336, %v4716, %v4724
      %v4743 = vsel %vm336, %v4718, %v4726
      %v4744 = vsel %vm336, %v4720, %v4728
      %v4745 = vsel %vm336, %v4706, %v4714
      %v4746 = vsel %vm336, %v4708, %v4716
      %v4747 = vsel %vm336, %v4710, %v4718
      %v4748 = vsel %vm336, %v4712, %v4720
      %v4749 = vsel %vm336, %v4730, %v4706
      %v4750 = vsel %vm336, %v4732, %v4708
      %v4751 = vsel %vm336, %v4734, %v4710
      %v4752 = vsel %vm336, %v4736, %v4712
      %v4753 = vmul.f32 %v4749, %v343
      %v4754 = vmul.f32 %v4745, %v344
      %v4755 = vmul.f32 %v4741, %v345
      %v4756 = vmul.f32 %v4737, %v346
      %v4757 = vmul.f32 %v4750, %v343
      %v4758 = vmul.f32 %v4746, %v344
      %v4759 = vmul.f32 %v4742, %v345
      %v4760 = vmul.f32 %v4738, %v346
      %v4761 = vmul.f32 %v4751, %v343
      %v4762 = vmul.f32 %v4747, %v344
      %v4763 = vmul.f32 %v4743, %v345
      %v4764 = vmul.f32 %v4739, %v346
      %v4765 = vmul.f32 %v4752, %v343
      %v4766 = vmul.f32 %v4748, %v344
      %v4767 = vmul.f32 %v4744, %v345
      %v4768 = vmul.f32 %v4740, %v346
      %4769 = vrot.lane.b32.xlu0 %v4559, 16
      %v4770 = vpop.permute.xlu0 %4769
      %4771 = vrot.lane.b32.xlu0 %v4561, 16
      %v4772 = vpop.permute.xlu0 %4771
      %4773 = vrot.lane.b32.xlu0 %v4563, 16
      %v4774 = vpop.permute.xlu0 %4773
      %4775 = vrot.lane.b32.xlu0 %v4565, 16
      %v4776 = vpop.permute.xlu0 %4775
      %4777 = vrot.lane.b32.xlu0 %v4560, 16
      %v4778 = vpop.permute.xlu0 %4777
      %4779 = vrot.lane.b32.xlu0 %v4562, 16
      %v4780 = vpop.permute.xlu0 %4779
      %4781 = vrot.lane.b32.xlu0 %v4564, 16
      %v4782 = vpop.permute.xlu0 %4781
      %4783 = vrot.lane.b32.xlu0 %v4566, 16
      %v4784 = vpop.permute.xlu0 %4783
      %4785 = vrot.lane.b32.xlu0 %v4683, 16
      %v4786 = vpop.permute.xlu0 %4785
      %4787 = vrot.lane.b32.xlu0 %v4685, 16
      %v4788 = vpop.permute.xlu0 %4787
      %4789 = vrot.lane.b32.xlu0 %v4687, 16
      %v4790 = vpop.permute.xlu0 %4789
      %4791 = vrot.lane.b32.xlu0 %v4689, 16
      %v4792 = vpop.permute.xlu0 %4791
      %4793 = vrot.lane.b32.xlu0 %v4684, 16
      %v4794 = vpop.permute.xlu0 %4793
      %4795 = vrot.lane.b32.xlu0 %v4686, 16
      %v4796 = vpop.permute.xlu0 %4795
      %4797 = vrot.lane.b32.xlu0 %v4688, 16
      %v4798 = vpop.permute.xlu0 %4797
      %4799 = vrot.lane.b32.xlu0 %v4690, 16
      %v4800 = vpop.permute.xlu0 %4799
      %v4801 = vsel %vm372, %v4786, %v4794
      %v4802 = vsel %vm372, %v4788, %v4796
      %v4803 = vsel %vm372, %v4790, %v4798
      %v4804 = vsel %vm372, %v4792, %v4800
      %v4805 = vsel %vm372, %v4778, %v4786
      %v4806 = vsel %vm372, %v4780, %v4788
      %v4807 = vsel %vm372, %v4782, %v4790
      %v4808 = vsel %vm372, %v4784, %v4792
      %v4809 = vsel %vm372, %v4770, %v4778
      %v4810 = vsel %vm372, %v4772, %v4780
      %v4811 = vsel %vm372, %v4774, %v4782
      %v4812 = vsel %vm372, %v4776, %v4784
      %v4813 = vsel %vm372, %v4794, %v4770
      %v4814 = vsel %vm372, %v4796, %v4772
      %v4815 = vsel %vm372, %v4798, %v4774
      %v4816 = vsel %vm372, %v4800, %v4776
      %v4817 = vmul.f32 %v4813, %v380
      %v4818 = vmul.f32 %v4809, %v381
      %v4819 = vmul.f32 %v4805, %v382
      %v4820 = vmul.f32 %v4801, %v383
      %v4821 = vmul.f32 %v4814, %v380
      %v4822 = vmul.f32 %v4810, %v381
      %v4823 = vmul.f32 %v4806, %v382
      %v4824 = vmul.f32 %v4802, %v383
      %v4825 = vmul.f32 %v4815, %v380
      %v4826 = vmul.f32 %v4811, %v381
      %v4827 = vmul.f32 %v4807, %v382
      %v4828 = vmul.f32 %v4803, %v383
      %v4829 = vmul.f32 %v4816, %v380
      %v4830 = vmul.f32 %v4812, %v381
      %v4831 = vmul.f32 %v4808, %v382
      %v4832 = vmul.f32 %v4804, %v383
      %4833 = vrot.lane.b32.xlu0 %v4559, 15
      %v4834 = vpop.permute.xlu0 %4833
      %4835 = vrot.lane.b32.xlu0 %v4561, 15
      %v4836 = vpop.permute.xlu0 %4835
      %4837 = vrot.lane.b32.xlu0 %v4563, 15
      %v4838 = vpop.permute.xlu0 %4837
      %4839 = vrot.lane.b32.xlu0 %v4565, 15
      %v4840 = vpop.permute.xlu0 %4839
      %4841 = vrot.lane.b32.xlu0 %v4560, 15
      %v4842 = vpop.permute.xlu0 %4841
      %4843 = vrot.lane.b32.xlu0 %v4562, 15
      %v4844 = vpop.permute.xlu0 %4843
      %4845 = vrot.lane.b32.xlu0 %v4564, 15
      %v4846 = vpop.permute.xlu0 %4845
      %4847 = vrot.lane.b32.xlu0 %v4566, 15
      %v4848 = vpop.permute.xlu0 %4847
      %4849 = vrot.lane.b32.xlu0 %v4683, 15
      %v4850 = vpop.permute.xlu0 %4849
      %4851 = vrot.lane.b32.xlu0 %v4685, 15
      %v4852 = vpop.permute.xlu0 %4851
      %4853 = vrot.lane.b32.xlu0 %v4687, 15
      %v4854 = vpop.permute.xlu0 %4853
      %4855 = vrot.lane.b32.xlu0 %v4689, 15
      %v4856 = vpop.permute.xlu0 %4855
      %4857 = vrot.lane.b32.xlu0 %v4684, 15
      %v4858 = vpop.permute.xlu0 %4857
      %4859 = vrot.lane.b32.xlu0 %v4686, 15
      %v4860 = vpop.permute.xlu0 %4859
      %4861 = vrot.lane.b32.xlu0 %v4688, 15
      %v4862 = vpop.permute.xlu0 %4861
      %4863 = vrot.lane.b32.xlu0 %v4690, 15
      %v4864 = vpop.permute.xlu0 %4863
      %v4865 = vsel %vm409, %v4850, %v4858
      %v4866 = vsel %vm409, %v4852, %v4860
      %v4867 = vsel %vm409, %v4854, %v4862
      %v4868 = vsel %vm409, %v4856, %v4864
      %v4869 = vsel %vm409, %v4842, %v4850
      %v4870 = vsel %vm409, %v4844, %v4852
      %v4871 = vsel %vm409, %v4846, %v4854
      %v4872 = vsel %vm409, %v4848, %v4856
      %v4873 = vsel %vm409, %v4834, %v4842
      %v4874 = vsel %vm409, %v4836, %v4844
      %v4875 = vsel %vm409, %v4838, %v4846
      %v4876 = vsel %vm409, %v4840, %v4848
      %v4877 = vsel %vm409, %v4858, %v4834
      %v4878 = vsel %vm409, %v4860, %v4836
      %v4879 = vsel %vm409, %v4862, %v4838
      %v4880 = vsel %vm409, %v4864, %v4840
      %v4881 = vmul.f32 %v4877, %v417
      %v4882 = vmul.f32 %v4873, %v418
      %v4883 = vmul.f32 %v4869, %v419
      %v4884 = vmul.f32 %v4865, %v420
      %v4885 = vmul.f32 %v4878, %v417
      %v4886 = vmul.f32 %v4874, %v418
      %v4887 = vmul.f32 %v4870, %v419
      %v4888 = vmul.f32 %v4866, %v420
      %v4889 = vmul.f32 %v4879, %v417
      %v4890 = vmul.f32 %v4875, %v418
      %v4891 = vmul.f32 %v4871, %v419
      %v4892 = vmul.f32 %v4867, %v420
      %v4893 = vmul.f32 %v4880, %v417
      %v4894 = vmul.f32 %v4876, %v418
      %v4895 = vmul.f32 %v4872, %v419
      %v4896 = vmul.f32 %v4868, %v420
      %4897 = vrot.lane.b32.xlu0 %v4559, 1
      %v4898 = vpop.permute.xlu0 %4897
      %4899 = vrot.lane.b32.xlu0 %v4561, 1
      %v4900 = vpop.permute.xlu0 %4899
      %4901 = vrot.lane.b32.xlu0 %v4563, 1
      %v4902 = vpop.permute.xlu0 %4901
      %4903 = vrot.lane.b32.xlu0 %v4565, 1
      %v4904 = vpop.permute.xlu0 %4903
      %4905 = vrot.lane.b32.xlu0 %v4560, 1
      %v4906 = vpop.permute.xlu0 %4905
      %4907 = vrot.lane.b32.xlu0 %v4562, 1
      %v4908 = vpop.permute.xlu0 %4907
      %4909 = vrot.lane.b32.xlu0 %v4564, 1
      %v4910 = vpop.permute.xlu0 %4909
      %4911 = vrot.lane.b32.xlu0 %v4566, 1
      %v4912 = vpop.permute.xlu0 %4911
      %4913 = vrot.lane.b32.xlu0 %v4683, 1
      %v4914 = vpop.permute.xlu0 %4913
      %4915 = vrot.lane.b32.xlu0 %v4685, 1
      %v4916 = vpop.permute.xlu0 %4915
      %4917 = vrot.lane.b32.xlu0 %v4687, 1
      %v4918 = vpop.permute.xlu0 %4917
      %4919 = vrot.lane.b32.xlu0 %v4689, 1
      %v4920 = vpop.permute.xlu0 %4919
      %4921 = vrot.lane.b32.xlu0 %v4684, 1
      %v4922 = vpop.permute.xlu0 %4921
      %4923 = vrot.lane.b32.xlu0 %v4686, 1
      %v4924 = vpop.permute.xlu0 %4923
      %4925 = vrot.lane.b32.xlu0 %v4688, 1
      %v4926 = vpop.permute.xlu0 %4925
      %4927 = vrot.lane.b32.xlu0 %v4690, 1
      %v4928 = vpop.permute.xlu0 %4927
      %v4929 = vsel %vm446, %v4914, %v4922
      %v4930 = vsel %vm446, %v4916, %v4924
      %v4931 = vsel %vm446, %v4918, %v4926
      %v4932 = vsel %vm446, %v4920, %v4928
      %v4933 = vsel %vm446, %v4906, %v4914
      %v4934 = vsel %vm446, %v4908, %v4916
      %v4935 = vsel %vm446, %v4910, %v4918
      %v4936 = vsel %vm446, %v4912, %v4920
      %v4937 = vsel %vm446, %v4898, %v4906
      %v4938 = vsel %vm446, %v4900, %v4908
      %v4939 = vsel %vm446, %v4902, %v4910
      %v4940 = vsel %vm446, %v4904, %v4912
      %v4941 = vsel %vm446, %v4922, %v4898
      %v4942 = vsel %vm446, %v4924, %v4900
      %v4943 = vsel %vm446, %v4926, %v4902
      %v4944 = vsel %vm446, %v4928, %v4904
      %v4945 = vmul.f32 %v4941, %v454
      %v4946 = vmul.f32 %v4937, %v455
      %v4947 = vmul.f32 %v4933, %v456
      %v4948 = vmul.f32 %v4929, %v457
      %v4949 = vmul.f32 %v4942, %v454
      %v4950 = vmul.f32 %v4938, %v455
      %v4951 = vmul.f32 %v4934, %v456
      %v4952 = vmul.f32 %v4930, %v457
      %v4953 = vmul.f32 %v4943, %v454
      %v4954 = vmul.f32 %v4939, %v455
      %v4955 = vmul.f32 %v4935, %v456
      %v4956 = vmul.f32 %v4931, %v457
      %v4957 = vmul.f32 %v4944, %v454
      %v4958 = vmul.f32 %v4940, %v455
      %v4959 = vmul.f32 %v4936, %v456
      %v4960 = vmul.f32 %v4932, %v457
      %4961 = vrot.lane.b32.xlu0 %v4559, 127
      %v4962 = vpop.permute.xlu0 %4961
      %4963 = vrot.lane.b32.xlu0 %v4561, 127
      %v4964 = vpop.permute.xlu0 %4963
      %4965 = vrot.lane.b32.xlu0 %v4563, 127
      %v4966 = vpop.permute.xlu0 %4965
      %4967 = vrot.lane.b32.xlu0 %v4565, 127
      %v4968 = vpop.permute.xlu0 %4967
      %4969 = vrot.lane.b32.xlu0 %v4560, 127
      %v4970 = vpop.permute.xlu0 %4969
      %4971 = vrot.lane.b32.xlu0 %v4562, 127
      %v4972 = vpop.permute.xlu0 %4971
      %4973 = vrot.lane.b32.xlu0 %v4564, 127
      %v4974 = vpop.permute.xlu0 %4973
      %4975 = vrot.lane.b32.xlu0 %v4566, 127
      %v4976 = vpop.permute.xlu0 %4975
      %4977 = vrot.lane.b32.xlu0 %v4683, 127
      %v4978 = vpop.permute.xlu0 %4977
      %4979 = vrot.lane.b32.xlu0 %v4685, 127
      %v4980 = vpop.permute.xlu0 %4979
      %4981 = vrot.lane.b32.xlu0 %v4687, 127
      %v4982 = vpop.permute.xlu0 %4981
      %4983 = vrot.lane.b32.xlu0 %v4689, 127
      %v4984 = vpop.permute.xlu0 %4983
      %4985 = vrot.lane.b32.xlu0 %v4684, 127
      %v4986 = vpop.permute.xlu0 %4985
      %4987 = vrot.lane.b32.xlu0 %v4686, 127
      %v4988 = vpop.permute.xlu0 %4987
      %4989 = vrot.lane.b32.xlu0 %v4688, 127
      %v4990 = vpop.permute.xlu0 %4989
      %4991 = vrot.lane.b32.xlu0 %v4690, 127
      %v4992 = vpop.permute.xlu0 %4991
      %v4993 = vsel %vm483, %v4978, %v4986
      %v4994 = vsel %vm483, %v4980, %v4988
      %v4995 = vsel %vm483, %v4982, %v4990
      %v4996 = vsel %vm483, %v4984, %v4992
      %v4997 = vsel %vm483, %v4970, %v4978
      %v4998 = vsel %vm483, %v4972, %v4980
      %v4999 = vsel %vm483, %v4974, %v4982
      %v5000 = vsel %vm483, %v4976, %v4984
      %v5001 = vsel %vm483, %v4962, %v4970
      %v5002 = vsel %vm483, %v4964, %v4972
      %v5003 = vsel %vm483, %v4966, %v4974
      %v5004 = vsel %vm483, %v4968, %v4976
      %v5005 = vsel %vm483, %v4986, %v4962
      %v5006 = vsel %vm483, %v4988, %v4964
      %v5007 = vsel %vm483, %v4990, %v4966
      %v5008 = vsel %vm483, %v4992, %v4968
      %v5009 = vmul.f32 %v5001, %v491
      %v5010 = vmul.f32 %v4997, %v492
      %v5011 = vmul.f32 %v4993, %v493
      %v5012 = vmul.f32 %v5005, %v494
      %v5013 = vmul.f32 %v5002, %v491
      %v5014 = vmul.f32 %v4998, %v492
      %v5015 = vmul.f32 %v4994, %v493
      %v5016 = vmul.f32 %v5006, %v494
      %v5017 = vmul.f32 %v5003, %v491
      %v5018 = vmul.f32 %v4999, %v492
      %v5019 = vmul.f32 %v4995, %v493
      %v5020 = vmul.f32 %v5007, %v494
      %v5021 = vmul.f32 %v5004, %v491
      %v5022 = vmul.f32 %v5000, %v492
      %v5023 = vmul.f32 %v4996, %v493
      %v5024 = vmul.f32 %v5008, %v494
      %5025 = vrot.lane.b32.xlu0 %v4559, 113
      %v5026 = vpop.permute.xlu0 %5025
      %5027 = vrot.lane.b32.xlu0 %v4561, 113
      %v5028 = vpop.permute.xlu0 %5027
      %5029 = vrot.lane.b32.xlu0 %v4563, 113
      %v5030 = vpop.permute.xlu0 %5029
      %5031 = vrot.lane.b32.xlu0 %v4565, 113
      %v5032 = vpop.permute.xlu0 %5031
      %5033 = vrot.lane.b32.xlu0 %v4560, 113
      %v5034 = vpop.permute.xlu0 %5033
      %5035 = vrot.lane.b32.xlu0 %v4562, 113
      %v5036 = vpop.permute.xlu0 %5035
      %5037 = vrot.lane.b32.xlu0 %v4564, 113
      %v5038 = vpop.permute.xlu0 %5037
      %5039 = vrot.lane.b32.xlu0 %v4566, 113
      %v5040 = vpop.permute.xlu0 %5039
      %5041 = vrot.lane.b32.xlu0 %v4683, 113
      %v5042 = vpop.permute.xlu0 %5041
      %5043 = vrot.lane.b32.xlu0 %v4685, 113
      %v5044 = vpop.permute.xlu0 %5043
      %5045 = vrot.lane.b32.xlu0 %v4687, 113
      %v5046 = vpop.permute.xlu0 %5045
      %5047 = vrot.lane.b32.xlu0 %v4689, 113
      %v5048 = vpop.permute.xlu0 %5047
      %5049 = vrot.lane.b32.xlu0 %v4684, 113
      %v5050 = vpop.permute.xlu0 %5049
      %5051 = vrot.lane.b32.xlu0 %v4686, 113
      %v5052 = vpop.permute.xlu0 %5051
      %5053 = vrot.lane.b32.xlu0 %v4688, 113
      %v5054 = vpop.permute.xlu0 %5053
      %5055 = vrot.lane.b32.xlu0 %v4690, 113
      %v5056 = vpop.permute.xlu0 %5055
      %v5057 = vsel %vm520, %v5042, %v5050
      %v5058 = vsel %vm520, %v5044, %v5052
      %v5059 = vsel %vm520, %v5046, %v5054
      %v5060 = vsel %vm520, %v5048, %v5056
      %v5061 = vsel %vm520, %v5034, %v5042
      %v5062 = vsel %vm520, %v5036, %v5044
      %v5063 = vsel %vm520, %v5038, %v5046
      %v5064 = vsel %vm520, %v5040, %v5048
      %v5065 = vsel %vm520, %v5026, %v5034
      %v5066 = vsel %vm520, %v5028, %v5036
      %v5067 = vsel %vm520, %v5030, %v5038
      %v5068 = vsel %vm520, %v5032, %v5040
      %v5069 = vsel %vm520, %v5050, %v5026
      %v5070 = vsel %vm520, %v5052, %v5028
      %v5071 = vsel %vm520, %v5054, %v5030
      %v5072 = vsel %vm520, %v5056, %v5032
      %v5073 = vmul.f32 %v5065, %v528
      %v5074 = vmul.f32 %v5061, %v529
      %v5075 = vmul.f32 %v5057, %v530
      %v5076 = vmul.f32 %v5069, %v531
      %v5077 = vmul.f32 %v5066, %v528
      %v5078 = vmul.f32 %v5062, %v529
      %v5079 = vmul.f32 %v5058, %v530
      %v5080 = vmul.f32 %v5070, %v531
      %v5081 = vmul.f32 %v5067, %v528
      %v5082 = vmul.f32 %v5063, %v529
      %v5083 = vmul.f32 %v5059, %v530
      %v5084 = vmul.f32 %v5071, %v531
      %v5085 = vmul.f32 %v5068, %v528
      %v5086 = vmul.f32 %v5064, %v529
      %v5087 = vmul.f32 %v5060, %v530
      %v5088 = vmul.f32 %v5072, %v531
      %5089 = vrot.lane.b32.xlu0 %v4559, 112
      %v5090 = vpop.permute.xlu0 %5089
      %5091 = vrot.lane.b32.xlu0 %v4561, 112
      %v5092 = vpop.permute.xlu0 %5091
      %5093 = vrot.lane.b32.xlu0 %v4563, 112
      %v5094 = vpop.permute.xlu0 %5093
      %5095 = vrot.lane.b32.xlu0 %v4565, 112
      %v5096 = vpop.permute.xlu0 %5095
      %5097 = vrot.lane.b32.xlu0 %v4560, 112
      %v5098 = vpop.permute.xlu0 %5097
      %5099 = vrot.lane.b32.xlu0 %v4562, 112
      %v5100 = vpop.permute.xlu0 %5099
      %5101 = vrot.lane.b32.xlu0 %v4564, 112
      %v5102 = vpop.permute.xlu0 %5101
      %5103 = vrot.lane.b32.xlu0 %v4566, 112
      %v5104 = vpop.permute.xlu0 %5103
      %5105 = vrot.lane.b32.xlu0 %v4683, 112
      %v5106 = vpop.permute.xlu0 %5105
      %5107 = vrot.lane.b32.xlu0 %v4685, 112
      %v5108 = vpop.permute.xlu0 %5107
      %5109 = vrot.lane.b32.xlu0 %v4687, 112
      %v5110 = vpop.permute.xlu0 %5109
      %5111 = vrot.lane.b32.xlu0 %v4689, 112
      %v5112 = vpop.permute.xlu0 %5111
      %5113 = vrot.lane.b32.xlu0 %v4684, 112
      %v5114 = vpop.permute.xlu0 %5113
      %5115 = vrot.lane.b32.xlu0 %v4686, 112
      %v5116 = vpop.permute.xlu0 %5115
      %5117 = vrot.lane.b32.xlu0 %v4688, 112
      %v5118 = vpop.permute.xlu0 %5117
      %5119 = vrot.lane.b32.xlu0 %v4690, 112
      %v5120 = vpop.permute.xlu0 %5119
      %v5121 = vsel %vm557, %v5106, %v5114
      %v5122 = vsel %vm557, %v5108, %v5116
      %v5123 = vsel %vm557, %v5110, %v5118
      %v5124 = vsel %vm557, %v5112, %v5120
      %v5125 = vsel %vm557, %v5098, %v5106
      %v5126 = vsel %vm557, %v5100, %v5108
      %v5127 = vsel %vm557, %v5102, %v5110
      %v5128 = vsel %vm557, %v5104, %v5112
      %v5129 = vsel %vm557, %v5090, %v5098
      %v5130 = vsel %vm557, %v5092, %v5100
      %v5131 = vsel %vm557, %v5094, %v5102
      %v5132 = vsel %vm557, %v5096, %v5104
      %v5133 = vsel %vm557, %v5114, %v5090
      %v5134 = vsel %vm557, %v5116, %v5092
      %v5135 = vsel %vm557, %v5118, %v5094
      %v5136 = vsel %vm557, %v5120, %v5096
      %v5137 = vmul.f32 %v5129, %v565
      %v5138 = vmul.f32 %v5125, %v566
      %v5139 = vmul.f32 %v5121, %v567
      %v5140 = vmul.f32 %v5133, %v568
      %v5141 = vmul.f32 %v5130, %v565
      %v5142 = vmul.f32 %v5126, %v566
      %v5143 = vmul.f32 %v5122, %v567
      %v5144 = vmul.f32 %v5134, %v568
      %v5145 = vmul.f32 %v5131, %v565
      %v5146 = vmul.f32 %v5127, %v566
      %v5147 = vmul.f32 %v5123, %v567
      %v5148 = vmul.f32 %v5135, %v568
      %v5149 = vmul.f32 %v5132, %v565
      %v5150 = vmul.f32 %v5128, %v566
      %v5151 = vmul.f32 %v5124, %v567
      %v5152 = vmul.f32 %v5136, %v568
      %5153 = vrot.lane.b32.xlu0 %v4559, 111
      %v5154 = vpop.permute.xlu0 %5153
      %5155 = vrot.lane.b32.xlu0 %v4561, 111
      %v5156 = vpop.permute.xlu0 %5155
      %5157 = vrot.lane.b32.xlu0 %v4563, 111
      %v5158 = vpop.permute.xlu0 %5157
      %5159 = vrot.lane.b32.xlu0 %v4565, 111
      %v5160 = vpop.permute.xlu0 %5159
      %5161 = vrot.lane.b32.xlu0 %v4560, 111
      %v5162 = vpop.permute.xlu0 %5161
      %5163 = vrot.lane.b32.xlu0 %v4562, 111
      %v5164 = vpop.permute.xlu0 %5163
      %5165 = vrot.lane.b32.xlu0 %v4564, 111
      %v5166 = vpop.permute.xlu0 %5165
      %5167 = vrot.lane.b32.xlu0 %v4566, 111
      %v5168 = vpop.permute.xlu0 %5167
      %5169 = vrot.lane.b32.xlu0 %v4683, 111
      %v5170 = vpop.permute.xlu0 %5169
      %5171 = vrot.lane.b32.xlu0 %v4685, 111
      %v5172 = vpop.permute.xlu0 %5171
      %5173 = vrot.lane.b32.xlu0 %v4687, 111
      %v5174 = vpop.permute.xlu0 %5173
      %5175 = vrot.lane.b32.xlu0 %v4689, 111
      %v5176 = vpop.permute.xlu0 %5175
      %5177 = vrot.lane.b32.xlu0 %v4684, 111
      %v5178 = vpop.permute.xlu0 %5177
      %5179 = vrot.lane.b32.xlu0 %v4686, 111
      %v5180 = vpop.permute.xlu0 %5179
      %5181 = vrot.lane.b32.xlu0 %v4688, 111
      %v5182 = vpop.permute.xlu0 %5181
      %5183 = vrot.lane.b32.xlu0 %v4690, 111
      %v5184 = vpop.permute.xlu0 %5183
      %v5185 = vsel %vm594, %v5170, %v5178
      %v5186 = vsel %vm594, %v5172, %v5180
      %v5187 = vsel %vm594, %v5174, %v5182
      %v5188 = vsel %vm594, %v5176, %v5184
      %v5189 = vsel %vm594, %v5162, %v5170
      %v5190 = vsel %vm594, %v5164, %v5172
      %v5191 = vsel %vm594, %v5166, %v5174
      %v5192 = vsel %vm594, %v5168, %v5176
      %v5193 = vsel %vm594, %v5154, %v5162
      %v5194 = vsel %vm594, %v5156, %v5164
      %v5195 = vsel %vm594, %v5158, %v5166
      %v5196 = vsel %vm594, %v5160, %v5168
      %v5197 = vsel %vm594, %v5178, %v5154
      %v5198 = vsel %vm594, %v5180, %v5156
      %v5199 = vsel %vm594, %v5182, %v5158
      %v5200 = vsel %vm594, %v5184, %v5160
      %v5201 = vmul.f32 %v5193, %v602
      %v5202 = vmul.f32 %v5189, %v603
      %v5203 = vmul.f32 %v5185, %v604
      %v5204 = vmul.f32 %v5197, %v605
      %v5205 = vmul.f32 %v5194, %v602
      %v5206 = vmul.f32 %v5190, %v603
      %v5207 = vmul.f32 %v5186, %v604
      %v5208 = vmul.f32 %v5198, %v605
      %v5209 = vmul.f32 %v5195, %v602
      %v5210 = vmul.f32 %v5191, %v603
      %v5211 = vmul.f32 %v5187, %v604
      %v5212 = vmul.f32 %v5199, %v605
      %v5213 = vmul.f32 %v5196, %v602
      %v5214 = vmul.f32 %v5192, %v603
      %v5215 = vmul.f32 %v5188, %v604
      %v5216 = vmul.f32 %v5200, %v605
      %v5217 = vpack.c.bf16 %v4757, %v4753
      %v5218 = vpack.c.bf16 %v4758, %v4754
      %v5219 = vpack.c.bf16 %v4759, %v4755
      %v5220 = vpack.c.bf16 %v4760, %v4756
      %v5221 = vpack.c.bf16 %v4765, %v4761
      %v5222 = vpack.c.bf16 %v4766, %v4762
      %v5223 = vpack.c.bf16 %v4767, %v4763
      %v5224 = vpack.c.bf16 %v4768, %v4764
      %v5225 = vpack.c.bf16 %v4821, %v4817
      %v5226 = vpack.c.bf16 %v4822, %v4818
      %v5227 = vpack.c.bf16 %v4823, %v4819
      %v5228 = vpack.c.bf16 %v4824, %v4820
      %v5229 = vpack.c.bf16 %v4829, %v4825
      %v5230 = vpack.c.bf16 %v4830, %v4826
      %v5231 = vpack.c.bf16 %v4831, %v4827
      %v5232 = vpack.c.bf16 %v4832, %v4828
      %v5233 = vpack.c.bf16 %v4885, %v4881
      %v5234 = vpack.c.bf16 %v4886, %v4882
      %v5235 = vpack.c.bf16 %v4887, %v4883
      %v5236 = vpack.c.bf16 %v4888, %v4884
      %v5237 = vpack.c.bf16 %v4893, %v4889
      %v5238 = vpack.c.bf16 %v4894, %v4890
      %v5239 = vpack.c.bf16 %v4895, %v4891
      %v5240 = vpack.c.bf16 %v4896, %v4892
      %v5241 = vpack.c.bf16 %v4949, %v4945
      %v5242 = vpack.c.bf16 %v4950, %v4946
      %v5243 = vpack.c.bf16 %v4951, %v4947
      %v5244 = vpack.c.bf16 %v4952, %v4948
      %v5245 = vpack.c.bf16 %v4957, %v4953
      %v5246 = vpack.c.bf16 %v4958, %v4954
      %v5247 = vpack.c.bf16 %v4959, %v4955
      %v5248 = vpack.c.bf16 %v4960, %v4956
      %v5249 = vpack.c.bf16 %v4561, %v4559
      %v5250 = vpack.c.bf16 %v4562, %v4560
      %v5251 = vpack.c.bf16 %v4685, %v4683
      %v5252 = vpack.c.bf16 %v4686, %v4684
      %v5253 = vpack.c.bf16 %v4565, %v4563
      %v5254 = vpack.c.bf16 %v4566, %v4564
      %v5255 = vpack.c.bf16 %v4689, %v4687
      %v5256 = vpack.c.bf16 %v4690, %v4688
      %v5257 = vpack.c.bf16 %v5013, %v5009
      %v5258 = vpack.c.bf16 %v5014, %v5010
      %v5259 = vpack.c.bf16 %v5015, %v5011
      %v5260 = vpack.c.bf16 %v5016, %v5012
      %v5261 = vpack.c.bf16 %v5021, %v5017
      %v5262 = vpack.c.bf16 %v5022, %v5018
      %v5263 = vpack.c.bf16 %v5023, %v5019
      %v5264 = vpack.c.bf16 %v5024, %v5020
      %v5265 = vpack.c.bf16 %v5077, %v5073
      %v5266 = vpack.c.bf16 %v5078, %v5074
      %v5267 = vpack.c.bf16 %v5079, %v5075
      %v5268 = vpack.c.bf16 %v5080, %v5076
      %v5269 = vpack.c.bf16 %v5085, %v5081
      %v5270 = vpack.c.bf16 %v5086, %v5082
      %v5271 = vpack.c.bf16 %v5087, %v5083
      %v5272 = vpack.c.bf16 %v5088, %v5084
      %v5273 = vpack.c.bf16 %v5141, %v5137
      %v5274 = vpack.c.bf16 %v5142, %v5138
      %v5275 = vpack.c.bf16 %v5143, %v5139
      %v5276 = vpack.c.bf16 %v5144, %v5140
      %v5277 = vpack.c.bf16 %v5149, %v5145
      %v5278 = vpack.c.bf16 %v5150, %v5146
      %v5279 = vpack.c.bf16 %v5151, %v5147
      %v5280 = vpack.c.bf16 %v5152, %v5148
      %v5281 = vpack.c.bf16 %v5205, %v5201
      %v5282 = vpack.c.bf16 %v5206, %v5202
      %v5283 = vpack.c.bf16 %v5207, %v5203
      %v5284 = vpack.c.bf16 %v5208, %v5204
      %v5285 = vpack.c.bf16 %v5213, %v5209
      %v5286 = vpack.c.bf16 %v5214, %v5210
      %v5287 = vpack.c.bf16 %v5215, %v5211
      %v5288 = vpack.c.bf16 %v5216, %v5212
      %5290 = vset.pattern.permute.xlu0 0
      %5291 = vperm.xlu0 %5290, %v4701
      %v5292 = vpop.permute.xlu0 %5291
      %5295 = vset.pattern.permute.xlu0 0
      %5296 = vperm.xlu0 %5295, %v4702
      %v5297 = vpop.permute.xlu0 %5296
      %5299 = vset.pattern.permute.xlu0 0
      %5300 = vperm.xlu0 %5299, %v4703
      %v5301 = vpop.permute.xlu0 %5300
      %5303 = vset.pattern.permute.xlu0 0
      %5304 = vperm.xlu0 %5303, %v4704
      %v5305 = vpop.permute.xlu0 %5304
      %v5314 = vunpack.c.l.b16 %v4692
      %v5315 = vunpack.c.h.b16 %v4692
      %v5316 = vunpack.c.l.b16 %v4693
      %v5317 = vunpack.c.l.b16 %v4694
      %v5318 = vunpack.c.h.b16 %v4694
      %v5319 = vunpack.c.l.b16 %v4695
      %v5320 = vunpack.c.l.b16 %v4696
      %v5321 = vunpack.c.h.b16 %v4696
      %v5322 = vunpack.c.l.b16 %v4697
      %v5323 = vunpack.c.l.b16 %v4698
      %v5324 = vunpack.c.h.b16 %v4698
      %v5325 = vunpack.c.l.b16 %v4699
      %v5326 = vpack.c.b16 %v5317, %v5314
      %v5327 = vpack.c.b16 %v5318, %v5315
      %v5328 = vpack.c.b16 %v5319, %v5316
      %v5329 = vpack.c.b16 %v5323, %v5320
      %v5330 = vpack.c.b16 %v5324, %v5321
      %v5331 = vpack.c.b16 %v5325, %v5322
      %v5337 = vsel %vm1798, %v5328, 0
      %v5340 = vsel %vm1798, %v5331, 0
      %5342 = vmatpush.bf16.msra.mxu0 %v5245
      %5343 = vmatpush.bf16.msra.mxu0 %v5241
      %5344 = vmatpush.bf16.msra.mxu0 %v5237
      %5345 = vmatpush.bf16.msra.mxu0 %v5233
      %5346 = vmatpush.bf16.msra.mxu0 %v5229
      %5347 = vmatpush.bf16.msra.mxu0 %v5225
      %5348 = vmatpush.bf16.msra.mxu0 %v5221
      %5349 = vmatpush.bf16.msra.mxu0 %v5217
      %5350 = vmatmul.bf16.gmra.mxu0 %v5326
      %v5351 = vpop.f32.mrf.mxu0
      %v5352 = vadd.f32 %v5292, %v5351
      %v5353 = vpop.f32.mrf.mxu0
      %5354 = vmatmul.bf16.gmra.mxu0 %v5329
      %v5355 = vpop.f32.mrf.mxu0
      %v5356 = vpop.f32.mrf.mxu0
      %5357 = vdwg.mxu0
      %5358 = vmatpush.bf16.msra.mxu0 %v5277
      %5359 = vmatpush.bf16.msra.mxu0 %v5273
      %5360 = vmatpush.bf16.msra.mxu0 %v5269
      %5361 = vmatpush.bf16.msra.mxu0 %v5265
      %5362 = vmatpush.bf16.msra.mxu0 %v5261
      %5363 = vmatpush.bf16.msra.mxu0 %v5257
      %5364 = vmatpush.bf16.msra.mxu0 %v5253
      %5365 = vmatpush.bf16.msra.mxu0 %v5249
      %5366 = vmatmul.bf16.gmra.mxu0 %v5327
      %v5367 = vpop.f32.mrf.mxu0
      %v5368 = vadd.f32 %v5352, %v5367
      %v5369 = vpop.f32.mrf.mxu0
      %5370 = vmatmul.bf16.gmra.mxu0 %v5330
      %v5371 = vpop.f32.mrf.mxu0
      %v5372 = vpop.f32.mrf.mxu0
      %5373 = vdwg.mxu0
      %5374 = vmatpush.bf16.msra.mxu0 0
      %5375 = vmatpush.bf16.msra.mxu0 0
      %5376 = vmatpush.bf16.msra.mxu0 0
      %5377 = vmatpush.bf16.msra.mxu0 0
      %5378 = vmatpush.bf16.msra.mxu0 0
      %5379 = vmatpush.bf16.msra.mxu0 0
      %5380 = vmatpush.bf16.msra.mxu0 %v5285
      %5381 = vmatpush.bf16.msra.mxu0 %v5281
      %5382 = vmatmul.bf16.gmra.mxu0 %v5337
      %v5383 = vpop.f32.mrf.mxu0
      %v5384 = vadd.f32 %v5368, %v5383
      %v5385 = vpop.f32.mrf.mxu0
      %5386 = vmatmul.bf16.gmra.mxu0 %v5340
      %v5387 = vpop.f32.mrf.mxu0
      %v5388 = vpop.f32.mrf.mxu0
      %5389 = vdwg.mxu0
      %5390 = vmatpush.bf16.msra.mxu0 %v5246
      %5391 = vmatpush.bf16.msra.mxu0 %v5242
      %5392 = vmatpush.bf16.msra.mxu0 %v5238
      %5393 = vmatpush.bf16.msra.mxu0 %v5234
      %5394 = vmatpush.bf16.msra.mxu0 %v5230
      %5395 = vmatpush.bf16.msra.mxu0 %v5226
      %5396 = vmatpush.bf16.msra.mxu0 %v5222
      %5397 = vmatpush.bf16.msra.mxu0 %v5218
      %5398 = vmatmul.bf16.gmra.mxu0 %v5326
      %v5399 = vpop.f32.mrf.mxu0
      %v5400 = vadd.f32 %v5292, %v5399
      %v5401 = vpop.f32.mrf.mxu0
      %5402 = vmatmul.bf16.gmra.mxu0 %v5329
      %v5403 = vpop.f32.mrf.mxu0
      %v5404 = vpop.f32.mrf.mxu0
      %5405 = vdwg.mxu0
      %5406 = vmatpush.bf16.msra.mxu0 %v5278
      %5407 = vmatpush.bf16.msra.mxu0 %v5274
      %5408 = vmatpush.bf16.msra.mxu0 %v5270
      %5409 = vmatpush.bf16.msra.mxu0 %v5266
      %5410 = vmatpush.bf16.msra.mxu0 %v5262
      %5411 = vmatpush.bf16.msra.mxu0 %v5258
      %5412 = vmatpush.bf16.msra.mxu0 %v5254
      %5413 = vmatpush.bf16.msra.mxu0 %v5250
      %5414 = vmatmul.bf16.gmra.mxu0 %v5327
      %v5415 = vpop.f32.mrf.mxu0
      %v5416 = vadd.f32 %v5400, %v5415
      %v5417 = vpop.f32.mrf.mxu0
      %5418 = vmatmul.bf16.gmra.mxu0 %v5330
      %v5419 = vpop.f32.mrf.mxu0
      %v5420 = vpop.f32.mrf.mxu0
      %5421 = vdwg.mxu0
      %5422 = vmatpush.bf16.msra.mxu0 0
      %5423 = vmatpush.bf16.msra.mxu0 0
      %5424 = vmatpush.bf16.msra.mxu0 0
      %5425 = vmatpush.bf16.msra.mxu0 0
      %5426 = vmatpush.bf16.msra.mxu0 0
      %5427 = vmatpush.bf16.msra.mxu0 0
      %5428 = vmatpush.bf16.msra.mxu0 %v5286
      %5429 = vmatpush.bf16.msra.mxu0 %v5282
      %5430 = vmatmul.bf16.gmra.mxu0 %v5337
      %v5431 = vpop.f32.mrf.mxu0
      %v5432 = vadd.f32 %v5416, %v5431
      %v5433 = vpop.f32.mrf.mxu0
      %5434 = vmatmul.bf16.gmra.mxu0 %v5340
      %v5435 = vpop.f32.mrf.mxu0
      %v5436 = vpop.f32.mrf.mxu0
      %5437 = vdwg.mxu0
      %5438 = vmatpush.bf16.msra.mxu0 %v5247
      %5439 = vmatpush.bf16.msra.mxu0 %v5243
      %5440 = vmatpush.bf16.msra.mxu0 %v5239
      %5441 = vmatpush.bf16.msra.mxu0 %v5235
      %5442 = vmatpush.bf16.msra.mxu0 %v5231
      %5443 = vmatpush.bf16.msra.mxu0 %v5227
      %5444 = vmatpush.bf16.msra.mxu0 %v5223
      %5445 = vmatpush.bf16.msra.mxu0 %v5219
      %5446 = vmatmul.bf16.gmra.mxu0 %v5326
      %v5447 = vpop.f32.mrf.mxu0
      %v5448 = vadd.f32 %v5292, %v5447
      %v5449 = vpop.f32.mrf.mxu0
      %5450 = vmatmul.bf16.gmra.mxu0 %v5329
      %v5451 = vpop.f32.mrf.mxu0
      %v5452 = vpop.f32.mrf.mxu0
      %5453 = vdwg.mxu0
      %5454 = vmatpush.bf16.msra.mxu0 %v5279
      %5455 = vmatpush.bf16.msra.mxu0 %v5275
      %5456 = vmatpush.bf16.msra.mxu0 %v5271
      %5457 = vmatpush.bf16.msra.mxu0 %v5267
      %5458 = vmatpush.bf16.msra.mxu0 %v5263
      %5459 = vmatpush.bf16.msra.mxu0 %v5259
      %5460 = vmatpush.bf16.msra.mxu0 %v5255
      %5461 = vmatpush.bf16.msra.mxu0 %v5251
      %5462 = vmatmul.bf16.gmra.mxu0 %v5327
      %v5463 = vpop.f32.mrf.mxu0
      %v5464 = vadd.f32 %v5448, %v5463
      %v5465 = vpop.f32.mrf.mxu0
      %5466 = vmatmul.bf16.gmra.mxu0 %v5330
      %v5467 = vpop.f32.mrf.mxu0
      %v5468 = vpop.f32.mrf.mxu0
      %5469 = vdwg.mxu0
      %5470 = vmatpush.bf16.msra.mxu0 0
      %5471 = vmatpush.bf16.msra.mxu0 0
      %5472 = vmatpush.bf16.msra.mxu0 0
      %5473 = vmatpush.bf16.msra.mxu0 0
      %5474 = vmatpush.bf16.msra.mxu0 0
      %5475 = vmatpush.bf16.msra.mxu0 0
      %5476 = vmatpush.bf16.msra.mxu0 %v5287
      %5477 = vmatpush.bf16.msra.mxu0 %v5283
      %5478 = vmatmul.bf16.gmra.mxu0 %v5337
      %v5479 = vpop.f32.mrf.mxu0
      %v5480 = vadd.f32 %v5464, %v5479
      %v5481 = vpop.f32.mrf.mxu0
      %5482 = vmatmul.bf16.gmra.mxu0 %v5340
      %v5483 = vpop.f32.mrf.mxu0
      %v5484 = vpop.f32.mrf.mxu0
      %5485 = vdwg.mxu0
      %5486 = vmatpush.bf16.msra.mxu0 %v5248
      %5487 = vmatpush.bf16.msra.mxu0 %v5244
      %5488 = vmatpush.bf16.msra.mxu0 %v5240
      %5489 = vmatpush.bf16.msra.mxu0 %v5236
      %5490 = vmatpush.bf16.msra.mxu0 %v5232
      %5491 = vmatpush.bf16.msra.mxu0 %v5228
      %5492 = vmatpush.bf16.msra.mxu0 %v5224
      %5493 = vmatpush.bf16.msra.mxu0 %v5220
      %5494 = vmatmul.bf16.gmra.mxu0 %v5326
      %v5495 = vpop.f32.mrf.mxu0
      %v5496 = vadd.f32 %v5292, %v5495
      %v5497 = vpop.f32.mrf.mxu0
      %5498 = vmatmul.bf16.gmra.mxu0 %v5329
      %v5499 = vpop.f32.mrf.mxu0
      %v5500 = vpop.f32.mrf.mxu0
      %5501 = vdwg.mxu0
      %5502 = vmatpush.bf16.msra.mxu0 %v5280
      %5503 = vmatpush.bf16.msra.mxu0 %v5276
      %5504 = vmatpush.bf16.msra.mxu0 %v5272
      %5505 = vmatpush.bf16.msra.mxu0 %v5268
      %5506 = vmatpush.bf16.msra.mxu0 %v5264
      %5507 = vmatpush.bf16.msra.mxu0 %v5260
      %5508 = vmatpush.bf16.msra.mxu0 %v5256
      %5509 = vmatpush.bf16.msra.mxu0 %v5252
      %5510 = vmatmul.bf16.gmra.mxu0 %v5327
      %v5511 = vpop.f32.mrf.mxu0
      %v5512 = vadd.f32 %v5496, %v5511
      %v5513 = vpop.f32.mrf.mxu0
      %5514 = vmatmul.bf16.gmra.mxu0 %v5330
      %v5515 = vpop.f32.mrf.mxu0
      %v5516 = vpop.f32.mrf.mxu0
      %5517 = vdwg.mxu0
      %5518 = vmatpush.bf16.msra.mxu0 0
      %5519 = vmatpush.bf16.msra.mxu0 0
      %5520 = vmatpush.bf16.msra.mxu0 0
      %5521 = vmatpush.bf16.msra.mxu0 0
      %5522 = vmatpush.bf16.msra.mxu0 0
      %5523 = vmatpush.bf16.msra.mxu0 0
      %5524 = vmatpush.bf16.msra.mxu0 %v5288
      %5525 = vmatpush.bf16.msra.mxu0 %v5284
      %5526 = vmatmul.bf16.gmra.mxu0 %v5337
      %v5527 = vpop.f32.mrf.mxu0
      %v5528 = vadd.f32 %v5512, %v5527
      %v5529 = vpop.f32.mrf.mxu0
      %5530 = vmatmul.bf16.gmra.mxu0 %v5340
      %v5531 = vpop.f32.mrf.mxu0
      %v5532 = vpop.f32.mrf.mxu0
      %5533 = vdwg.mxu0
      %5534 = vst [vmem:[#allocation1] ss:$4 sm:$0xff] %v307
      %v5535 = vld.sshfl [vmem:[#allocation1] sm:$0xff pattern:$0x73625140]
      %v5536 = vld.sshfl [vmem:[#allocation1 + $0x8] sm:$0xff pattern:$0x73625140]
      %v5537 = vld.sshfl [vmem:[#allocation1 + $0x10] sm:$0xff pattern:$0x73625140]
      %v5538 = vld.sshfl [vmem:[#allocation1 + $0x18] sm:$0xff pattern:$0x73625140]
      %v5543 = vadd.f32 %v5384, %v5535
      %v5544 = vadd.f32 %v5432, %v5536
      %v5545 = vadd.f32 %v5480, %v5537
      %v5546 = vadd.f32 %v5528, %v5538
      %v5551 = vrot.slane %v5544, 6
      %v5552 = vrot.slane %v5545, 4
      %v5553 = vrot.slane %v5546, 2
      %v5554 = vsel %vm695, %v5543, %v5551
      %vm5555 = vcmask 1045508
      %v5556 = vsel %vm5555, %v5552, %v5553
      %v5557 = vsel %vm700, %v5554, %v5556
      %5559 = vst [vmem:[%s305] sm:$0xff] %v5557
      %p5560 = scmp.lt.s32.totalorder %s19, 3
      %s5561 = scalar_select %p5560, %s19, 3
      %s5562 = smul.addr %s5561, 4
      %s5563 = smul.addr %s5562, 2
      %s5564 = scalar_lea.vmem %s8, %s5563
      // Predicated region
      $region53: #{kikinet_forward.8} parent=51 // pred_check
        %p5565 = pneg %p210
      $region54: #{kikinet_forward.8} parent=51 // pred_check_branch
        %5567 = sbr.rel (%p5565) target = $region56
      $region55: #{kikinet_forward.8} parent=51 // pred_region
        _
      $region56: #{kikinet_forward.8} parent=51 // pred_fallthru
        _
    $region52: #{kikinet_forward.8} parent=5 // pred_fallthru
      _
    %p5568 = scmp.le.s32.totalorder 2, %s14
    // Predicated region
    $region57: #{kikinet_forward.8} parent=5 // pred_check
      %p5569 = pneg %p5568
    $region58: #{kikinet_forward.8} parent=5 // pred_check_branch
      %5571 = sbr.rel (%p5569) target = $region60
    $region59: #{kikinet_forward.8} parent=5 // pred_region
      %s5572 = ssub.s32 %s14, 2
      // Predicated region
      $region61: #{kikinet_forward.8} parent=59 // pred_check
        %p5573 = pneg %p216
      $region62: #{kikinet_forward.8} parent=59 // pred_check_branch
        %5575 = sbr.rel (%p5573) target = $region64
      $region63: #{kikinet_forward.8} parent=59 // pred_region
        %p5576 = scmp.lt.s32.totalorder %s20, 3
        %s5577 = scalar_select %p5576, %s20, 3
        %s5578 = smul.addr %s5577, 4
        %s5579 = smul.addr %s5578, 2
        %s5580 = scalar_lea.vmem %s8, %s5579
      $region64: #{kikinet_forward.8} parent=59 // pred_fallthru
        _
    $region60: #{kikinet_forward.8} parent=5 // pred_fallthru
      _
  $region6: #{kikinet_forward.8} parent=0 // loop_footer
    %s18 = sadd.s32 1, %s14
  $region7: #{kikinet_forward.8} parent=0 // loop_footer_branch
    %13 = sbr.rel target = $region3
  $region8: #{kikinet_forward.8} parent=0 // loop_exit
    _

// kernel: kikinet_forward.10
$region0: #{kikinet_forward.10}
  #allocation0 [shape = 'u32[]', space=smem, size = 0x4, offset = 0x4, fixed_abs, tag = 'smem constant byte address 0x4 - core index']
  #allocation1 [shape = 'u32[72,128]{1,0:T(1,128)}', space=vmem, size = 0x9000, scoped, tag = 'internal scratch']
  %s0 = inlined_call_operand.vmem [shape: f32[2,1,256], index: 0, kind: input, shape index: {}]
  %s1 = inlined_call_operand.vmem [shape: f32[2,1,256], index: 1, kind: input, shape index: {}]
  %s2 = inlined_call_operand.vmem [shape: f32[2,4,256], index: 2, kind: input, shape index: {}]
  %s3 = inlined_call_operand.vmem [shape: f32[2,4,256], index: 3, kind: input, shape index: {}]
  %s4 = inlined_call_operand.vmem [shape: f32[2,4,256], index: 4, kind: output, shape index: {0}]
  %s5 = inlined_call_operand.vmem [shape: f32[2,4,256], index: 5, kind: output, shape index: {1}]
  %6 = xla_tuple %s4, %s5
  %s7 = sld [smem:[#allocation0]]
  $region57: #{kikinet_forward.10} parent=0
    _
  %s9 = ssub.s32 1, %s7
  %s10 = scalar_select 0, %s9, %s7
  loop: start=0, step=1, limit=4
  $region2: #{kikinet_forward.10} parent=0 // loop_pre_header
    _
  $region3: #{kikinet_forward.10} parent=0 // loop_header
    %s12 = sphi 0, %s16
    %p13 = scmp.ge.s32.totalorder %s12, 4
    %s22 = sphi 0, %s24
    %s25 = sphi 0, %s22
    %s26 = sphi 0, %s25
    %s42 = sphi 0, %s26
    %s48 = sphi 0, %s50
    %s51 = sphi 0, %s48
    %s52 = sphi 0, %s51
    %s68 = sphi 0, %s52
    %s74 = sphi 0, %s76
    %s77 = sphi 0, %s74
    %s78 = sphi 0, %s77
    %s94 = sphi 0, %s78
    %s100 = sphi 0, %s102
    %s103 = sphi 0, %s100
    %s104 = sphi 0, %s103
    %s120 = sphi 0, %s104
    %s126 = sphi 0, %s128
    %s129 = sphi 0, %s126
    %s130 = sphi 0, %s129
    %s146 = sphi 0, %s130
    %s152 = sphi 0, %s154
    %s155 = sphi 0, %s152
    %s156 = sphi 0, %s155
    %s172 = sphi 0, %s156
  $region4: #{kikinet_forward.10} parent=0 // loop_header_branch
    %15 = sbr.rel (%p13) target = $region8
  $region5: #{kikinet_forward.10} parent=0 // loop_body
    %s17 = ssub.s32 %s12, 1
    %s18 = ssub.s32 %s12, 2
    %s19 = sadd.s32 %s12, 1
    %s20 = ssub.s32 %s12, %s19
    %p21 = scmp.eq.s32.totalorder %s20, 0
    %s23 = sadd.s32 %s22, 1
    %s24 = scalar_select %p21, %s22, %s23
    %p27 = pneg %p21
    %p28 = scmp.eq.s32.totalorder %s12, 1
    %p29 = por %p27, %p28
    %p30 = scmp.ne.s32.totalorder %s22, %s25
    %p31 = scmp.eq.s32.totalorder %s12, 0
    %p32 = por %p30, %p31
    %p33 = scmp.ne.s32.totalorder %s22, %s25
    %p34 = scmp.eq.s32.totalorder %s17, 1
    %p35 = por %p33, %p34
    %p36 = scmp.ne.s32.totalorder %s25, %s26
    %p37 = scmp.eq.s32.totalorder %s17, 0
    %p38 = por %p36, %p37
    %p39 = scmp.ne.s32.totalorder %s25, %s26
    %p40 = scmp.eq.s32.totalorder %s18, 1
    %p41 = por %p39, %p40
    %p43 = scmp.ne.s32.totalorder %s26, %s42
    %p44 = scmp.eq.s32.totalorder %s18, 0
    %p45 = por %p43, %p44
    %s46 = ssub.s32 %s12, %s19
    %p47 = scmp.eq.s32.totalorder %s46, 0
    %s49 = sadd.s32 %s48, 1
    %s50 = scalar_select %p47, %s48, %s49
    %p53 = pneg %p47
    %p54 = scmp.eq.s32.totalorder %s12, 1
    %p55 = por %p53, %p54
    %p56 = scmp.ne.s32.totalorder %s48, %s51
    %p57 = scmp.eq.s32.totalorder %s12, 0
    %p58 = por %p56, %p57
    %p59 = scmp.ne.s32.totalorder %s48, %s51
    %p60 = scmp.eq.s32.totalorder %s17, 1
    %p61 = por %p59, %p60
    %p62 = scmp.ne.s32.totalorder %s51, %s52
    %p63 = scmp.eq.s32.totalorder %s17, 0
    %p64 = por %p62, %p63
    %p65 = scmp.ne.s32.totalorder %s51, %s52
    %p66 = scmp.eq.s32.totalorder %s18, 1
    %p67 = por %p65, %p66
    %p69 = scmp.ne.s32.totalorder %s52, %s68
    %p70 = scmp.eq.s32.totalorder %s18, 0
    %p71 = por %p69, %p70
    %s72 = ssub.s32 %s12, %s19
    %p73 = scmp.eq.s32.totalorder %s72, 0
    %s75 = sadd.s32 %s74, 1
    %s76 = scalar_select %p73, %s74, %s75
    %p79 = pneg %p73
    %p80 = scmp.eq.s32.totalorder %s12, 1
    %p81 = por %p79, %p80
    %p82 = scmp.ne.s32.totalorder %s74, %s77
    %p83 = scmp.eq.s32.totalorder %s12, 0
    %p84 = por %p82, %p83
    %p85 = scmp.ne.s32.totalorder %s74, %s77
    %p86 = scmp.eq.s32.totalorder %s17, 1
    %p87 = por %p85, %p86
    %p88 = scmp.ne.s32.totalorder %s77, %s78
    %p89 = scmp.eq.s32.totalorder %s17, 0
    %p90 = por %p88, %p89
    %p91 = scmp.ne.s32.totalorder %s77, %s78
    %p92 = scmp.eq.s32.totalorder %s18, 1
    %p93 = por %p91, %p92
    %p95 = scmp.ne.s32.totalorder %s78, %s94
    %p96 = scmp.eq.s32.totalorder %s18, 0
    %p97 = por %p95, %p96
    %s98 = ssub.s32 %s12, %s19
    %p99 = scmp.eq.s32.totalorder %s98, 0
    %s101 = sadd.s32 %s100, 1
    %s102 = scalar_select %p99, %s100, %s101
    %p105 = pneg %p99
    %p106 = scmp.eq.s32.totalorder %s12, 1
    %p107 = por %p105, %p106
    %p108 = scmp.ne.s32.totalorder %s100, %s103
    %p109 = scmp.eq.s32.totalorder %s12, 0
    %p110 = por %p108, %p109
    %p111 = scmp.ne.s32.totalorder %s100, %s103
    %p112 = scmp.eq.s32.totalorder %s17, 1
    %p113 = por %p111, %p112
    %p114 = scmp.ne.s32.totalorder %s103, %s104
    %p115 = scmp.eq.s32.totalorder %s17, 0
    %p116 = por %p114, %p115
    %p117 = scmp.ne.s32.totalorder %s103, %s104
    %p118 = scmp.eq.s32.totalorder %s18, 1
    %p119 = por %p117, %p118
    %p121 = scmp.ne.s32.totalorder %s104, %s120
    %p122 = scmp.eq.s32.totalorder %s18, 0
    %p123 = por %p121, %p122
    %s124 = ssub.s32 %s12, %s19
    %p125 = scmp.eq.s32.totalorder %s124, 0
    %s127 = sadd.s32 %s126, 1
    %s128 = scalar_select %p125, %s126, %s127
    %p131 = pneg %p125
    %p132 = scmp.eq.s32.totalorder %s12, 1
    %p133 = por %p131, %p132
    %p134 = scmp.ne.s32.totalorder %s126, %s129
    %p135 = scmp.eq.s32.totalorder %s12, 0
    %p136 = por %p134, %p135
    %p137 = scmp.ne.s32.totalorder %s126, %s129
    %p138 = scmp.eq.s32.totalorder %s17, 1
    %p139 = por %p137, %p138
    %p140 = scmp.ne.s32.totalorder %s129, %s130
    %p141 = scmp.eq.s32.totalorder %s17, 0
    %p142 = por %p140, %p141
    %p143 = scmp.ne.s32.totalorder %s129, %s130
    %p144 = scmp.eq.s32.totalorder %s18, 1
    %p145 = por %p143, %p144
    %p147 = scmp.ne.s32.totalorder %s130, %s146
    %p148 = scmp.eq.s32.totalorder %s18, 0
    %p149 = por %p147, %p148
    %s150 = ssub.s32 %s12, %s19
    %p151 = scmp.eq.s32.totalorder %s150, 0
    %s153 = sadd.s32 %s152, 1
    %s154 = scalar_select %p151, %s152, %s153
    %p157 = pneg %p151
    %p158 = scmp.eq.s32.totalorder %s12, 1
    %p159 = por %p157, %p158
    %p160 = scmp.ne.s32.totalorder %s152, %s155
    %p161 = scmp.eq.s32.totalorder %s12, 0
    %p162 = por %p160, %p161
    %p163 = scmp.ne.s32.totalorder %s152, %s155
    %p164 = scmp.eq.s32.totalorder %s17, 1
    %p165 = por %p163, %p164
    %p166 = scmp.ne.s32.totalorder %s155, %s156
    %p167 = scmp.eq.s32.totalorder %s17, 0
    %p168 = por %p166, %p167
    %p169 = scmp.ne.s32.totalorder %s155, %s156
    %p170 = scmp.eq.s32.totalorder %s18, 1
    %p171 = por %p169, %p170
    %p173 = scmp.ne.s32.totalorder %s156, %s172
    %p174 = scmp.eq.s32.totalorder %s18, 0
    %p175 = por %p173, %p174
    %p176 = scmp.le.s32.totalorder 1, %s12
    %p177 = scmp.lt.s32.totalorder %s12, 3
    %p178 = pnand %p176, %p177
    %p179 = pneg %p178
    // Predicated region
    $region9: #{kikinet_forward.10} parent=5 // pred_check
      _
    $region10: #{kikinet_forward.10} parent=5 // pred_check_branch
      %181 = sbr.rel (%p178) target = $region12
    $region11: #{kikinet_forward.10} parent=5 // pred_region
      %s182 = ssub.s32 %s12, 1
    $region12: #{kikinet_forward.10} parent=5 // pred_fallthru
      _
    %p183 = scmp.lt.s32.totalorder %s12, 2
    // Predicated region
    $region13: #{kikinet_forward.10} parent=5 // pred_check
      %p184 = pneg %p183
    $region14: #{kikinet_forward.10} parent=5 // pred_check_branch
      %186 = sbr.rel (%p184) target = $region16
    $region15: #{kikinet_forward.10} parent=5 // pred_region
      // Predicated region
      $region17: #{kikinet_forward.10} parent=15 // pred_check
        %p187 = pneg %p32
      $region18: #{kikinet_forward.10} parent=15 // pred_check_branch
        %189 = sbr.rel (%p187) target = $region20
      $region19: #{kikinet_forward.10} parent=15 // pred_region
        %p190 = scmp.lt.s32.totalorder %s12, 1
        %s191 = scalar_select %p190, %s12, 1
        %s192 = smul.addr %s191, 2
        %s193 = scalar_lea.vmem %s0, %s192
      $region20: #{kikinet_forward.10} parent=15 // pred_fallthru
        _
      // Predicated region
      $region21: #{kikinet_forward.10} parent=15 // pred_check
        %p194 = pneg %p58
      $region22: #{kikinet_forward.10} parent=15 // pred_check_branch
        %196 = sbr.rel (%p194) target = $region24
      $region23: #{kikinet_forward.10} parent=15 // pred_region
        %p197 = scmp.lt.s32.totalorder %s12, 1
        %s198 = scalar_select %p197, %s12, 1
        %s199 = smul.addr %s198, 2
        %s200 = scalar_lea.vmem %s1, %s199
      $region24: #{kikinet_forward.10} parent=15 // pred_fallthru
        _
      // Predicated region
      $region25: #{kikinet_forward.10} parent=15 // pred_check
        %p201 = pneg %p84
      $region26: #{kikinet_forward.10} parent=15 // pred_check_branch
        %203 = sbr.rel (%p201) target = $region28
      $region27: #{kikinet_forward.10} parent=15 // pred_region
        %p204 = scmp.lt.s32.totalorder %s12, 1
        %s205 = scalar_select %p204, %s12, 1
        %s206 = smul.addr %s205, 2
        %s207 = smul.addr %s206, 4
        %s208 = scalar_lea.vmem %s2, %s207
      $region28: #{kikinet_forward.10} parent=15 // pred_fallthru
        _
      // Predicated region
      $region29: #{kikinet_forward.10} parent=15 // pred_check
        %p209 = pneg %p110
      $region30: #{kikinet_forward.10} parent=15 // pred_check_branch
        %211 = sbr.rel (%p209) target = $region32
      $region31: #{kikinet_forward.10} parent=15 // pred_region
        %p212 = scmp.lt.s32.totalorder %s12, 1
        %s213 = scalar_select %p212, %s12, 1
        %s214 = smul.addr %s213, 2
        %s215 = smul.addr %s214, 4
        %s216 = scalar_lea.vmem %s3, %s215
      $region32: #{kikinet_forward.10} parent=15 // pred_fallthru
        _
    $region16: #{kikinet_forward.10} parent=5 // pred_fallthru
      _
    %p217 = scmp.le.s32.totalorder 1, %s12
    %p218 = scmp.lt.s32.totalorder %s12, 3
    %p219 = pnand %p217, %p218
    %p220 = pneg %p219
    // Predicated region
    $region33: #{kikinet_forward.10} parent=5 // pred_check
      _
    $region34: #{kikinet_forward.10} parent=5 // pred_check_branch
      %222 = sbr.rel (%p219) target = $region36
    $region35: #{kikinet_forward.10} parent=5 // pred_region
      %s223 = ssub.s32 %s12, 1
      %p224 = scmp.lt.s32.totalorder %s17, 1
      %s225 = scalar_select %p224, %s17, 1
      %s226 = smul.addr %s225, 2
      %s227 = scalar_lea.vmem %s0, %s226
      %p228 = pneg %p38
      %p229 = pneg %p35
      %p230 = scmp.lt.s32.totalorder %s17, 1
      %s231 = scalar_select %p230, %s17, 1
      %s232 = smul.addr %s231, 2
      %s233 = scalar_lea.vmem %s1, %s232
      %p234 = pneg %p64
      %p235 = pneg %p61
      %p236 = scmp.lt.s32.totalorder %s17, 1
      %s237 = scalar_select %p236, %s17, 1
      %s238 = smul.addr %s237, 2
      %s239 = smul.addr %s238, 4
      %s240 = scalar_lea.vmem %s2, %s239
      %p241 = pneg %p90
      %p242 = pneg %p87
      %p243 = scmp.lt.s32.totalorder %s17, 1
      %s244 = scalar_select %p243, %s17, 1
      %s245 = smul.addr %s244, 2
      %s246 = smul.addr %s245, 4
      %s247 = scalar_lea.vmem %s3, %s246
      %p248 = pneg %p116
      %p249 = pneg %p113
      %p250 = pneg %p142
      %p251 = pneg %p139
      %p252 = scmp.lt.s32.totalorder %s17, 1
      %s253 = scalar_select %p252, %s17, 1
      %s254 = smul.addr %s253, 2
      %s255 = smul.addr %s254, 4
      %s256 = scalar_lea.vmem %s4, %s255
      %p257 = pneg %p168
      %p258 = pneg %p165
      %p259 = scmp.lt.s32.totalorder %s17, 1
      %s260 = scalar_select %p259, %s17, 1
      %s261 = smul.addr %s260, 2
      %s262 = smul.addr %s261, 4
      %s263 = scalar_lea.vmem %s5, %s262
      %p264 = scmp.lt.s32.totalorder %s17, 1
      %s265 = scalar_select %p264, %s17, 1
      %s266 = smul.addr %s265, 2
      %s267 = scalar_lea.vmem %s0, %s266
      %p268 = scmp.lt.s32.totalorder %s17, 1
      %s269 = scalar_select %p268, %s17, 1
      %s270 = smul.addr %s269, 2
      %s271 = scalar_lea.vmem %s1, %s270
      %p272 = scmp.lt.s32.totalorder %s17, 1
      %s273 = scalar_select %p272, %s17, 1
      %s274 = smul.addr %s273, 2
      %s275 = smul.addr %s274, 4
      %s276 = scalar_lea.vmem %s2, %s275
      %p277 = scmp.lt.s32.totalorder %s17, 1
      %s278 = scalar_select %p277, %s17, 1
      %s279 = smul.addr %s278, 2
      %s280 = smul.addr %s279, 4
      %s281 = scalar_lea.vmem %s3, %s280
      %p282 = scmp.lt.s32.totalorder %s17, 1
      %s283 = scalar_select %p282, %s17, 1
      %s284 = smul.addr %s283, 2
      %s285 = smul.addr %s284, 4
      %s286 = scalar_lea.vmem %s4, %s285
      %p287 = scmp.lt.s32.totalorder %s17, 1
      %s288 = scalar_select %p287, %s17, 1
      %s289 = smul.addr %s288, 2
      %s290 = smul.addr %s289, 4
      %s291 = scalar_lea.vmem %s5, %s290
      %v292 = vld [vmem:[%s267] sm:$0x3]
      %v293 = vld [vmem:[%s271] sm:$0x3]
      %v294 = vld [vmem:[%s276] sm:$0xff]
      %v295 = vld [vmem:[%s281] sm:$0xff]
      %v297 = vperm.slane %v292, 0
      %v298 = vperm.slane %v292, 1
      %302 = vst [vmem:[#allocation1] ss:$2 sm:$0xff] %v294
      %v303 = vld.sshfl [vmem:[#allocation1] sm:$0xff pattern:$0x75316420]
      %v304 = vld.sshfl [vmem:[#allocation1 + $0x8] sm:$0xff pattern:$0x75316420]
      %v307 = vmul.f32 %v297, %v303
      %v308 = vmul.f32 %v298, %v304
      %v310 = vperm.slane %v293, 0
      %v311 = vperm.slane %v293, 1
      %315 = vst [vmem:[#allocation1] ss:$2 sm:$0xff] %v295
      %v316 = vld.sshfl [vmem:[#allocation1] sm:$0xff pattern:$0x75316420]
      %v317 = vld.sshfl [vmem:[#allocation1 + $0x8] sm:$0xff pattern:$0x75316420]
      %v320 = vmul.f32 %v310, %v316
      %v321 = vmul.f32 %v311, %v317
      %v322 = vsub.f32 %v307, %v320
      %v323 = vsub.f32 %v308, %v321
      %v326 = vrot.slane %v323, 4
      %vm327 = vcmask 1043456
      %v328 = vsel %vm327, %v322, %v326
      %330 = vst [vmem:[%s286] sm:$0xff] %v328
      %331 = vst [vmem:[#allocation1] ss:$2 sm:$0xff] %v295
      %v332 = vld.sshfl [vmem:[#allocation1] sm:$0xff pattern:$0x75316420]
      %v333 = vld.sshfl [vmem:[#allocation1 + $0x8] sm:$0xff pattern:$0x75316420]
      %v336 = vmul.f32 %v297, %v332
      %v337 = vmul.f32 %v298, %v333
      %338 = vst [vmem:[#allocation1] ss:$2 sm:$0xff] %v294
      %v339 = vld.sshfl [vmem:[#allocation1] sm:$0xff pattern:$0x75316420]
      %v340 = vld.sshfl [vmem:[#allocation1 + $0x8] sm:$0xff pattern:$0x75316420]
      %v343 = vmul.f32 %v310, %v339
      %v344 = vmul.f32 %v311, %v340
      %v345 = vadd.f32 %v336, %v343
      %v346 = vadd.f32 %v337, %v344
      %v349 = vrot.slane %v346, 4
      %v350 = vsel %vm327, %v345, %v349
      %352 = vst [vmem:[%s291] sm:$0xff] %v350
      %p353 = scmp.lt.s32.totalorder %s17, 1
      %s354 = scalar_select %p353, %s17, 1
      %s355 = smul.addr %s354, 2
      %s356 = smul.addr %s355, 4
      %s357 = scalar_lea.vmem %s4, %s356
      %p358 = scmp.lt.s32.totalorder %s17, 1
      %s359 = scalar_select %p358, %s17, 1
      %s360 = smul.addr %s359, 2
      %s361 = smul.addr %s360, 4
      %s362 = scalar_lea.vmem %s5, %s361
      // Predicated region
      $region37: #{kikinet_forward.10} parent=35 // pred_check
        %p363 = pneg %p139
      $region38: #{kikinet_forward.10} parent=35 // pred_check_branch
        %365 = sbr.rel (%p363) target = $region40
      $region39: #{kikinet_forward.10} parent=35 // pred_region
        _
      $region40: #{kikinet_forward.10} parent=35 // pred_fallthru
        _
      // Predicated region
      $region41: #{kikinet_forward.10} parent=35 // pred_check
        %p366 = pneg %p165
      $region42: #{kikinet_forward.10} parent=35 // pred_check_branch
        %368 = sbr.rel (%p366) target = $region44
      $region43: #{kikinet_forward.10} parent=35 // pred_region
        _
      $region44: #{kikinet_forward.10} parent=35 // pred_fallthru
        _
    $region36: #{kikinet_forward.10} parent=5 // pred_fallthru
      _
    %p369 = scmp.le.s32.totalorder 2, %s12
    // Predicated region
    $region45: #{kikinet_forward.10} parent=5 // pred_check
      %p370 = pneg %p369
    $region46: #{kikinet_forward.10} parent=5 // pred_check_branch
      %372 = sbr.rel (%p370) target = $region48
    $region47: #{kikinet_forward.10} parent=5 // pred_region
      %s373 = ssub.s32 %s12, 2
      // Predicated region
      $region49: #{kikinet_forward.10} parent=47 // pred_check
        %p374 = pneg %p145
      $region50: #{kikinet_forward.10} parent=47 // pred_check_branch
        %376 = sbr.rel (%p374) target = $region52
      $region51: #{kikinet_forward.10} parent=47 // pred_region
        %p377 = scmp.lt.s32.totalorder %s18, 1
        %s378 = scalar_select %p377, %s18, 1
        %s379 = smul.addr %s378, 2
        %s380 = smul.addr %s379, 4
        %s381 = scalar_lea.vmem %s4, %s380
      $region52: #{kikinet_forward.10} parent=47 // pred_fallthru
        _
      // Predicated region
      $region53: #{kikinet_forward.10} parent=47 // pred_check
        %p382 = pneg %p171
      $region54: #{kikinet_forward.10} parent=47 // pred_check_branch
        %384 = sbr.rel (%p382) target = $region56
      $region55: #{kikinet_forward.10} parent=47 // pred_region
        %p385 = scmp.lt.s32.totalorder %s18, 1
        %s386 = scalar_select %p385, %s18, 1
        %s387 = smul.addr %s386, 2
        %s388 = smul.addr %s387, 4
        %s389 = scalar_lea.vmem %s5, %s388
      $region56: #{kikinet_forward.10} parent=47 // pred_fallthru
        _
    $region48: #{kikinet_forward.10} parent=5 // pred_fallthru
      _
  $region6: #{kikinet_forward.10} parent=0 // loop_footer
    %s16 = sadd.s32 1, %s12
  $region7: #{kikinet_forward.10} parent=0 // loop_footer_branch
    %11 = sbr.rel target = $region3
  $region8: #{kikinet_forward.10} parent=0 // loop_exit
    _

// kernel: kikinet_forward.9
$region0: #{kikinet_forward.9}
  #allocation0 [shape = 'u32[]', space=smem, size = 0x4, offset = 0x4, fixed_abs, tag = 'smem constant byte address 0x4 - core index']
  #allocation1 [shape = 'u32[72,128]{1,0:T(1,128)}', space=vmem, size = 0x9000, scoped, tag = 'internal scratch']
  %s0 = inlined_call_operand.vmem [shape: f32[2,4,256], index: 0, kind: input, shape index: {}]
  %s1 = inlined_call_operand.vmem [shape: f32[2,4,256], index: 1, kind: input, shape index: {}]
  %s2 = inlined_call_operand.vmem [shape: f32[2,4,256], index: 2, kind: input, shape index: {}]
  %s3 = inlined_call_operand.vmem [shape: f32[2,4,256], index: 3, kind: input, shape index: {}]
  %s4 = inlined_call_operand.vmem [shape: f32[2,1,256], index: 4, kind: output, shape index: {0}]
  %s5 = inlined_call_operand.vmem [shape: f32[2,1,256], index: 5, kind: output, shape index: {1}]
  %6 = xla_tuple %s4, %s5
  %s7 = sld [smem:[#allocation0]]
  $region57: #{kikinet_forward.9} parent=0
    _
  %s9 = ssub.s32 1, %s7
  %s10 = scalar_select 0, %s9, %s7
  loop: start=0, step=1, limit=4
  $region2: #{kikinet_forward.9} parent=0 // loop_pre_header
    _
  $region3: #{kikinet_forward.9} parent=0 // loop_header
    %s12 = sphi 0, %s16
    %p13 = scmp.ge.s32.totalorder %s12, 4
    %s22 = sphi 0, %s24
    %s25 = sphi 0, %s22
    %s26 = sphi 0, %s25
    %s42 = sphi 0, %s26
    %s48 = sphi 0, %s50
    %s51 = sphi 0, %s48
    %s52 = sphi 0, %s51
    %s68 = sphi 0, %s52
    %s74 = sphi 0, %s76
    %s77 = sphi 0, %s74
    %s78 = sphi 0, %s77
    %s94 = sphi 0, %s78
    %s100 = sphi 0, %s102
    %s103 = sphi 0, %s100
    %s104 = sphi 0, %s103
    %s120 = sphi 0, %s104
    %s126 = sphi 0, %s128
    %s129 = sphi 0, %s126
    %s130 = sphi 0, %s129
    %s146 = sphi 0, %s130
    %s152 = sphi 0, %s154
    %s155 = sphi 0, %s152
    %s156 = sphi 0, %s155
    %s172 = sphi 0, %s156
  $region4: #{kikinet_forward.9} parent=0 // loop_header_branch
    %15 = sbr.rel (%p13) target = $region8
  $region5: #{kikinet_forward.9} parent=0 // loop_body
    %s17 = ssub.s32 %s12, 1
    %s18 = ssub.s32 %s12, 2
    %s19 = sadd.s32 %s12, 1
    %s20 = ssub.s32 %s12, %s19
    %p21 = scmp.eq.s32.totalorder %s20, 0
    %s23 = sadd.s32 %s22, 1
    %s24 = scalar_select %p21, %s22, %s23
    %p27 = pneg %p21
    %p28 = scmp.eq.s32.totalorder %s12, 1
    %p29 = por %p27, %p28
    %p30 = scmp.ne.s32.totalorder %s22, %s25
    %p31 = scmp.eq.s32.totalorder %s12, 0
    %p32 = por %p30, %p31
    %p33 = scmp.ne.s32.totalorder %s22, %s25
    %p34 = scmp.eq.s32.totalorder %s17, 1
    %p35 = por %p33, %p34
    %p36 = scmp.ne.s32.totalorder %s25, %s26
    %p37 = scmp.eq.s32.totalorder %s17, 0
    %p38 = por %p36, %p37
    %p39 = scmp.ne.s32.totalorder %s25, %s26
    %p40 = scmp.eq.s32.totalorder %s18, 1
    %p41 = por %p39, %p40
    %p43 = scmp.ne.s32.totalorder %s26, %s42
    %p44 = scmp.eq.s32.totalorder %s18, 0
    %p45 = por %p43, %p44
    %s46 = ssub.s32 %s12, %s19
    %p47 = scmp.eq.s32.totalorder %s46, 0
    %s49 = sadd.s32 %s48, 1
    %s50 = scalar_select %p47, %s48, %s49
    %p53 = pneg %p47
    %p54 = scmp.eq.s32.totalorder %s12, 1
    %p55 = por %p53, %p54
    %p56 = scmp.ne.s32.totalorder %s48, %s51
    %p57 = scmp.eq.s32.totalorder %s12, 0
    %p58 = por %p56, %p57
    %p59 = scmp.ne.s32.totalorder %s48, %s51
    %p60 = scmp.eq.s32.totalorder %s17, 1
    %p61 = por %p59, %p60
    %p62 = scmp.ne.s32.totalorder %s51, %s52
    %p63 = scmp.eq.s32.totalorder %s17, 0
    %p64 = por %p62, %p63
    %p65 = scmp.ne.s32.totalorder %s51, %s52
    %p66 = scmp.eq.s32.totalorder %s18, 1
    %p67 = por %p65, %p66
    %p69 = scmp.ne.s32.totalorder %s52, %s68
    %p70 = scmp.eq.s32.totalorder %s18, 0
    %p71 = por %p69, %p70
    %s72 = ssub.s32 %s12, %s19
    %p73 = scmp.eq.s32.totalorder %s72, 0
    %s75 = sadd.s32 %s74, 1
    %s76 = scalar_select %p73, %s74, %s75
    %p79 = pneg %p73
    %p80 = scmp.eq.s32.totalorder %s12, 1
    %p81 = por %p79, %p80
    %p82 = scmp.ne.s32.totalorder %s74, %s77
    %p83 = scmp.eq.s32.totalorder %s12, 0
    %p84 = por %p82, %p83
    %p85 = scmp.ne.s32.totalorder %s74, %s77
    %p86 = scmp.eq.s32.totalorder %s17, 1
    %p87 = por %p85, %p86
    %p88 = scmp.ne.s32.totalorder %s77, %s78
    %p89 = scmp.eq.s32.totalorder %s17, 0
    %p90 = por %p88, %p89
    %p91 = scmp.ne.s32.totalorder %s77, %s78
    %p92 = scmp.eq.s32.totalorder %s18, 1
    %p93 = por %p91, %p92
    %p95 = scmp.ne.s32.totalorder %s78, %s94
    %p96 = scmp.eq.s32.totalorder %s18, 0
    %p97 = por %p95, %p96
    %s98 = ssub.s32 %s12, %s19
    %p99 = scmp.eq.s32.totalorder %s98, 0
    %s101 = sadd.s32 %s100, 1
    %s102 = scalar_select %p99, %s100, %s101
    %p105 = pneg %p99
    %p106 = scmp.eq.s32.totalorder %s12, 1
    %p107 = por %p105, %p106
    %p108 = scmp.ne.s32.totalorder %s100, %s103
    %p109 = scmp.eq.s32.totalorder %s12, 0
    %p110 = por %p108, %p109
    %p111 = scmp.ne.s32.totalorder %s100, %s103
    %p112 = scmp.eq.s32.totalorder %s17, 1
    %p113 = por %p111, %p112
    %p114 = scmp.ne.s32.totalorder %s103, %s104
    %p115 = scmp.eq.s32.totalorder %s17, 0
    %p116 = por %p114, %p115
    %p117 = scmp.ne.s32.totalorder %s103, %s104
    %p118 = scmp.eq.s32.totalorder %s18, 1
    %p119 = por %p117, %p118
    %p121 = scmp.ne.s32.totalorder %s104, %s120
    %p122 = scmp.eq.s32.totalorder %s18, 0
    %p123 = por %p121, %p122
    %s124 = ssub.s32 %s12, %s19
    %p125 = scmp.eq.s32.totalorder %s124, 0
    %s127 = sadd.s32 %s126, 1
    %s128 = scalar_select %p125, %s126, %s127
    %p131 = pneg %p125
    %p132 = scmp.eq.s32.totalorder %s12, 1
    %p133 = por %p131, %p132
    %p134 = scmp.ne.s32.totalorder %s126, %s129
    %p135 = scmp.eq.s32.totalorder %s12, 0
    %p136 = por %p134, %p135
    %p137 = scmp.ne.s32.totalorder %s126, %s129
    %p138 = scmp.eq.s32.totalorder %s17, 1
    %p139 = por %p137, %p138
    %p140 = scmp.ne.s32.totalorder %s129, %s130
    %p141 = scmp.eq.s32.totalorder %s17, 0
    %p142 = por %p140, %p141
    %p143 = scmp.ne.s32.totalorder %s129, %s130
    %p144 = scmp.eq.s32.totalorder %s18, 1
    %p145 = por %p143, %p144
    %p147 = scmp.ne.s32.totalorder %s130, %s146
    %p148 = scmp.eq.s32.totalorder %s18, 0
    %p149 = por %p147, %p148
    %s150 = ssub.s32 %s12, %s19
    %p151 = scmp.eq.s32.totalorder %s150, 0
    %s153 = sadd.s32 %s152, 1
    %s154 = scalar_select %p151, %s152, %s153
    %p157 = pneg %p151
    %p158 = scmp.eq.s32.totalorder %s12, 1
    %p159 = por %p157, %p158
    %p160 = scmp.ne.s32.totalorder %s152, %s155
    %p161 = scmp.eq.s32.totalorder %s12, 0
    %p162 = por %p160, %p161
    %p163 = scmp.ne.s32.totalorder %s152, %s155
    %p164 = scmp.eq.s32.totalorder %s17, 1
    %p165 = por %p163, %p164
    %p166 = scmp.ne.s32.totalorder %s155, %s156
    %p167 = scmp.eq.s32.totalorder %s17, 0
    %p168 = por %p166, %p167
    %p169 = scmp.ne.s32.totalorder %s155, %s156
    %p170 = scmp.eq.s32.totalorder %s18, 1
    %p171 = por %p169, %p170
    %p173 = scmp.ne.s32.totalorder %s156, %s172
    %p174 = scmp.eq.s32.totalorder %s18, 0
    %p175 = por %p173, %p174
    %p176 = scmp.le.s32.totalorder 1, %s12
    %p177 = scmp.lt.s32.totalorder %s12, 3
    %p178 = pnand %p176, %p177
    %p179 = pneg %p178
    // Predicated region
    $region9: #{kikinet_forward.9} parent=5 // pred_check
      _
    $region10: #{kikinet_forward.9} parent=5 // pred_check_branch
      %181 = sbr.rel (%p178) target = $region12
    $region11: #{kikinet_forward.9} parent=5 // pred_region
      %s182 = ssub.s32 %s12, 1
    $region12: #{kikinet_forward.9} parent=5 // pred_fallthru
      _
    %p183 = scmp.lt.s32.totalorder %s12, 2
    // Predicated region
    $region13: #{kikinet_forward.9} parent=5 // pred_check
      %p184 = pneg %p183
    $region14: #{kikinet_forward.9} parent=5 // pred_check_branch
      %186 = sbr.rel (%p184) target = $region16
    $region15: #{kikinet_forward.9} parent=5 // pred_region
      // Predicated region
      $region17: #{kikinet_forward.9} parent=15 // pred_check
        %p187 = pneg %p32
      $region18: #{kikinet_forward.9} parent=15 // pred_check_branch
        %189 = sbr.rel (%p187) target = $region20
      $region19: #{kikinet_forward.9} parent=15 // pred_region
        %p190 = scmp.lt.s32.totalorder %s12, 1
        %s191 = scalar_select %p190, %s12, 1
        %s192 = smul.addr %s191, 2
        %s193 = smul.addr %s192, 4
        %s194 = scalar_lea.vmem %s0, %s193
      $region20: #{kikinet_forward.9} parent=15 // pred_fallthru
        _
      // Predicated region
      $region21: #{kikinet_forward.9} parent=15 // pred_check
        %p195 = pneg %p58
      $region22: #{kikinet_forward.9} parent=15 // pred_check_branch
        %197 = sbr.rel (%p195) target = $region24
      $region23: #{kikinet_forward.9} parent=15 // pred_region
        %p198 = scmp.lt.s32.totalorder %s12, 1
        %s199 = scalar_select %p198, %s12, 1
        %s200 = smul.addr %s199, 2
        %s201 = smul.addr %s200, 4
        %s202 = scalar_lea.vmem %s1, %s201
      $region24: #{kikinet_forward.9} parent=15 // pred_fallthru
        _
      // Predicated region
      $region25: #{kikinet_forward.9} parent=15 // pred_check
        %p203 = pneg %p84
      $region26: #{kikinet_forward.9} parent=15 // pred_check_branch
        %205 = sbr.rel (%p203) target = $region28
      $region27: #{kikinet_forward.9} parent=15 // pred_region
        %p206 = scmp.lt.s32.totalorder %s12, 1
        %s207 = scalar_select %p206, %s12, 1
        %s208 = smul.addr %s207, 2
        %s209 = smul.addr %s208, 4
        %s210 = scalar_lea.vmem %s2, %s209
      $region28: #{kikinet_forward.9} parent=15 // pred_fallthru
        _
      // Predicated region
      $region29: #{kikinet_forward.9} parent=15 // pred_check
        %p211 = pneg %p110
      $region30: #{kikinet_forward.9} parent=15 // pred_check_branch
        %213 = sbr.rel (%p211) target = $region32
      $region31: #{kikinet_forward.9} parent=15 // pred_region
        %p214 = scmp.lt.s32.totalorder %s12, 1
        %s215 = scalar_select %p214, %s12, 1
        %s216 = smul.addr %s215, 2
        %s217 = smul.addr %s216, 4
        %s218 = scalar_lea.vmem %s3, %s217
      $region32: #{kikinet_forward.9} parent=15 // pred_fallthru
        _
    $region16: #{kikinet_forward.9} parent=5 // pred_fallthru
      _
    %p219 = scmp.le.s32.totalorder 1, %s12
    %p220 = scmp.lt.s32.totalorder %s12, 3
    %p221 = pnand %p219, %p220
    %p222 = pneg %p221
    // Predicated region
    $region33: #{kikinet_forward.9} parent=5 // pred_check
      _
    $region34: #{kikinet_forward.9} parent=5 // pred_check_branch
      %224 = sbr.rel (%p221) target = $region36
    $region35: #{kikinet_forward.9} parent=5 // pred_region
      %s225 = ssub.s32 %s12, 1
      %p226 = scmp.lt.s32.totalorder %s17, 1
      %s227 = scalar_select %p226, %s17, 1
      %s228 = smul.addr %s227, 2
      %s229 = smul.addr %s228, 4
      %s230 = scalar_lea.vmem %s0, %s229
      %p231 = pneg %p38
      %p232 = pneg %p35
      %p233 = scmp.lt.s32.totalorder %s17, 1
      %s234 = scalar_select %p233, %s17, 1
      %s235 = smul.addr %s234, 2
      %s236 = smul.addr %s235, 4
      %s237 = scalar_lea.vmem %s1, %s236
      %p238 = pneg %p64
      %p239 = pneg %p61
      %p240 = scmp.lt.s32.totalorder %s17, 1
      %s241 = scalar_select %p240, %s17, 1
      %s242 = smul.addr %s241, 2
      %s243 = smul.addr %s242, 4
      %s244 = scalar_lea.vmem %s2, %s243
      %p245 = pneg %p90
      %p246 = pneg %p87
      %p247 = scmp.lt.s32.totalorder %s17, 1
      %s248 = scalar_select %p247, %s17, 1
      %s249 = smul.addr %s248, 2
      %s250 = smul.addr %s249, 4
      %s251 = scalar_lea.vmem %s3, %s250
      %p252 = pneg %p116
      %p253 = pneg %p113
      %p254 = pneg %p142
      %p255 = pneg %p139
      %p256 = scmp.lt.s32.totalorder %s17, 1
      %s257 = scalar_select %p256, %s17, 1
      %s258 = smul.addr %s257, 2
      %s259 = scalar_lea.vmem %s4, %s258
      %p260 = pneg %p168
      %p261 = pneg %p165
      %p262 = scmp.lt.s32.totalorder %s17, 1
      %s263 = scalar_select %p262, %s17, 1
      %s264 = smul.addr %s263, 2
      %s265 = scalar_lea.vmem %s5, %s264
      %p266 = scmp.lt.s32.totalorder %s17, 1
      %s267 = scalar_select %p266, %s17, 1
      %s268 = smul.addr %s267, 2
      %s269 = smul.addr %s268, 4
      %s270 = scalar_lea.vmem %s0, %s269
      %p271 = scmp.lt.s32.totalorder %s17, 1
      %s272 = scalar_select %p271, %s17, 1
      %s273 = smul.addr %s272, 2
      %s274 = smul.addr %s273, 4
      %s275 = scalar_lea.vmem %s1, %s274
      %p276 = scmp.lt.s32.totalorder %s17, 1
      %s277 = scalar_select %p276, %s17, 1
      %s278 = smul.addr %s277, 2
      %s279 = smul.addr %s278, 4
      %s280 = scalar_lea.vmem %s2, %s279
      %p281 = scmp.lt.s32.totalorder %s17, 1
      %s282 = scalar_select %p281, %s17, 1
      %s283 = smul.addr %s282, 2
      %s284 = smul.addr %s283, 4
      %s285 = scalar_lea.vmem %s3, %s284
      %p286 = scmp.lt.s32.totalorder %s17, 1
      %s287 = scalar_select %p286, %s17, 1
      %s288 = smul.addr %s287, 2
      %s289 = scalar_lea.vmem %s4, %s288
      %p290 = scmp.lt.s32.totalorder %s17, 1
      %s291 = scalar_select %p290, %s17, 1
      %s292 = smul.addr %s291, 2
      %s293 = scalar_lea.vmem %s5, %s292
      %v294 = vld [vmem:[%s270] sm:$0xff]
      %v295 = vld [vmem:[%s275] sm:$0xff]
      %v296 = vld [vmem:[%s280] sm:$0xff]
      %v297 = vld [vmem:[%s285] sm:$0xff]
      %v298 = vmul.f32 %v294, %v296
      %v299 = vmul.f32 %v295, %v297
      %v300 = vadd.f32 %v298, %v299
      %302 = vst [vmem:[#allocation1] ss:$2 sm:$0xff] %v300
      %v303 = vld.sshfl [vmem:[#allocation1] sm:$0xff pattern:$0x75316420]
      %v304 = vld.sshfl [vmem:[#allocation1 + $0x8] sm:$0xff pattern:$0x75316420]
      %vm307 = vcmask 1043456
      %v308 = vsel %vm307, %v303, 0.0
      %v309 = vrot.slane %v308, 4
      %v310 = vadd.f32 %v308, %v309
      %v311 = vrot.slane %v310, 2
      %v312 = vadd.f32 %v310, %v311
      %v313 = vrot.slane %v312, 1
      %v314 = vadd.f32 %v312, %v313
      %v315 = vsel %vm307, %v304, 0.0
      %v316 = vrot.slane %v315, 4
      %v317 = vadd.f32 %v315, %v316
      %v318 = vrot.slane %v317, 2
      %v319 = vadd.f32 %v317, %v318
      %v320 = vrot.slane %v319, 1
      %v321 = vadd.f32 %v319, %v320
      %v324 = vrot.slane %v321, 7
      %vm325 = vcmask 1040384
      %v326 = vsel %vm325, %v314, %v324
      %v328 = vlaneseq
      %vm329 = vcmp.ge.s32.totalorder %v328, 0
      %vm330 = vcmp.lt.s32.totalorder %v328, 256
      %vm331 = vmand %vm329, %vm330
      %332 = vst.msk [vmem:[%s289] sm:$0x3] %vm331, %v326
      %v333 = vmul.f32 %v295, %v296
      %v334 = vmul.f32 %v294, %v297
      %v335 = vsub.f32 %v333, %v334
      %337 = vst [vmem:[#allocation1] ss:$2 sm:$0xff] %v335
      %v338 = vld.sshfl [vmem:[#allocation1] sm:$0xff pattern:$0x75316420]
      %v339 = vld.sshfl [vmem:[#allocation1 + $0x8] sm:$0xff pattern:$0x75316420]
      %v342 = vsel %vm307, %v338, 0.0
      %v343 = vrot.slane %v342, 4
      %v344 = vadd.f32 %v342, %v343
      %v345 = vrot.slane %v344, 2
      %v346 = vadd.f32 %v344, %v345
      %v347 = vrot.slane %v346, 1
      %v348 = vadd.f32 %v346, %v347
      %v349 = vsel %vm307, %v339, 0.0
      %v350 = vrot.slane %v349, 4
      %v351 = vadd.f32 %v349, %v350
      %v352 = vrot.slane %v351, 2
      %v353 = vadd.f32 %v351, %v352
      %v354 = vrot.slane %v353, 1
      %v355 = vadd.f32 %v353, %v354
      %v358 = vrot.slane %v355, 7
      %v359 = vsel %vm325, %v348, %v358
      %361 = vst.msk [vmem:[%s293] sm:$0x3] %vm331, %v359
      %p362 = scmp.lt.s32.totalorder %s17, 1
      %s363 = scalar_select %p362, %s17, 1
      %s364 = smul.addr %s363, 2
      %s365 = scalar_lea.vmem %s4, %s364
      %p366 = scmp.lt.s32.totalorder %s17, 1
      %s367 = scalar_select %p366, %s17, 1
      %s368 = smul.addr %s367, 2
      %s369 = scalar_lea.vmem %s5, %s368
      // Predicated region
      $region37: #{kikinet_forward.9} parent=35 // pred_check
        %p370 = pneg %p139
      $region38: #{kikinet_forward.9} parent=35 // pred_check_branch
        %372 = sbr.rel (%p370) target = $region40
      $region39: #{kikinet_forward.9} parent=35 // pred_region
        _
      $region40: #{kikinet_forward.9} parent=35 // pred_fallthru
        _
      // Predicated region
      $region41: #{kikinet_forward.9} parent=35 // pred_check
        %p373 = pneg %p165
      $region42: #{kikinet_forward.9} parent=35 // pred_check_branch
        %375 = sbr.rel (%p373) target = $region44
      $region43: #{kikinet_forward.9} parent=35 // pred_region
        _
      $region44: #{kikinet_forward.9} parent=35 // pred_fallthru
        _
    $region36: #{kikinet_forward.9} parent=5 // pred_fallthru
      _
    %p376 = scmp.le.s32.totalorder 2, %s12
    // Predicated region
    $region45: #{kikinet_forward.9} parent=5 // pred_check
      %p377 = pneg %p376
    $region46: #{kikinet_forward.9} parent=5 // pred_check_branch
      %379 = sbr.rel (%p377) target = $region48
    $region47: #{kikinet_forward.9} parent=5 // pred_region
      %s380 = ssub.s32 %s12, 2
      // Predicated region
      $region49: #{kikinet_forward.9} parent=47 // pred_check
        %p381 = pneg %p145
      $region50: #{kikinet_forward.9} parent=47 // pred_check_branch
        %383 = sbr.rel (%p381) target = $region52
      $region51: #{kikinet_forward.9} parent=47 // pred_region
        %p384 = scmp.lt.s32.totalorder %s18, 1
        %s385 = scalar_select %p384, %s18, 1
        %s386 = smul.addr %s385, 2
        %s387 = scalar_lea.vmem %s4, %s386
      $region52: #{kikinet_forward.9} parent=47 // pred_fallthru
        _
      // Predicated region
      $region53: #{kikinet_forward.9} parent=47 // pred_check
        %p388 = pneg %p171
      $region54: #{kikinet_forward.9} parent=47 // pred_check_branch
        %390 = sbr.rel (%p388) target = $region56
      $region55: #{kikinet_forward.9} parent=47 // pred_region
        %p391 = scmp.lt.s32.totalorder %s18, 1
        %s392 = scalar_select %p391, %s18, 1
        %s393 = smul.addr %s392, 2
        %s394 = scalar_lea.vmem %s5, %s393
      $region56: #{kikinet_forward.9} parent=47 // pred_fallthru
        _
    $region48: #{kikinet_forward.9} parent=5 // pred_fallthru
      _
  $region6: #{kikinet_forward.9} parent=0 // loop_footer
    %s16 = sadd.s32 1, %s12
  $region7: #{kikinet_forward.9} parent=0 // loop_footer_branch
    %11 = sbr.rel target = $region3
  $region8: #{kikinet_forward.9} parent=0 // loop_exit
    _

// kernel: kikinet_forward.11
$region0: #{kikinet_forward.11}
  #allocation0 [shape = 'u32[]', space=smem, size = 0x4, offset = 0x4, fixed_abs, tag = 'smem constant byte address 0x4 - core index']
  #allocation1 [shape = 'u32[72,128]{1,0:T(1,128)}', space=vmem, size = 0x9000, scoped, tag = 'internal scratch']
  %s0 = inlined_call_operand.vmem [shape: f32[2,4,256], index: 0, kind: input, shape index: {}, may-alias: {0,5}]
  %s1 = inlined_call_operand.vmem [shape: f32[2,4,256], index: 1, kind: input, shape index: {}, may-alias: {1,6}]
  %s2 = inlined_call_operand.vmem [shape: f32[2,4,256], index: 2, kind: input, shape index: {}]
  %s3 = inlined_call_operand.vmem [shape: f32[2,4,256], index: 3, kind: input, shape index: {}]
  %s4 = inlined_call_operand.vmem [shape: f32[2,1,256], index: 4, kind: input, shape index: {}]
  %s5 = inlined_call_operand.vmem [shape: f32[2,4,256], index: 5, kind: output, shape index: {0}, may-alias: {0,5}]
  %s6 = inlined_call_operand.vmem [shape: f32[2,4,256], index: 6, kind: output, shape index: {1}, may-alias: {1,6}]
  %7 = xla_tuple %s5, %s6
  %s8 = sld [smem:[#allocation0]]
  $region61: #{kikinet_forward.11} parent=0
    _
  %s10 = ssub.s32 1, %s8
  %s11 = scalar_select 0, %s10, %s8
  loop: start=0, step=1, limit=4
  $region2: #{kikinet_forward.11} parent=0 // loop_pre_header
    _
  $region3: #{kikinet_forward.11} parent=0 // loop_header
    %s13 = sphi 0, %s17
    %p14 = scmp.ge.s32.totalorder %s13, 4
    %s23 = sphi 0, %s25
    %s26 = sphi 0, %s23
    %s27 = sphi 0, %s26
    %s43 = sphi 0, %s27
    %s49 = sphi 0, %s51
    %s52 = sphi 0, %s49
    %s53 = sphi 0, %s52
    %s69 = sphi 0, %s53
    %s75 = sphi 0, %s77
    %s78 = sphi 0, %s75
    %s79 = sphi 0, %s78
    %s95 = sphi 0, %s79
    %s101 = sphi 0, %s103
    %s104 = sphi 0, %s101
    %s105 = sphi 0, %s104
    %s121 = sphi 0, %s105
    %s127 = sphi 0, %s129
    %s130 = sphi 0, %s127
    %s131 = sphi 0, %s130
    %s147 = sphi 0, %s131
    %s153 = sphi 0, %s155
    %s156 = sphi 0, %s153
    %s157 = sphi 0, %s156
    %s173 = sphi 0, %s157
    %s179 = sphi 0, %s181
    %s182 = sphi 0, %s179
    %s183 = sphi 0, %s182
    %s199 = sphi 0, %s183
  $region4: #{kikinet_forward.11} parent=0 // loop_header_branch
    %16 = sbr.rel (%p14) target = $region8
  $region5: #{kikinet_forward.11} parent=0 // loop_body
    %s18 = ssub.s32 %s13, 1
    %s19 = ssub.s32 %s13, 2
    %s20 = sadd.s32 %s13, 1
    %s21 = ssub.s32 %s13, %s20
    %p22 = scmp.eq.s32.totalorder %s21, 0
    %s24 = sadd.s32 %s23, 1
    %s25 = scalar_select %p22, %s23, %s24
    %p28 = pneg %p22
    %p29 = scmp.eq.s32.totalorder %s13, 1
    %p30 = por %p28, %p29
    %p31 = scmp.ne.s32.totalorder %s23, %s26
    %p32 = scmp.eq.s32.totalorder %s13, 0
    %p33 = por %p31, %p32
    %p34 = scmp.ne.s32.totalorder %s23, %s26
    %p35 = scmp.eq.s32.totalorder %s18, 1
    %p36 = por %p34, %p35
    %p37 = scmp.ne.s32.totalorder %s26, %s27
    %p38 = scmp.eq.s32.totalorder %s18, 0
    %p39 = por %p37, %p38
    %p40 = scmp.ne.s32.totalorder %s26, %s27
    %p41 = scmp.eq.s32.totalorder %s19, 1
    %p42 = por %p40, %p41
    %p44 = scmp.ne.s32.totalorder %s27, %s43
    %p45 = scmp.eq.s32.totalorder %s19, 0
    %p46 = por %p44, %p45
    %s47 = ssub.s32 %s13, %s20
    %p48 = scmp.eq.s32.totalorder %s47, 0
    %s50 = sadd.s32 %s49, 1
    %s51 = scalar_select %p48, %s49, %s50
    %p54 = pneg %p48
    %p55 = scmp.eq.s32.totalorder %s13, 1
    %p56 = por %p54, %p55
    %p57 = scmp.ne.s32.totalorder %s49, %s52
    %p58 = scmp.eq.s32.totalorder %s13, 0
    %p59 = por %p57, %p58
    %p60 = scmp.ne.s32.totalorder %s49, %s52
    %p61 = scmp.eq.s32.totalorder %s18, 1
    %p62 = por %p60, %p61
    %p63 = scmp.ne.s32.totalorder %s52, %s53
    %p64 = scmp.eq.s32.totalorder %s18, 0
    %p65 = por %p63, %p64
    %p66 = scmp.ne.s32.totalorder %s52, %s53
    %p67 = scmp.eq.s32.totalorder %s19, 1
    %p68 = por %p66, %p67
    %p70 = scmp.ne.s32.totalorder %s53, %s69
    %p71 = scmp.eq.s32.totalorder %s19, 0
    %p72 = por %p70, %p71
    %s73 = ssub.s32 %s13, %s20
    %p74 = scmp.eq.s32.totalorder %s73, 0
    %s76 = sadd.s32 %s75, 1
    %s77 = scalar_select %p74, %s75, %s76
    %p80 = pneg %p74
    %p81 = scmp.eq.s32.totalorder %s13, 1
    %p82 = por %p80, %p81
    %p83 = scmp.ne.s32.totalorder %s75, %s78
    %p84 = scmp.eq.s32.totalorder %s13, 0
    %p85 = por %p83, %p84
    %p86 = scmp.ne.s32.totalorder %s75, %s78
    %p87 = scmp.eq.s32.totalorder %s18, 1
    %p88 = por %p86, %p87
    %p89 = scmp.ne.s32.totalorder %s78, %s79
    %p90 = scmp.eq.s32.totalorder %s18, 0
    %p91 = por %p89, %p90
    %p92 = scmp.ne.s32.totalorder %s78, %s79
    %p93 = scmp.eq.s32.totalorder %s19, 1
    %p94 = por %p92, %p93
    %p96 = scmp.ne.s32.totalorder %s79, %s95
    %p97 = scmp.eq.s32.totalorder %s19, 0
    %p98 = por %p96, %p97
    %s99 = ssub.s32 %s13, %s20
    %p100 = scmp.eq.s32.totalorder %s99, 0
    %s102 = sadd.s32 %s101, 1
    %s103 = scalar_select %p100, %s101, %s102
    %p106 = pneg %p100
    %p107 = scmp.eq.s32.totalorder %s13, 1
    %p108 = por %p106, %p107
    %p109 = scmp.ne.s32.totalorder %s101, %s104
    %p110 = scmp.eq.s32.totalorder %s13, 0
    %p111 = por %p109, %p110
    %p112 = scmp.ne.s32.totalorder %s101, %s104
    %p113 = scmp.eq.s32.totalorder %s18, 1
    %p114 = por %p112, %p113
    %p115 = scmp.ne.s32.totalorder %s104, %s105
    %p116 = scmp.eq.s32.totalorder %s18, 0
    %p117 = por %p115, %p116
    %p118 = scmp.ne.s32.totalorder %s104, %s105
    %p119 = scmp.eq.s32.totalorder %s19, 1
    %p120 = por %p118, %p119
    %p122 = scmp.ne.s32.totalorder %s105, %s121
    %p123 = scmp.eq.s32.totalorder %s19, 0
    %p124 = por %p122, %p123
    %s125 = ssub.s32 %s13, %s20
    %p126 = scmp.eq.s32.totalorder %s125, 0
    %s128 = sadd.s32 %s127, 1
    %s129 = scalar_select %p126, %s127, %s128
    %p132 = pneg %p126
    %p133 = scmp.eq.s32.totalorder %s13, 1
    %p134 = por %p132, %p133
    %p135 = scmp.ne.s32.totalorder %s127, %s130
    %p136 = scmp.eq.s32.totalorder %s13, 0
    %p137 = por %p135, %p136
    %p138 = scmp.ne.s32.totalorder %s127, %s130
    %p139 = scmp.eq.s32.totalorder %s18, 1
    %p140 = por %p138, %p139
    %p141 = scmp.ne.s32.totalorder %s130, %s131
    %p142 = scmp.eq.s32.totalorder %s18, 0
    %p143 = por %p141, %p142
    %p144 = scmp.ne.s32.totalorder %s130, %s131
    %p145 = scmp.eq.s32.totalorder %s19, 1
    %p146 = por %p144, %p145
    %p148 = scmp.ne.s32.totalorder %s131, %s147
    %p149 = scmp.eq.s32.totalorder %s19, 0
    %p150 = por %p148, %p149
    %s151 = ssub.s32 %s13, %s20
    %p152 = scmp.eq.s32.totalorder %s151, 0
    %s154 = sadd.s32 %s153, 1
    %s155 = scalar_select %p152, %s153, %s154
    %p158 = pneg %p152
    %p159 = scmp.eq.s32.totalorder %s13, 1
    %p160 = por %p158, %p159
    %p161 = scmp.ne.s32.totalorder %s153, %s156
    %p162 = scmp.eq.s32.totalorder %s13, 0
    %p163 = por %p161, %p162
    %p164 = scmp.ne.s32.totalorder %s153, %s156
    %p165 = scmp.eq.s32.totalorder %s18, 1
    %p166 = por %p164, %p165
    %p167 = scmp.ne.s32.totalorder %s156, %s157
    %p168 = scmp.eq.s32.totalorder %s18, 0
    %p169 = por %p167, %p168
    %p170 = scmp.ne.s32.totalorder %s156, %s157
    %p171 = scmp.eq.s32.totalorder %s19, 1
    %p172 = por %p170, %p171
    %p174 = scmp.ne.s32.totalorder %s157, %s173
    %p175 = scmp.eq.s32.totalorder %s19, 0
    %p176 = por %p174, %p175
    %s177 = ssub.s32 %s13, %s20
    %p178 = scmp.eq.s32.totalorder %s177, 0
    %s180 = sadd.s32 %s179, 1
    %s181 = scalar_select %p178, %s179, %s180
    %p184 = pneg %p178
    %p185 = scmp.eq.s32.totalorder %s13, 1
    %p186 = por %p184, %p185
    %p187 = scmp.ne.s32.totalorder %s179, %s182
    %p188 = scmp.eq.s32.totalorder %s13, 0
    %p189 = por %p187, %p188
    %p190 = scmp.ne.s32.totalorder %s179, %s182
    %p191 = scmp.eq.s32.totalorder %s18, 1
    %p192 = por %p190, %p191
    %p193 = scmp.ne.s32.totalorder %s182, %s183
    %p194 = scmp.eq.s32.totalorder %s18, 0
    %p195 = por %p193, %p194
    %p196 = scmp.ne.s32.totalorder %s182, %s183
    %p197 = scmp.eq.s32.totalorder %s19, 1
    %p198 = por %p196, %p197
    %p200 = scmp.ne.s32.totalorder %s183, %s199
    %p201 = scmp.eq.s32.totalorder %s19, 0
    %p202 = por %p200, %p201
    %p203 = scmp.le.s32.totalorder 1, %s13
    %p204 = scmp.lt.s32.totalorder %s13, 3
    %p205 = pnand %p203, %p204
    %p206 = pneg %p205
    // Predicated region
    $region9: #{kikinet_forward.11} parent=5 // pred_check
      _
    $region10: #{kikinet_forward.11} parent=5 // pred_check_branch
      %208 = sbr.rel (%p205) target = $region12
    $region11: #{kikinet_forward.11} parent=5 // pred_region
      %s209 = ssub.s32 %s13, 1
    $region12: #{kikinet_forward.11} parent=5 // pred_fallthru
      _
    %p210 = scmp.lt.s32.totalorder %s13, 2
    // Predicated region
    $region13: #{kikinet_forward.11} parent=5 // pred_check
      %p211 = pneg %p210
    $region14: #{kikinet_forward.11} parent=5 // pred_check_branch
      %213 = sbr.rel (%p211) target = $region16
    $region15: #{kikinet_forward.11} parent=5 // pred_region
      // Predicated region
      $region17: #{kikinet_forward.11} parent=15 // pred_check
        %p214 = pneg %p33
      $region18: #{kikinet_forward.11} parent=15 // pred_check_branch
        %216 = sbr.rel (%p214) target = $region20
      $region19: #{kikinet_forward.11} parent=15 // pred_region
        %p217 = scmp.lt.s32.totalorder %s13, 1
        %s218 = scalar_select %p217, %s13, 1
        %s219 = smul.addr %s218, 2
        %s220 = smul.addr %s219, 4
        %s221 = scalar_lea.vmem %s0, %s220
      $region20: #{kikinet_forward.11} parent=15 // pred_fallthru
        _
      // Predicated region
      $region21: #{kikinet_forward.11} parent=15 // pred_check
        %p222 = pneg %p59
      $region22: #{kikinet_forward.11} parent=15 // pred_check_branch
        %224 = sbr.rel (%p222) target = $region24
      $region23: #{kikinet_forward.11} parent=15 // pred_region
        %p225 = scmp.lt.s32.totalorder %s13, 1
        %s226 = scalar_select %p225, %s13, 1
        %s227 = smul.addr %s226, 2
        %s228 = smul.addr %s227, 4
        %s229 = scalar_lea.vmem %s1, %s228
      $region24: #{kikinet_forward.11} parent=15 // pred_fallthru
        _
      // Predicated region
      $region25: #{kikinet_forward.11} parent=15 // pred_check
        %p230 = pneg %p85
      $region26: #{kikinet_forward.11} parent=15 // pred_check_branch
        %232 = sbr.rel (%p230) target = $region28
      $region27: #{kikinet_forward.11} parent=15 // pred_region
        %p233 = scmp.lt.s32.totalorder %s13, 1
        %s234 = scalar_select %p233, %s13, 1
        %s235 = smul.addr %s234, 2
        %s236 = smul.addr %s235, 4
        %s237 = scalar_lea.vmem %s2, %s236
      $region28: #{kikinet_forward.11} parent=15 // pred_fallthru
        _
      // Predicated region
      $region29: #{kikinet_forward.11} parent=15 // pred_check
        %p238 = pneg %p111
      $region30: #{kikinet_forward.11} parent=15 // pred_check_branch
        %240 = sbr.rel (%p238) target = $region32
      $region31: #{kikinet_forward.11} parent=15 // pred_region
        %p241 = scmp.lt.s32.totalorder %s13, 1
        %s242 = scalar_select %p241, %s13, 1
        %s243 = smul.addr %s242, 2
        %s244 = smul.addr %s243, 4
        %s245 = scalar_lea.vmem %s3, %s244
      $region32: #{kikinet_forward.11} parent=15 // pred_fallthru
        _
      // Predicated region
      $region33: #{kikinet_forward.11} parent=15 // pred_check
        %p246 = pneg %p137
      $region34: #{kikinet_forward.11} parent=15 // pred_check_branch
        %248 = sbr.rel (%p246) target = $region36
      $region35: #{kikinet_forward.11} parent=15 // pred_region
        %p249 = scmp.lt.s32.totalorder %s13, 1
        %s250 = scalar_select %p249, %s13, 1
        %s251 = smul.addr %s250, 2
        %s252 = scalar_lea.vmem %s4, %s251
      $region36: #{kikinet_forward.11} parent=15 // pred_fallthru
        _
    $region16: #{kikinet_forward.11} parent=5 // pred_fallthru
      _
    %p253 = scmp.le.s32.totalorder 1, %s13
    %p254 = scmp.lt.s32.totalorder %s13, 3
    %p255 = pnand %p253, %p254
    %p256 = pneg %p255
    // Predicated region
    $region37: #{kikinet_forward.11} parent=5 // pred_check
      _
    $region38: #{kikinet_forward.11} parent=5 // pred_check_branch
      %258 = sbr.rel (%p255) target = $region40
    $region39: #{kikinet_forward.11} parent=5 // pred_region
      %s259 = ssub.s32 %s13, 1
      %p260 = scmp.lt.s32.totalorder %s18, 1
      %s261 = scalar_select %p260, %s18, 1
      %s262 = smul.addr %s261, 2
      %s263 = smul.addr %s262, 4
      %s264 = scalar_lea.vmem %s0, %s263
      %p265 = pneg %p39
      %p266 = pneg %p36
      %p267 = scmp.lt.s32.totalorder %s18, 1
      %s268 = scalar_select %p267, %s18, 1
      %s269 = smul.addr %s268, 2
      %s270 = smul.addr %s269, 4
      %s271 = scalar_lea.vmem %s1, %s270
      %p272 = pneg %p65
      %p273 = pneg %p62
      %p274 = scmp.lt.s32.totalorder %s18, 1
      %s275 = scalar_select %p274, %s18, 1
      %s276 = smul.addr %s275, 2
      %s277 = smul.addr %s276, 4
      %s278 = scalar_lea.vmem %s2, %s277
      %p279 = pneg %p91
      %p280 = pneg %p88
      %p281 = scmp.lt.s32.totalorder %s18, 1
      %s282 = scalar_select %p281, %s18, 1
      %s283 = smul.addr %s282, 2
      %s284 = smul.addr %s283, 4
      %s285 = scalar_lea.vmem %s3, %s284
      %p286 = pneg %p117
      %p287 = pneg %p114
      %p288 = scmp.lt.s32.totalorder %s18, 1
      %s289 = scalar_select %p288, %s18, 1
      %s290 = smul.addr %s289, 2
      %s291 = scalar_lea.vmem %s4, %s290
      %p292 = pneg %p143
      %p293 = pneg %p140
      %p294 = pneg %p169
      %p295 = pneg %p166
      %p296 = scmp.lt.s32.totalorder %s18, 1
      %s297 = scalar_select %p296, %s18, 1
      %s298 = smul.addr %s297, 2
      %s299 = smul.addr %s298, 4
      %s300 = scalar_lea.vmem %s5, %s299
      %p301 = pneg %p195
      %p302 = pneg %p192
      %p303 = scmp.lt.s32.totalorder %s18, 1
      %s304 = scalar_select %p303, %s18, 1
      %s305 = smul.addr %s304, 2
      %s306 = smul.addr %s305, 4
      %s307 = scalar_lea.vmem %s6, %s306
      %p308 = scmp.lt.s32.totalorder %s18, 1
      %s309 = scalar_select %p308, %s18, 1
      %s310 = smul.addr %s309, 2
      %s311 = smul.addr %s310, 4
      %s312 = scalar_lea.vmem %s0, %s311
      %p313 = scmp.lt.s32.totalorder %s18, 1
      %s314 = scalar_select %p313, %s18, 1
      %s315 = smul.addr %s314, 2
      %s316 = smul.addr %s315, 4
      %s317 = scalar_lea.vmem %s1, %s316
      %p318 = scmp.lt.s32.totalorder %s18, 1
      %s319 = scalar_select %p318, %s18, 1
      %s320 = smul.addr %s319, 2
      %s321 = smul.addr %s320, 4
      %s322 = scalar_lea.vmem %s2, %s321
      %p323 = scmp.lt.s32.totalorder %s18, 1
      %s324 = scalar_select %p323, %s18, 1
      %s325 = smul.addr %s324, 2
      %s326 = smul.addr %s325, 4
      %s327 = scalar_lea.vmem %s3, %s326
      %p328 = scmp.lt.s32.totalorder %s18, 1
      %s329 = scalar_select %p328, %s18, 1
      %s330 = smul.addr %s329, 2
      %s331 = scalar_lea.vmem %s4, %s330
      %p332 = scmp.lt.s32.totalorder %s18, 1
      %s333 = scalar_select %p332, %s18, 1
      %s334 = smul.addr %s333, 2
      %s335 = smul.addr %s334, 4
      %s336 = scalar_lea.vmem %s5, %s335
      %p337 = scmp.lt.s32.totalorder %s18, 1
      %s338 = scalar_select %p337, %s18, 1
      %s339 = smul.addr %s338, 2
      %s340 = smul.addr %s339, 4
      %s341 = scalar_lea.vmem %s6, %s340
      %v342 = vld [vmem:[%s331] sm:$0x3]
      %v343 = vld [vmem:[%s312] sm:$0xff]
      %v344 = vld [vmem:[%s317] sm:$0xff]
      %v345 = vld [vmem:[%s322] sm:$0xff]
      %v346 = vsub.f32 %v345, %v343
      %v348 = vperm.slane %v342, 0
      %v349 = vperm.slane %v342, 1
      %353 = vst [vmem:[#allocation1] ss:$2 sm:$0xff] %v346
      %v354 = vld.sshfl [vmem:[#allocation1] sm:$0xff pattern:$0x75316420]
      %v355 = vld.sshfl [vmem:[#allocation1 + $0x8] sm:$0xff pattern:$0x75316420]
      %v358 = vmul.f32 %v348, %v354
      %v359 = vmul.f32 %v349, %v355
      %v362 = vrot.slane %v359, 4
      %vm363 = vcmask 1043456
      %v364 = vsel %vm363, %v358, %v362
      %v366 = vadd.f32 %v343, %v364
      %367 = vst [vmem:[%s336] sm:$0xff] %v366
      %v368 = vld [vmem:[%s327] sm:$0xff]
      %v369 = vsub.f32 %v368, %v344
      %371 = vst [vmem:[#allocation1] ss:$2 sm:$0xff] %v369
      %v372 = vld.sshfl [vmem:[#allocation1] sm:$0xff pattern:$0x75316420]
      %v373 = vld.sshfl [vmem:[#allocation1 + $0x8] sm:$0xff pattern:$0x75316420]
      %v376 = vmul.f32 %v348, %v372
      %v377 = vmul.f32 %v349, %v373
      %v380 = vrot.slane %v377, 4
      %v381 = vsel %vm363, %v376, %v380
      %v383 = vadd.f32 %v344, %v381
      %384 = vst [vmem:[%s341] sm:$0xff] %v383
      %p385 = scmp.lt.s32.totalorder %s18, 1
      %s386 = scalar_select %p385, %s18, 1
      %s387 = smul.addr %s386, 2
      %s388 = smul.addr %s387, 4
      %s389 = scalar_lea.vmem %s5, %s388
      %p390 = scmp.lt.s32.totalorder %s18, 1
      %s391 = scalar_select %p390, %s18, 1
      %s392 = smul.addr %s391, 2
      %s393 = smul.addr %s392, 4
      %s394 = scalar_lea.vmem %s6, %s393
      // Predicated region
      $region41: #{kikinet_forward.11} parent=39 // pred_check
        %p395 = pneg %p166
      $region42: #{kikinet_forward.11} parent=39 // pred_check_branch
        %397 = sbr.rel (%p395) target = $region44
      $region43: #{kikinet_forward.11} parent=39 // pred_region
        _
      $region44: #{kikinet_forward.11} parent=39 // pred_fallthru
        _
      // Predicated region
      $region45: #{kikinet_forward.11} parent=39 // pred_check
        %p398 = pneg %p192
      $region46: #{kikinet_forward.11} parent=39 // pred_check_branch
        %400 = sbr.rel (%p398) target = $region48
      $region47: #{kikinet_forward.11} parent=39 // pred_region
        _
      $region48: #{kikinet_forward.11} parent=39 // pred_fallthru
        _
    $region40: #{kikinet_forward.11} parent=5 // pred_fallthru
      _
    %p401 = scmp.le.s32.totalorder 2, %s13
    // Predicated region
    $region49: #{kikinet_forward.11} parent=5 // pred_check
      %p402 = pneg %p401
    $region50: #{kikinet_forward.11} parent=5 // pred_check_branch
      %404 = sbr.rel (%p402) target = $region52
    $region51: #{kikinet_forward.11} parent=5 // pred_region
      %s405 = ssub.s32 %s13, 2
      // Predicated region
      $region53: #{kikinet_forward.11} parent=51 // pred_check
        %p406 = pneg %p172
      $region54: #{kikinet_forward.11} parent=51 // pred_check_branch
        %408 = sbr.rel (%p406) target = $region56
      $region55: #{kikinet_forward.11} parent=51 // pred_region
        %p409 = scmp.lt.s32.totalorder %s19, 1
        %s410 = scalar_select %p409, %s19, 1
        %s411 = smul.addr %s410, 2
        %s412 = smul.addr %s411, 4
        %s413 = scalar_lea.vmem %s5, %s412
      $region56: #{kikinet_forward.11} parent=51 // pred_fallthru
        _
      // Predicated region
      $region57: #{kikinet_forward.11} parent=51 // pred_check
        %p414 = pneg %p198
      $region58: #{kikinet_forward.11} parent=51 // pred_check_branch
        %416 = sbr.rel (%p414) target = $region60
      $region59: #{kikinet_forward.11} parent=51 // pred_region
        %p417 = scmp.lt.s32.totalorder %s19, 1
        %s418 = scalar_select %p417, %s19, 1
        %s419 = smul.addr %s418, 2
        %s420 = smul.addr %s419, 4
        %s421 = scalar_lea.vmem %s6, %s420
      $region60: #{kikinet_forward.11} parent=51 // pred_fallthru
        _
    $region52: #{kikinet_forward.11} parent=5 // pred_fallthru
      _
  $region6: #{kikinet_forward.11} parent=0 // loop_footer
    %s17 = sadd.s32 1, %s13
  $region7: #{kikinet_forward.11} parent=0 // loop_footer_branch
    %12 = sbr.rel target = $region3
  $region8: #{kikinet_forward.11} parent=0 // loop_exit
    _

</llo_original>
